<compile_context>
chip_gen: v5e
topology: v5e:2x2
jax: 0.10.0
libtpu: 0.0.40
codegen_flags: <defaults>
</compile_context>

<pallas_src>
import functools

import numpy as np
import jax
import jax.numpy as jnp
from jax.experimental import pallas as pl
from jax.experimental.pallas import tpu as pltpu


KERNEL_SIZES = (1, 3, 5, 7)
KMAX = max(KERNEL_SIZES)      # 7
PMAX = KMAX // 2              # 3
NTAPS = KMAX * KMAX           # 49


def _make_fused_kernel(C, H, W, pad_l, group, n_groups):
    HW = H * W

    def kernel(x_ref, w_ref, b_ref, m_ref, o_ref):
        # x_ref: (1, C, total_pad)        halo-padded, row-major flattened input
        # w_ref: (n_groups, C, group*C)   packed block-diagonal per-tap weights
        # b_ref: (C, 1)                   bias
        # m_ref: (NTAPS, HW)              per-tap 0/1 validity masks
        # o_ref: (1, C, HW)
        xv = x_ref[0]                                             # (C, total_pad)
        acc = jnp.broadcast_to(b_ref[...].astype(jnp.float32), (C, HW))
        for g in range(n_groups):                                 # short static unroll
            pieces = []
            for j in range(group):
                t = g * group + j
                if t < NTAPS:
                    dh = t // KMAX - PMAX
                    dw = t % KMAX - PMAX
                    start = pad_l + dh * W + dw                   # static lane offset
                    win = xv[:, start:start + HW].astype(jnp.float32)   # (C, HW)
                    pieces.append(win * m_ref[t:t + 1, :])        # mask row-wrap
                else:                                             # zero-pad tap
                    pieces.append(jnp.zeros((C, HW), jnp.float32))
            stacked = pieces[0] if group == 1 else jnp.concatenate(pieces, axis=0)
            acc = acc + jnp.dot(w_ref[g].astype(jnp.float32), stacked,
                                preferred_element_type=jnp.float32,
                                precision=jax.lax.Precision.HIGHEST)
        o_ref[0] = acc.astype(o_ref.dtype)

    return kernel


def mul_small_fused(x_nchw, w_packed, b_comb, masks, group):
    """Fused MUL_small forward. x_nchw: (N, C, H, W) with C = n_feats."""
    N, C, H, W = x_nchw.shape
    HW = H * W
    n_groups = w_packed.shape[0]
    pad_l = PMAX * W + PMAX                   # halo for the largest (7x7) kernel
    total = pad_l + HW + pad_l
    total_pad = ((total + 127) // 128) * 128  # lane-align the padded row
    pad_r = total_pad - HW - pad_l

    x_flat = x_nchw.reshape(N, C, HW)                          # free (contiguous merge)
    x_pad = jnp.pad(x_flat, ((0, 0), (0, 0), (pad_l, pad_r)))  # single shared halo pad

    kernel = _make_fused_kernel(C, H, W, pad_l, group, n_groups)
    out = pl.pallas_call(
        kernel,
        out_shape=jax.ShapeDtypeStruct((N, C, HW), x_nchw.dtype),
        grid=(N,),
        in_specs=[
            pl.BlockSpec((1, C, total_pad), lambda n: (n, 0, 0)),
            pl.BlockSpec((n_groups, C, group * C), lambda n: (0, 0, 0)),
            pl.BlockSpec((C, 1), lambda n: (0, 0)),
            pl.BlockSpec((NTAPS, HW), lambda n: (0, 0)),
        ],
        out_specs=pl.BlockSpec((1, C, HW), lambda n: (n, 0, 0)),
        compiler_params=pltpu.CompilerParams(
            dimension_semantics=("parallel",)),
    )(x_pad, w_packed, b_comb.reshape(C, 1), masks)
    return out.reshape(N, C, H, W)


@functools.lru_cache(maxsize=None)
def _build_masks(H, W):
    """(NTAPS, H*W) 0/1 masks: tap (dh, dw) valid iff (h+dh, w+dw) stays in-image."""
    HW = H * W
    h = np.repeat(np.arange(H), W)
    w = np.tile(np.arange(W), H)
    m = np.zeros((NTAPS, HW), np.float32)
    for t in range(NTAPS):
        dh = t // KMAX - PMAX
        dw = t % KMAX - PMAX
        valid = (h + dh >= 0) & (h + dh < H) & (w + dw >= 0) & (w + dw < W)
        m[t] = valid.astype(np.float32)
    return jnp.asarray(m)


class MULSmallPallas:
    """Pallas equivalent of MUL_small(conv=default_conv, n_feats, bias=True)."""

    KERNEL_SIZES = KERNEL_SIZES

    def __init__(self, n_feats, key, dtype=jnp.float32):
        assert n_feats % 4 == 0
        self.n_feats = n_feats
        c = n_feats // 4
        self.params = {}
        keys = jax.random.split(key, 2 * len(self.KERNEL_SIZES))
        for i, K in enumerate(self.KERNEL_SIZES):
            # PyTorch-style uniform(-1/sqrt(fan_in), 1/sqrt(fan_in)); HWIO layout.
            fan_in = c * K * K
            bound = 1.0 / (fan_in ** 0.5)
            w = jax.random.uniform(keys[2 * i], (K, K, c, c), dtype,
                                   minval=-bound, maxval=bound)
            b = jax.random.uniform(keys[2 * i + 1], (c,), dtype,
                                   minval=-bound, maxval=bound)
            self.params[K] = (w, b)

        # Fold the four group convs into one block-diagonal per-tap weight + bias.
        C = n_feats
        w_comb = np.zeros((NTAPS, C, C), np.float32)
        b_comb = np.zeros((C,), np.float32)
        for g, K in enumerate(self.KERNEL_SIZES):
            w, b = self.params[K]
            wg = np.asarray(w)                         # (K, K, c_in, c_out)
            p = K // 2
            for kh in range(K):
                for kw in range(K):
                    t = (kh - p + PMAX) * KMAX + (kw - p + PMAX)
                    w_comb[t, g * c:(g + 1) * c, g * c:(g + 1) * c] = wg[kh, kw].T
            b_comb[g * c:(g + 1) * c] = np.asarray(b)

        # Pack taps in groups along the MXU contraction dim (target ~128 per dot).
        self.group = max(1, -(-128 // C))              # ceil(128 / C)
        n_groups = -(-NTAPS // self.group)             # ceil(49 / group)
        w_packed = np.zeros((n_groups, C, self.group * C), np.float32)
        for t in range(NTAPS):
            gi, j = divmod(t, self.group)
            w_packed[gi, :, j * C:(j + 1) * C] = w_comb[t]   # [c_out, c_in] block
        self.w_packed = jnp.asarray(w_packed, dtype)
        self.b_comb = jnp.asarray(b_comb, dtype)

    def __call__(self, x_nchw):
        _, _, H, W = x_nchw.shape
        masks = _build_masks(H, W)
        return mul_small_fused(x_nchw, self.w_packed, self.b_comb, masks, self.group)


if __name__ == "__main__":
    key = jax.random.PRNGKey(0)
    kx, kp = jax.random.split(key)

    N, n_feats, H, W = 2, 16, 16, 16
    x = jax.random.normal(kx, (N, n_feats, H, W), jnp.float32)

    model = MULSmallPallas(n_feats, kp)
    y = jax.block_until_ready(model(x))
    assert y.shape == (N, n_feats, H, W), y.shape

    # Cross-check against XLA convs ('SAME' padding == PyTorch pad=K//2).
    x_nhwc = jnp.transpose(x, (0, 2, 3, 1))
    le = n_feats // 4
    refs = []
    for i, K in enumerate(MULSmallPallas.KERNEL_SIZES):
        w, b = model.params[K]
        xg = x_nhwc[..., i * le:(i + 1) * le]
        r = jax.lax.conv_general_dilated(
            xg, w, window_strides=(1, 1), padding="SAME",
            dimension_numbers=("NHWC", "HWIO", "NHWC"),
            precision=jax.lax.Precision.HIGHEST) + b
        refs.append(r)
    y_ref = jnp.transpose(jnp.concatenate(refs, axis=-1), (0, 3, 1, 2))
    assert jnp.allclose(y, y_ref, atol=2e-2, rtol=2e-2), "mismatch vs reference conv"

    print("KERNEL_OK")
</pallas_src>

<mosaic_0001>
module attributes {stable_mosaic.version = 11 : i64} {
  func.func @kernel(%arg0: i32, %arg1: memref<1x16x384xf32, #tpu.memory_space<vmem>>, %arg2: memref<7x16x128xf32, #tpu.memory_space<vmem>>, %arg3: memref<16x1xf32, #tpu.memory_space<vmem>>, %arg4: memref<49x256xf32, #tpu.memory_space<vmem>>, %arg5: memref<1x16x256xf32, #tpu.memory_space<vmem>>) attributes {dimension_semantics = [#tpu.dimension_semantics<parallel>], iteration_bounds = array<i64: 2>, scalar_prefetch = 0 : i64, scratch_operands = 0 : i64, tpu.core_type = #tpu.core_type<tc>, window_params = [{transform_indices = @transform_0, window_bounds = array<i64: 1, 16, 384>}, {pipeline_mode = #tpu.pipeline_mode<synchronous>, transform_indices = @transform_1, window_bounds = array<i64: 7, 16, 128>}, {pipeline_mode = #tpu.pipeline_mode<synchronous>, transform_indices = @transform_2, window_bounds = array<i64: 16, 1>}, {pipeline_mode = #tpu.pipeline_mode<synchronous>, transform_indices = @transform_3, window_bounds = array<i64: 49, 256>}, {transform_indices = @transform_4, window_bounds = array<i64: 1, 16, 256>}]} {
    %c0 = arith.constant 0 : index
    %c0_0 = arith.constant 0 : index
    %c0_1 = arith.constant 0 : index
    %0 = vector.load %arg1[%c0, %c0_0, %c0_1] : memref<1x16x384xf32, #tpu.memory_space<vmem>>, vector<1x16x384xf32>
    %1 = vector.shape_cast %0 : vector<1x16x384xf32> to vector<16x384xf32>
    %c0_2 = arith.constant 0 : index
    %c0_3 = arith.constant 0 : index
    %2 = vector.load %arg3[%c0_2, %c0_3] : memref<16x1xf32, #tpu.memory_space<vmem>>, vector<16x1xf32>
    %3 = vector.shape_cast %2 : vector<16x1xf32> to vector<16x1xf32>
    %4 = vector.broadcast %3 : vector<16x1xf32> to vector<16x256xf32>
    %5 = vector.extract_strided_slice %1 {offsets = [0, 0], sizes = [16, 256], strides = [1, 1]} : vector<16x384xf32> to vector<16x256xf32>
    %c0_4 = arith.constant 0 : index
    %c0_5 = arith.constant 0 : index
    %6 = vector.load %arg4[%c0_4, %c0_5] : memref<49x256xf32, #tpu.memory_space<vmem>>, vector<1x256xf32>
    %7 = vector.broadcast %6 : vector<1x256xf32> to vector<16x256xf32>
    %8 = arith.mulf %5, %7 : vector<16x256xf32>
    %9 = vector.extract_strided_slice %1 {offsets = [0, 1], sizes = [16, 256], strides = [1, 1]} : vector<16x384xf32> to vector<16x256xf32>
    %c1 = arith.constant 1 : index
    %c0_6 = arith.constant 0 : index
    %10 = vector.load %arg4[%c1, %c0_6] : memref<49x256xf32, #tpu.memory_space<vmem>>, vector<1x256xf32>
    %11 = vector.broadcast %10 : vector<1x256xf32> to vector<16x256xf32>
    %12 = arith.mulf %9, %11 : vector<16x256xf32>
    %13 = vector.extract_strided_slice %1 {offsets = [0, 2], sizes = [16, 256], strides = [1, 1]} : vector<16x384xf32> to vector<16x256xf32>
    %c2 = arith.constant 2 : index
    %c0_7 = arith.constant 0 : index
    %14 = vector.load %arg4[%c2, %c0_7] : memref<49x256xf32, #tpu.memory_space<vmem>>, vector<1x256xf32>
    %15 = vector.broadcast %14 : vector<1x256xf32> to vector<16x256xf32>
    %16 = arith.mulf %13, %15 : vector<16x256xf32>
    %17 = vector.extract_strided_slice %1 {offsets = [0, 3], sizes = [16, 256], strides = [1, 1]} : vector<16x384xf32> to vector<16x256xf32>
    %c3 = arith.constant 3 : index
    %c0_8 = arith.constant 0 : index
    %18 = vector.load %arg4[%c3, %c0_8] : memref<49x256xf32, #tpu.memory_space<vmem>>, vector<1x256xf32>
    %19 = vector.broadcast %18 : vector<1x256xf32> to vector<16x256xf32>
    %20 = arith.mulf %17, %19 : vector<16x256xf32>
    %21 = vector.extract_strided_slice %1 {offsets = [0, 4], sizes = [16, 256], strides = [1, 1]} : vector<16x384xf32> to vector<16x256xf32>
    %c4 = arith.constant 4 : index
    %c0_9 = arith.constant 0 : index
    %22 = vector.load %arg4[%c4, %c0_9] : memref<49x256xf32, #tpu.memory_space<vmem>>, vector<1x256xf32>
    %23 = vector.broadcast %22 : vector<1x256xf32> to vector<16x256xf32>
    %24 = arith.mulf %21, %23 : vector<16x256xf32>
    %25 = vector.extract_strided_slice %1 {offsets = [0, 5], sizes = [16, 256], strides = [1, 1]} : vector<16x384xf32> to vector<16x256xf32>
    %c5 = arith.constant 5 : index
    %c0_10 = arith.constant 0 : index
    %26 = vector.load %arg4[%c5, %c0_10] : memref<49x256xf32, #tpu.memory_space<vmem>>, vector<1x256xf32>
    %27 = vector.broadcast %26 : vector<1x256xf32> to vector<16x256xf32>
    %28 = arith.mulf %25, %27 : vector<16x256xf32>
    %29 = vector.extract_strided_slice %1 {offsets = [0, 6], sizes = [16, 256], strides = [1, 1]} : vector<16x384xf32> to vector<16x256xf32>
    %c6 = arith.constant 6 : index
    %c0_11 = arith.constant 0 : index
    %30 = vector.load %arg4[%c6, %c0_11] : memref<49x256xf32, #tpu.memory_space<vmem>>, vector<1x256xf32>
    %31 = vector.broadcast %30 : vector<1x256xf32> to vector<16x256xf32>
    %32 = arith.mulf %29, %31 : vector<16x256xf32>
    %33 = vector.extract_strided_slice %1 {offsets = [0, 16], sizes = [16, 256], strides = [1, 1]} : vector<16x384xf32> to vector<16x256xf32>
    %c7 = arith.constant 7 : index
    %c0_12 = arith.constant 0 : index
    %34 = vector.load %arg4[%c7, %c0_12] : memref<49x256xf32, #tpu.memory_space<vmem>>, vector<1x256xf32>
    %35 = vector.broadcast %34 : vector<1x256xf32> to vector<16x256xf32>
    %36 = arith.mulf %33, %35 : vector<16x256xf32>
    %37 = tpu.concatenate %8, %12, %16, %20, %24, %28, %32, %36 in 0 : vector<16x256xf32>, vector<16x256xf32>, vector<16x256xf32>, vector<16x256xf32>, vector<16x256xf32>, vector<16x256xf32>, vector<16x256xf32>, vector<16x256xf32> -> vector<128x256xf32>
    %c0_13 = arith.constant 0 : index
    %c0_14 = arith.constant 0 : index
    %c0_15 = arith.constant 0 : index
    %38 = vector.load %arg2[%c0_13, %c0_14, %c0_15] : memref<7x16x128xf32, #tpu.memory_space<vmem>>, vector<1x16x128xf32>
    %39 = vector.shape_cast %38 : vector<1x16x128xf32> to vector<16x128xf32>
    %cst = arith.constant dense<0.000000e+00> : vector<16x256xf32>
    %40 = tpu.matmul %39, %37, %cst {dimension_numbers = #tpu.dot_dimension_numbers<[1], [0], [0], [1], [0, 0, 1, 1], [], []>, precision = #tpu.contract_precision<fp32>} : vector<16x128xf32>, vector<128x256xf32>, vector<16x256xf32> -> vector<16x256xf32>
    %41 = arith.addf %4, %40 : vector<16x256xf32>
    %42 = vector.extract_strided_slice %1 {offsets = [0, 17], sizes = [16, 256], strides = [1, 1]} : vector<16x384xf32> to vector<16x256xf32>
    %c8 = arith.constant 8 : index
    %c0_16 = arith.constant 0 : index
    %43 = vector.load %arg4[%c8, %c0_16] : memref<49x256xf32, #tpu.memory_space<vmem>>, vector<1x256xf32>
    %44 = vector.broadcast %43 : vector<1x256xf32> to vector<16x256xf32>
    %45 = arith.mulf %42, %44 : vector<16x256xf32>
    %46 = vector.extract_strided_slice %1 {offsets = [0, 18], sizes = [16, 256], strides = [1, 1]} : vector<16x384xf32> to vector<16x256xf32>
    %c9 = arith.constant 9 : index
    %c0_17 = arith.constant 0 : index
    %47 = vector.load %arg4[%c9, %c0_17] : memref<49x256xf32, #tpu.memory_space<vmem>>, vector<1x256xf32>
    %48 = vector.broadcast %47 : vector<1x256xf32> to vector<16x256xf32>
    %49 = arith.mulf %46, %48 : vector<16x256xf32>
    %50 = vector.extract_strided_slice %1 {offsets = [0, 19], sizes = [16, 256], strides = [1, 1]} : vector<16x384xf32> to vector<16x256xf32>
    %c10 = arith.constant 10 : index
    %c0_18 = arith.constant 0 : index
    %51 = vector.load %arg4[%c10, %c0_18] : memref<49x256xf32, #tpu.memory_space<vmem>>, vector<1x256xf32>
    %52 = vector.broadcast %51 : vector<1x256xf32> to vector<16x256xf32>
    %53 = arith.mulf %50, %52 : vector<16x256xf32>
    %54 = vector.extract_strided_slice %1 {offsets = [0, 20], sizes = [16, 256], strides = [1, 1]} : vector<16x384xf32> to vector<16x256xf32>
    %c11 = arith.constant 11 : index
    %c0_19 = arith.constant 0 : index
    %55 = vector.load %arg4[%c11, %c0_19] : memref<49x256xf32, #tpu.memory_space<vmem>>, vector<1x256xf32>
    %56 = vector.broadcast %55 : vector<1x256xf32> to vector<16x256xf32>
    %57 = arith.mulf %54, %56 : vector<16x256xf32>
    %58 = vector.extract_strided_slice %1 {offsets = [0, 21], sizes = [16, 256], strides = [1, 1]} : vector<16x384xf32> to vector<16x256xf32>
    %c12 = arith.constant 12 : index
    %c0_20 = arith.constant 0 : index
    %59 = vector.load %arg4[%c12, %c0_20] : memref<49x256xf32, #tpu.memory_space<vmem>>, vector<1x256xf32>
    %60 = vector.broadcast %59 : vector<1x256xf32> to vector<16x256xf32>
    %61 = arith.mulf %58, %60 : vector<16x256xf32>
    %62 = vector.extract_strided_slice %1 {offsets = [0, 22], sizes = [16, 256], strides = [1, 1]} : vector<16x384xf32> to vector<16x256xf32>
    %c13 = arith.constant 13 : index
    %c0_21 = arith.constant 0 : index
    %63 = vector.load %arg4[%c13, %c0_21] : memref<49x256xf32, #tpu.memory_space<vmem>>, vector<1x256xf32>
    %64 = vector.broadcast %63 : vector<1x256xf32> to vector<16x256xf32>
    %65 = arith.mulf %62, %64 : vector<16x256xf32>
    %66 = vector.extract_strided_slice %1 {offsets = [0, 32], sizes = [16, 256], strides = [1, 1]} : vector<16x384xf32> to vector<16x256xf32>
    %c14 = arith.constant 14 : index
    %c0_22 = arith.constant 0 : index
    %67 = vector.load %arg4[%c14, %c0_22] : memref<49x256xf32, #tpu.memory_space<vmem>>, vector<1x256xf32>
    %68 = vector.broadcast %67 : vector<1x256xf32> to vector<16x256xf32>
    %69 = arith.mulf %66, %68 : vector<16x256xf32>
    %70 = vector.extract_strided_slice %1 {offsets = [0, 33], sizes = [16, 256], strides = [1, 1]} : vector<16x384xf32> to vector<16x256xf32>
    %c15 = arith.constant 15 : index
    %c0_23 = arith.constant 0 : index
    %71 = vector.load %arg4[%c15, %c0_23] : memref<49x256xf32, #tpu.memory_space<vmem>>, vector<1x256xf32>
    %72 = vector.broadcast %71 : vector<1x256xf32> to vector<16x256xf32>
    %73 = arith.mulf %70, %72 : vector<16x256xf32>
    %74 = tpu.concatenate %45, %49, %53, %57, %61, %65, %69, %73 in 0 : vector<16x256xf32>, vector<16x256xf32>, vector<16x256xf32>, vector<16x256xf32>, vector<16x256xf32>, vector<16x256xf32>, vector<16x256xf32>, vector<16x256xf32> -> vector<128x256xf32>
    %c1_24 = arith.constant 1 : index
    %c0_25 = arith.constant 0 : index
    %c0_26 = arith.constant 0 : index
    %75 = vector.load %arg2[%c1_24, %c0_25, %c0_26] : memref<7x16x128xf32, #tpu.memory_space<vmem>>, vector<1x16x128xf32>
    %76 = vector.shape_cast %75 : vector<1x16x128xf32> to vector<16x128xf32>
    %cst_27 = arith.constant dense<0.000000e+00> : vector<16x256xf32>
    %77 = tpu.matmul %76, %74, %cst_27 {dimension_numbers = #tpu.dot_dimension_numbers<[1], [0], [0], [1], [0, 0, 1, 1], [], []>, precision = #tpu.contract_precision<fp32>} : vector<16x128xf32>, vector<128x256xf32>, vector<16x256xf32> -> vector<16x256xf32>
    %78 = arith.addf %41, %77 : vector<16x256xf32>
    %79 = vector.extract_strided_slice %1 {offsets = [0, 34], sizes = [16, 256], strides = [1, 1]} : vector<16x384xf32> to vector<16x256xf32>
    %c16 = arith.constant 16 : index
    %c0_28 = arith.constant 0 : index
    %80 = vector.load %arg4[%c16, %c0_28] : memref<49x256xf32, #tpu.memory_space<vmem>>, vector<1x256xf32>
    %81 = vector.broadcast %80 : vector<1x256xf32> to vector<16x256xf32>
    %82 = arith.mulf %79, %81 : vector<16x256xf32>
    %83 = vector.extract_strided_slice %1 {offsets = [0, 35], sizes = [16, 256], strides = [1, 1]} : vector<16x384xf32> to vector<16x256xf32>
    %c17 = arith.constant 17 : index
    %c0_29 = arith.constant 0 : index
    %84 = vector.load %arg4[%c17, %c0_29] : memref<49x256xf32, #tpu.memory_space<vmem>>, vector<1x256xf32>
    %85 = vector.broadcast %84 : vector<1x256xf32> to vector<16x256xf32>
    %86 = arith.mulf %83, %85 : vector<16x256xf32>
    %87 = vector.extract_strided_slice %1 {offsets = [0, 36], sizes = [16, 256], strides = [1, 1]} : vector<16x384xf32> to vector<16x256xf32>
    %c18 = arith.constant 18 : index
    %c0_30 = arith.constant 0 : index
    %88 = vector.load %arg4[%c18, %c0_30] : memref<49x256xf32, #tpu.memory_space<vmem>>, vector<1x256xf32>
    %89 = vector.broadcast %88 : vector<1x256xf32> to vector<16x256xf32>
    %90 = arith.mulf %87, %89 : vector<16x256xf32>
    %91 = vector.extract_strided_slice %1 {offsets = [0, 37], sizes = [16, 256], strides = [1, 1]} : vector<16x384xf32> to vector<16x256xf32>
    %c19 = arith.constant 19 : index
    %c0_31 = arith.constant 0 : index
    %92 = vector.load %arg4[%c19, %c0_31] : memref<49x256xf32, #tpu.memory_space<vmem>>, vector<1x256xf32>
    %93 = vector.broadcast %92 : vector<1x256xf32> to vector<16x256xf32>
    %94 = arith.mulf %91, %93 : vector<16x256xf32>
    %95 = vector.extract_strided_slice %1 {offsets = [0, 38], sizes = [16, 256], strides = [1, 1]} : vector<16x384xf32> to vector<16x256xf32>
    %c20 = arith.constant 20 : index
    %c0_32 = arith.constant 0 : index
    %96 = vector.load %arg4[%c20, %c0_32] : memref<49x256xf32, #tpu.memory_space<vmem>>, vector<1x256xf32>
    %97 = vector.broadcast %96 : vector<1x256xf32> to vector<16x256xf32>
    %98 = arith.mulf %95, %97 : vector<16x256xf32>
    %99 = vector.extract_strided_slice %1 {offsets = [0, 48], sizes = [16, 256], strides = [1, 1]} : vector<16x384xf32> to vector<16x256xf32>
    %c21 = arith.constant 21 : index
    %c0_33 = arith.constant 0 : index
    %100 = vector.load %arg4[%c21, %c0_33] : memref<49x256xf32, #tpu.memory_space<vmem>>, vector<1x256xf32>
    %101 = vector.broadcast %100 : vector<1x256xf32> to vector<16x256xf32>
    %102 = arith.mulf %99, %101 : vector<16x256xf32>
    %103 = vector.extract_strided_slice %1 {offsets = [0, 49], sizes = [16, 256], strides = [1, 1]} : vector<16x384xf32> to vector<16x256xf32>
    %c22 = arith.constant 22 : index
    %c0_34 = arith.constant 0 : index
    %104 = vector.load %arg4[%c22, %c0_34] : memref<49x256xf32, #tpu.memory_space<vmem>>, vector<1x256xf32>
    %105 = vector.broadcast %104 : vector<1x256xf32> to vector<16x256xf32>
    %106 = arith.mulf %103, %105 : vector<16x256xf32>
    %107 = vector.extract_strided_slice %1 {offsets = [0, 50], sizes = [16, 256], strides = [1, 1]} : vector<16x384xf32> to vector<16x256xf32>
    %c23 = arith.constant 23 : index
    %c0_35 = arith.constant 0 : index
    %108 = vector.load %arg4[%c23, %c0_35] : memref<49x256xf32, #tpu.memory_space<vmem>>, vector<1x256xf32>
    %109 = vector.broadcast %108 : vector<1x256xf32> to vector<16x256xf32>
    %110 = arith.mulf %107, %109 : vector<16x256xf32>
    %111 = tpu.concatenate %82, %86, %90, %94, %98, %102, %106, %110 in 0 : vector<16x256xf32>, vector<16x256xf32>, vector<16x256xf32>, vector<16x256xf32>, vector<16x256xf32>, vector<16x256xf32>, vector<16x256xf32>, vector<16x256xf32> -> vector<128x256xf32>
    %c2_36 = arith.constant 2 : index
    %c0_37 = arith.constant 0 : index
    %c0_38 = arith.constant 0 : index
    %112 = vector.load %arg2[%c2_36, %c0_37, %c0_38] : memref<7x16x128xf32, #tpu.memory_space<vmem>>, vector<1x16x128xf32>
    %113 = vector.shape_cast %112 : vector<1x16x128xf32> to vector<16x128xf32>
    %cst_39 = arith.constant dense<0.000000e+00> : vector<16x256xf32>
    %114 = tpu.matmul %113, %111, %cst_39 {dimension_numbers = #tpu.dot_dimension_numbers<[1], [0], [0], [1], [0, 0, 1, 1], [], []>, precision = #tpu.contract_precision<fp32>} : vector<16x128xf32>, vector<128x256xf32>, vector<16x256xf32> -> vector<16x256xf32>
    %115 = arith.addf %78, %114 : vector<16x256xf32>
    %116 = vector.extract_strided_slice %1 {offsets = [0, 51], sizes = [16, 256], strides = [1, 1]} : vector<16x384xf32> to vector<16x256xf32>
    %c24 = arith.constant 24 : index
    %c0_40 = arith.constant 0 : index
    %117 = vector.load %arg4[%c24, %c0_40] : memref<49x256xf32, #tpu.memory_space<vmem>>, vector<1x256xf32>
    %118 = vector.broadcast %117 : vector<1x256xf32> to vector<16x256xf32>
    %119 = arith.mulf %116, %118 : vector<16x256xf32>
    %120 = vector.extract_strided_slice %1 {offsets = [0, 52], sizes = [16, 256], strides = [1, 1]} : vector<16x384xf32> to vector<16x256xf32>
    %c25 = arith.constant 25 : index
    %c0_41 = arith.constant 0 : index
    %121 = vector.load %arg4[%c25, %c0_41] : memref<49x256xf32, #tpu.memory_space<vmem>>, vector<1x256xf32>
    %122 = vector.broadcast %121 : vector<1x256xf32> to vector<16x256xf32>
    %123 = arith.mulf %120, %122 : vector<16x256xf32>
    %124 = vector.extract_strided_slice %1 {offsets = [0, 53], sizes = [16, 256], strides = [1, 1]} : vector<16x384xf32> to vector<16x256xf32>
    %c26 = arith.constant 26 : index
    %c0_42 = arith.constant 0 : index
    %125 = vector.load %arg4[%c26, %c0_42] : memref<49x256xf32, #tpu.memory_space<vmem>>, vector<1x256xf32>
    %126 = vector.broadcast %125 : vector<1x256xf32> to vector<16x256xf32>
    %127 = arith.mulf %124, %126 : vector<16x256xf32>
    %128 = vector.extract_strided_slice %1 {offsets = [0, 54], sizes = [16, 256], strides = [1, 1]} : vector<16x384xf32> to vector<16x256xf32>
    %c27 = arith.constant 27 : index
    %c0_43 = arith.constant 0 : index
    %129 = vector.load %arg4[%c27, %c0_43] : memref<49x256xf32, #tpu.memory_space<vmem>>, vector<1x256xf32>
    %130 = vector.broadcast %129 : vector<1x256xf32> to vector<16x256xf32>
    %131 = arith.mulf %128, %130 : vector<16x256xf32>
    %132 = vector.extract_strided_slice %1 {offsets = [0, 64], sizes = [16, 256], strides = [1, 1]} : vector<16x384xf32> to vector<16x256xf32>
    %c28 = arith.constant 28 : index
    %c0_44 = arith.constant 0 : index
    %133 = vector.load %arg4[%c28, %c0_44] : memref<49x256xf32, #tpu.memory_space<vmem>>, vector<1x256xf32>
    %134 = vector.broadcast %133 : vector<1x256xf32> to vector<16x256xf32>
    %135 = arith.mulf %132, %134 : vector<16x256xf32>
    %136 = vector.extract_strided_slice %1 {offsets = [0, 65], sizes = [16, 256], strides = [1, 1]} : vector<16x384xf32> to vector<16x256xf32>
    %c29 = arith.constant 29 : index
    %c0_45 = arith.constant 0 : index
    %137 = vector.load %arg4[%c29, %c0_45] : memref<49x256xf32, #tpu.memory_space<vmem>>, vector<1x256xf32>
    %138 = vector.broadcast %137 : vector<1x256xf32> to vector<16x256xf32>
    %139 = arith.mulf %136, %138 : vector<16x256xf32>
    %140 = vector.extract_strided_slice %1 {offsets = [0, 66], sizes = [16, 256], strides = [1, 1]} : vector<16x384xf32> to vector<16x256xf32>
    %c30 = arith.constant 30 : index
    %c0_46 = arith.constant 0 : index
    %141 = vector.load %arg4[%c30, %c0_46] : memref<49x256xf32, #tpu.memory_space<vmem>>, vector<1x256xf32>
    %142 = vector.broadcast %141 : vector<1x256xf32> to vector<16x256xf32>
    %143 = arith.mulf %140, %142 : vector<16x256xf32>
    %144 = vector.extract_strided_slice %1 {offsets = [0, 67], sizes = [16, 256], strides = [1, 1]} : vector<16x384xf32> to vector<16x256xf32>
    %c31 = arith.constant 31 : index
    %c0_47 = arith.constant 0 : index
    %145 = vector.load %arg4[%c31, %c0_47] : memref<49x256xf32, #tpu.memory_space<vmem>>, vector<1x256xf32>
    %146 = vector.broadcast %145 : vector<1x256xf32> to vector<16x256xf32>
    %147 = arith.mulf %144, %146 : vector<16x256xf32>
    %148 = tpu.concatenate %119, %123, %127, %131, %135, %139, %143, %147 in 0 : vector<16x256xf32>, vector<16x256xf32>, vector<16x256xf32>, vector<16x256xf32>, vector<16x256xf32>, vector<16x256xf32>, vector<16x256xf32>, vector<16x256xf32> -> vector<128x256xf32>
    %c3_48 = arith.constant 3 : index
    %c0_49 = arith.constant 0 : index
    %c0_50 = arith.constant 0 : index
    %149 = vector.load %arg2[%c3_48, %c0_49, %c0_50] : memref<7x16x128xf32, #tpu.memory_space<vmem>>, vector<1x16x128xf32>
    %150 = vector.shape_cast %149 : vector<1x16x128xf32> to vector<16x128xf32>
    %cst_51 = arith.constant dense<0.000000e+00> : vector<16x256xf32>
    %151 = tpu.matmul %150, %148, %cst_51 {dimension_numbers = #tpu.dot_dimension_numbers<[1], [0], [0], [1], [0, 0, 1, 1], [], []>, precision = #tpu.contract_precision<fp32>} : vector<16x128xf32>, vector<128x256xf32>, vector<16x256xf32> -> vector<16x256xf32>
    %152 = arith.addf %115, %151 : vector<16x256xf32>
    %153 = vector.extract_strided_slice %1 {offsets = [0, 68], sizes = [16, 256], strides = [1, 1]} : vector<16x384xf32> to vector<16x256xf32>
    %c32 = arith.constant 32 : index
    %c0_52 = arith.constant 0 : index
    %154 = vector.load %arg4[%c32, %c0_52] : memref<49x256xf32, #tpu.memory_space<vmem>>, vector<1x256xf32>
    %155 = vector.broadcast %154 : vector<1x256xf32> to vector<16x256xf32>
    %156 = arith.mulf %153, %155 : vector<16x256xf32>
    %157 = vector.extract_strided_slice %1 {offsets = [0, 69], sizes = [16, 256], strides = [1, 1]} : vector<16x384xf32> to vector<16x256xf32>
    %c33 = arith.constant 33 : index
    %c0_53 = arith.constant 0 : index
    %158 = vector.load %arg4[%c33, %c0_53] : memref<49x256xf32, #tpu.memory_space<vmem>>, vector<1x256xf32>
    %159 = vector.broadcast %158 : vector<1x256xf32> to vector<16x256xf32>
    %160 = arith.mulf %157, %159 : vector<16x256xf32>
    %161 = vector.extract_strided_slice %1 {offsets = [0, 70], sizes = [16, 256], strides = [1, 1]} : vector<16x384xf32> to vector<16x256xf32>
    %c34 = arith.constant 34 : index
    %c0_54 = arith.constant 0 : index
    %162 = vector.load %arg4[%c34, %c0_54] : memref<49x256xf32, #tpu.memory_space<vmem>>, vector<1x256xf32>
    %163 = vector.broadcast %162 : vector<1x256xf32> to vector<16x256xf32>
    %164 = arith.mulf %161, %163 : vector<16x256xf32>
    %165 = vector.extract_strided_slice %1 {offsets = [0, 80], sizes = [16, 256], strides = [1, 1]} : vector<16x384xf32> to vector<16x256xf32>
    %c35 = arith.constant 35 : index
    %c0_55 = arith.constant 0 : index
    %166 = vector.load %arg4[%c35, %c0_55] : memref<49x256xf32, #tpu.memory_space<vmem>>, vector<1x256xf32>
    %167 = vector.broadcast %166 : vector<1x256xf32> to vector<16x256xf32>
    %168 = arith.mulf %165, %167 : vector<16x256xf32>
    %169 = vector.extract_strided_slice %1 {offsets = [0, 81], sizes = [16, 256], strides = [1, 1]} : vector<16x384xf32> to vector<16x256xf32>
    %c36 = arith.constant 36 : index
    %c0_56 = arith.constant 0 : index
    %170 = vector.load %arg4[%c36, %c0_56] : memref<49x256xf32, #tpu.memory_space<vmem>>, vector<1x256xf32>
    %171 = vector.broadcast %170 : vector<1x256xf32> to vector<16x256xf32>
    %172 = arith.mulf %169, %171 : vector<16x256xf32>
    %173 = vector.extract_strided_slice %1 {offsets = [0, 82], sizes = [16, 256], strides = [1, 1]} : vector<16x384xf32> to vector<16x256xf32>
    %c37 = arith.constant 37 : index
    %c0_57 = arith.constant 0 : index
    %174 = vector.load %arg4[%c37, %c0_57] : memref<49x256xf32, #tpu.memory_space<vmem>>, vector<1x256xf32>
    %175 = vector.broadcast %174 : vector<1x256xf32> to vector<16x256xf32>
    %176 = arith.mulf %173, %175 : vector<16x256xf32>
    %177 = vector.extract_strided_slice %1 {offsets = [0, 83], sizes = [16, 256], strides = [1, 1]} : vector<16x384xf32> to vector<16x256xf32>
    %c38 = arith.constant 38 : index
    %c0_58 = arith.constant 0 : index
    %178 = vector.load %arg4[%c38, %c0_58] : memref<49x256xf32, #tpu.memory_space<vmem>>, vector<1x256xf32>
    %179 = vector.broadcast %178 : vector<1x256xf32> to vector<16x256xf32>
    %180 = arith.mulf %177, %179 : vector<16x256xf32>
    %181 = vector.extract_strided_slice %1 {offsets = [0, 84], sizes = [16, 256], strides = [1, 1]} : vector<16x384xf32> to vector<16x256xf32>
    %c39 = arith.constant 39 : index
    %c0_59 = arith.constant 0 : index
    %182 = vector.load %arg4[%c39, %c0_59] : memref<49x256xf32, #tpu.memory_space<vmem>>, vector<1x256xf32>
    %183 = vector.broadcast %182 : vector<1x256xf32> to vector<16x256xf32>
    %184 = arith.mulf %181, %183 : vector<16x256xf32>
    %185 = tpu.concatenate %156, %160, %164, %168, %172, %176, %180, %184 in 0 : vector<16x256xf32>, vector<16x256xf32>, vector<16x256xf32>, vector<16x256xf32>, vector<16x256xf32>, vector<16x256xf32>, vector<16x256xf32>, vector<16x256xf32> -> vector<128x256xf32>
    %c4_60 = arith.constant 4 : index
    %c0_61 = arith.constant 0 : index
    %c0_62 = arith.constant 0 : index
    %186 = vector.load %arg2[%c4_60, %c0_61, %c0_62] : memref<7x16x128xf32, #tpu.memory_space<vmem>>, vector<1x16x128xf32>
    %187 = vector.shape_cast %186 : vector<1x16x128xf32> to vector<16x128xf32>
    %cst_63 = arith.constant dense<0.000000e+00> : vector<16x256xf32>
    %188 = tpu.matmul %187, %185, %cst_63 {dimension_numbers = #tpu.dot_dimension_numbers<[1], [0], [0], [1], [0, 0, 1, 1], [], []>, precision = #tpu.contract_precision<fp32>} : vector<16x128xf32>, vector<128x256xf32>, vector<16x256xf32> -> vector<16x256xf32>
    %189 = arith.addf %152, %188 : vector<16x256xf32>
    %190 = vector.extract_strided_slice %1 {offsets = [0, 85], sizes = [16, 256], strides = [1, 1]} : vector<16x384xf32> to vector<16x256xf32>
    %c40 = arith.constant 40 : index
    %c0_64 = arith.constant 0 : index
    %191 = vector.load %arg4[%c40, %c0_64] : memref<49x256xf32, #tpu.memory_space<vmem>>, vector<1x256xf32>
    %192 = vector.broadcast %191 : vector<1x256xf32> to vector<16x256xf32>
    %193 = arith.mulf %190, %192 : vector<16x256xf32>
    %194 = vector.extract_strided_slice %1 {offsets = [0, 86], sizes = [16, 256], strides = [1, 1]} : vector<16x384xf32> to vector<16x256xf32>
    %c41 = arith.constant 41 : index
    %c0_65 = arith.constant 0 : index
    %195 = vector.load %arg4[%c41, %c0_65] : memref<49x256xf32, #tpu.memory_space<vmem>>, vector<1x256xf32>
    %196 = vector.broadcast %195 : vector<1x256xf32> to vector<16x256xf32>
    %197 = arith.mulf %194, %196 : vector<16x256xf32>
    %198 = vector.extract_strided_slice %1 {offsets = [0, 96], sizes = [16, 256], strides = [1, 1]} : vector<16x384xf32> to vector<16x256xf32>
    %c42 = arith.constant 42 : index
    %c0_66 = arith.constant 0 : index
    %199 = vector.load %arg4[%c42, %c0_66] : memref<49x256xf32, #tpu.memory_space<vmem>>, vector<1x256xf32>
    %200 = vector.broadcast %199 : vector<1x256xf32> to vector<16x256xf32>
    %201 = arith.mulf %198, %200 : vector<16x256xf32>
    %202 = vector.extract_strided_slice %1 {offsets = [0, 97], sizes = [16, 256], strides = [1, 1]} : vector<16x384xf32> to vector<16x256xf32>
    %c43 = arith.constant 43 : index
    %c0_67 = arith.constant 0 : index
    %203 = vector.load %arg4[%c43, %c0_67] : memref<49x256xf32, #tpu.memory_space<vmem>>, vector<1x256xf32>
    %204 = vector.broadcast %203 : vector<1x256xf32> to vector<16x256xf32>
    %205 = arith.mulf %202, %204 : vector<16x256xf32>
    %206 = vector.extract_strided_slice %1 {offsets = [0, 98], sizes = [16, 256], strides = [1, 1]} : vector<16x384xf32> to vector<16x256xf32>
    %c44 = arith.constant 44 : index
    %c0_68 = arith.constant 0 : index
    %207 = vector.load %arg4[%c44, %c0_68] : memref<49x256xf32, #tpu.memory_space<vmem>>, vector<1x256xf32>
    %208 = vector.broadcast %207 : vector<1x256xf32> to vector<16x256xf32>
    %209 = arith.mulf %206, %208 : vector<16x256xf32>
    %210 = vector.extract_strided_slice %1 {offsets = [0, 99], sizes = [16, 256], strides = [1, 1]} : vector<16x384xf32> to vector<16x256xf32>
    %c45 = arith.constant 45 : index
    %c0_69 = arith.constant 0 : index
    %211 = vector.load %arg4[%c45, %c0_69] : memref<49x256xf32, #tpu.memory_space<vmem>>, vector<1x256xf32>
    %212 = vector.broadcast %211 : vector<1x256xf32> to vector<16x256xf32>
    %213 = arith.mulf %210, %212 : vector<16x256xf32>
    %214 = vector.extract_strided_slice %1 {offsets = [0, 100], sizes = [16, 256], strides = [1, 1]} : vector<16x384xf32> to vector<16x256xf32>
    %c46 = arith.constant 46 : index
    %c0_70 = arith.constant 0 : index
    %215 = vector.load %arg4[%c46, %c0_70] : memref<49x256xf32, #tpu.memory_space<vmem>>, vector<1x256xf32>
    %216 = vector.broadcast %215 : vector<1x256xf32> to vector<16x256xf32>
    %217 = arith.mulf %214, %216 : vector<16x256xf32>
    %218 = vector.extract_strided_slice %1 {offsets = [0, 101], sizes = [16, 256], strides = [1, 1]} : vector<16x384xf32> to vector<16x256xf32>
    %c47 = arith.constant 47 : index
    %c0_71 = arith.constant 0 : index
    %219 = vector.load %arg4[%c47, %c0_71] : memref<49x256xf32, #tpu.memory_space<vmem>>, vector<1x256xf32>
    %220 = vector.broadcast %219 : vector<1x256xf32> to vector<16x256xf32>
    %221 = arith.mulf %218, %220 : vector<16x256xf32>
    %222 = tpu.concatenate %193, %197, %201, %205, %209, %213, %217, %221 in 0 : vector<16x256xf32>, vector<16x256xf32>, vector<16x256xf32>, vector<16x256xf32>, vector<16x256xf32>, vector<16x256xf32>, vector<16x256xf32>, vector<16x256xf32> -> vector<128x256xf32>
    %c5_72 = arith.constant 5 : index
    %c0_73 = arith.constant 0 : index
    %c0_74 = arith.constant 0 : index
    %223 = vector.load %arg2[%c5_72, %c0_73, %c0_74] : memref<7x16x128xf32, #tpu.memory_space<vmem>>, vector<1x16x128xf32>
    %224 = vector.shape_cast %223 : vector<1x16x128xf32> to vector<16x128xf32>
    %cst_75 = arith.constant dense<0.000000e+00> : vector<16x256xf32>
    %225 = tpu.matmul %224, %222, %cst_75 {dimension_numbers = #tpu.dot_dimension_numbers<[1], [0], [0], [1], [0, 0, 1, 1], [], []>, precision = #tpu.contract_precision<fp32>} : vector<16x128xf32>, vector<128x256xf32>, vector<16x256xf32> -> vector<16x256xf32>
    %226 = arith.addf %189, %225 : vector<16x256xf32>
    %227 = vector.extract_strided_slice %1 {offsets = [0, 102], sizes = [16, 256], strides = [1, 1]} : vector<16x384xf32> to vector<16x256xf32>
    %c48 = arith.constant 48 : index
    %c0_76 = arith.constant 0 : index
    %228 = vector.load %arg4[%c48, %c0_76] : memref<49x256xf32, #tpu.memory_space<vmem>>, vector<1x256xf32>
    %229 = vector.broadcast %228 : vector<1x256xf32> to vector<16x256xf32>
    %230 = arith.mulf %227, %229 : vector<16x256xf32>
    %cst_77 = arith.constant 0.000000e+00 : f32
    %231 = vector.broadcast %cst_77 : f32 to vector<16x256xf32>
    %cst_78 = arith.constant 0.000000e+00 : f32
    %232 = vector.broadcast %cst_78 : f32 to vector<16x256xf32>
    %cst_79 = arith.constant 0.000000e+00 : f32
    %233 = vector.broadcast %cst_79 : f32 to vector<16x256xf32>
    %cst_80 = arith.constant 0.000000e+00 : f32
    %234 = vector.broadcast %cst_80 : f32 to vector<16x256xf32>
    %cst_81 = arith.constant 0.000000e+00 : f32
    %235 = vector.broadcast %cst_81 : f32 to vector<16x256xf32>
    %cst_82 = arith.constant 0.000000e+00 : f32
    %236 = vector.broadcast %cst_82 : f32 to vector<16x256xf32>
    %cst_83 = arith.constant 0.000000e+00 : f32
    %237 = vector.broadcast %cst_83 : f32 to vector<16x256xf32>
    %238 = tpu.concatenate %230, %231, %232, %233, %234, %235, %236, %237 in 0 : vector<16x256xf32>, vector<16x256xf32>, vector<16x256xf32>, vector<16x256xf32>, vector<16x256xf32>, vector<16x256xf32>, vector<16x256xf32>, vector<16x256xf32> -> vector<128x256xf32>
    %c6_84 = arith.constant 6 : index
    %c0_85 = arith.constant 0 : index
    %c0_86 = arith.constant 0 : index
    %239 = vector.load %arg2[%c6_84, %c0_85, %c0_86] : memref<7x16x128xf32, #tpu.memory_space<vmem>>, vector<1x16x128xf32>
    %240 = vector.shape_cast %239 : vector<1x16x128xf32> to vector<16x128xf32>
    %cst_87 = arith.constant dense<0.000000e+00> : vector<16x256xf32>
    %241 = tpu.matmul %240, %238, %cst_87 {dimension_numbers = #tpu.dot_dimension_numbers<[1], [0], [0], [1], [0, 0, 1, 1], [], []>, precision = #tpu.contract_precision<fp32>} : vector<16x128xf32>, vector<128x256xf32>, vector<16x256xf32> -> vector<16x256xf32>
    %242 = arith.addf %226, %241 : vector<16x256xf32>
    %c0_88 = arith.constant 0 : index
    %c0_89 = arith.constant 0 : index
    %c0_90 = arith.constant 0 : index
    %243 = vector.load %arg5[%c0_88, %c0_89, %c0_90] : memref<1x16x256xf32, #tpu.memory_space<vmem>>, vector<1x16x256xf32>
    %244 = vector.shape_cast %243 : vector<1x16x256xf32> to vector<16x256xf32>
    %245 = vector.shape_cast %242 : vector<16x256xf32> to vector<1x16x256xf32>
    tpu.vector_store %arg5[%c0_88, %c0_89, %c0_90], %245 {strides = array<i32>} : memref<1x16x256xf32, #tpu.memory_space<vmem>>, vector<1x16x256xf32>,
    return
  }
  func.func @transform_0(%arg0: i32) -> (i32, i32, i32) {
    %c0_i32 = arith.constant 0 : i32
    %c0_i32_0 = arith.constant 0 : i32
    %c0_i32_1 = arith.constant 0 : i32
    return %arg0, %c0_i32, %c0_i32_0 : i32, i32, i32
  }
  func.func @transform_1(%arg0: i32) -> (i32, i32, i32) {
    %c0_i32 = arith.constant 0 : i32
    %c0_i32_0 = arith.constant 0 : i32
    %c0_i32_1 = arith.constant 0 : i32
    %c0_i32_2 = arith.constant 0 : i32
    return %c0_i32, %c0_i32_0, %c0_i32_1 : i32, i32, i32
  }
  func.func @transform_2(%arg0: i32) -> (i32, i32) {
    %c0_i32 = arith.constant 0 : i32
    %c0_i32_0 = arith.constant 0 : i32
    %c0_i32_1 = arith.constant 0 : i32
    return %c0_i32, %c0_i32_0 : i32, i32
  }
  func.func @transform_3(%arg0: i32) -> (i32, i32) {
    %c0_i32 = arith.constant 0 : i32
    %c0_i32_0 = arith.constant 0 : i32
    %c0_i32_1 = arith.constant 0 : i32
    return %c0_i32, %c0_i32_0 : i32, i32
  }
  func.func @transform_4(%arg0: i32) -> (i32, i32, i32) {
    %c0_i32 = arith.constant 0 : i32
    %c0_i32_0 = arith.constant 0 : i32
    %c0_i32_1 = arith.constant 0 : i32
    return %arg0, %c0_i32, %c0_i32_0 : i32, i32, i32
  }
}

</mosaic_0001>

<llo_original>
// kernel: tpu_custom_call.1
$region0: #{tpu_custom_call.1}
  #allocation0 [shape = 'u32[]', space=smem, size = 0x4, offset = 0x4, fixed_abs, tag = 'smem constant byte address 0x4 - core index']
  #allocation1 [shape = 'u32[72,128]{1,0:T(1,128)}', space=vmem, size = 0x9000, scoped, tag = 'internal scratch']
  %s0 = inlined_call_operand.hbm [shape: f32[2,16,384], index: 0, kind: input, shape index: {}]
  %s1 = inlined_call_operand.hbm [shape: f32[7,16,128], index: 1, kind: input, shape index: {}]
  %s2 = inlined_call_operand.vmem [shape: f32[16,1], index: 2, kind: input, shape index: {}]
  %s3 = inlined_call_operand.hbm [shape: f32[49,256], index: 3, kind: input, shape index: {}]
  %s4 = inlined_call_operand.hbm [shape: f32[2,16,256], index: 4, kind: output, shape index: {}]
  %s5 = sld [smem:[#allocation0]]
  $region61: #{tpu_custom_call.1} parent=0
    _
  %s7 = ssub.s32 1, %s5
  %s8 = scalar_select 0, %s7, %s5
  $region1: #{tpu_custom_call.1} parent=0
    #allocation2 [shape = 'u8[49152]{0}', space=vmem, size = 0xc000, scoped, tag = 'input window, operand 0']
    #allocation3 [shape = 's32[2]{0}', space=sflag, size = 0x8, scoped, tag = 'scoped memory for tpu_custom_call.1']
    #allocation4 [shape = 's32[2]{0}', space=sflag, size = 0x8, scoped, tag = 'scoped memory for tpu_custom_call.1']
    #allocation5 [shape = 'u8[57344]{0}', space=vmem, size = 0xe000, scoped, tag = 'input window, operand 1, single buffered']
    #allocation6 [shape = 's32[1]{0}', space=sflag, size = 0x4, scoped, tag = 'scoped memory for tpu_custom_call.1']
    #allocation7 [shape = 'u8[57344]{0}', space=vmem, size = 0xe000, scoped, tag = 'input window, operand 3, single buffered']
    #allocation8 [shape = 'u8[32768]{0}', space=vmem, size = 0x8000, scoped, tag = 'output window, operand 0']
    %9 = vsyncpa [#allocation3], 0
    %s10 = scalar_lea.sflag [#allocation3], 1
    %11 = vsyncpa %s10, 0
    %12 = vsyncpa [#allocation6], 0
    %13 = vsyncpa [#allocation4], 0
    %s14 = scalar_lea.sflag [#allocation4], 1
    %15 = vsyncpa %s14, 0
    loop: start=0, step=1, limit=4
    $region2: #{tpu_custom_call.1} parent=1 // loop_pre_header
      _
    $region3: #{tpu_custom_call.1} parent=1 // loop_header
      %s17 = sphi 0, %s21
      %p18 = scmp.ge.s32.totalorder %s17, 4
      %s27 = sphi 0, %s29
      %s30 = sphi 0, %s27
      %s31 = sphi 0, %s30
      %s47 = sphi 0, %s31
      %s51 = sphi 0, %s51
      %s53 = sphi 0, %s51
      %s54 = sphi 0, %s53
      %s68 = sphi 0, %s54
      %s72 = sphi 0, %s72
      %s74 = sphi 0, %s72
      %s75 = sphi 0, %s74
      %s89 = sphi 0, %s75
      %s93 = sphi 0, %s93
      %s95 = sphi 0, %s93
      %s96 = sphi 0, %s95
      %s110 = sphi 0, %s96
      %s116 = sphi 0, %s118
      %s119 = sphi 0, %s116
      %s120 = sphi 0, %s119
      %s136 = sphi 0, %s120
    $region4: #{tpu_custom_call.1} parent=1 // loop_header_branch
      %20 = sbr.rel (%p18) target = $region8
    $region5: #{tpu_custom_call.1} parent=1 // loop_body
      %s22 = ssub.s32 %s17, 1
      %s23 = ssub.s32 %s17, 2
      %s24 = sadd.s32 %s17, 1
      %s25 = ssub.s32 %s17, %s24
      %p26 = scmp.eq.s32.totalorder %s25, 0
      %s28 = sadd.s32 %s27, 1
      %s29 = scalar_select %p26, %s27, %s28
      %p32 = pneg %p26
      %p33 = scmp.eq.s32.totalorder %s17, 1
      %p34 = por %p32, %p33
      %p35 = scmp.ne.s32.totalorder %s27, %s30
      %p36 = scmp.eq.s32.totalorder %s17, 0
      %p37 = por %p35, %p36
      %p38 = scmp.ne.s32.totalorder %s27, %s30
      %p39 = scmp.eq.s32.totalorder %s22, 1
      %p40 = por %p38, %p39
      %p41 = scmp.ne.s32.totalorder %s30, %s31
      %p42 = scmp.eq.s32.totalorder %s22, 0
      %p43 = por %p41, %p42
      %p44 = scmp.ne.s32.totalorder %s30, %s31
      %p45 = scmp.eq.s32.totalorder %s23, 1
      %p46 = por %p44, %p45
      %p48 = scmp.ne.s32.totalorder %s31, %s47
      %p49 = scmp.eq.s32.totalorder %s23, 0
      %p50 = por %p48, %p49
      %s52 = sadd.s32 %s51, 1
      %p55 = scmp.eq.s32.totalorder %s17, 1
      %p56 = scmp.ne.s32.totalorder %s51, %s53
      %p57 = scmp.eq.s32.totalorder %s17, 0
      %p58 = por %p56, %p57
      %p59 = scmp.ne.s32.totalorder %s51, %s53
      %p60 = scmp.eq.s32.totalorder %s22, 1
      %p61 = por %p59, %p60
      %p62 = scmp.ne.s32.totalorder %s53, %s54
      %p63 = scmp.eq.s32.totalorder %s22, 0
      %p64 = por %p62, %p63
      %p65 = scmp.ne.s32.totalorder %s53, %s54
      %p66 = scmp.eq.s32.totalorder %s23, 1
      %p67 = por %p65, %p66
      %p69 = scmp.ne.s32.totalorder %s54, %s68
      %p70 = scmp.eq.s32.totalorder %s23, 0
      %p71 = por %p69, %p70
      %s73 = sadd.s32 %s72, 1
      %p76 = scmp.eq.s32.totalorder %s17, 1
      %p77 = scmp.ne.s32.totalorder %s72, %s74
      %p78 = scmp.eq.s32.totalorder %s17, 0
      %p79 = por %p77, %p78
      %p80 = scmp.ne.s32.totalorder %s72, %s74
      %p81 = scmp.eq.s32.totalorder %s22, 1
      %p82 = por %p80, %p81
      %p83 = scmp.ne.s32.totalorder %s74, %s75
      %p84 = scmp.eq.s32.totalorder %s22, 0
      %p85 = por %p83, %p84
      %p86 = scmp.ne.s32.totalorder %s74, %s75
      %p87 = scmp.eq.s32.totalorder %s23, 1
      %p88 = por %p86, %p87
      %p90 = scmp.ne.s32.totalorder %s75, %s89
      %p91 = scmp.eq.s32.totalorder %s23, 0
      %p92 = por %p90, %p91
      %s94 = sadd.s32 %s93, 1
      %p97 = scmp.eq.s32.totalorder %s17, 1
      %p98 = scmp.ne.s32.totalorder %s93, %s95
      %p99 = scmp.eq.s32.totalorder %s17, 0
      %p100 = por %p98, %p99
      %p101 = scmp.ne.s32.totalorder %s93, %s95
      %p102 = scmp.eq.s32.totalorder %s22, 1
      %p103 = por %p101, %p102
      %p104 = scmp.ne.s32.totalorder %s95, %s96
      %p105 = scmp.eq.s32.totalorder %s22, 0
      %p106 = por %p104, %p105
      %p107 = scmp.ne.s32.totalorder %s95, %s96
      %p108 = scmp.eq.s32.totalorder %s23, 1
      %p109 = por %p107, %p108
      %p111 = scmp.ne.s32.totalorder %s96, %s110
      %p112 = scmp.eq.s32.totalorder %s23, 0
      %p113 = por %p111, %p112
      %s114 = ssub.s32 %s17, %s24
      %p115 = scmp.eq.s32.totalorder %s114, 0
      %s117 = sadd.s32 %s116, 1
      %s118 = scalar_select %p115, %s116, %s117
      %p121 = pneg %p115
      %p122 = scmp.eq.s32.totalorder %s17, 1
      %p123 = por %p121, %p122
      %p124 = scmp.ne.s32.totalorder %s116, %s119
      %p125 = scmp.eq.s32.totalorder %s17, 0
      %p126 = por %p124, %p125
      %p127 = scmp.ne.s32.totalorder %s116, %s119
      %p128 = scmp.eq.s32.totalorder %s22, 1
      %p129 = por %p127, %p128
      %p130 = scmp.ne.s32.totalorder %s119, %s120
      %p131 = scmp.eq.s32.totalorder %s22, 0
      %p132 = por %p130, %p131
      %p133 = scmp.ne.s32.totalorder %s119, %s120
      %p134 = scmp.eq.s32.totalorder %s23, 1
      %p135 = por %p133, %p134
      %p137 = scmp.ne.s32.totalorder %s120, %s136
      %p138 = scmp.eq.s32.totalorder %s23, 0
      %p139 = por %p137, %p138
      %p140 = scmp.le.s32.totalorder 1, %s17
      %p141 = scmp.lt.s32.totalorder %s17, 3
      %p142 = pnand %p140, %p141
      %p143 = pneg %p142
      // Predicated region
      $region9: #{tpu_custom_call.1} parent=5 // pred_check
        _
      $region10: #{tpu_custom_call.1} parent=5 // pred_check_branch
        %145 = sbr.rel (%p142) target = $region12
      $region11: #{tpu_custom_call.1} parent=5 // pred_region
        %s146 = ssub.s32 %s17, 1
        // Predicated region
        $region13: #{tpu_custom_call.1} parent=11 // pred_check
          %p147 = pneg %p64
        $region14: #{tpu_custom_call.1} parent=11 // pred_check_branch
          %149 = sbr.rel (%p147) target = $region16
        $region15: #{tpu_custom_call.1} parent=11 // pred_region
          %151 = vsyncadd [#allocation6], 0
          %s152 = sshll.u32 %s1, 4
          %s153 = int_to_ptr.hbm [resolvable:$true] %s152
          %s154 = sshll.u32 [#allocation5], 4
          %s155 = int_to_ptr.vmem [resolvable:$true] %s154
          %160 = dma.hbm_to_vmem [thread:$0]  %s153, 1792, %s155, [#allocation6], 128, 128, 8
        $region16: #{tpu_custom_call.1} parent=11 // pred_fallthru
          _
        // Predicated region
        $region17: #{tpu_custom_call.1} parent=11 // pred_check
          %p161 = pneg %p85
        $region18: #{tpu_custom_call.1} parent=11 // pred_check_branch
          %163 = sbr.rel (%p161) target = $region20
        $region19: #{tpu_custom_call.1} parent=11 // pred_region
          _
        $region20: #{tpu_custom_call.1} parent=11 // pred_fallthru
          _
        // Predicated region
        $region21: #{tpu_custom_call.1} parent=11 // pred_check
          %p164 = pneg %p106
        $region22: #{tpu_custom_call.1} parent=11 // pred_check_branch
          %166 = sbr.rel (%p164) target = $region24
        $region23: #{tpu_custom_call.1} parent=11 // pred_region
          %168 = vsyncadd [#allocation6], 0
          %s169 = sshll.u32 %s3, 4
          %s170 = int_to_ptr.hbm [resolvable:$true] %s169
          %s171 = sshll.u32 [#allocation7], 4
          %s172 = int_to_ptr.vmem [resolvable:$true] %s171
          %177 = dma.hbm_to_vmem [thread:$0]  %s170, 1792, %s172, [#allocation6], 256, 256, 16
        $region24: #{tpu_custom_call.1} parent=11 // pred_fallthru
          _
      $region12: #{tpu_custom_call.1} parent=5 // pred_fallthru
        _
      %p178 = scmp.lt.s32.totalorder %s17, 2
      // Predicated region
      $region25: #{tpu_custom_call.1} parent=5 // pred_check
        %p179 = pneg %p178
      $region26: #{tpu_custom_call.1} parent=5 // pred_check_branch
        %181 = sbr.rel (%p179) target = $region28
      $region27: #{tpu_custom_call.1} parent=5 // pred_region
        // Predicated region
        $region29: #{tpu_custom_call.1} parent=27 // pred_check
          %p182 = pneg %p37
        $region30: #{tpu_custom_call.1} parent=27 // pred_check_branch
          %184 = sbr.rel (%p182) target = $region32
        $region31: #{tpu_custom_call.1} parent=27 // pred_region
          %s185 = sand.u32 %s27, 1
          %s186 = scalar_lea.sflag [#allocation3], %s185
          %s187 = sand.u32 %s27, 1
          %s188 = smul.addr %s187, 48
          %s189 = scalar_lea.vmem [#allocation2], %s188
          %191 = vsyncadd %s186, 0
          %s192 = smul.addr %s17, 6
          %s193 = smul.addr %s192, 8
          %s194 = scalar_lea.hbm %s0, %s193
          %s195 = sshll.u32 %s194, 4
          %s196 = int_to_ptr.hbm [resolvable:$true] %s195
          %s197 = sshll.u32 %s189, 4
          %s198 = int_to_ptr.vmem [resolvable:$true] %s197
          %203 = dma.hbm_to_vmem [thread:$0]  %s196, 768, %s198, %s186, 384, 384, 24
        $region32: #{tpu_custom_call.1} parent=27 // pred_fallthru
          _
      $region28: #{tpu_custom_call.1} parent=5 // pred_fallthru
        _
      %p204 = scmp.le.s32.totalorder 1, %s17
      %p205 = scmp.lt.s32.totalorder %s17, 3
      %p206 = pnand %p204, %p205
      %p207 = pneg %p206
      // Predicated region
      $region33: #{tpu_custom_call.1} parent=5 // pred_check
        _
      $region34: #{tpu_custom_call.1} parent=5 // pred_check_branch
        %209 = sbr.rel (%p206) target = $region36
      $region35: #{tpu_custom_call.1} parent=5 // pred_region
        %s210 = ssub.s32 %s17, 1
        %s211 = sand.u32 %s30, 1
        %s212 = scalar_lea.sflag [#allocation3], %s211
        %s213 = sand.u32 %s30, 1
        %s214 = smul.addr %s213, 48
        %s215 = scalar_lea.vmem [#allocation2], %s214
        // Predicated region
        $region37: #{tpu_custom_call.1} parent=35 // pred_check
          %p216 = pneg %p43
        $region38: #{tpu_custom_call.1} parent=35 // pred_check_branch
          %218 = sbr.rel (%p216) target = $region40
        $region39: #{tpu_custom_call.1} parent=35 // pred_region
          %220 = dma.done %s212, 768
        $region40: #{tpu_custom_call.1} parent=35 // pred_fallthru
          _
        // Predicated region
        $region41: #{tpu_custom_call.1} parent=35 // pred_check
          %p221 = pneg %p64
        $region42: #{tpu_custom_call.1} parent=35 // pred_check_branch
          %223 = sbr.rel (%p221) target = $region44
        $region43: #{tpu_custom_call.1} parent=35 // pred_region
          %225 = dma.done [#allocation6], 1792
        $region44: #{tpu_custom_call.1} parent=35 // pred_fallthru
          _
        // Predicated region
        $region45: #{tpu_custom_call.1} parent=35 // pred_check
          %p226 = pneg %p106
        $region46: #{tpu_custom_call.1} parent=35 // pred_check_branch
          %228 = sbr.rel (%p226) target = $region48
        $region47: #{tpu_custom_call.1} parent=35 // pred_region
          %230 = dma.done [#allocation6], 1792
        $region48: #{tpu_custom_call.1} parent=35 // pred_fallthru
          _
        %s231 = sand.u32 %s30, 1
        %s232 = scalar_lea.sflag [#allocation3], %s231
        %s233 = sand.u32 %s30, 1
        %s234 = smul.addr %s233, 48
        %s235 = scalar_lea.vmem [#allocation2], %s234
        %p236 = pneg %p43
        %p237 = pneg %p40
        %p238 = pneg %p64
        %p239 = pneg %p61
        %p240 = pneg %p85
        %p241 = pneg %p82
        %p242 = pneg %p106
        %p243 = pneg %p103
        %p244 = pneg %p132
        %p245 = pneg %p129
        %s246 = sand.u32 %s119, 1
        %s247 = scalar_lea.sflag [#allocation4], %s246
        %s248 = sand.u32 %s119, 1
        %s249 = smul.addr %s248, 32
        %s250 = scalar_lea.vmem [#allocation8], %s249
        %v251 = vld [vmem:[%s215] sm:$0xff]
        %v252 = vld [vmem:[%s215 + $0x8] sm:$0xff]
        %v253 = vld [vmem:[%s215 + $0x10] sm:$0xff]
        %v254 = vld [vmem:[%s215 + $0x18] sm:$0xff]
        %v255 = vld [vmem:[%s215 + $0x20] sm:$0xff]
        %v256 = vld [vmem:[%s215 + $0x28] sm:$0xff]
        %v257 = vld [vmem:[%s2] sm:$0xff]
        %v258 = vld [vmem:[%s2 + $0x8] sm:$0xff]
        %260 = vset.pattern.permute.xlu0 0
        %261 = vperm.xlu0 %260, %v257
        %v262 = vpop.permute.xlu0 %261
        %265 = vset.pattern.permute.xlu0 0
        %266 = vperm.xlu0 %265, %v258
        %v267 = vpop.permute.xlu0 %266
        %v269 = vld [vmem:[#allocation7] ss:$8 sm:$0x3]
        %v271 = vperm.slane %v269, 0
        %v272 = vperm.slane %v269, 1
        %v275 = vmul.f32 %v251, %v271
        %v276 = vmul.f32 %v252, %v272
        %v277 = vmul.f32 %v254, %v271
        %v278 = vmul.f32 %v255, %v272
        %s279 = scalar_lea.vmem [#allocation7], 1
        %v280 = vld [vmem:[%s279] ss:$8 sm:$0x3]
        %v282 = vperm.slane %v280, 0
        %v283 = vperm.slane %v280, 1
        %284 = vrot.lane.b32.xlu0 %v282, 1
        %v285 = vpop.permute.xlu0 %284
        %286 = vrot.lane.b32.xlu0 %v283, 1
        %v287 = vpop.permute.xlu0 %286
        %vm288 = vcmask 7168
        %v289 = vsel %vm288, %v285, %v287
        %v293 = vmul.f32 %v251, %v285
        %v294 = vmul.f32 %v252, %v289
        %v295 = vmul.f32 %v253, %v287
        %v296 = vmul.f32 %v254, %v285
        %v297 = vmul.f32 %v255, %v289
        %v298 = vmul.f32 %v256, %v287
        %s299 = scalar_lea.vmem [#allocation7], 2
        %v300 = vld [vmem:[%s299] ss:$8 sm:$0x3]
        %v302 = vperm.slane %v300, 0
        %v303 = vperm.slane %v300, 1
        %304 = vrot.lane.b32.xlu0 %v302, 2
        %v305 = vpop.permute.xlu0 %304
        %306 = vrot.lane.b32.xlu0 %v303, 2
        %v307 = vpop.permute.xlu0 %306
        %vm308 = vcmask 15360
        %v309 = vsel %vm308, %v305, %v307
        %v313 = vmul.f32 %v251, %v305
        %v314 = vmul.f32 %v252, %v309
        %v315 = vmul.f32 %v253, %v307
        %v316 = vmul.f32 %v254, %v305
        %v317 = vmul.f32 %v255, %v309
        %v318 = vmul.f32 %v256, %v307
        %s319 = scalar_lea.vmem [#allocation7], 3
        %v320 = vld [vmem:[%s319] ss:$8 sm:$0x3]
        %v322 = vperm.slane %v320, 0
        %v323 = vperm.slane %v320, 1
        %324 = vrot.lane.b32.xlu0 %v322, 3
        %v325 = vpop.permute.xlu0 %324
        %326 = vrot.lane.b32.xlu0 %v323, 3
        %v327 = vpop.permute.xlu0 %326
        %vm328 = vcmask 23552
        %v329 = vsel %vm328, %v325, %v327
        %v333 = vmul.f32 %v251, %v325
        %v334 = vmul.f32 %v252, %v329
        %v335 = vmul.f32 %v253, %v327
        %v336 = vmul.f32 %v254, %v325
        %v337 = vmul.f32 %v255, %v329
        %v338 = vmul.f32 %v256, %v327
        %s339 = scalar_lea.vmem [#allocation7], 4
        %v340 = vld [vmem:[%s339] ss:$8 sm:$0x3]
        %v342 = vperm.slane %v340, 0
        %v343 = vperm.slane %v340, 1
        %344 = vrot.lane.b32.xlu0 %v342, 4
        %v345 = vpop.permute.xlu0 %344
        %346 = vrot.lane.b32.xlu0 %v343, 4
        %v347 = vpop.permute.xlu0 %346
        %vm348 = vcmask 31744
        %v349 = vsel %vm348, %v345, %v347
        %v353 = vmul.f32 %v251, %v345
        %v354 = vmul.f32 %v252, %v349
        %v355 = vmul.f32 %v253, %v347
        %v356 = vmul.f32 %v254, %v345
        %v357 = vmul.f32 %v255, %v349
        %v358 = vmul.f32 %v256, %v347
        %s359 = scalar_lea.vmem [#allocation7], 5
        %v360 = vld [vmem:[%s359] ss:$8 sm:$0x3]
        %v362 = vperm.slane %v360, 0
        %v363 = vperm.slane %v360, 1
        %364 = vrot.lane.b32.xlu0 %v362, 5
        %v365 = vpop.permute.xlu0 %364
        %366 = vrot.lane.b32.xlu0 %v363, 5
        %v367 = vpop.permute.xlu0 %366
        %vm368 = vcmask 39936
        %v369 = vsel %vm368, %v365, %v367
        %v373 = vmul.f32 %v251, %v365
        %v374 = vmul.f32 %v252, %v369
        %v375 = vmul.f32 %v253, %v367
        %v376 = vmul.f32 %v254, %v365
        %v377 = vmul.f32 %v255, %v369
        %v378 = vmul.f32 %v256, %v367
        %s379 = scalar_lea.vmem [#allocation7], 6
        %v380 = vld [vmem:[%s379] ss:$8 sm:$0x3]
        %v382 = vperm.slane %v380, 0
        %v383 = vperm.slane %v380, 1
        %384 = vrot.lane.b32.xlu0 %v382, 6
        %v385 = vpop.permute.xlu0 %384
        %386 = vrot.lane.b32.xlu0 %v383, 6
        %v387 = vpop.permute.xlu0 %386
        %vm388 = vcmask 48128
        %v389 = vsel %vm388, %v385, %v387
        %v393 = vmul.f32 %v251, %v385
        %v394 = vmul.f32 %v252, %v389
        %v395 = vmul.f32 %v253, %v387
        %v396 = vmul.f32 %v254, %v385
        %v397 = vmul.f32 %v255, %v389
        %v398 = vmul.f32 %v256, %v387
        %s399 = scalar_lea.vmem [#allocation7], 7
        %v400 = vld [vmem:[%s399] ss:$8 sm:$0x3]
        %v402 = vperm.slane %v400, 0
        %v403 = vperm.slane %v400, 1
        %404 = vrot.lane.b32.xlu0 %v402, 16
        %v405 = vpop.permute.xlu0 %404
        %406 = vrot.lane.b32.xlu0 %v403, 16
        %v407 = vpop.permute.xlu0 %406
        %vm408 = vcmask 130048
        %v409 = vsel %vm408, %v405, %v407
        %v413 = vmul.f32 %v251, %v405
        %v414 = vmul.f32 %v252, %v409
        %v415 = vmul.f32 %v253, %v407
        %v416 = vmul.f32 %v254, %v405
        %v417 = vmul.f32 %v255, %v409
        %v418 = vmul.f32 %v256, %v407
        %425 = vrot.lane.b32.xlu0 %v293, 127
        %v426 = vpop.permute.xlu0 %425
        %427 = vrot.lane.b32.xlu0 %v294, 127
        %v428 = vpop.permute.xlu0 %427
        %429 = vrot.lane.b32.xlu0 %v295, 127
        %v430 = vpop.permute.xlu0 %429
        %431 = vrot.lane.b32.xlu0 %v296, 127
        %v432 = vpop.permute.xlu0 %431
        %433 = vrot.lane.b32.xlu0 %v297, 127
        %v434 = vpop.permute.xlu0 %433
        %435 = vrot.lane.b32.xlu0 %v298, 127
        %v436 = vpop.permute.xlu0 %435
        %vm437 = vcmask 1039360
        %v438 = vsel %vm437, %v426, %v428
        %v439 = vsel %vm437, %v428, %v430
        %v440 = vsel %vm437, %v432, %v434
        %v441 = vsel %vm437, %v434, %v436
        %452 = vrot.lane.b32.xlu0 %v313, 126
        %v453 = vpop.permute.xlu0 %452
        %454 = vrot.lane.b32.xlu0 %v314, 126
        %v455 = vpop.permute.xlu0 %454
        %456 = vrot.lane.b32.xlu0 %v315, 126
        %v457 = vpop.permute.xlu0 %456
        %458 = vrot.lane.b32.xlu0 %v316, 126
        %v459 = vpop.permute.xlu0 %458
        %460 = vrot.lane.b32.xlu0 %v317, 126
        %v461 = vpop.permute.xlu0 %460
        %462 = vrot.lane.b32.xlu0 %v318, 126
        %v463 = vpop.permute.xlu0 %462
        %vm464 = vcmask 1031168
        %v465 = vsel %vm464, %v453, %v455
        %v466 = vsel %vm464, %v455, %v457
        %v467 = vsel %vm464, %v459, %v461
        %v468 = vsel %vm464, %v461, %v463
        %479 = vrot.lane.b32.xlu0 %v333, 125
        %v480 = vpop.permute.xlu0 %479
        %481 = vrot.lane.b32.xlu0 %v334, 125
        %v482 = vpop.permute.xlu0 %481
        %483 = vrot.lane.b32.xlu0 %v335, 125
        %v484 = vpop.permute.xlu0 %483
        %485 = vrot.lane.b32.xlu0 %v336, 125
        %v486 = vpop.permute.xlu0 %485
        %487 = vrot.lane.b32.xlu0 %v337, 125
        %v488 = vpop.permute.xlu0 %487
        %489 = vrot.lane.b32.xlu0 %v338, 125
        %v490 = vpop.permute.xlu0 %489
        %vm491 = vcmask 1022976
        %v492 = vsel %vm491, %v480, %v482
        %v493 = vsel %vm491, %v482, %v484
        %v494 = vsel %vm491, %v486, %v488
        %v495 = vsel %vm491, %v488, %v490
        %506 = vrot.lane.b32.xlu0 %v353, 124
        %v507 = vpop.permute.xlu0 %506
        %508 = vrot.lane.b32.xlu0 %v354, 124
        %v509 = vpop.permute.xlu0 %508
        %510 = vrot.lane.b32.xlu0 %v355, 124
        %v511 = vpop.permute.xlu0 %510
        %512 = vrot.lane.b32.xlu0 %v356, 124
        %v513 = vpop.permute.xlu0 %512
        %514 = vrot.lane.b32.xlu0 %v357, 124
        %v515 = vpop.permute.xlu0 %514
        %516 = vrot.lane.b32.xlu0 %v358, 124
        %v517 = vpop.permute.xlu0 %516
        %vm518 = vcmask 1014784
        %v519 = vsel %vm518, %v507, %v509
        %v520 = vsel %vm518, %v509, %v511
        %v521 = vsel %vm518, %v513, %v515
        %v522 = vsel %vm518, %v515, %v517
        %533 = vrot.lane.b32.xlu0 %v373, 123
        %v534 = vpop.permute.xlu0 %533
        %535 = vrot.lane.b32.xlu0 %v374, 123
        %v536 = vpop.permute.xlu0 %535
        %537 = vrot.lane.b32.xlu0 %v375, 123
        %v538 = vpop.permute.xlu0 %537
        %539 = vrot.lane.b32.xlu0 %v376, 123
        %v540 = vpop.permute.xlu0 %539
        %541 = vrot.lane.b32.xlu0 %v377, 123
        %v542 = vpop.permute.xlu0 %541
        %543 = vrot.lane.b32.xlu0 %v378, 123
        %v544 = vpop.permute.xlu0 %543
        %vm545 = vcmask 1006592
        %v546 = vsel %vm545, %v534, %v536
        %v547 = vsel %vm545, %v536, %v538
        %v548 = vsel %vm545, %v540, %v542
        %v549 = vsel %vm545, %v542, %v544
        %560 = vrot.lane.b32.xlu0 %v393, 122
        %v561 = vpop.permute.xlu0 %560
        %562 = vrot.lane.b32.xlu0 %v394, 122
        %v563 = vpop.permute.xlu0 %562
        %564 = vrot.lane.b32.xlu0 %v395, 122
        %v565 = vpop.permute.xlu0 %564
        %566 = vrot.lane.b32.xlu0 %v396, 122
        %v567 = vpop.permute.xlu0 %566
        %568 = vrot.lane.b32.xlu0 %v397, 122
        %v569 = vpop.permute.xlu0 %568
        %570 = vrot.lane.b32.xlu0 %v398, 122
        %v571 = vpop.permute.xlu0 %570
        %vm572 = vcmask 998400
        %v573 = vsel %vm572, %v561, %v563
        %v574 = vsel %vm572, %v563, %v565
        %v575 = vsel %vm572, %v567, %v569
        %v576 = vsel %vm572, %v569, %v571
        %587 = vrot.lane.b32.xlu0 %v413, 112
        %v588 = vpop.permute.xlu0 %587
        %589 = vrot.lane.b32.xlu0 %v414, 112
        %v590 = vpop.permute.xlu0 %589
        %591 = vrot.lane.b32.xlu0 %v415, 112
        %v592 = vpop.permute.xlu0 %591
        %593 = vrot.lane.b32.xlu0 %v416, 112
        %v594 = vpop.permute.xlu0 %593
        %595 = vrot.lane.b32.xlu0 %v417, 112
        %v596 = vpop.permute.xlu0 %595
        %597 = vrot.lane.b32.xlu0 %v418, 112
        %v598 = vpop.permute.xlu0 %597
        %vm599 = vcmask 916480
        %v600 = vsel %vm599, %v588, %v590
        %v601 = vsel %vm599, %v590, %v592
        %v602 = vsel %vm599, %v594, %v596
        %v603 = vsel %vm599, %v596, %v598
        %v608 = vld [vmem:[#allocation5] sm:$0xff]
        %v609 = vld [vmem:[#allocation5 + $0x8] sm:$0xff]
        %v610 = vand.u32 %v602, 4294901760
        %611 = vmatpush.msra.mxu0 %v610
        %v612 = vand.u32 %v600, 4294901760
        %613 = vmatpush.msra.mxu0 %v612
        %v614 = vand.u32 %v575, 4294901760
        %615 = vmatpush.msra.mxu0 %v614
        %v616 = vand.u32 %v573, 4294901760
        %617 = vmatpush.msra.mxu0 %v616
        %v618 = vand.u32 %v548, 4294901760
        %619 = vmatpush.msra.mxu0 %v618
        %v620 = vand.u32 %v546, 4294901760
        %621 = vmatpush.msra.mxu0 %v620
        %v622 = vand.u32 %v521, 4294901760
        %623 = vmatpush.msra.mxu0 %v622
        %v624 = vand.u32 %v519, 4294901760
        %625 = vmatpush.msra.mxu0 %v624
        %v626 = vand.u32 %v494, 4294901760
        %627 = vmatpush.msra.mxu0 %v626
        %v628 = vand.u32 %v492, 4294901760
        %629 = vmatpush.msra.mxu0 %v628
        %v630 = vand.u32 %v467, 4294901760
        %631 = vmatpush.msra.mxu0 %v630
        %v632 = vand.u32 %v465, 4294901760
        %633 = vmatpush.msra.mxu0 %v632
        %v634 = vand.u32 %v440, 4294901760
        %635 = vmatpush.msra.mxu0 %v634
        %v636 = vand.u32 %v438, 4294901760
        %637 = vmatpush.msra.mxu0 %v636
        %v638 = vand.u32 %v277, 4294901760
        %639 = vmatpush.msra.mxu0 %v638
        %v640 = vand.u32 %v275, 4294901760
        %641 = vmatpush.msra.mxu0 %v640
        %v642 = vand.u32 %v608, 4294901760
        %v643 = vsub.f32 %v608, %v642
        %v644 = vand.u32 %v643, 4294901760
        %v645 = vsub.f32 %v643, %v644
        %v646 = vand.u32 %v645, 4294901760
        %647 = vmatmul.f32.gmra.mxu0 %v646
        %v648 = vpop.f32.mrf.mxu0
        %v649 = vadd.f32 0.0, %v648
        %v650 = vand.u32 %v609, 4294901760
        %v651 = vsub.f32 %v609, %v650
        %v652 = vand.u32 %v651, 4294901760
        %v653 = vsub.f32 %v651, %v652
        %v654 = vand.u32 %v653, 4294901760
        %655 = vmatmul.f32.gmra.mxu0 %v654
        %v656 = vpop.f32.mrf.mxu0
        %v657 = vadd.f32 0.0, %v656
        %658 = vdwg.mxu0
        %v659 = vand.u32 %v602, 4294901760
        %v660 = vsub.f32 %v602, %v659
        %v661 = vand.u32 %v660, 4294901760
        %v662 = vsub.f32 %v660, %v661
        %v663 = vand.u32 %v662, 4294901760
        %664 = vmatpush.msra.mxu0 %v663
        %v665 = vand.u32 %v600, 4294901760
        %v666 = vsub.f32 %v600, %v665
        %v667 = vand.u32 %v666, 4294901760
        %v668 = vsub.f32 %v666, %v667
        %v669 = vand.u32 %v668, 4294901760
        %670 = vmatpush.msra.mxu0 %v669
        %v671 = vand.u32 %v575, 4294901760
        %v672 = vsub.f32 %v575, %v671
        %v673 = vand.u32 %v672, 4294901760
        %v674 = vsub.f32 %v672, %v673
        %v675 = vand.u32 %v674, 4294901760
        %676 = vmatpush.msra.mxu0 %v675
        %v677 = vand.u32 %v573, 4294901760
        %v678 = vsub.f32 %v573, %v677
        %v679 = vand.u32 %v678, 4294901760
        %v680 = vsub.f32 %v678, %v679
        %v681 = vand.u32 %v680, 4294901760
        %682 = vmatpush.msra.mxu0 %v681
        %v683 = vand.u32 %v548, 4294901760
        %v684 = vsub.f32 %v548, %v683
        %v685 = vand.u32 %v684, 4294901760
        %v686 = vsub.f32 %v684, %v685
        %v687 = vand.u32 %v686, 4294901760
        %688 = vmatpush.msra.mxu0 %v687
        %v689 = vand.u32 %v546, 4294901760
        %v690 = vsub.f32 %v546, %v689
        %v691 = vand.u32 %v690, 4294901760
        %v692 = vsub.f32 %v690, %v691
        %v693 = vand.u32 %v692, 4294901760
        %694 = vmatpush.msra.mxu0 %v693
        %v695 = vand.u32 %v521, 4294901760
        %v696 = vsub.f32 %v521, %v695
        %v697 = vand.u32 %v696, 4294901760
        %v698 = vsub.f32 %v696, %v697
        %v699 = vand.u32 %v698, 4294901760
        %700 = vmatpush.msra.mxu0 %v699
        %v701 = vand.u32 %v519, 4294901760
        %v702 = vsub.f32 %v519, %v701
        %v703 = vand.u32 %v702, 4294901760
        %v704 = vsub.f32 %v702, %v703
        %v705 = vand.u32 %v704, 4294901760
        %706 = vmatpush.msra.mxu0 %v705
        %v707 = vand.u32 %v494, 4294901760
        %v708 = vsub.f32 %v494, %v707
        %v709 = vand.u32 %v708, 4294901760
        %v710 = vsub.f32 %v708, %v709
        %v711 = vand.u32 %v710, 4294901760
        %712 = vmatpush.msra.mxu0 %v711
        %v713 = vand.u32 %v492, 4294901760
        %v714 = vsub.f32 %v492, %v713
        %v715 = vand.u32 %v714, 4294901760
        %v716 = vsub.f32 %v714, %v715
        %v717 = vand.u32 %v716, 4294901760
        %718 = vmatpush.msra.mxu0 %v717
        %v719 = vand.u32 %v467, 4294901760
        %v720 = vsub.f32 %v467, %v719
        %v721 = vand.u32 %v720, 4294901760
        %v722 = vsub.f32 %v720, %v721
        %v723 = vand.u32 %v722, 4294901760
        %724 = vmatpush.msra.mxu0 %v723
        %v725 = vand.u32 %v465, 4294901760
        %v726 = vsub.f32 %v465, %v725
        %v727 = vand.u32 %v726, 4294901760
        %v728 = vsub.f32 %v726, %v727
        %v729 = vand.u32 %v728, 4294901760
        %730 = vmatpush.msra.mxu0 %v729
        %v731 = vand.u32 %v440, 4294901760
        %v732 = vsub.f32 %v440, %v731
        %v733 = vand.u32 %v732, 4294901760
        %v734 = vsub.f32 %v732, %v733
        %v735 = vand.u32 %v734, 4294901760
        %736 = vmatpush.msra.mxu0 %v735
        %v737 = vand.u32 %v438, 4294901760
        %v738 = vsub.f32 %v438, %v737
        %v739 = vand.u32 %v738, 4294901760
        %v740 = vsub.f32 %v738, %v739
        %v741 = vand.u32 %v740, 4294901760
        %742 = vmatpush.msra.mxu0 %v741
        %v743 = vand.u32 %v277, 4294901760
        %v744 = vsub.f32 %v277, %v743
        %v745 = vand.u32 %v744, 4294901760
        %v746 = vsub.f32 %v744, %v745
        %v747 = vand.u32 %v746, 4294901760
        %748 = vmatpush.msra.mxu0 %v747
        %v749 = vand.u32 %v275, 4294901760
        %v750 = vsub.f32 %v275, %v749
        %v751 = vand.u32 %v750, 4294901760
        %v752 = vsub.f32 %v750, %v751
        %v753 = vand.u32 %v752, 4294901760
        %754 = vmatpush.msra.mxu0 %v753
        %v755 = vand.u32 %v608, 4294901760
        %756 = vmatmul.f32.gmra.mxu0 %v755
        %v757 = vpop.f32.mrf.mxu0
        %v758 = vadd.f32 %v649, %v757
        %v759 = vand.u32 %v609, 4294901760
        %760 = vmatmul.f32.gmra.mxu0 %v759
        %v761 = vpop.f32.mrf.mxu0
        %v762 = vadd.f32 %v657, %v761
        %763 = vdwg.mxu0
        %v764 = vand.u32 %v602, 4294901760
        %v765 = vsub.f32 %v602, %v764
        %766 = vmatpush.msra.mxu0 %v765
        %v767 = vand.u32 %v600, 4294901760
        %v768 = vsub.f32 %v600, %v767
        %769 = vmatpush.msra.mxu0 %v768
        %v770 = vand.u32 %v575, 4294901760
        %v771 = vsub.f32 %v575, %v770
        %772 = vmatpush.msra.mxu0 %v771
        %v773 = vand.u32 %v573, 4294901760
        %v774 = vsub.f32 %v573, %v773
        %775 = vmatpush.msra.mxu0 %v774
        %v776 = vand.u32 %v548, 4294901760
        %v777 = vsub.f32 %v548, %v776
        %778 = vmatpush.msra.mxu0 %v777
        %v779 = vand.u32 %v546, 4294901760
        %v780 = vsub.f32 %v546, %v779
        %781 = vmatpush.msra.mxu0 %v780
        %v782 = vand.u32 %v521, 4294901760
        %v783 = vsub.f32 %v521, %v782
        %784 = vmatpush.msra.mxu0 %v783
        %v785 = vand.u32 %v519, 4294901760
        %v786 = vsub.f32 %v519, %v785
        %787 = vmatpush.msra.mxu0 %v786
        %v788 = vand.u32 %v494, 4294901760
        %v789 = vsub.f32 %v494, %v788
        %790 = vmatpush.msra.mxu0 %v789
        %v791 = vand.u32 %v492, 4294901760
        %v792 = vsub.f32 %v492, %v791
        %793 = vmatpush.msra.mxu0 %v792
        %v794 = vand.u32 %v467, 4294901760
        %v795 = vsub.f32 %v467, %v794
        %796 = vmatpush.msra.mxu0 %v795
        %v797 = vand.u32 %v465, 4294901760
        %v798 = vsub.f32 %v465, %v797
        %799 = vmatpush.msra.mxu0 %v798
        %v800 = vand.u32 %v440, 4294901760
        %v801 = vsub.f32 %v440, %v800
        %802 = vmatpush.msra.mxu0 %v801
        %v803 = vand.u32 %v438, 4294901760
        %v804 = vsub.f32 %v438, %v803
        %805 = vmatpush.msra.mxu0 %v804
        %v806 = vand.u32 %v277, 4294901760
        %v807 = vsub.f32 %v277, %v806
        %808 = vmatpush.msra.mxu0 %v807
        %v809 = vand.u32 %v275, 4294901760
        %v810 = vsub.f32 %v275, %v809
        %811 = vmatpush.msra.mxu0 %v810
        %v812 = vand.u32 %v608, 4294901760
        %v813 = vsub.f32 %v608, %v812
        %814 = vmatmul.f32.gmra.mxu0 %v813
        %v815 = vpop.f32.mrf.mxu0
        %v816 = vadd.f32 %v758, %v815
        %v817 = vand.u32 %v609, 4294901760
        %v818 = vsub.f32 %v609, %v817
        %819 = vmatmul.f32.gmra.mxu0 %v818
        %v820 = vpop.f32.mrf.mxu0
        %v821 = vadd.f32 %v762, %v820
        %822 = vdwg.mxu0
        %v823 = vand.u32 %v602, 4294901760
        %824 = vmatpush.msra.mxu0 %v823
        %v825 = vand.u32 %v600, 4294901760
        %826 = vmatpush.msra.mxu0 %v825
        %v827 = vand.u32 %v575, 4294901760
        %828 = vmatpush.msra.mxu0 %v827
        %v829 = vand.u32 %v573, 4294901760
        %830 = vmatpush.msra.mxu0 %v829
        %v831 = vand.u32 %v548, 4294901760
        %832 = vmatpush.msra.mxu0 %v831
        %v833 = vand.u32 %v546, 4294901760
        %834 = vmatpush.msra.mxu0 %v833
        %v835 = vand.u32 %v521, 4294901760
        %836 = vmatpush.msra.mxu0 %v835
        %v837 = vand.u32 %v519, 4294901760
        %838 = vmatpush.msra.mxu0 %v837
        %v839 = vand.u32 %v494, 4294901760
        %840 = vmatpush.msra.mxu0 %v839
        %v841 = vand.u32 %v492, 4294901760
        %842 = vmatpush.msra.mxu0 %v841
        %v843 = vand.u32 %v467, 4294901760
        %844 = vmatpush.msra.mxu0 %v843
        %v845 = vand.u32 %v465, 4294901760
        %846 = vmatpush.msra.mxu0 %v845
        %v847 = vand.u32 %v440, 4294901760
        %848 = vmatpush.msra.mxu0 %v847
        %v849 = vand.u32 %v438, 4294901760
        %850 = vmatpush.msra.mxu0 %v849
        %v851 = vand.u32 %v277, 4294901760
        %852 = vmatpush.msra.mxu0 %v851
        %v853 = vand.u32 %v275, 4294901760
        %854 = vmatpush.msra.mxu0 %v853
        %v855 = vand.u32 %v608, 4294901760
        %v856 = vsub.f32 %v608, %v855
        %v857 = vand.u32 %v856, 4294901760
        %858 = vmatmul.f32.gmra.mxu0 %v857
        %v859 = vpop.f32.mrf.mxu0
        %v860 = vadd.f32 %v816, %v859
        %v861 = vand.u32 %v609, 4294901760
        %v862 = vsub.f32 %v609, %v861
        %v863 = vand.u32 %v862, 4294901760
        %864 = vmatmul.f32.gmra.mxu0 %v863
        %v865 = vpop.f32.mrf.mxu0
        %v866 = vadd.f32 %v821, %v865
        %867 = vdwg.mxu0
        %v868 = vand.u32 %v602, 4294901760
        %v869 = vsub.f32 %v602, %v868
        %v870 = vand.u32 %v869, 4294901760
        %871 = vmatpush.msra.mxu0 %v870
        %v872 = vand.u32 %v600, 4294901760
        %v873 = vsub.f32 %v600, %v872
        %v874 = vand.u32 %v873, 4294901760
        %875 = vmatpush.msra.mxu0 %v874
        %v876 = vand.u32 %v575, 4294901760
        %v877 = vsub.f32 %v575, %v876
        %v878 = vand.u32 %v877, 4294901760
        %879 = vmatpush.msra.mxu0 %v878
        %v880 = vand.u32 %v573, 4294901760
        %v881 = vsub.f32 %v573, %v880
        %v882 = vand.u32 %v881, 4294901760
        %883 = vmatpush.msra.mxu0 %v882
        %v884 = vand.u32 %v548, 4294901760
        %v885 = vsub.f32 %v548, %v884
        %v886 = vand.u32 %v885, 4294901760
        %887 = vmatpush.msra.mxu0 %v886
        %v888 = vand.u32 %v546, 4294901760
        %v889 = vsub.f32 %v546, %v888
        %v890 = vand.u32 %v889, 4294901760
        %891 = vmatpush.msra.mxu0 %v890
        %v892 = vand.u32 %v521, 4294901760
        %v893 = vsub.f32 %v521, %v892
        %v894 = vand.u32 %v893, 4294901760
        %895 = vmatpush.msra.mxu0 %v894
        %v896 = vand.u32 %v519, 4294901760
        %v897 = vsub.f32 %v519, %v896
        %v898 = vand.u32 %v897, 4294901760
        %899 = vmatpush.msra.mxu0 %v898
        %v900 = vand.u32 %v494, 4294901760
        %v901 = vsub.f32 %v494, %v900
        %v902 = vand.u32 %v901, 4294901760
        %903 = vmatpush.msra.mxu0 %v902
        %v904 = vand.u32 %v492, 4294901760
        %v905 = vsub.f32 %v492, %v904
        %v906 = vand.u32 %v905, 4294901760
        %907 = vmatpush.msra.mxu0 %v906
        %v908 = vand.u32 %v467, 4294901760
        %v909 = vsub.f32 %v467, %v908
        %v910 = vand.u32 %v909, 4294901760
        %911 = vmatpush.msra.mxu0 %v910
        %v912 = vand.u32 %v465, 4294901760
        %v913 = vsub.f32 %v465, %v912
        %v914 = vand.u32 %v913, 4294901760
        %915 = vmatpush.msra.mxu0 %v914
        %v916 = vand.u32 %v440, 4294901760
        %v917 = vsub.f32 %v440, %v916
        %v918 = vand.u32 %v917, 4294901760
        %919 = vmatpush.msra.mxu0 %v918
        %v920 = vand.u32 %v438, 4294901760
        %v921 = vsub.f32 %v438, %v920
        %v922 = vand.u32 %v921, 4294901760
        %923 = vmatpush.msra.mxu0 %v922
        %v924 = vand.u32 %v277, 4294901760
        %v925 = vsub.f32 %v277, %v924
        %v926 = vand.u32 %v925, 4294901760
        %927 = vmatpush.msra.mxu0 %v926
        %v928 = vand.u32 %v275, 4294901760
        %v929 = vsub.f32 %v275, %v928
        %v930 = vand.u32 %v929, 4294901760
        %931 = vmatpush.msra.mxu0 %v930
        %v932 = vand.u32 %v608, 4294901760
        %933 = vmatmul.f32.gmra.mxu0 %v932
        %v934 = vpop.f32.mrf.mxu0
        %v935 = vadd.f32 %v860, %v934
        %v936 = vand.u32 %v609, 4294901760
        %937 = vmatmul.f32.gmra.mxu0 %v936
        %v938 = vpop.f32.mrf.mxu0
        %v939 = vadd.f32 %v866, %v938
        %940 = vdwg.mxu0
        %v941 = vand.u32 %v602, 4294901760
        %942 = vmatpush.msra.mxu0 %v941
        %v943 = vand.u32 %v600, 4294901760
        %944 = vmatpush.msra.mxu0 %v943
        %v945 = vand.u32 %v575, 4294901760
        %946 = vmatpush.msra.mxu0 %v945
        %v947 = vand.u32 %v573, 4294901760
        %948 = vmatpush.msra.mxu0 %v947
        %v949 = vand.u32 %v548, 4294901760
        %950 = vmatpush.msra.mxu0 %v949
        %v951 = vand.u32 %v546, 4294901760
        %952 = vmatpush.msra.mxu0 %v951
        %v953 = vand.u32 %v521, 4294901760
        %954 = vmatpush.msra.mxu0 %v953
        %v955 = vand.u32 %v519, 4294901760
        %956 = vmatpush.msra.mxu0 %v955
        %v957 = vand.u32 %v494, 4294901760
        %958 = vmatpush.msra.mxu0 %v957
        %v959 = vand.u32 %v492, 4294901760
        %960 = vmatpush.msra.mxu0 %v959
        %v961 = vand.u32 %v467, 4294901760
        %962 = vmatpush.msra.mxu0 %v961
        %v963 = vand.u32 %v465, 4294901760
        %964 = vmatpush.msra.mxu0 %v963
        %v965 = vand.u32 %v440, 4294901760
        %966 = vmatpush.msra.mxu0 %v965
        %v967 = vand.u32 %v438, 4294901760
        %968 = vmatpush.msra.mxu0 %v967
        %v969 = vand.u32 %v277, 4294901760
        %970 = vmatpush.msra.mxu0 %v969
        %v971 = vand.u32 %v275, 4294901760
        %972 = vmatpush.msra.mxu0 %v971
        %v973 = vand.u32 %v608, 4294901760
        %974 = vmatmul.f32.gmra.mxu0 %v973
        %v975 = vpop.f32.mrf.mxu0
        %v976 = vadd.f32 %v935, %v975
        %v977 = vand.u32 %v609, 4294901760
        %978 = vmatmul.f32.gmra.mxu0 %v977
        %v979 = vpop.f32.mrf.mxu0
        %v980 = vadd.f32 %v939, %v979
        %981 = vdwg.mxu0
        %v982 = vand.u32 %v603, 4294901760
        %983 = vmatpush.msra.mxu0 %v982
        %v984 = vand.u32 %v601, 4294901760
        %985 = vmatpush.msra.mxu0 %v984
        %v986 = vand.u32 %v576, 4294901760
        %987 = vmatpush.msra.mxu0 %v986
        %v988 = vand.u32 %v574, 4294901760
        %989 = vmatpush.msra.mxu0 %v988
        %v990 = vand.u32 %v549, 4294901760
        %991 = vmatpush.msra.mxu0 %v990
        %v992 = vand.u32 %v547, 4294901760
        %993 = vmatpush.msra.mxu0 %v992
        %v994 = vand.u32 %v522, 4294901760
        %995 = vmatpush.msra.mxu0 %v994
        %v996 = vand.u32 %v520, 4294901760
        %997 = vmatpush.msra.mxu0 %v996
        %v998 = vand.u32 %v495, 4294901760
        %999 = vmatpush.msra.mxu0 %v998
        %v1000 = vand.u32 %v493, 4294901760
        %1001 = vmatpush.msra.mxu0 %v1000
        %v1002 = vand.u32 %v468, 4294901760
        %1003 = vmatpush.msra.mxu0 %v1002
        %v1004 = vand.u32 %v466, 4294901760
        %1005 = vmatpush.msra.mxu0 %v1004
        %v1006 = vand.u32 %v441, 4294901760
        %1007 = vmatpush.msra.mxu0 %v1006
        %v1008 = vand.u32 %v439, 4294901760
        %1009 = vmatpush.msra.mxu0 %v1008
        %v1010 = vand.u32 %v278, 4294901760
        %1011 = vmatpush.msra.mxu0 %v1010
        %v1012 = vand.u32 %v276, 4294901760
        %1013 = vmatpush.msra.mxu0 %v1012
        %v1014 = vand.u32 %v608, 4294901760
        %v1015 = vsub.f32 %v608, %v1014
        %v1016 = vand.u32 %v1015, 4294901760
        %v1017 = vsub.f32 %v1015, %v1016
        %v1018 = vand.u32 %v1017, 4294901760
        %1019 = vmatmul.f32.gmra.mxu0 %v1018
        %v1020 = vpop.f32.mrf.mxu0
        %v1021 = vadd.f32 0.0, %v1020
        %v1022 = vand.u32 %v609, 4294901760
        %v1023 = vsub.f32 %v609, %v1022
        %v1024 = vand.u32 %v1023, 4294901760
        %v1025 = vsub.f32 %v1023, %v1024
        %v1026 = vand.u32 %v1025, 4294901760
        %1027 = vmatmul.f32.gmra.mxu0 %v1026
        %v1028 = vpop.f32.mrf.mxu0
        %v1029 = vadd.f32 0.0, %v1028
        %1030 = vdwg.mxu0
        %v1031 = vand.u32 %v603, 4294901760
        %v1032 = vsub.f32 %v603, %v1031
        %v1033 = vand.u32 %v1032, 4294901760
        %v1034 = vsub.f32 %v1032, %v1033
        %v1035 = vand.u32 %v1034, 4294901760
        %1036 = vmatpush.msra.mxu0 %v1035
        %v1037 = vand.u32 %v601, 4294901760
        %v1038 = vsub.f32 %v601, %v1037
        %v1039 = vand.u32 %v1038, 4294901760
        %v1040 = vsub.f32 %v1038, %v1039
        %v1041 = vand.u32 %v1040, 4294901760
        %1042 = vmatpush.msra.mxu0 %v1041
        %v1043 = vand.u32 %v576, 4294901760
        %v1044 = vsub.f32 %v576, %v1043
        %v1045 = vand.u32 %v1044, 4294901760
        %v1046 = vsub.f32 %v1044, %v1045
        %v1047 = vand.u32 %v1046, 4294901760
        %1048 = vmatpush.msra.mxu0 %v1047
        %v1049 = vand.u32 %v574, 4294901760
        %v1050 = vsub.f32 %v574, %v1049
        %v1051 = vand.u32 %v1050, 4294901760
        %v1052 = vsub.f32 %v1050, %v1051
        %v1053 = vand.u32 %v1052, 4294901760
        %1054 = vmatpush.msra.mxu0 %v1053
        %v1055 = vand.u32 %v549, 4294901760
        %v1056 = vsub.f32 %v549, %v1055
        %v1057 = vand.u32 %v1056, 4294901760
        %v1058 = vsub.f32 %v1056, %v1057
        %v1059 = vand.u32 %v1058, 4294901760
        %1060 = vmatpush.msra.mxu0 %v1059
        %v1061 = vand.u32 %v547, 4294901760
        %v1062 = vsub.f32 %v547, %v1061
        %v1063 = vand.u32 %v1062, 4294901760
        %v1064 = vsub.f32 %v1062, %v1063
        %v1065 = vand.u32 %v1064, 4294901760
        %1066 = vmatpush.msra.mxu0 %v1065
        %v1067 = vand.u32 %v522, 4294901760
        %v1068 = vsub.f32 %v522, %v1067
        %v1069 = vand.u32 %v1068, 4294901760
        %v1070 = vsub.f32 %v1068, %v1069
        %v1071 = vand.u32 %v1070, 4294901760
        %1072 = vmatpush.msra.mxu0 %v1071
        %v1073 = vand.u32 %v520, 4294901760
        %v1074 = vsub.f32 %v520, %v1073
        %v1075 = vand.u32 %v1074, 4294901760
        %v1076 = vsub.f32 %v1074, %v1075
        %v1077 = vand.u32 %v1076, 4294901760
        %1078 = vmatpush.msra.mxu0 %v1077
        %v1079 = vand.u32 %v495, 4294901760
        %v1080 = vsub.f32 %v495, %v1079
        %v1081 = vand.u32 %v1080, 4294901760
        %v1082 = vsub.f32 %v1080, %v1081
        %v1083 = vand.u32 %v1082, 4294901760
        %1084 = vmatpush.msra.mxu0 %v1083
        %v1085 = vand.u32 %v493, 4294901760
        %v1086 = vsub.f32 %v493, %v1085
        %v1087 = vand.u32 %v1086, 4294901760
        %v1088 = vsub.f32 %v1086, %v1087
        %v1089 = vand.u32 %v1088, 4294901760
        %1090 = vmatpush.msra.mxu0 %v1089
        %v1091 = vand.u32 %v468, 4294901760
        %v1092 = vsub.f32 %v468, %v1091
        %v1093 = vand.u32 %v1092, 4294901760
        %v1094 = vsub.f32 %v1092, %v1093
        %v1095 = vand.u32 %v1094, 4294901760
        %1096 = vmatpush.msra.mxu0 %v1095
        %v1097 = vand.u32 %v466, 4294901760
        %v1098 = vsub.f32 %v466, %v1097
        %v1099 = vand.u32 %v1098, 4294901760
        %v1100 = vsub.f32 %v1098, %v1099
        %v1101 = vand.u32 %v1100, 4294901760
        %1102 = vmatpush.msra.mxu0 %v1101
        %v1103 = vand.u32 %v441, 4294901760
        %v1104 = vsub.f32 %v441, %v1103
        %v1105 = vand.u32 %v1104, 4294901760
        %v1106 = vsub.f32 %v1104, %v1105
        %v1107 = vand.u32 %v1106, 4294901760
        %1108 = vmatpush.msra.mxu0 %v1107
        %v1109 = vand.u32 %v439, 4294901760
        %v1110 = vsub.f32 %v439, %v1109
        %v1111 = vand.u32 %v1110, 4294901760
        %v1112 = vsub.f32 %v1110, %v1111
        %v1113 = vand.u32 %v1112, 4294901760
        %1114 = vmatpush.msra.mxu0 %v1113
        %v1115 = vand.u32 %v278, 4294901760
        %v1116 = vsub.f32 %v278, %v1115
        %v1117 = vand.u32 %v1116, 4294901760
        %v1118 = vsub.f32 %v1116, %v1117
        %v1119 = vand.u32 %v1118, 4294901760
        %1120 = vmatpush.msra.mxu0 %v1119
        %v1121 = vand.u32 %v276, 4294901760
        %v1122 = vsub.f32 %v276, %v1121
        %v1123 = vand.u32 %v1122, 4294901760
        %v1124 = vsub.f32 %v1122, %v1123
        %v1125 = vand.u32 %v1124, 4294901760
        %1126 = vmatpush.msra.mxu0 %v1125
        %v1127 = vand.u32 %v608, 4294901760
        %1128 = vmatmul.f32.gmra.mxu0 %v1127
        %v1129 = vpop.f32.mrf.mxu0
        %v1130 = vadd.f32 %v1021, %v1129
        %v1131 = vand.u32 %v609, 4294901760
        %1132 = vmatmul.f32.gmra.mxu0 %v1131
        %v1133 = vpop.f32.mrf.mxu0
        %v1134 = vadd.f32 %v1029, %v1133
        %1135 = vdwg.mxu0
        %v1136 = vand.u32 %v603, 4294901760
        %v1137 = vsub.f32 %v603, %v1136
        %1138 = vmatpush.msra.mxu0 %v1137
        %v1139 = vand.u32 %v601, 4294901760
        %v1140 = vsub.f32 %v601, %v1139
        %1141 = vmatpush.msra.mxu0 %v1140
        %v1142 = vand.u32 %v576, 4294901760
        %v1143 = vsub.f32 %v576, %v1142
        %1144 = vmatpush.msra.mxu0 %v1143
        %v1145 = vand.u32 %v574, 4294901760
        %v1146 = vsub.f32 %v574, %v1145
        %1147 = vmatpush.msra.mxu0 %v1146
        %v1148 = vand.u32 %v549, 4294901760
        %v1149 = vsub.f32 %v549, %v1148
        %1150 = vmatpush.msra.mxu0 %v1149
        %v1151 = vand.u32 %v547, 4294901760
        %v1152 = vsub.f32 %v547, %v1151
        %1153 = vmatpush.msra.mxu0 %v1152
        %v1154 = vand.u32 %v522, 4294901760
        %v1155 = vsub.f32 %v522, %v1154
        %1156 = vmatpush.msra.mxu0 %v1155
        %v1157 = vand.u32 %v520, 4294901760
        %v1158 = vsub.f32 %v520, %v1157
        %1159 = vmatpush.msra.mxu0 %v1158
        %v1160 = vand.u32 %v495, 4294901760
        %v1161 = vsub.f32 %v495, %v1160
        %1162 = vmatpush.msra.mxu0 %v1161
        %v1163 = vand.u32 %v493, 4294901760
        %v1164 = vsub.f32 %v493, %v1163
        %1165 = vmatpush.msra.mxu0 %v1164
        %v1166 = vand.u32 %v468, 4294901760
        %v1167 = vsub.f32 %v468, %v1166
        %1168 = vmatpush.msra.mxu0 %v1167
        %v1169 = vand.u32 %v466, 4294901760
        %v1170 = vsub.f32 %v466, %v1169
        %1171 = vmatpush.msra.mxu0 %v1170
        %v1172 = vand.u32 %v441, 4294901760
        %v1173 = vsub.f32 %v441, %v1172
        %1174 = vmatpush.msra.mxu0 %v1173
        %v1175 = vand.u32 %v439, 4294901760
        %v1176 = vsub.f32 %v439, %v1175
        %1177 = vmatpush.msra.mxu0 %v1176
        %v1178 = vand.u32 %v278, 4294901760
        %v1179 = vsub.f32 %v278, %v1178
        %1180 = vmatpush.msra.mxu0 %v1179
        %v1181 = vand.u32 %v276, 4294901760
        %v1182 = vsub.f32 %v276, %v1181
        %1183 = vmatpush.msra.mxu0 %v1182
        %v1184 = vand.u32 %v608, 4294901760
        %v1185 = vsub.f32 %v608, %v1184
        %1186 = vmatmul.f32.gmra.mxu0 %v1185
        %v1187 = vpop.f32.mrf.mxu0
        %v1188 = vadd.f32 %v1130, %v1187
        %v1189 = vand.u32 %v609, 4294901760
        %v1190 = vsub.f32 %v609, %v1189
        %1191 = vmatmul.f32.gmra.mxu0 %v1190
        %v1192 = vpop.f32.mrf.mxu0
        %v1193 = vadd.f32 %v1134, %v1192
        %1194 = vdwg.mxu0
        %v1195 = vand.u32 %v603, 4294901760
        %1196 = vmatpush.msra.mxu0 %v1195
        %v1197 = vand.u32 %v601, 4294901760
        %1198 = vmatpush.msra.mxu0 %v1197
        %v1199 = vand.u32 %v576, 4294901760
        %1200 = vmatpush.msra.mxu0 %v1199
        %v1201 = vand.u32 %v574, 4294901760
        %1202 = vmatpush.msra.mxu0 %v1201
        %v1203 = vand.u32 %v549, 4294901760
        %1204 = vmatpush.msra.mxu0 %v1203
        %v1205 = vand.u32 %v547, 4294901760
        %1206 = vmatpush.msra.mxu0 %v1205
        %v1207 = vand.u32 %v522, 4294901760
        %1208 = vmatpush.msra.mxu0 %v1207
        %v1209 = vand.u32 %v520, 4294901760
        %1210 = vmatpush.msra.mxu0 %v1209
        %v1211 = vand.u32 %v495, 4294901760
        %1212 = vmatpush.msra.mxu0 %v1211
        %v1213 = vand.u32 %v493, 4294901760
        %1214 = vmatpush.msra.mxu0 %v1213
        %v1215 = vand.u32 %v468, 4294901760
        %1216 = vmatpush.msra.mxu0 %v1215
        %v1217 = vand.u32 %v466, 4294901760
        %1218 = vmatpush.msra.mxu0 %v1217
        %v1219 = vand.u32 %v441, 4294901760
        %1220 = vmatpush.msra.mxu0 %v1219
        %v1221 = vand.u32 %v439, 4294901760
        %1222 = vmatpush.msra.mxu0 %v1221
        %v1223 = vand.u32 %v278, 4294901760
        %1224 = vmatpush.msra.mxu0 %v1223
        %v1225 = vand.u32 %v276, 4294901760
        %1226 = vmatpush.msra.mxu0 %v1225
        %v1227 = vand.u32 %v608, 4294901760
        %v1228 = vsub.f32 %v608, %v1227
        %v1229 = vand.u32 %v1228, 4294901760
        %1230 = vmatmul.f32.gmra.mxu0 %v1229
        %v1231 = vpop.f32.mrf.mxu0
        %v1232 = vadd.f32 %v1188, %v1231
        %v1233 = vand.u32 %v609, 4294901760
        %v1234 = vsub.f32 %v609, %v1233
        %v1235 = vand.u32 %v1234, 4294901760
        %1236 = vmatmul.f32.gmra.mxu0 %v1235
        %v1237 = vpop.f32.mrf.mxu0
        %v1238 = vadd.f32 %v1193, %v1237
        %1239 = vdwg.mxu0
        %v1240 = vand.u32 %v603, 4294901760
        %v1241 = vsub.f32 %v603, %v1240
        %v1242 = vand.u32 %v1241, 4294901760
        %1243 = vmatpush.msra.mxu0 %v1242
        %v1244 = vand.u32 %v601, 4294901760
        %v1245 = vsub.f32 %v601, %v1244
        %v1246 = vand.u32 %v1245, 4294901760
        %1247 = vmatpush.msra.mxu0 %v1246
        %v1248 = vand.u32 %v576, 4294901760
        %v1249 = vsub.f32 %v576, %v1248
        %v1250 = vand.u32 %v1249, 4294901760
        %1251 = vmatpush.msra.mxu0 %v1250
        %v1252 = vand.u32 %v574, 4294901760
        %v1253 = vsub.f32 %v574, %v1252
        %v1254 = vand.u32 %v1253, 4294901760
        %1255 = vmatpush.msra.mxu0 %v1254
        %v1256 = vand.u32 %v549, 4294901760
        %v1257 = vsub.f32 %v549, %v1256
        %v1258 = vand.u32 %v1257, 4294901760
        %1259 = vmatpush.msra.mxu0 %v1258
        %v1260 = vand.u32 %v547, 4294901760
        %v1261 = vsub.f32 %v547, %v1260
        %v1262 = vand.u32 %v1261, 4294901760
        %1263 = vmatpush.msra.mxu0 %v1262
        %v1264 = vand.u32 %v522, 4294901760
        %v1265 = vsub.f32 %v522, %v1264
        %v1266 = vand.u32 %v1265, 4294901760
        %1267 = vmatpush.msra.mxu0 %v1266
        %v1268 = vand.u32 %v520, 4294901760
        %v1269 = vsub.f32 %v520, %v1268
        %v1270 = vand.u32 %v1269, 4294901760
        %1271 = vmatpush.msra.mxu0 %v1270
        %v1272 = vand.u32 %v495, 4294901760
        %v1273 = vsub.f32 %v495, %v1272
        %v1274 = vand.u32 %v1273, 4294901760
        %1275 = vmatpush.msra.mxu0 %v1274
        %v1276 = vand.u32 %v493, 4294901760
        %v1277 = vsub.f32 %v493, %v1276
        %v1278 = vand.u32 %v1277, 4294901760
        %1279 = vmatpush.msra.mxu0 %v1278
        %v1280 = vand.u32 %v468, 4294901760
        %v1281 = vsub.f32 %v468, %v1280
        %v1282 = vand.u32 %v1281, 4294901760
        %1283 = vmatpush.msra.mxu0 %v1282
        %v1284 = vand.u32 %v466, 4294901760
        %v1285 = vsub.f32 %v466, %v1284
        %v1286 = vand.u32 %v1285, 4294901760
        %1287 = vmatpush.msra.mxu0 %v1286
        %v1288 = vand.u32 %v441, 4294901760
        %v1289 = vsub.f32 %v441, %v1288
        %v1290 = vand.u32 %v1289, 4294901760
        %1291 = vmatpush.msra.mxu0 %v1290
        %v1292 = vand.u32 %v439, 4294901760
        %v1293 = vsub.f32 %v439, %v1292
        %v1294 = vand.u32 %v1293, 4294901760
        %1295 = vmatpush.msra.mxu0 %v1294
        %v1296 = vand.u32 %v278, 4294901760
        %v1297 = vsub.f32 %v278, %v1296
        %v1298 = vand.u32 %v1297, 4294901760
        %1299 = vmatpush.msra.mxu0 %v1298
        %v1300 = vand.u32 %v276, 4294901760
        %v1301 = vsub.f32 %v276, %v1300
        %v1302 = vand.u32 %v1301, 4294901760
        %1303 = vmatpush.msra.mxu0 %v1302
        %v1304 = vand.u32 %v608, 4294901760
        %1305 = vmatmul.f32.gmra.mxu0 %v1304
        %v1306 = vpop.f32.mrf.mxu0
        %v1307 = vadd.f32 %v1232, %v1306
        %v1308 = vand.u32 %v609, 4294901760
        %1309 = vmatmul.f32.gmra.mxu0 %v1308
        %v1310 = vpop.f32.mrf.mxu0
        %v1311 = vadd.f32 %v1238, %v1310
        %1312 = vdwg.mxu0
        %v1313 = vand.u32 %v603, 4294901760
        %1314 = vmatpush.msra.mxu0 %v1313
        %v1315 = vand.u32 %v601, 4294901760
        %1316 = vmatpush.msra.mxu0 %v1315
        %v1317 = vand.u32 %v576, 4294901760
        %1318 = vmatpush.msra.mxu0 %v1317
        %v1319 = vand.u32 %v574, 4294901760
        %1320 = vmatpush.msra.mxu0 %v1319
        %v1321 = vand.u32 %v549, 4294901760
        %1322 = vmatpush.msra.mxu0 %v1321
        %v1323 = vand.u32 %v547, 4294901760
        %1324 = vmatpush.msra.mxu0 %v1323
        %v1325 = vand.u32 %v522, 4294901760
        %1326 = vmatpush.msra.mxu0 %v1325
        %v1327 = vand.u32 %v520, 4294901760
        %1328 = vmatpush.msra.mxu0 %v1327
        %v1329 = vand.u32 %v495, 4294901760
        %1330 = vmatpush.msra.mxu0 %v1329
        %v1331 = vand.u32 %v493, 4294901760
        %1332 = vmatpush.msra.mxu0 %v1331
        %v1333 = vand.u32 %v468, 4294901760
        %1334 = vmatpush.msra.mxu0 %v1333
        %v1335 = vand.u32 %v466, 4294901760
        %1336 = vmatpush.msra.mxu0 %v1335
        %v1337 = vand.u32 %v441, 4294901760
        %1338 = vmatpush.msra.mxu0 %v1337
        %v1339 = vand.u32 %v439, 4294901760
        %1340 = vmatpush.msra.mxu0 %v1339
        %v1341 = vand.u32 %v278, 4294901760
        %1342 = vmatpush.msra.mxu0 %v1341
        %v1343 = vand.u32 %v276, 4294901760
        %1344 = vmatpush.msra.mxu0 %v1343
        %v1345 = vand.u32 %v608, 4294901760
        %1346 = vmatmul.f32.gmra.mxu0 %v1345
        %v1347 = vpop.f32.mrf.mxu0
        %v1348 = vadd.f32 %v1307, %v1347
        %v1349 = vand.u32 %v609, 4294901760
        %1350 = vmatmul.f32.gmra.mxu0 %v1349
        %v1351 = vpop.f32.mrf.mxu0
        %v1352 = vadd.f32 %v1311, %v1351
        %1353 = vdwg.mxu0
        %v1354 = vadd.f32 %v262, %v976
        %v1355 = vadd.f32 %v262, %v1348
        %v1356 = vadd.f32 %v267, %v980
        %v1357 = vadd.f32 %v267, %v1352
        %s1358 = scalar_lea.vmem [#allocation7], 16
        %v1359 = vld [vmem:[%s1358] ss:$8 sm:$0x3]
        %v1361 = vperm.slane %v1359, 0
        %v1362 = vperm.slane %v1359, 1
        %1363 = vrot.lane.b32.xlu0 %v1361, 17
        %v1364 = vpop.permute.xlu0 %1363
        %1365 = vrot.lane.b32.xlu0 %v1362, 17
        %v1366 = vpop.permute.xlu0 %1365
        %vm1367 = vcmask 138240
        %v1368 = vsel %vm1367, %v1364, %v1366
        %v1372 = vmul.f32 %v251, %v1364
        %v1373 = vmul.f32 %v252, %v1368
        %v1374 = vmul.f32 %v253, %v1366
        %v1375 = vmul.f32 %v254, %v1364
        %v1376 = vmul.f32 %v255, %v1368
        %v1377 = vmul.f32 %v256, %v1366
        %s1378 = scalar_lea.vmem [#allocation7], 17
        %v1379 = vld [vmem:[%s1378] ss:$8 sm:$0x3]
        %v1381 = vperm.slane %v1379, 0
        %v1382 = vperm.slane %v1379, 1
        %1383 = vrot.lane.b32.xlu0 %v1381, 18
        %v1384 = vpop.permute.xlu0 %1383
        %1385 = vrot.lane.b32.xlu0 %v1382, 18
        %v1386 = vpop.permute.xlu0 %1385
        %vm1387 = vcmask 146432
        %v1388 = vsel %vm1387, %v1384, %v1386
        %v1392 = vmul.f32 %v251, %v1384
        %v1393 = vmul.f32 %v252, %v1388
        %v1394 = vmul.f32 %v253, %v1386
        %v1395 = vmul.f32 %v254, %v1384
        %v1396 = vmul.f32 %v255, %v1388
        %v1397 = vmul.f32 %v256, %v1386
        %s1398 = scalar_lea.vmem [#allocation7], 18
        %v1399 = vld [vmem:[%s1398] ss:$8 sm:$0x3]
        %v1401 = vperm.slane %v1399, 0
        %v1402 = vperm.slane %v1399, 1
        %1403 = vrot.lane.b32.xlu0 %v1401, 19
        %v1404 = vpop.permute.xlu0 %1403
        %1405 = vrot.lane.b32.xlu0 %v1402, 19
        %v1406 = vpop.permute.xlu0 %1405
        %vm1407 = vcmask 154624
        %v1408 = vsel %vm1407, %v1404, %v1406
        %v1412 = vmul.f32 %v251, %v1404
        %v1413 = vmul.f32 %v252, %v1408
        %v1414 = vmul.f32 %v253, %v1406
        %v1415 = vmul.f32 %v254, %v1404
        %v1416 = vmul.f32 %v255, %v1408
        %v1417 = vmul.f32 %v256, %v1406
        %s1418 = scalar_lea.vmem [#allocation7], 19
        %v1419 = vld [vmem:[%s1418] ss:$8 sm:$0x3]
        %v1421 = vperm.slane %v1419, 0
        %v1422 = vperm.slane %v1419, 1
        %1423 = vrot.lane.b32.xlu0 %v1421, 20
        %v1424 = vpop.permute.xlu0 %1423
        %1425 = vrot.lane.b32.xlu0 %v1422, 20
        %v1426 = vpop.permute.xlu0 %1425
        %vm1427 = vcmask 162816
        %v1428 = vsel %vm1427, %v1424, %v1426
        %v1432 = vmul.f32 %v251, %v1424
        %v1433 = vmul.f32 %v252, %v1428
        %v1434 = vmul.f32 %v253, %v1426
        %v1435 = vmul.f32 %v254, %v1424
        %v1436 = vmul.f32 %v255, %v1428
        %v1437 = vmul.f32 %v256, %v1426
        %s1438 = scalar_lea.vmem [#allocation7], 20
        %v1439 = vld [vmem:[%s1438] ss:$8 sm:$0x3]
        %v1441 = vperm.slane %v1439, 0
        %v1442 = vperm.slane %v1439, 1
        %1443 = vrot.lane.b32.xlu0 %v1441, 21
        %v1444 = vpop.permute.xlu0 %1443
        %1445 = vrot.lane.b32.xlu0 %v1442, 21
        %v1446 = vpop.permute.xlu0 %1445
        %vm1447 = vcmask 171008
        %v1448 = vsel %vm1447, %v1444, %v1446
        %v1452 = vmul.f32 %v251, %v1444
        %v1453 = vmul.f32 %v252, %v1448
        %v1454 = vmul.f32 %v253, %v1446
        %v1455 = vmul.f32 %v254, %v1444
        %v1456 = vmul.f32 %v255, %v1448
        %v1457 = vmul.f32 %v256, %v1446
        %s1458 = scalar_lea.vmem [#allocation7], 21
        %v1459 = vld [vmem:[%s1458] ss:$8 sm:$0x3]
        %v1461 = vperm.slane %v1459, 0
        %v1462 = vperm.slane %v1459, 1
        %1463 = vrot.lane.b32.xlu0 %v1461, 22
        %v1464 = vpop.permute.xlu0 %1463
        %1465 = vrot.lane.b32.xlu0 %v1462, 22
        %v1466 = vpop.permute.xlu0 %1465
        %vm1467 = vcmask 179200
        %v1468 = vsel %vm1467, %v1464, %v1466
        %v1472 = vmul.f32 %v251, %v1464
        %v1473 = vmul.f32 %v252, %v1468
        %v1474 = vmul.f32 %v253, %v1466
        %v1475 = vmul.f32 %v254, %v1464
        %v1476 = vmul.f32 %v255, %v1468
        %v1477 = vmul.f32 %v256, %v1466
        %s1478 = scalar_lea.vmem [#allocation7], 22
        %v1479 = vld [vmem:[%s1478] ss:$8 sm:$0x3]
        %v1481 = vperm.slane %v1479, 0
        %v1482 = vperm.slane %v1479, 1
        %1483 = vrot.lane.b32.xlu0 %v1481, 32
        %v1484 = vpop.permute.xlu0 %1483
        %1485 = vrot.lane.b32.xlu0 %v1482, 32
        %v1486 = vpop.permute.xlu0 %1485
        %vm1487 = vcmask 261120
        %v1488 = vsel %vm1487, %v1484, %v1486
        %v1492 = vmul.f32 %v251, %v1484
        %v1493 = vmul.f32 %v252, %v1488
        %v1494 = vmul.f32 %v253, %v1486
        %v1495 = vmul.f32 %v254, %v1484
        %v1496 = vmul.f32 %v255, %v1488
        %v1497 = vmul.f32 %v256, %v1486
        %s1498 = scalar_lea.vmem [#allocation7], 23
        %v1499 = vld [vmem:[%s1498] ss:$8 sm:$0x3]
        %v1501 = vperm.slane %v1499, 0
        %v1502 = vperm.slane %v1499, 1
        %1503 = vrot.lane.b32.xlu0 %v1501, 33
        %v1504 = vpop.permute.xlu0 %1503
        %1505 = vrot.lane.b32.xlu0 %v1502, 33
        %v1506 = vpop.permute.xlu0 %1505
        %vm1507 = vcmask 269312
        %v1508 = vsel %vm1507, %v1504, %v1506
        %v1512 = vmul.f32 %v251, %v1504
        %v1513 = vmul.f32 %v252, %v1508
        %v1514 = vmul.f32 %v253, %v1506
        %v1515 = vmul.f32 %v254, %v1504
        %v1516 = vmul.f32 %v255, %v1508
        %v1517 = vmul.f32 %v256, %v1506
        %1524 = vrot.lane.b32.xlu0 %v1392, 127
        %v1525 = vpop.permute.xlu0 %1524
        %1526 = vrot.lane.b32.xlu0 %v1393, 127
        %v1527 = vpop.permute.xlu0 %1526
        %1528 = vrot.lane.b32.xlu0 %v1394, 127
        %v1529 = vpop.permute.xlu0 %1528
        %1530 = vrot.lane.b32.xlu0 %v1395, 127
        %v1531 = vpop.permute.xlu0 %1530
        %1532 = vrot.lane.b32.xlu0 %v1396, 127
        %v1533 = vpop.permute.xlu0 %1532
        %1534 = vrot.lane.b32.xlu0 %v1397, 127
        %v1535 = vpop.permute.xlu0 %1534
        %v1536 = vsel %vm437, %v1525, %v1527
        %v1537 = vsel %vm437, %v1527, %v1529
        %v1538 = vsel %vm437, %v1531, %v1533
        %v1539 = vsel %vm437, %v1533, %v1535
        %1546 = vrot.lane.b32.xlu0 %v1412, 126
        %v1547 = vpop.permute.xlu0 %1546
        %1548 = vrot.lane.b32.xlu0 %v1413, 126
        %v1549 = vpop.permute.xlu0 %1548
        %1550 = vrot.lane.b32.xlu0 %v1414, 126
        %v1551 = vpop.permute.xlu0 %1550
        %1552 = vrot.lane.b32.xlu0 %v1415, 126
        %v1553 = vpop.permute.xlu0 %1552
        %1554 = vrot.lane.b32.xlu0 %v1416, 126
        %v1555 = vpop.permute.xlu0 %1554
        %1556 = vrot.lane.b32.xlu0 %v1417, 126
        %v1557 = vpop.permute.xlu0 %1556
        %v1558 = vsel %vm464, %v1547, %v1549
        %v1559 = vsel %vm464, %v1549, %v1551
        %v1560 = vsel %vm464, %v1553, %v1555
        %v1561 = vsel %vm464, %v1555, %v1557
        %1568 = vrot.lane.b32.xlu0 %v1432, 125
        %v1569 = vpop.permute.xlu0 %1568
        %1570 = vrot.lane.b32.xlu0 %v1433, 125
        %v1571 = vpop.permute.xlu0 %1570
        %1572 = vrot.lane.b32.xlu0 %v1434, 125
        %v1573 = vpop.permute.xlu0 %1572
        %1574 = vrot.lane.b32.xlu0 %v1435, 125
        %v1575 = vpop.permute.xlu0 %1574
        %1576 = vrot.lane.b32.xlu0 %v1436, 125
        %v1577 = vpop.permute.xlu0 %1576
        %1578 = vrot.lane.b32.xlu0 %v1437, 125
        %v1579 = vpop.permute.xlu0 %1578
        %v1580 = vsel %vm491, %v1569, %v1571
        %v1581 = vsel %vm491, %v1571, %v1573
        %v1582 = vsel %vm491, %v1575, %v1577
        %v1583 = vsel %vm491, %v1577, %v1579
        %1590 = vrot.lane.b32.xlu0 %v1452, 124
        %v1591 = vpop.permute.xlu0 %1590
        %1592 = vrot.lane.b32.xlu0 %v1453, 124
        %v1593 = vpop.permute.xlu0 %1592
        %1594 = vrot.lane.b32.xlu0 %v1454, 124
        %v1595 = vpop.permute.xlu0 %1594
        %1596 = vrot.lane.b32.xlu0 %v1455, 124
        %v1597 = vpop.permute.xlu0 %1596
        %1598 = vrot.lane.b32.xlu0 %v1456, 124
        %v1599 = vpop.permute.xlu0 %1598
        %1600 = vrot.lane.b32.xlu0 %v1457, 124
        %v1601 = vpop.permute.xlu0 %1600
        %v1602 = vsel %vm518, %v1591, %v1593
        %v1603 = vsel %vm518, %v1593, %v1595
        %v1604 = vsel %vm518, %v1597, %v1599
        %v1605 = vsel %vm518, %v1599, %v1601
        %1612 = vrot.lane.b32.xlu0 %v1472, 123
        %v1613 = vpop.permute.xlu0 %1612
        %1614 = vrot.lane.b32.xlu0 %v1473, 123
        %v1615 = vpop.permute.xlu0 %1614
        %1616 = vrot.lane.b32.xlu0 %v1474, 123
        %v1617 = vpop.permute.xlu0 %1616
        %1618 = vrot.lane.b32.xlu0 %v1475, 123
        %v1619 = vpop.permute.xlu0 %1618
        %1620 = vrot.lane.b32.xlu0 %v1476, 123
        %v1621 = vpop.permute.xlu0 %1620
        %1622 = vrot.lane.b32.xlu0 %v1477, 123
        %v1623 = vpop.permute.xlu0 %1622
        %v1624 = vsel %vm545, %v1613, %v1615
        %v1625 = vsel %vm545, %v1615, %v1617
        %v1626 = vsel %vm545, %v1619, %v1621
        %v1627 = vsel %vm545, %v1621, %v1623
        %1634 = vrot.lane.b32.xlu0 %v1492, 113
        %v1635 = vpop.permute.xlu0 %1634
        %1636 = vrot.lane.b32.xlu0 %v1493, 113
        %v1637 = vpop.permute.xlu0 %1636
        %1638 = vrot.lane.b32.xlu0 %v1494, 113
        %v1639 = vpop.permute.xlu0 %1638
        %1640 = vrot.lane.b32.xlu0 %v1495, 113
        %v1641 = vpop.permute.xlu0 %1640
        %1642 = vrot.lane.b32.xlu0 %v1496, 113
        %v1643 = vpop.permute.xlu0 %1642
        %1644 = vrot.lane.b32.xlu0 %v1497, 113
        %v1645 = vpop.permute.xlu0 %1644
        %vm1646 = vcmask 924672
        %v1647 = vsel %vm1646, %v1635, %v1637
        %v1648 = vsel %vm1646, %v1637, %v1639
        %v1649 = vsel %vm1646, %v1641, %v1643
        %v1650 = vsel %vm1646, %v1643, %v1645
        %1657 = vrot.lane.b32.xlu0 %v1512, 112
        %v1658 = vpop.permute.xlu0 %1657
        %1659 = vrot.lane.b32.xlu0 %v1513, 112
        %v1660 = vpop.permute.xlu0 %1659
        %1661 = vrot.lane.b32.xlu0 %v1514, 112
        %v1662 = vpop.permute.xlu0 %1661
        %1663 = vrot.lane.b32.xlu0 %v1515, 112
        %v1664 = vpop.permute.xlu0 %1663
        %1665 = vrot.lane.b32.xlu0 %v1516, 112
        %v1666 = vpop.permute.xlu0 %1665
        %1667 = vrot.lane.b32.xlu0 %v1517, 112
        %v1668 = vpop.permute.xlu0 %1667
        %v1669 = vsel %vm599, %v1658, %v1660
        %v1670 = vsel %vm599, %v1660, %v1662
        %v1671 = vsel %vm599, %v1664, %v1666
        %v1672 = vsel %vm599, %v1666, %v1668
        %s1673 = scalar_lea.vmem [#allocation5], 16
        %v1674 = vld [vmem:[%s1673] sm:$0xff]
        %v1675 = vld [vmem:[%s1673 + $0x8] sm:$0xff]
        %1682 = vrot.lane.b32.xlu0 %v1372, 111
        %v1683 = vpop.permute.xlu0 %1682
        %1684 = vrot.lane.b32.xlu0 %v1373, 111
        %v1685 = vpop.permute.xlu0 %1684
        %1686 = vrot.lane.b32.xlu0 %v1374, 111
        %v1687 = vpop.permute.xlu0 %1686
        %1688 = vrot.lane.b32.xlu0 %v1375, 111
        %v1689 = vpop.permute.xlu0 %1688
        %1690 = vrot.lane.b32.xlu0 %v1376, 111
        %v1691 = vpop.permute.xlu0 %1690
        %1692 = vrot.lane.b32.xlu0 %v1377, 111
        %v1693 = vpop.permute.xlu0 %1692
        %1694 = vrot.lane.b32.xlu0 %v1536, 111
        %v1695 = vpop.permute.xlu0 %1694
        %1696 = vrot.lane.b32.xlu0 %v1537, 111
        %v1697 = vpop.permute.xlu0 %1696
        %1698 = vrot.lane.b32.xlu0 %v1529, 111
        %v1699 = vpop.permute.xlu0 %1698
        %1700 = vrot.lane.b32.xlu0 %v1538, 111
        %v1701 = vpop.permute.xlu0 %1700
        %1702 = vrot.lane.b32.xlu0 %v1539, 111
        %v1703 = vpop.permute.xlu0 %1702
        %1704 = vrot.lane.b32.xlu0 %v1535, 111
        %v1705 = vpop.permute.xlu0 %1704
        %1706 = vrot.lane.b32.xlu0 %v1558, 111
        %v1707 = vpop.permute.xlu0 %1706
        %1708 = vrot.lane.b32.xlu0 %v1559, 111
        %v1709 = vpop.permute.xlu0 %1708
        %1710 = vrot.lane.b32.xlu0 %v1551, 111
        %v1711 = vpop.permute.xlu0 %1710
        %1712 = vrot.lane.b32.xlu0 %v1560, 111
        %v1713 = vpop.permute.xlu0 %1712
        %1714 = vrot.lane.b32.xlu0 %v1561, 111
        %v1715 = vpop.permute.xlu0 %1714
        %1716 = vrot.lane.b32.xlu0 %v1557, 111
        %v1717 = vpop.permute.xlu0 %1716
        %1718 = vrot.lane.b32.xlu0 %v1580, 111
        %v1719 = vpop.permute.xlu0 %1718
        %1720 = vrot.lane.b32.xlu0 %v1581, 111
        %v1721 = vpop.permute.xlu0 %1720
        %1722 = vrot.lane.b32.xlu0 %v1573, 111
        %v1723 = vpop.permute.xlu0 %1722
        %1724 = vrot.lane.b32.xlu0 %v1582, 111
        %v1725 = vpop.permute.xlu0 %1724
        %1726 = vrot.lane.b32.xlu0 %v1583, 111
        %v1727 = vpop.permute.xlu0 %1726
        %1728 = vrot.lane.b32.xlu0 %v1579, 111
        %v1729 = vpop.permute.xlu0 %1728
        %1730 = vrot.lane.b32.xlu0 %v1602, 111
        %v1731 = vpop.permute.xlu0 %1730
        %1732 = vrot.lane.b32.xlu0 %v1603, 111
        %v1733 = vpop.permute.xlu0 %1732
        %1734 = vrot.lane.b32.xlu0 %v1595, 111
        %v1735 = vpop.permute.xlu0 %1734
        %1736 = vrot.lane.b32.xlu0 %v1604, 111
        %v1737 = vpop.permute.xlu0 %1736
        %1738 = vrot.lane.b32.xlu0 %v1605, 111
        %v1739 = vpop.permute.xlu0 %1738
        %1740 = vrot.lane.b32.xlu0 %v1601, 111
        %v1741 = vpop.permute.xlu0 %1740
        %1742 = vrot.lane.b32.xlu0 %v1624, 111
        %v1743 = vpop.permute.xlu0 %1742
        %1744 = vrot.lane.b32.xlu0 %v1625, 111
        %v1745 = vpop.permute.xlu0 %1744
        %1746 = vrot.lane.b32.xlu0 %v1617, 111
        %v1747 = vpop.permute.xlu0 %1746
        %1748 = vrot.lane.b32.xlu0 %v1626, 111
        %v1749 = vpop.permute.xlu0 %1748
        %1750 = vrot.lane.b32.xlu0 %v1627, 111
        %v1751 = vpop.permute.xlu0 %1750
        %1752 = vrot.lane.b32.xlu0 %v1623, 111
        %v1753 = vpop.permute.xlu0 %1752
        %1754 = vrot.lane.b32.xlu0 %v1647, 111
        %v1755 = vpop.permute.xlu0 %1754
        %1756 = vrot.lane.b32.xlu0 %v1648, 111
        %v1757 = vpop.permute.xlu0 %1756
        %1758 = vrot.lane.b32.xlu0 %v1639, 111
        %v1759 = vpop.permute.xlu0 %1758
        %1760 = vrot.lane.b32.xlu0 %v1649, 111
        %v1761 = vpop.permute.xlu0 %1760
        %1762 = vrot.lane.b32.xlu0 %v1650, 111
        %v1763 = vpop.permute.xlu0 %1762
        %1764 = vrot.lane.b32.xlu0 %v1645, 111
        %v1765 = vpop.permute.xlu0 %1764
        %1766 = vrot.lane.b32.xlu0 %v1669, 111
        %v1767 = vpop.permute.xlu0 %1766
        %1768 = vrot.lane.b32.xlu0 %v1670, 111
        %v1769 = vpop.permute.xlu0 %1768
        %1770 = vrot.lane.b32.xlu0 %v1662, 111
        %v1771 = vpop.permute.xlu0 %1770
        %1772 = vrot.lane.b32.xlu0 %v1671, 111
        %v1773 = vpop.permute.xlu0 %1772
        %1774 = vrot.lane.b32.xlu0 %v1672, 111
        %v1775 = vpop.permute.xlu0 %1774
        %1776 = vrot.lane.b32.xlu0 %v1668, 111
        %v1777 = vpop.permute.xlu0 %1776
        %vm1778 = vcmask 908288
        %v1779 = vsel %vm1778, %v1683, %v1685
        %v1780 = vsel %vm1778, %v1685, %v1687
        %v1781 = vsel %vm1778, %v1689, %v1691
        %v1782 = vsel %vm1778, %v1691, %v1693
        %v1783 = vsel %vm1778, %v1695, %v1697
        %v1784 = vsel %vm1778, %v1697, %v1699
        %v1785 = vsel %vm1778, %v1701, %v1703
        %v1786 = vsel %vm1778, %v1703, %v1705
        %v1787 = vsel %vm1778, %v1707, %v1709
        %v1788 = vsel %vm1778, %v1709, %v1711
        %v1789 = vsel %vm1778, %v1713, %v1715
        %v1790 = vsel %vm1778, %v1715, %v1717
        %v1791 = vsel %vm1778, %v1719, %v1721
        %v1792 = vsel %vm1778, %v1721, %v1723
        %v1793 = vsel %vm1778, %v1725, %v1727
        %v1794 = vsel %vm1778, %v1727, %v1729
        %v1795 = vsel %vm1778, %v1731, %v1733
        %v1796 = vsel %vm1778, %v1733, %v1735
        %v1797 = vsel %vm1778, %v1737, %v1739
        %v1798 = vsel %vm1778, %v1739, %v1741
        %v1799 = vsel %vm1778, %v1743, %v1745
        %v1800 = vsel %vm1778, %v1745, %v1747
        %v1801 = vsel %vm1778, %v1749, %v1751
        %v1802 = vsel %vm1778, %v1751, %v1753
        %v1803 = vsel %vm1778, %v1755, %v1757
        %v1804 = vsel %vm1778, %v1757, %v1759
        %v1805 = vsel %vm1778, %v1761, %v1763
        %v1806 = vsel %vm1778, %v1763, %v1765
        %v1807 = vsel %vm1778, %v1767, %v1769
        %v1808 = vsel %vm1778, %v1769, %v1771
        %v1809 = vsel %vm1778, %v1773, %v1775
        %v1810 = vsel %vm1778, %v1775, %v1777
        %v1843 = vand.u32 %v1809, 4294901760
        %1844 = vmatpush.msra.mxu0 %v1843
        %v1845 = vand.u32 %v1807, 4294901760
        %1846 = vmatpush.msra.mxu0 %v1845
        %v1847 = vand.u32 %v1805, 4294901760
        %1848 = vmatpush.msra.mxu0 %v1847
        %v1849 = vand.u32 %v1803, 4294901760
        %1850 = vmatpush.msra.mxu0 %v1849
        %v1851 = vand.u32 %v1801, 4294901760
        %1852 = vmatpush.msra.mxu0 %v1851
        %v1853 = vand.u32 %v1799, 4294901760
        %1854 = vmatpush.msra.mxu0 %v1853
        %v1855 = vand.u32 %v1797, 4294901760
        %1856 = vmatpush.msra.mxu0 %v1855
        %v1857 = vand.u32 %v1795, 4294901760
        %1858 = vmatpush.msra.mxu0 %v1857
        %v1859 = vand.u32 %v1793, 4294901760
        %1860 = vmatpush.msra.mxu0 %v1859
        %v1861 = vand.u32 %v1791, 4294901760
        %1862 = vmatpush.msra.mxu0 %v1861
        %v1863 = vand.u32 %v1789, 4294901760
        %1864 = vmatpush.msra.mxu0 %v1863
        %v1865 = vand.u32 %v1787, 4294901760
        %1866 = vmatpush.msra.mxu0 %v1865
        %v1867 = vand.u32 %v1785, 4294901760
        %1868 = vmatpush.msra.mxu0 %v1867
        %v1869 = vand.u32 %v1783, 4294901760
        %1870 = vmatpush.msra.mxu0 %v1869
        %v1871 = vand.u32 %v1781, 4294901760
        %1872 = vmatpush.msra.mxu0 %v1871
        %v1873 = vand.u32 %v1779, 4294901760
        %1874 = vmatpush.msra.mxu0 %v1873
        %v1875 = vand.u32 %v1674, 4294901760
        %v1876 = vsub.f32 %v1674, %v1875
        %v1877 = vand.u32 %v1876, 4294901760
        %v1878 = vsub.f32 %v1876, %v1877
        %v1879 = vand.u32 %v1878, 4294901760
        %1880 = vmatmul.f32.gmra.mxu0 %v1879
        %v1881 = vpop.f32.mrf.mxu0
        %v1882 = vadd.f32 0.0, %v1881
        %v1883 = vand.u32 %v1675, 4294901760
        %v1884 = vsub.f32 %v1675, %v1883
        %v1885 = vand.u32 %v1884, 4294901760
        %v1886 = vsub.f32 %v1884, %v1885
        %v1887 = vand.u32 %v1886, 4294901760
        %1888 = vmatmul.f32.gmra.mxu0 %v1887
        %v1889 = vpop.f32.mrf.mxu0
        %v1890 = vadd.f32 0.0, %v1889
        %1891 = vdwg.mxu0
        %v1892 = vand.u32 %v1809, 4294901760
        %v1893 = vsub.f32 %v1809, %v1892
        %v1894 = vand.u32 %v1893, 4294901760
        %v1895 = vsub.f32 %v1893, %v1894
        %v1896 = vand.u32 %v1895, 4294901760
        %1897 = vmatpush.msra.mxu0 %v1896
        %v1898 = vand.u32 %v1807, 4294901760
        %v1899 = vsub.f32 %v1807, %v1898
        %v1900 = vand.u32 %v1899, 4294901760
        %v1901 = vsub.f32 %v1899, %v1900
        %v1902 = vand.u32 %v1901, 4294901760
        %1903 = vmatpush.msra.mxu0 %v1902
        %v1904 = vand.u32 %v1805, 4294901760
        %v1905 = vsub.f32 %v1805, %v1904
        %v1906 = vand.u32 %v1905, 4294901760
        %v1907 = vsub.f32 %v1905, %v1906
        %v1908 = vand.u32 %v1907, 4294901760
        %1909 = vmatpush.msra.mxu0 %v1908
        %v1910 = vand.u32 %v1803, 4294901760
        %v1911 = vsub.f32 %v1803, %v1910
        %v1912 = vand.u32 %v1911, 4294901760
        %v1913 = vsub.f32 %v1911, %v1912
        %v1914 = vand.u32 %v1913, 4294901760
        %1915 = vmatpush.msra.mxu0 %v1914
        %v1916 = vand.u32 %v1801, 4294901760
        %v1917 = vsub.f32 %v1801, %v1916
        %v1918 = vand.u32 %v1917, 4294901760
        %v1919 = vsub.f32 %v1917, %v1918
        %v1920 = vand.u32 %v1919, 4294901760
        %1921 = vmatpush.msra.mxu0 %v1920
        %v1922 = vand.u32 %v1799, 4294901760
        %v1923 = vsub.f32 %v1799, %v1922
        %v1924 = vand.u32 %v1923, 4294901760
        %v1925 = vsub.f32 %v1923, %v1924
        %v1926 = vand.u32 %v1925, 4294901760
        %1927 = vmatpush.msra.mxu0 %v1926
        %v1928 = vand.u32 %v1797, 4294901760
        %v1929 = vsub.f32 %v1797, %v1928
        %v1930 = vand.u32 %v1929, 4294901760
        %v1931 = vsub.f32 %v1929, %v1930
        %v1932 = vand.u32 %v1931, 4294901760
        %1933 = vmatpush.msra.mxu0 %v1932
        %v1934 = vand.u32 %v1795, 4294901760
        %v1935 = vsub.f32 %v1795, %v1934
        %v1936 = vand.u32 %v1935, 4294901760
        %v1937 = vsub.f32 %v1935, %v1936
        %v1938 = vand.u32 %v1937, 4294901760
        %1939 = vmatpush.msra.mxu0 %v1938
        %v1940 = vand.u32 %v1793, 4294901760
        %v1941 = vsub.f32 %v1793, %v1940
        %v1942 = vand.u32 %v1941, 4294901760
        %v1943 = vsub.f32 %v1941, %v1942
        %v1944 = vand.u32 %v1943, 4294901760
        %1945 = vmatpush.msra.mxu0 %v1944
        %v1946 = vand.u32 %v1791, 4294901760
        %v1947 = vsub.f32 %v1791, %v1946
        %v1948 = vand.u32 %v1947, 4294901760
        %v1949 = vsub.f32 %v1947, %v1948
        %v1950 = vand.u32 %v1949, 4294901760
        %1951 = vmatpush.msra.mxu0 %v1950
        %v1952 = vand.u32 %v1789, 4294901760
        %v1953 = vsub.f32 %v1789, %v1952
        %v1954 = vand.u32 %v1953, 4294901760
        %v1955 = vsub.f32 %v1953, %v1954
        %v1956 = vand.u32 %v1955, 4294901760
        %1957 = vmatpush.msra.mxu0 %v1956
        %v1958 = vand.u32 %v1787, 4294901760
        %v1959 = vsub.f32 %v1787, %v1958
        %v1960 = vand.u32 %v1959, 4294901760
        %v1961 = vsub.f32 %v1959, %v1960
        %v1962 = vand.u32 %v1961, 4294901760
        %1963 = vmatpush.msra.mxu0 %v1962
        %v1964 = vand.u32 %v1785, 4294901760
        %v1965 = vsub.f32 %v1785, %v1964
        %v1966 = vand.u32 %v1965, 4294901760
        %v1967 = vsub.f32 %v1965, %v1966
        %v1968 = vand.u32 %v1967, 4294901760
        %1969 = vmatpush.msra.mxu0 %v1968
        %v1970 = vand.u32 %v1783, 4294901760
        %v1971 = vsub.f32 %v1783, %v1970
        %v1972 = vand.u32 %v1971, 4294901760
        %v1973 = vsub.f32 %v1971, %v1972
        %v1974 = vand.u32 %v1973, 4294901760
        %1975 = vmatpush.msra.mxu0 %v1974
        %v1976 = vand.u32 %v1781, 4294901760
        %v1977 = vsub.f32 %v1781, %v1976
        %v1978 = vand.u32 %v1977, 4294901760
        %v1979 = vsub.f32 %v1977, %v1978
        %v1980 = vand.u32 %v1979, 4294901760
        %1981 = vmatpush.msra.mxu0 %v1980
        %v1982 = vand.u32 %v1779, 4294901760
        %v1983 = vsub.f32 %v1779, %v1982
        %v1984 = vand.u32 %v1983, 4294901760
        %v1985 = vsub.f32 %v1983, %v1984
        %v1986 = vand.u32 %v1985, 4294901760
        %1987 = vmatpush.msra.mxu0 %v1986
        %v1988 = vand.u32 %v1674, 4294901760
        %1989 = vmatmul.f32.gmra.mxu0 %v1988
        %v1990 = vpop.f32.mrf.mxu0
        %v1991 = vadd.f32 %v1882, %v1990
        %v1992 = vand.u32 %v1675, 4294901760
        %1993 = vmatmul.f32.gmra.mxu0 %v1992
        %v1994 = vpop.f32.mrf.mxu0
        %v1995 = vadd.f32 %v1890, %v1994
        %1996 = vdwg.mxu0
        %v1997 = vand.u32 %v1809, 4294901760
        %v1998 = vsub.f32 %v1809, %v1997
        %1999 = vmatpush.msra.mxu0 %v1998
        %v2000 = vand.u32 %v1807, 4294901760
        %v2001 = vsub.f32 %v1807, %v2000
        %2002 = vmatpush.msra.mxu0 %v2001
        %v2003 = vand.u32 %v1805, 4294901760
        %v2004 = vsub.f32 %v1805, %v2003
        %2005 = vmatpush.msra.mxu0 %v2004
        %v2006 = vand.u32 %v1803, 4294901760
        %v2007 = vsub.f32 %v1803, %v2006
        %2008 = vmatpush.msra.mxu0 %v2007
        %v2009 = vand.u32 %v1801, 4294901760
        %v2010 = vsub.f32 %v1801, %v2009
        %2011 = vmatpush.msra.mxu0 %v2010
        %v2012 = vand.u32 %v1799, 4294901760
        %v2013 = vsub.f32 %v1799, %v2012
        %2014 = vmatpush.msra.mxu0 %v2013
        %v2015 = vand.u32 %v1797, 4294901760
        %v2016 = vsub.f32 %v1797, %v2015
        %2017 = vmatpush.msra.mxu0 %v2016
        %v2018 = vand.u32 %v1795, 4294901760
        %v2019 = vsub.f32 %v1795, %v2018
        %2020 = vmatpush.msra.mxu0 %v2019
        %v2021 = vand.u32 %v1793, 4294901760
        %v2022 = vsub.f32 %v1793, %v2021
        %2023 = vmatpush.msra.mxu0 %v2022
        %v2024 = vand.u32 %v1791, 4294901760
        %v2025 = vsub.f32 %v1791, %v2024
        %2026 = vmatpush.msra.mxu0 %v2025
        %v2027 = vand.u32 %v1789, 4294901760
        %v2028 = vsub.f32 %v1789, %v2027
        %2029 = vmatpush.msra.mxu0 %v2028
        %v2030 = vand.u32 %v1787, 4294901760
        %v2031 = vsub.f32 %v1787, %v2030
        %2032 = vmatpush.msra.mxu0 %v2031
        %v2033 = vand.u32 %v1785, 4294901760
        %v2034 = vsub.f32 %v1785, %v2033
        %2035 = vmatpush.msra.mxu0 %v2034
        %v2036 = vand.u32 %v1783, 4294901760
        %v2037 = vsub.f32 %v1783, %v2036
        %2038 = vmatpush.msra.mxu0 %v2037
        %v2039 = vand.u32 %v1781, 4294901760
        %v2040 = vsub.f32 %v1781, %v2039
        %2041 = vmatpush.msra.mxu0 %v2040
        %v2042 = vand.u32 %v1779, 4294901760
        %v2043 = vsub.f32 %v1779, %v2042
        %2044 = vmatpush.msra.mxu0 %v2043
        %v2045 = vand.u32 %v1674, 4294901760
        %v2046 = vsub.f32 %v1674, %v2045
        %2047 = vmatmul.f32.gmra.mxu0 %v2046
        %v2048 = vpop.f32.mrf.mxu0
        %v2049 = vadd.f32 %v1991, %v2048
        %v2050 = vand.u32 %v1675, 4294901760
        %v2051 = vsub.f32 %v1675, %v2050
        %2052 = vmatmul.f32.gmra.mxu0 %v2051
        %v2053 = vpop.f32.mrf.mxu0
        %v2054 = vadd.f32 %v1995, %v2053
        %2055 = vdwg.mxu0
        %v2056 = vand.u32 %v1809, 4294901760
        %2057 = vmatpush.msra.mxu0 %v2056
        %v2058 = vand.u32 %v1807, 4294901760
        %2059 = vmatpush.msra.mxu0 %v2058
        %v2060 = vand.u32 %v1805, 4294901760
        %2061 = vmatpush.msra.mxu0 %v2060
        %v2062 = vand.u32 %v1803, 4294901760
        %2063 = vmatpush.msra.mxu0 %v2062
        %v2064 = vand.u32 %v1801, 4294901760
        %2065 = vmatpush.msra.mxu0 %v2064
        %v2066 = vand.u32 %v1799, 4294901760
        %2067 = vmatpush.msra.mxu0 %v2066
        %v2068 = vand.u32 %v1797, 4294901760
        %2069 = vmatpush.msra.mxu0 %v2068
        %v2070 = vand.u32 %v1795, 4294901760
        %2071 = vmatpush.msra.mxu0 %v2070
        %v2072 = vand.u32 %v1793, 4294901760
        %2073 = vmatpush.msra.mxu0 %v2072
        %v2074 = vand.u32 %v1791, 4294901760
        %2075 = vmatpush.msra.mxu0 %v2074
        %v2076 = vand.u32 %v1789, 4294901760
        %2077 = vmatpush.msra.mxu0 %v2076
        %v2078 = vand.u32 %v1787, 4294901760
        %2079 = vmatpush.msra.mxu0 %v2078
        %v2080 = vand.u32 %v1785, 4294901760
        %2081 = vmatpush.msra.mxu0 %v2080
        %v2082 = vand.u32 %v1783, 4294901760
        %2083 = vmatpush.msra.mxu0 %v2082
        %v2084 = vand.u32 %v1781, 4294901760
        %2085 = vmatpush.msra.mxu0 %v2084
        %v2086 = vand.u32 %v1779, 4294901760
        %2087 = vmatpush.msra.mxu0 %v2086
        %v2088 = vand.u32 %v1674, 4294901760
        %v2089 = vsub.f32 %v1674, %v2088
        %v2090 = vand.u32 %v2089, 4294901760
        %2091 = vmatmul.f32.gmra.mxu0 %v2090
        %v2092 = vpop.f32.mrf.mxu0
        %v2093 = vadd.f32 %v2049, %v2092
        %v2094 = vand.u32 %v1675, 4294901760
        %v2095 = vsub.f32 %v1675, %v2094
        %v2096 = vand.u32 %v2095, 4294901760
        %2097 = vmatmul.f32.gmra.mxu0 %v2096
        %v2098 = vpop.f32.mrf.mxu0
        %v2099 = vadd.f32 %v2054, %v2098
        %2100 = vdwg.mxu0
        %v2101 = vand.u32 %v1809, 4294901760
        %v2102 = vsub.f32 %v1809, %v2101
        %v2103 = vand.u32 %v2102, 4294901760
        %2104 = vmatpush.msra.mxu0 %v2103
        %v2105 = vand.u32 %v1807, 4294901760
        %v2106 = vsub.f32 %v1807, %v2105
        %v2107 = vand.u32 %v2106, 4294901760
        %2108 = vmatpush.msra.mxu0 %v2107
        %v2109 = vand.u32 %v1805, 4294901760
        %v2110 = vsub.f32 %v1805, %v2109
        %v2111 = vand.u32 %v2110, 4294901760
        %2112 = vmatpush.msra.mxu0 %v2111
        %v2113 = vand.u32 %v1803, 4294901760
        %v2114 = vsub.f32 %v1803, %v2113
        %v2115 = vand.u32 %v2114, 4294901760
        %2116 = vmatpush.msra.mxu0 %v2115
        %v2117 = vand.u32 %v1801, 4294901760
        %v2118 = vsub.f32 %v1801, %v2117
        %v2119 = vand.u32 %v2118, 4294901760
        %2120 = vmatpush.msra.mxu0 %v2119
        %v2121 = vand.u32 %v1799, 4294901760
        %v2122 = vsub.f32 %v1799, %v2121
        %v2123 = vand.u32 %v2122, 4294901760
        %2124 = vmatpush.msra.mxu0 %v2123
        %v2125 = vand.u32 %v1797, 4294901760
        %v2126 = vsub.f32 %v1797, %v2125
        %v2127 = vand.u32 %v2126, 4294901760
        %2128 = vmatpush.msra.mxu0 %v2127
        %v2129 = vand.u32 %v1795, 4294901760
        %v2130 = vsub.f32 %v1795, %v2129
        %v2131 = vand.u32 %v2130, 4294901760
        %2132 = vmatpush.msra.mxu0 %v2131
        %v2133 = vand.u32 %v1793, 4294901760
        %v2134 = vsub.f32 %v1793, %v2133
        %v2135 = vand.u32 %v2134, 4294901760
        %2136 = vmatpush.msra.mxu0 %v2135
        %v2137 = vand.u32 %v1791, 4294901760
        %v2138 = vsub.f32 %v1791, %v2137
        %v2139 = vand.u32 %v2138, 4294901760
        %2140 = vmatpush.msra.mxu0 %v2139
        %v2141 = vand.u32 %v1789, 4294901760
        %v2142 = vsub.f32 %v1789, %v2141
        %v2143 = vand.u32 %v2142, 4294901760
        %2144 = vmatpush.msra.mxu0 %v2143
        %v2145 = vand.u32 %v1787, 4294901760
        %v2146 = vsub.f32 %v1787, %v2145
        %v2147 = vand.u32 %v2146, 4294901760
        %2148 = vmatpush.msra.mxu0 %v2147
        %v2149 = vand.u32 %v1785, 4294901760
        %v2150 = vsub.f32 %v1785, %v2149
        %v2151 = vand.u32 %v2150, 4294901760
        %2152 = vmatpush.msra.mxu0 %v2151
        %v2153 = vand.u32 %v1783, 4294901760
        %v2154 = vsub.f32 %v1783, %v2153
        %v2155 = vand.u32 %v2154, 4294901760
        %2156 = vmatpush.msra.mxu0 %v2155
        %v2157 = vand.u32 %v1781, 4294901760
        %v2158 = vsub.f32 %v1781, %v2157
        %v2159 = vand.u32 %v2158, 4294901760
        %2160 = vmatpush.msra.mxu0 %v2159
        %v2161 = vand.u32 %v1779, 4294901760
        %v2162 = vsub.f32 %v1779, %v2161
        %v2163 = vand.u32 %v2162, 4294901760
        %2164 = vmatpush.msra.mxu0 %v2163
        %v2165 = vand.u32 %v1674, 4294901760
        %2166 = vmatmul.f32.gmra.mxu0 %v2165
        %v2167 = vpop.f32.mrf.mxu0
        %v2168 = vadd.f32 %v2093, %v2167
        %v2169 = vand.u32 %v1675, 4294901760
        %2170 = vmatmul.f32.gmra.mxu0 %v2169
        %v2171 = vpop.f32.mrf.mxu0
        %v2172 = vadd.f32 %v2099, %v2171
        %2173 = vdwg.mxu0
        %v2174 = vand.u32 %v1809, 4294901760
        %2175 = vmatpush.msra.mxu0 %v2174
        %v2176 = vand.u32 %v1807, 4294901760
        %2177 = vmatpush.msra.mxu0 %v2176
        %v2178 = vand.u32 %v1805, 4294901760
        %2179 = vmatpush.msra.mxu0 %v2178
        %v2180 = vand.u32 %v1803, 4294901760
        %2181 = vmatpush.msra.mxu0 %v2180
        %v2182 = vand.u32 %v1801, 4294901760
        %2183 = vmatpush.msra.mxu0 %v2182
        %v2184 = vand.u32 %v1799, 4294901760
        %2185 = vmatpush.msra.mxu0 %v2184
        %v2186 = vand.u32 %v1797, 4294901760
        %2187 = vmatpush.msra.mxu0 %v2186
        %v2188 = vand.u32 %v1795, 4294901760
        %2189 = vmatpush.msra.mxu0 %v2188
        %v2190 = vand.u32 %v1793, 4294901760
        %2191 = vmatpush.msra.mxu0 %v2190
        %v2192 = vand.u32 %v1791, 4294901760
        %2193 = vmatpush.msra.mxu0 %v2192
        %v2194 = vand.u32 %v1789, 4294901760
        %2195 = vmatpush.msra.mxu0 %v2194
        %v2196 = vand.u32 %v1787, 4294901760
        %2197 = vmatpush.msra.mxu0 %v2196
        %v2198 = vand.u32 %v1785, 4294901760
        %2199 = vmatpush.msra.mxu0 %v2198
        %v2200 = vand.u32 %v1783, 4294901760
        %2201 = vmatpush.msra.mxu0 %v2200
        %v2202 = vand.u32 %v1781, 4294901760
        %2203 = vmatpush.msra.mxu0 %v2202
        %v2204 = vand.u32 %v1779, 4294901760
        %2205 = vmatpush.msra.mxu0 %v2204
        %v2206 = vand.u32 %v1674, 4294901760
        %2207 = vmatmul.f32.gmra.mxu0 %v2206
        %v2208 = vpop.f32.mrf.mxu0
        %v2209 = vadd.f32 %v2168, %v2208
        %v2210 = vand.u32 %v1675, 4294901760
        %2211 = vmatmul.f32.gmra.mxu0 %v2210
        %v2212 = vpop.f32.mrf.mxu0
        %v2213 = vadd.f32 %v2172, %v2212
        %2214 = vdwg.mxu0
        %v2215 = vand.u32 %v1810, 4294901760
        %2216 = vmatpush.msra.mxu0 %v2215
        %v2217 = vand.u32 %v1808, 4294901760
        %2218 = vmatpush.msra.mxu0 %v2217
        %v2219 = vand.u32 %v1806, 4294901760
        %2220 = vmatpush.msra.mxu0 %v2219
        %v2221 = vand.u32 %v1804, 4294901760
        %2222 = vmatpush.msra.mxu0 %v2221
        %v2223 = vand.u32 %v1802, 4294901760
        %2224 = vmatpush.msra.mxu0 %v2223
        %v2225 = vand.u32 %v1800, 4294901760
        %2226 = vmatpush.msra.mxu0 %v2225
        %v2227 = vand.u32 %v1798, 4294901760
        %2228 = vmatpush.msra.mxu0 %v2227
        %v2229 = vand.u32 %v1796, 4294901760
        %2230 = vmatpush.msra.mxu0 %v2229
        %v2231 = vand.u32 %v1794, 4294901760
        %2232 = vmatpush.msra.mxu0 %v2231
        %v2233 = vand.u32 %v1792, 4294901760
        %2234 = vmatpush.msra.mxu0 %v2233
        %v2235 = vand.u32 %v1790, 4294901760
        %2236 = vmatpush.msra.mxu0 %v2235
        %v2237 = vand.u32 %v1788, 4294901760
        %2238 = vmatpush.msra.mxu0 %v2237
        %v2239 = vand.u32 %v1786, 4294901760
        %2240 = vmatpush.msra.mxu0 %v2239
        %v2241 = vand.u32 %v1784, 4294901760
        %2242 = vmatpush.msra.mxu0 %v2241
        %v2243 = vand.u32 %v1782, 4294901760
        %2244 = vmatpush.msra.mxu0 %v2243
        %v2245 = vand.u32 %v1780, 4294901760
        %2246 = vmatpush.msra.mxu0 %v2245
        %v2247 = vand.u32 %v1674, 4294901760
        %v2248 = vsub.f32 %v1674, %v2247
        %v2249 = vand.u32 %v2248, 4294901760
        %v2250 = vsub.f32 %v2248, %v2249
        %v2251 = vand.u32 %v2250, 4294901760
        %2252 = vmatmul.f32.gmra.mxu0 %v2251
        %v2253 = vpop.f32.mrf.mxu0
        %v2254 = vadd.f32 0.0, %v2253
        %v2255 = vand.u32 %v1675, 4294901760
        %v2256 = vsub.f32 %v1675, %v2255
        %v2257 = vand.u32 %v2256, 4294901760
        %v2258 = vsub.f32 %v2256, %v2257
        %v2259 = vand.u32 %v2258, 4294901760
        %2260 = vmatmul.f32.gmra.mxu0 %v2259
        %v2261 = vpop.f32.mrf.mxu0
        %v2262 = vadd.f32 0.0, %v2261
        %2263 = vdwg.mxu0
        %v2264 = vand.u32 %v1810, 4294901760
        %v2265 = vsub.f32 %v1810, %v2264
        %v2266 = vand.u32 %v2265, 4294901760
        %v2267 = vsub.f32 %v2265, %v2266
        %v2268 = vand.u32 %v2267, 4294901760
        %2269 = vmatpush.msra.mxu0 %v2268
        %v2270 = vand.u32 %v1808, 4294901760
        %v2271 = vsub.f32 %v1808, %v2270
        %v2272 = vand.u32 %v2271, 4294901760
        %v2273 = vsub.f32 %v2271, %v2272
        %v2274 = vand.u32 %v2273, 4294901760
        %2275 = vmatpush.msra.mxu0 %v2274
        %v2276 = vand.u32 %v1806, 4294901760
        %v2277 = vsub.f32 %v1806, %v2276
        %v2278 = vand.u32 %v2277, 4294901760
        %v2279 = vsub.f32 %v2277, %v2278
        %v2280 = vand.u32 %v2279, 4294901760
        %2281 = vmatpush.msra.mxu0 %v2280
        %v2282 = vand.u32 %v1804, 4294901760
        %v2283 = vsub.f32 %v1804, %v2282
        %v2284 = vand.u32 %v2283, 4294901760
        %v2285 = vsub.f32 %v2283, %v2284
        %v2286 = vand.u32 %v2285, 4294901760
        %2287 = vmatpush.msra.mxu0 %v2286
        %v2288 = vand.u32 %v1802, 4294901760
        %v2289 = vsub.f32 %v1802, %v2288
        %v2290 = vand.u32 %v2289, 4294901760
        %v2291 = vsub.f32 %v2289, %v2290
        %v2292 = vand.u32 %v2291, 4294901760
        %2293 = vmatpush.msra.mxu0 %v2292
        %v2294 = vand.u32 %v1800, 4294901760
        %v2295 = vsub.f32 %v1800, %v2294
        %v2296 = vand.u32 %v2295, 4294901760
        %v2297 = vsub.f32 %v2295, %v2296
        %v2298 = vand.u32 %v2297, 4294901760
        %2299 = vmatpush.msra.mxu0 %v2298
        %v2300 = vand.u32 %v1798, 4294901760
        %v2301 = vsub.f32 %v1798, %v2300
        %v2302 = vand.u32 %v2301, 4294901760
        %v2303 = vsub.f32 %v2301, %v2302
        %v2304 = vand.u32 %v2303, 4294901760
        %2305 = vmatpush.msra.mxu0 %v2304
        %v2306 = vand.u32 %v1796, 4294901760
        %v2307 = vsub.f32 %v1796, %v2306
        %v2308 = vand.u32 %v2307, 4294901760
        %v2309 = vsub.f32 %v2307, %v2308
        %v2310 = vand.u32 %v2309, 4294901760
        %2311 = vmatpush.msra.mxu0 %v2310
        %v2312 = vand.u32 %v1794, 4294901760
        %v2313 = vsub.f32 %v1794, %v2312
        %v2314 = vand.u32 %v2313, 4294901760
        %v2315 = vsub.f32 %v2313, %v2314
        %v2316 = vand.u32 %v2315, 4294901760
        %2317 = vmatpush.msra.mxu0 %v2316
        %v2318 = vand.u32 %v1792, 4294901760
        %v2319 = vsub.f32 %v1792, %v2318
        %v2320 = vand.u32 %v2319, 4294901760
        %v2321 = vsub.f32 %v2319, %v2320
        %v2322 = vand.u32 %v2321, 4294901760
        %2323 = vmatpush.msra.mxu0 %v2322
        %v2324 = vand.u32 %v1790, 4294901760
        %v2325 = vsub.f32 %v1790, %v2324
        %v2326 = vand.u32 %v2325, 4294901760
        %v2327 = vsub.f32 %v2325, %v2326
        %v2328 = vand.u32 %v2327, 4294901760
        %2329 = vmatpush.msra.mxu0 %v2328
        %v2330 = vand.u32 %v1788, 4294901760
        %v2331 = vsub.f32 %v1788, %v2330
        %v2332 = vand.u32 %v2331, 4294901760
        %v2333 = vsub.f32 %v2331, %v2332
        %v2334 = vand.u32 %v2333, 4294901760
        %2335 = vmatpush.msra.mxu0 %v2334
        %v2336 = vand.u32 %v1786, 4294901760
        %v2337 = vsub.f32 %v1786, %v2336
        %v2338 = vand.u32 %v2337, 4294901760
        %v2339 = vsub.f32 %v2337, %v2338
        %v2340 = vand.u32 %v2339, 4294901760
        %2341 = vmatpush.msra.mxu0 %v2340
        %v2342 = vand.u32 %v1784, 4294901760
        %v2343 = vsub.f32 %v1784, %v2342
        %v2344 = vand.u32 %v2343, 4294901760
        %v2345 = vsub.f32 %v2343, %v2344
        %v2346 = vand.u32 %v2345, 4294901760
        %2347 = vmatpush.msra.mxu0 %v2346
        %v2348 = vand.u32 %v1782, 4294901760
        %v2349 = vsub.f32 %v1782, %v2348
        %v2350 = vand.u32 %v2349, 4294901760
        %v2351 = vsub.f32 %v2349, %v2350
        %v2352 = vand.u32 %v2351, 4294901760
        %2353 = vmatpush.msra.mxu0 %v2352
        %v2354 = vand.u32 %v1780, 4294901760
        %v2355 = vsub.f32 %v1780, %v2354
        %v2356 = vand.u32 %v2355, 4294901760
        %v2357 = vsub.f32 %v2355, %v2356
        %v2358 = vand.u32 %v2357, 4294901760
        %2359 = vmatpush.msra.mxu0 %v2358
        %v2360 = vand.u32 %v1674, 4294901760
        %2361 = vmatmul.f32.gmra.mxu0 %v2360
        %v2362 = vpop.f32.mrf.mxu0
        %v2363 = vadd.f32 %v2254, %v2362
        %v2364 = vand.u32 %v1675, 4294901760
        %2365 = vmatmul.f32.gmra.mxu0 %v2364
        %v2366 = vpop.f32.mrf.mxu0
        %v2367 = vadd.f32 %v2262, %v2366
        %2368 = vdwg.mxu0
        %v2369 = vand.u32 %v1810, 4294901760
        %v2370 = vsub.f32 %v1810, %v2369
        %2371 = vmatpush.msra.mxu0 %v2370
        %v2372 = vand.u32 %v1808, 4294901760
        %v2373 = vsub.f32 %v1808, %v2372
        %2374 = vmatpush.msra.mxu0 %v2373
        %v2375 = vand.u32 %v1806, 4294901760
        %v2376 = vsub.f32 %v1806, %v2375
        %2377 = vmatpush.msra.mxu0 %v2376
        %v2378 = vand.u32 %v1804, 4294901760
        %v2379 = vsub.f32 %v1804, %v2378
        %2380 = vmatpush.msra.mxu0 %v2379
        %v2381 = vand.u32 %v1802, 4294901760
        %v2382 = vsub.f32 %v1802, %v2381
        %2383 = vmatpush.msra.mxu0 %v2382
        %v2384 = vand.u32 %v1800, 4294901760
        %v2385 = vsub.f32 %v1800, %v2384
        %2386 = vmatpush.msra.mxu0 %v2385
        %v2387 = vand.u32 %v1798, 4294901760
        %v2388 = vsub.f32 %v1798, %v2387
        %2389 = vmatpush.msra.mxu0 %v2388
        %v2390 = vand.u32 %v1796, 4294901760
        %v2391 = vsub.f32 %v1796, %v2390
        %2392 = vmatpush.msra.mxu0 %v2391
        %v2393 = vand.u32 %v1794, 4294901760
        %v2394 = vsub.f32 %v1794, %v2393
        %2395 = vmatpush.msra.mxu0 %v2394
        %v2396 = vand.u32 %v1792, 4294901760
        %v2397 = vsub.f32 %v1792, %v2396
        %2398 = vmatpush.msra.mxu0 %v2397
        %v2399 = vand.u32 %v1790, 4294901760
        %v2400 = vsub.f32 %v1790, %v2399
        %2401 = vmatpush.msra.mxu0 %v2400
        %v2402 = vand.u32 %v1788, 4294901760
        %v2403 = vsub.f32 %v1788, %v2402
        %2404 = vmatpush.msra.mxu0 %v2403
        %v2405 = vand.u32 %v1786, 4294901760
        %v2406 = vsub.f32 %v1786, %v2405
        %2407 = vmatpush.msra.mxu0 %v2406
        %v2408 = vand.u32 %v1784, 4294901760
        %v2409 = vsub.f32 %v1784, %v2408
        %2410 = vmatpush.msra.mxu0 %v2409
        %v2411 = vand.u32 %v1782, 4294901760
        %v2412 = vsub.f32 %v1782, %v2411
        %2413 = vmatpush.msra.mxu0 %v2412
        %v2414 = vand.u32 %v1780, 4294901760
        %v2415 = vsub.f32 %v1780, %v2414
        %2416 = vmatpush.msra.mxu0 %v2415
        %v2417 = vand.u32 %v1674, 4294901760
        %v2418 = vsub.f32 %v1674, %v2417
        %2419 = vmatmul.f32.gmra.mxu0 %v2418
        %v2420 = vpop.f32.mrf.mxu0
        %v2421 = vadd.f32 %v2363, %v2420
        %v2422 = vand.u32 %v1675, 4294901760
        %v2423 = vsub.f32 %v1675, %v2422
        %2424 = vmatmul.f32.gmra.mxu0 %v2423
        %v2425 = vpop.f32.mrf.mxu0
        %v2426 = vadd.f32 %v2367, %v2425
        %2427 = vdwg.mxu0
        %v2428 = vand.u32 %v1810, 4294901760
        %2429 = vmatpush.msra.mxu0 %v2428
        %v2430 = vand.u32 %v1808, 4294901760
        %2431 = vmatpush.msra.mxu0 %v2430
        %v2432 = vand.u32 %v1806, 4294901760
        %2433 = vmatpush.msra.mxu0 %v2432
        %v2434 = vand.u32 %v1804, 4294901760
        %2435 = vmatpush.msra.mxu0 %v2434
        %v2436 = vand.u32 %v1802, 4294901760
        %2437 = vmatpush.msra.mxu0 %v2436
        %v2438 = vand.u32 %v1800, 4294901760
        %2439 = vmatpush.msra.mxu0 %v2438
        %v2440 = vand.u32 %v1798, 4294901760
        %2441 = vmatpush.msra.mxu0 %v2440
        %v2442 = vand.u32 %v1796, 4294901760
        %2443 = vmatpush.msra.mxu0 %v2442
        %v2444 = vand.u32 %v1794, 4294901760
        %2445 = vmatpush.msra.mxu0 %v2444
        %v2446 = vand.u32 %v1792, 4294901760
        %2447 = vmatpush.msra.mxu0 %v2446
        %v2448 = vand.u32 %v1790, 4294901760
        %2449 = vmatpush.msra.mxu0 %v2448
        %v2450 = vand.u32 %v1788, 4294901760
        %2451 = vmatpush.msra.mxu0 %v2450
        %v2452 = vand.u32 %v1786, 4294901760
        %2453 = vmatpush.msra.mxu0 %v2452
        %v2454 = vand.u32 %v1784, 4294901760
        %2455 = vmatpush.msra.mxu0 %v2454
        %v2456 = vand.u32 %v1782, 4294901760
        %2457 = vmatpush.msra.mxu0 %v2456
        %v2458 = vand.u32 %v1780, 4294901760
        %2459 = vmatpush.msra.mxu0 %v2458
        %v2460 = vand.u32 %v1674, 4294901760
        %v2461 = vsub.f32 %v1674, %v2460
        %v2462 = vand.u32 %v2461, 4294901760
        %2463 = vmatmul.f32.gmra.mxu0 %v2462
        %v2464 = vpop.f32.mrf.mxu0
        %v2465 = vadd.f32 %v2421, %v2464
        %v2466 = vand.u32 %v1675, 4294901760
        %v2467 = vsub.f32 %v1675, %v2466
        %v2468 = vand.u32 %v2467, 4294901760
        %2469 = vmatmul.f32.gmra.mxu0 %v2468
        %v2470 = vpop.f32.mrf.mxu0
        %v2471 = vadd.f32 %v2426, %v2470
        %2472 = vdwg.mxu0
        %v2473 = vand.u32 %v1810, 4294901760
        %v2474 = vsub.f32 %v1810, %v2473
        %v2475 = vand.u32 %v2474, 4294901760
        %2476 = vmatpush.msra.mxu0 %v2475
        %v2477 = vand.u32 %v1808, 4294901760
        %v2478 = vsub.f32 %v1808, %v2477
        %v2479 = vand.u32 %v2478, 4294901760
        %2480 = vmatpush.msra.mxu0 %v2479
        %v2481 = vand.u32 %v1806, 4294901760
        %v2482 = vsub.f32 %v1806, %v2481
        %v2483 = vand.u32 %v2482, 4294901760
        %2484 = vmatpush.msra.mxu0 %v2483
        %v2485 = vand.u32 %v1804, 4294901760
        %v2486 = vsub.f32 %v1804, %v2485
        %v2487 = vand.u32 %v2486, 4294901760
        %2488 = vmatpush.msra.mxu0 %v2487
        %v2489 = vand.u32 %v1802, 4294901760
        %v2490 = vsub.f32 %v1802, %v2489
        %v2491 = vand.u32 %v2490, 4294901760
        %2492 = vmatpush.msra.mxu0 %v2491
        %v2493 = vand.u32 %v1800, 4294901760
        %v2494 = vsub.f32 %v1800, %v2493
        %v2495 = vand.u32 %v2494, 4294901760
        %2496 = vmatpush.msra.mxu0 %v2495
        %v2497 = vand.u32 %v1798, 4294901760
        %v2498 = vsub.f32 %v1798, %v2497
        %v2499 = vand.u32 %v2498, 4294901760
        %2500 = vmatpush.msra.mxu0 %v2499
        %v2501 = vand.u32 %v1796, 4294901760
        %v2502 = vsub.f32 %v1796, %v2501
        %v2503 = vand.u32 %v2502, 4294901760
        %2504 = vmatpush.msra.mxu0 %v2503
        %v2505 = vand.u32 %v1794, 4294901760
        %v2506 = vsub.f32 %v1794, %v2505
        %v2507 = vand.u32 %v2506, 4294901760
        %2508 = vmatpush.msra.mxu0 %v2507
        %v2509 = vand.u32 %v1792, 4294901760
        %v2510 = vsub.f32 %v1792, %v2509
        %v2511 = vand.u32 %v2510, 4294901760
        %2512 = vmatpush.msra.mxu0 %v2511
        %v2513 = vand.u32 %v1790, 4294901760
        %v2514 = vsub.f32 %v1790, %v2513
        %v2515 = vand.u32 %v2514, 4294901760
        %2516 = vmatpush.msra.mxu0 %v2515
        %v2517 = vand.u32 %v1788, 4294901760
        %v2518 = vsub.f32 %v1788, %v2517
        %v2519 = vand.u32 %v2518, 4294901760
        %2520 = vmatpush.msra.mxu0 %v2519
        %v2521 = vand.u32 %v1786, 4294901760
        %v2522 = vsub.f32 %v1786, %v2521
        %v2523 = vand.u32 %v2522, 4294901760
        %2524 = vmatpush.msra.mxu0 %v2523
        %v2525 = vand.u32 %v1784, 4294901760
        %v2526 = vsub.f32 %v1784, %v2525
        %v2527 = vand.u32 %v2526, 4294901760
        %2528 = vmatpush.msra.mxu0 %v2527
        %v2529 = vand.u32 %v1782, 4294901760
        %v2530 = vsub.f32 %v1782, %v2529
        %v2531 = vand.u32 %v2530, 4294901760
        %2532 = vmatpush.msra.mxu0 %v2531
        %v2533 = vand.u32 %v1780, 4294901760
        %v2534 = vsub.f32 %v1780, %v2533
        %v2535 = vand.u32 %v2534, 4294901760
        %2536 = vmatpush.msra.mxu0 %v2535
        %v2537 = vand.u32 %v1674, 4294901760
        %2538 = vmatmul.f32.gmra.mxu0 %v2537
        %v2539 = vpop.f32.mrf.mxu0
        %v2540 = vadd.f32 %v2465, %v2539
        %v2541 = vand.u32 %v1675, 4294901760
        %2542 = vmatmul.f32.gmra.mxu0 %v2541
        %v2543 = vpop.f32.mrf.mxu0
        %v2544 = vadd.f32 %v2471, %v2543
        %2545 = vdwg.mxu0
        %v2546 = vand.u32 %v1810, 4294901760
        %2547 = vmatpush.msra.mxu0 %v2546
        %v2548 = vand.u32 %v1808, 4294901760
        %2549 = vmatpush.msra.mxu0 %v2548
        %v2550 = vand.u32 %v1806, 4294901760
        %2551 = vmatpush.msra.mxu0 %v2550
        %v2552 = vand.u32 %v1804, 4294901760
        %2553 = vmatpush.msra.mxu0 %v2552
        %v2554 = vand.u32 %v1802, 4294901760
        %2555 = vmatpush.msra.mxu0 %v2554
        %v2556 = vand.u32 %v1800, 4294901760
        %2557 = vmatpush.msra.mxu0 %v2556
        %v2558 = vand.u32 %v1798, 4294901760
        %2559 = vmatpush.msra.mxu0 %v2558
        %v2560 = vand.u32 %v1796, 4294901760
        %2561 = vmatpush.msra.mxu0 %v2560
        %v2562 = vand.u32 %v1794, 4294901760
        %2563 = vmatpush.msra.mxu0 %v2562
        %v2564 = vand.u32 %v1792, 4294901760
        %2565 = vmatpush.msra.mxu0 %v2564
        %v2566 = vand.u32 %v1790, 4294901760
        %2567 = vmatpush.msra.mxu0 %v2566
        %v2568 = vand.u32 %v1788, 4294901760
        %2569 = vmatpush.msra.mxu0 %v2568
        %v2570 = vand.u32 %v1786, 4294901760
        %2571 = vmatpush.msra.mxu0 %v2570
        %v2572 = vand.u32 %v1784, 4294901760
        %2573 = vmatpush.msra.mxu0 %v2572
        %v2574 = vand.u32 %v1782, 4294901760
        %2575 = vmatpush.msra.mxu0 %v2574
        %v2576 = vand.u32 %v1780, 4294901760
        %2577 = vmatpush.msra.mxu0 %v2576
        %v2578 = vand.u32 %v1674, 4294901760
        %2579 = vmatmul.f32.gmra.mxu0 %v2578
        %v2580 = vpop.f32.mrf.mxu0
        %v2581 = vadd.f32 %v2540, %v2580
        %v2582 = vand.u32 %v1675, 4294901760
        %2583 = vmatmul.f32.gmra.mxu0 %v2582
        %v2584 = vpop.f32.mrf.mxu0
        %v2585 = vadd.f32 %v2544, %v2584
        %2586 = vdwg.mxu0
        %v2587 = vadd.f32 %v1354, %v2209
        %v2588 = vadd.f32 %v1355, %v2581
        %v2589 = vadd.f32 %v1356, %v2213
        %v2590 = vadd.f32 %v1357, %v2585
        %s2591 = scalar_lea.vmem [#allocation7], 32
        %v2592 = vld [vmem:[%s2591] ss:$8 sm:$0x3]
        %v2594 = vperm.slane %v2592, 0
        %v2595 = vperm.slane %v2592, 1
        %2596 = vrot.lane.b32.xlu0 %v2594, 34
        %v2597 = vpop.permute.xlu0 %2596
        %2598 = vrot.lane.b32.xlu0 %v2595, 34
        %v2599 = vpop.permute.xlu0 %2598
        %vm2600 = vcmask 277504
        %v2601 = vsel %vm2600, %v2597, %v2599
        %v2605 = vmul.f32 %v251, %v2597
        %v2606 = vmul.f32 %v252, %v2601
        %v2607 = vmul.f32 %v253, %v2599
        %v2608 = vmul.f32 %v254, %v2597
        %v2609 = vmul.f32 %v255, %v2601
        %v2610 = vmul.f32 %v256, %v2599
        %s2611 = scalar_lea.vmem [#allocation7], 33
        %v2612 = vld [vmem:[%s2611] ss:$8 sm:$0x3]
        %v2614 = vperm.slane %v2612, 0
        %v2615 = vperm.slane %v2612, 1
        %2616 = vrot.lane.b32.xlu0 %v2614, 35
        %v2617 = vpop.permute.xlu0 %2616
        %2618 = vrot.lane.b32.xlu0 %v2615, 35
        %v2619 = vpop.permute.xlu0 %2618
        %vm2620 = vcmask 285696
        %v2621 = vsel %vm2620, %v2617, %v2619
        %v2625 = vmul.f32 %v251, %v2617
        %v2626 = vmul.f32 %v252, %v2621
        %v2627 = vmul.f32 %v253, %v2619
        %v2628 = vmul.f32 %v254, %v2617
        %v2629 = vmul.f32 %v255, %v2621
        %v2630 = vmul.f32 %v256, %v2619
        %s2631 = scalar_lea.vmem [#allocation7], 34
        %v2632 = vld [vmem:[%s2631] ss:$8 sm:$0x3]
        %v2634 = vperm.slane %v2632, 0
        %v2635 = vperm.slane %v2632, 1
        %2636 = vrot.lane.b32.xlu0 %v2634, 36
        %v2637 = vpop.permute.xlu0 %2636
        %2638 = vrot.lane.b32.xlu0 %v2635, 36
        %v2639 = vpop.permute.xlu0 %2638
        %vm2640 = vcmask 293888
        %v2641 = vsel %vm2640, %v2637, %v2639
        %v2645 = vmul.f32 %v251, %v2637
        %v2646 = vmul.f32 %v252, %v2641
        %v2647 = vmul.f32 %v253, %v2639
        %v2648 = vmul.f32 %v254, %v2637
        %v2649 = vmul.f32 %v255, %v2641
        %v2650 = vmul.f32 %v256, %v2639
        %s2651 = scalar_lea.vmem [#allocation7], 35
        %v2652 = vld [vmem:[%s2651] ss:$8 sm:$0x3]
        %v2654 = vperm.slane %v2652, 0
        %v2655 = vperm.slane %v2652, 1
        %2656 = vrot.lane.b32.xlu0 %v2654, 37
        %v2657 = vpop.permute.xlu0 %2656
        %2658 = vrot.lane.b32.xlu0 %v2655, 37
        %v2659 = vpop.permute.xlu0 %2658
        %vm2660 = vcmask 302080
        %v2661 = vsel %vm2660, %v2657, %v2659
        %v2665 = vmul.f32 %v251, %v2657
        %v2666 = vmul.f32 %v252, %v2661
        %v2667 = vmul.f32 %v253, %v2659
        %v2668 = vmul.f32 %v254, %v2657
        %v2669 = vmul.f32 %v255, %v2661
        %v2670 = vmul.f32 %v256, %v2659
        %s2671 = scalar_lea.vmem [#allocation7], 36
        %v2672 = vld [vmem:[%s2671] ss:$8 sm:$0x3]
        %v2674 = vperm.slane %v2672, 0
        %v2675 = vperm.slane %v2672, 1
        %2676 = vrot.lane.b32.xlu0 %v2674, 38
        %v2677 = vpop.permute.xlu0 %2676
        %2678 = vrot.lane.b32.xlu0 %v2675, 38
        %v2679 = vpop.permute.xlu0 %2678
        %vm2680 = vcmask 310272
        %v2681 = vsel %vm2680, %v2677, %v2679
        %v2685 = vmul.f32 %v251, %v2677
        %v2686 = vmul.f32 %v252, %v2681
        %v2687 = vmul.f32 %v253, %v2679
        %v2688 = vmul.f32 %v254, %v2677
        %v2689 = vmul.f32 %v255, %v2681
        %v2690 = vmul.f32 %v256, %v2679
        %s2691 = scalar_lea.vmem [#allocation7], 37
        %v2692 = vld [vmem:[%s2691] ss:$8 sm:$0x3]
        %v2694 = vperm.slane %v2692, 0
        %v2695 = vperm.slane %v2692, 1
        %2696 = vrot.lane.b32.xlu0 %v2694, 48
        %v2697 = vpop.permute.xlu0 %2696
        %2698 = vrot.lane.b32.xlu0 %v2695, 48
        %v2699 = vpop.permute.xlu0 %2698
        %vm2700 = vcmask 392192
        %v2701 = vsel %vm2700, %v2697, %v2699
        %v2705 = vmul.f32 %v251, %v2697
        %v2706 = vmul.f32 %v252, %v2701
        %v2707 = vmul.f32 %v253, %v2699
        %v2708 = vmul.f32 %v254, %v2697
        %v2709 = vmul.f32 %v255, %v2701
        %v2710 = vmul.f32 %v256, %v2699
        %s2711 = scalar_lea.vmem [#allocation7], 38
        %v2712 = vld [vmem:[%s2711] ss:$8 sm:$0x3]
        %v2714 = vperm.slane %v2712, 0
        %v2715 = vperm.slane %v2712, 1
        %2716 = vrot.lane.b32.xlu0 %v2714, 49
        %v2717 = vpop.permute.xlu0 %2716
        %2718 = vrot.lane.b32.xlu0 %v2715, 49
        %v2719 = vpop.permute.xlu0 %2718
        %vm2720 = vcmask 400384
        %v2721 = vsel %vm2720, %v2717, %v2719
        %v2725 = vmul.f32 %v251, %v2717
        %v2726 = vmul.f32 %v252, %v2721
        %v2727 = vmul.f32 %v253, %v2719
        %v2728 = vmul.f32 %v254, %v2717
        %v2729 = vmul.f32 %v255, %v2721
        %v2730 = vmul.f32 %v256, %v2719
        %s2731 = scalar_lea.vmem [#allocation7], 39
        %v2732 = vld [vmem:[%s2731] ss:$8 sm:$0x3]
        %v2734 = vperm.slane %v2732, 0
        %v2735 = vperm.slane %v2732, 1
        %2736 = vrot.lane.b32.xlu0 %v2734, 50
        %v2737 = vpop.permute.xlu0 %2736
        %2738 = vrot.lane.b32.xlu0 %v2735, 50
        %v2739 = vpop.permute.xlu0 %2738
        %vm2740 = vcmask 408576
        %v2741 = vsel %vm2740, %v2737, %v2739
        %v2745 = vmul.f32 %v251, %v2737
        %v2746 = vmul.f32 %v252, %v2741
        %v2747 = vmul.f32 %v253, %v2739
        %v2748 = vmul.f32 %v254, %v2737
        %v2749 = vmul.f32 %v255, %v2741
        %v2750 = vmul.f32 %v256, %v2739
        %2757 = vrot.lane.b32.xlu0 %v2625, 127
        %v2758 = vpop.permute.xlu0 %2757
        %2759 = vrot.lane.b32.xlu0 %v2626, 127
        %v2760 = vpop.permute.xlu0 %2759
        %2761 = vrot.lane.b32.xlu0 %v2627, 127
        %v2762 = vpop.permute.xlu0 %2761
        %2763 = vrot.lane.b32.xlu0 %v2628, 127
        %v2764 = vpop.permute.xlu0 %2763
        %2765 = vrot.lane.b32.xlu0 %v2629, 127
        %v2766 = vpop.permute.xlu0 %2765
        %2767 = vrot.lane.b32.xlu0 %v2630, 127
        %v2768 = vpop.permute.xlu0 %2767
        %v2769 = vsel %vm437, %v2758, %v2760
        %v2770 = vsel %vm437, %v2760, %v2762
        %v2771 = vsel %vm437, %v2764, %v2766
        %v2772 = vsel %vm437, %v2766, %v2768
        %2779 = vrot.lane.b32.xlu0 %v2645, 126
        %v2780 = vpop.permute.xlu0 %2779
        %2781 = vrot.lane.b32.xlu0 %v2646, 126
        %v2782 = vpop.permute.xlu0 %2781
        %2783 = vrot.lane.b32.xlu0 %v2647, 126
        %v2784 = vpop.permute.xlu0 %2783
        %2785 = vrot.lane.b32.xlu0 %v2648, 126
        %v2786 = vpop.permute.xlu0 %2785
        %2787 = vrot.lane.b32.xlu0 %v2649, 126
        %v2788 = vpop.permute.xlu0 %2787
        %2789 = vrot.lane.b32.xlu0 %v2650, 126
        %v2790 = vpop.permute.xlu0 %2789
        %v2791 = vsel %vm464, %v2780, %v2782
        %v2792 = vsel %vm464, %v2782, %v2784
        %v2793 = vsel %vm464, %v2786, %v2788
        %v2794 = vsel %vm464, %v2788, %v2790
        %2801 = vrot.lane.b32.xlu0 %v2665, 125
        %v2802 = vpop.permute.xlu0 %2801
        %2803 = vrot.lane.b32.xlu0 %v2666, 125
        %v2804 = vpop.permute.xlu0 %2803
        %2805 = vrot.lane.b32.xlu0 %v2667, 125
        %v2806 = vpop.permute.xlu0 %2805
        %2807 = vrot.lane.b32.xlu0 %v2668, 125
        %v2808 = vpop.permute.xlu0 %2807
        %2809 = vrot.lane.b32.xlu0 %v2669, 125
        %v2810 = vpop.permute.xlu0 %2809
        %2811 = vrot.lane.b32.xlu0 %v2670, 125
        %v2812 = vpop.permute.xlu0 %2811
        %v2813 = vsel %vm491, %v2802, %v2804
        %v2814 = vsel %vm491, %v2804, %v2806
        %v2815 = vsel %vm491, %v2808, %v2810
        %v2816 = vsel %vm491, %v2810, %v2812
        %2823 = vrot.lane.b32.xlu0 %v2685, 124
        %v2824 = vpop.permute.xlu0 %2823
        %2825 = vrot.lane.b32.xlu0 %v2686, 124
        %v2826 = vpop.permute.xlu0 %2825
        %2827 = vrot.lane.b32.xlu0 %v2687, 124
        %v2828 = vpop.permute.xlu0 %2827
        %2829 = vrot.lane.b32.xlu0 %v2688, 124
        %v2830 = vpop.permute.xlu0 %2829
        %2831 = vrot.lane.b32.xlu0 %v2689, 124
        %v2832 = vpop.permute.xlu0 %2831
        %2833 = vrot.lane.b32.xlu0 %v2690, 124
        %v2834 = vpop.permute.xlu0 %2833
        %v2835 = vsel %vm518, %v2824, %v2826
        %v2836 = vsel %vm518, %v2826, %v2828
        %v2837 = vsel %vm518, %v2830, %v2832
        %v2838 = vsel %vm518, %v2832, %v2834
        %2845 = vrot.lane.b32.xlu0 %v2705, 114
        %v2846 = vpop.permute.xlu0 %2845
        %2847 = vrot.lane.b32.xlu0 %v2706, 114
        %v2848 = vpop.permute.xlu0 %2847
        %2849 = vrot.lane.b32.xlu0 %v2707, 114
        %v2850 = vpop.permute.xlu0 %2849
        %2851 = vrot.lane.b32.xlu0 %v2708, 114
        %v2852 = vpop.permute.xlu0 %2851
        %2853 = vrot.lane.b32.xlu0 %v2709, 114
        %v2854 = vpop.permute.xlu0 %2853
        %2855 = vrot.lane.b32.xlu0 %v2710, 114
        %v2856 = vpop.permute.xlu0 %2855
        %vm2857 = vcmask 932864
        %v2858 = vsel %vm2857, %v2846, %v2848
        %v2859 = vsel %vm2857, %v2848, %v2850
        %v2860 = vsel %vm2857, %v2852, %v2854
        %v2861 = vsel %vm2857, %v2854, %v2856
        %2868 = vrot.lane.b32.xlu0 %v2725, 113
        %v2869 = vpop.permute.xlu0 %2868
        %2870 = vrot.lane.b32.xlu0 %v2726, 113
        %v2871 = vpop.permute.xlu0 %2870
        %2872 = vrot.lane.b32.xlu0 %v2727, 113
        %v2873 = vpop.permute.xlu0 %2872
        %2874 = vrot.lane.b32.xlu0 %v2728, 113
        %v2875 = vpop.permute.xlu0 %2874
        %2876 = vrot.lane.b32.xlu0 %v2729, 113
        %v2877 = vpop.permute.xlu0 %2876
        %2878 = vrot.lane.b32.xlu0 %v2730, 113
        %v2879 = vpop.permute.xlu0 %2878
        %v2880 = vsel %vm1646, %v2869, %v2871
        %v2881 = vsel %vm1646, %v2871, %v2873
        %v2882 = vsel %vm1646, %v2875, %v2877
        %v2883 = vsel %vm1646, %v2877, %v2879
        %2890 = vrot.lane.b32.xlu0 %v2745, 112
        %v2891 = vpop.permute.xlu0 %2890
        %2892 = vrot.lane.b32.xlu0 %v2746, 112
        %v2893 = vpop.permute.xlu0 %2892
        %2894 = vrot.lane.b32.xlu0 %v2747, 112
        %v2895 = vpop.permute.xlu0 %2894
        %2896 = vrot.lane.b32.xlu0 %v2748, 112
        %v2897 = vpop.permute.xlu0 %2896
        %2898 = vrot.lane.b32.xlu0 %v2749, 112
        %v2899 = vpop.permute.xlu0 %2898
        %2900 = vrot.lane.b32.xlu0 %v2750, 112
        %v2901 = vpop.permute.xlu0 %2900
        %v2902 = vsel %vm599, %v2891, %v2893
        %v2903 = vsel %vm599, %v2893, %v2895
        %v2904 = vsel %vm599, %v2897, %v2899
        %v2905 = vsel %vm599, %v2899, %v2901
        %s2906 = scalar_lea.vmem [#allocation5], 32
        %v2907 = vld [vmem:[%s2906] sm:$0xff]
        %v2908 = vld [vmem:[%s2906 + $0x8] sm:$0xff]
        %2915 = vrot.lane.b32.xlu0 %v2605, 94
        %v2916 = vpop.permute.xlu0 %2915
        %2917 = vrot.lane.b32.xlu0 %v2606, 94
        %v2918 = vpop.permute.xlu0 %2917
        %2919 = vrot.lane.b32.xlu0 %v2607, 94
        %v2920 = vpop.permute.xlu0 %2919
        %2921 = vrot.lane.b32.xlu0 %v2608, 94
        %v2922 = vpop.permute.xlu0 %2921
        %2923 = vrot.lane.b32.xlu0 %v2609, 94
        %v2924 = vpop.permute.xlu0 %2923
        %2925 = vrot.lane.b32.xlu0 %v2610, 94
        %v2926 = vpop.permute.xlu0 %2925
        %2927 = vrot.lane.b32.xlu0 %v2769, 94
        %v2928 = vpop.permute.xlu0 %2927
        %2929 = vrot.lane.b32.xlu0 %v2770, 94
        %v2930 = vpop.permute.xlu0 %2929
        %2931 = vrot.lane.b32.xlu0 %v2762, 94
        %v2932 = vpop.permute.xlu0 %2931
        %2933 = vrot.lane.b32.xlu0 %v2771, 94
        %v2934 = vpop.permute.xlu0 %2933
        %2935 = vrot.lane.b32.xlu0 %v2772, 94
        %v2936 = vpop.permute.xlu0 %2935
        %2937 = vrot.lane.b32.xlu0 %v2768, 94
        %v2938 = vpop.permute.xlu0 %2937
        %2939 = vrot.lane.b32.xlu0 %v2791, 94
        %v2940 = vpop.permute.xlu0 %2939
        %2941 = vrot.lane.b32.xlu0 %v2792, 94
        %v2942 = vpop.permute.xlu0 %2941
        %2943 = vrot.lane.b32.xlu0 %v2784, 94
        %v2944 = vpop.permute.xlu0 %2943
        %2945 = vrot.lane.b32.xlu0 %v2793, 94
        %v2946 = vpop.permute.xlu0 %2945
        %2947 = vrot.lane.b32.xlu0 %v2794, 94
        %v2948 = vpop.permute.xlu0 %2947
        %2949 = vrot.lane.b32.xlu0 %v2790, 94
        %v2950 = vpop.permute.xlu0 %2949
        %2951 = vrot.lane.b32.xlu0 %v2813, 94
        %v2952 = vpop.permute.xlu0 %2951
        %2953 = vrot.lane.b32.xlu0 %v2814, 94
        %v2954 = vpop.permute.xlu0 %2953
        %2955 = vrot.lane.b32.xlu0 %v2806, 94
        %v2956 = vpop.permute.xlu0 %2955
        %2957 = vrot.lane.b32.xlu0 %v2815, 94
        %v2958 = vpop.permute.xlu0 %2957
        %2959 = vrot.lane.b32.xlu0 %v2816, 94
        %v2960 = vpop.permute.xlu0 %2959
        %2961 = vrot.lane.b32.xlu0 %v2812, 94
        %v2962 = vpop.permute.xlu0 %2961
        %2963 = vrot.lane.b32.xlu0 %v2835, 94
        %v2964 = vpop.permute.xlu0 %2963
        %2965 = vrot.lane.b32.xlu0 %v2836, 94
        %v2966 = vpop.permute.xlu0 %2965
        %2967 = vrot.lane.b32.xlu0 %v2828, 94
        %v2968 = vpop.permute.xlu0 %2967
        %2969 = vrot.lane.b32.xlu0 %v2837, 94
        %v2970 = vpop.permute.xlu0 %2969
        %2971 = vrot.lane.b32.xlu0 %v2838, 94
        %v2972 = vpop.permute.xlu0 %2971
        %2973 = vrot.lane.b32.xlu0 %v2834, 94
        %v2974 = vpop.permute.xlu0 %2973
        %2975 = vrot.lane.b32.xlu0 %v2858, 94
        %v2976 = vpop.permute.xlu0 %2975
        %2977 = vrot.lane.b32.xlu0 %v2859, 94
        %v2978 = vpop.permute.xlu0 %2977
        %2979 = vrot.lane.b32.xlu0 %v2850, 94
        %v2980 = vpop.permute.xlu0 %2979
        %2981 = vrot.lane.b32.xlu0 %v2860, 94
        %v2982 = vpop.permute.xlu0 %2981
        %2983 = vrot.lane.b32.xlu0 %v2861, 94
        %v2984 = vpop.permute.xlu0 %2983
        %2985 = vrot.lane.b32.xlu0 %v2856, 94
        %v2986 = vpop.permute.xlu0 %2985
        %2987 = vrot.lane.b32.xlu0 %v2880, 94
        %v2988 = vpop.permute.xlu0 %2987
        %2989 = vrot.lane.b32.xlu0 %v2881, 94
        %v2990 = vpop.permute.xlu0 %2989
        %2991 = vrot.lane.b32.xlu0 %v2873, 94
        %v2992 = vpop.permute.xlu0 %2991
        %2993 = vrot.lane.b32.xlu0 %v2882, 94
        %v2994 = vpop.permute.xlu0 %2993
        %2995 = vrot.lane.b32.xlu0 %v2883, 94
        %v2996 = vpop.permute.xlu0 %2995
        %2997 = vrot.lane.b32.xlu0 %v2879, 94
        %v2998 = vpop.permute.xlu0 %2997
        %2999 = vrot.lane.b32.xlu0 %v2902, 94
        %v3000 = vpop.permute.xlu0 %2999
        %3001 = vrot.lane.b32.xlu0 %v2903, 94
        %v3002 = vpop.permute.xlu0 %3001
        %3003 = vrot.lane.b32.xlu0 %v2895, 94
        %v3004 = vpop.permute.xlu0 %3003
        %3005 = vrot.lane.b32.xlu0 %v2904, 94
        %v3006 = vpop.permute.xlu0 %3005
        %3007 = vrot.lane.b32.xlu0 %v2905, 94
        %v3008 = vpop.permute.xlu0 %3007
        %3009 = vrot.lane.b32.xlu0 %v2901, 94
        %v3010 = vpop.permute.xlu0 %3009
        %vm3011 = vcmask 769024
        %v3012 = vsel %vm3011, %v2916, %v2918
        %v3013 = vsel %vm3011, %v2918, %v2920
        %v3014 = vsel %vm3011, %v2922, %v2924
        %v3015 = vsel %vm3011, %v2924, %v2926
        %v3016 = vsel %vm3011, %v2928, %v2930
        %v3017 = vsel %vm3011, %v2930, %v2932
        %v3018 = vsel %vm3011, %v2934, %v2936
        %v3019 = vsel %vm3011, %v2936, %v2938
        %v3020 = vsel %vm3011, %v2940, %v2942
        %v3021 = vsel %vm3011, %v2942, %v2944
        %v3022 = vsel %vm3011, %v2946, %v2948
        %v3023 = vsel %vm3011, %v2948, %v2950
        %v3024 = vsel %vm3011, %v2952, %v2954
        %v3025 = vsel %vm3011, %v2954, %v2956
        %v3026 = vsel %vm3011, %v2958, %v2960
        %v3027 = vsel %vm3011, %v2960, %v2962
        %v3028 = vsel %vm3011, %v2964, %v2966
        %v3029 = vsel %vm3011, %v2966, %v2968
        %v3030 = vsel %vm3011, %v2970, %v2972
        %v3031 = vsel %vm3011, %v2972, %v2974
        %v3032 = vsel %vm3011, %v2976, %v2978
        %v3033 = vsel %vm3011, %v2978, %v2980
        %v3034 = vsel %vm3011, %v2982, %v2984
        %v3035 = vsel %vm3011, %v2984, %v2986
        %v3036 = vsel %vm3011, %v2988, %v2990
        %v3037 = vsel %vm3011, %v2990, %v2992
        %v3038 = vsel %vm3011, %v2994, %v2996
        %v3039 = vsel %vm3011, %v2996, %v2998
        %v3040 = vsel %vm3011, %v3000, %v3002
        %v3041 = vsel %vm3011, %v3002, %v3004
        %v3042 = vsel %vm3011, %v3006, %v3008
        %v3043 = vsel %vm3011, %v3008, %v3010
        %v3076 = vand.u32 %v3042, 4294901760
        %3077 = vmatpush.msra.mxu0 %v3076
        %v3078 = vand.u32 %v3040, 4294901760
        %3079 = vmatpush.msra.mxu0 %v3078
        %v3080 = vand.u32 %v3038, 4294901760
        %3081 = vmatpush.msra.mxu0 %v3080
        %v3082 = vand.u32 %v3036, 4294901760
        %3083 = vmatpush.msra.mxu0 %v3082
        %v3084 = vand.u32 %v3034, 4294901760
        %3085 = vmatpush.msra.mxu0 %v3084
        %v3086 = vand.u32 %v3032, 4294901760
        %3087 = vmatpush.msra.mxu0 %v3086
        %v3088 = vand.u32 %v3030, 4294901760
        %3089 = vmatpush.msra.mxu0 %v3088
        %v3090 = vand.u32 %v3028, 4294901760
        %3091 = vmatpush.msra.mxu0 %v3090
        %v3092 = vand.u32 %v3026, 4294901760
        %3093 = vmatpush.msra.mxu0 %v3092
        %v3094 = vand.u32 %v3024, 4294901760
        %3095 = vmatpush.msra.mxu0 %v3094
        %v3096 = vand.u32 %v3022, 4294901760
        %3097 = vmatpush.msra.mxu0 %v3096
        %v3098 = vand.u32 %v3020, 4294901760
        %3099 = vmatpush.msra.mxu0 %v3098
        %v3100 = vand.u32 %v3018, 4294901760
        %3101 = vmatpush.msra.mxu0 %v3100
        %v3102 = vand.u32 %v3016, 4294901760
        %3103 = vmatpush.msra.mxu0 %v3102
        %v3104 = vand.u32 %v3014, 4294901760
        %3105 = vmatpush.msra.mxu0 %v3104
        %v3106 = vand.u32 %v3012, 4294901760
        %3107 = vmatpush.msra.mxu0 %v3106
        %v3108 = vand.u32 %v2907, 4294901760
        %v3109 = vsub.f32 %v2907, %v3108
        %v3110 = vand.u32 %v3109, 4294901760
        %v3111 = vsub.f32 %v3109, %v3110
        %v3112 = vand.u32 %v3111, 4294901760
        %3113 = vmatmul.f32.gmra.mxu0 %v3112
        %v3114 = vpop.f32.mrf.mxu0
        %v3115 = vadd.f32 0.0, %v3114
        %v3116 = vand.u32 %v2908, 4294901760
        %v3117 = vsub.f32 %v2908, %v3116
        %v3118 = vand.u32 %v3117, 4294901760
        %v3119 = vsub.f32 %v3117, %v3118
        %v3120 = vand.u32 %v3119, 4294901760
        %3121 = vmatmul.f32.gmra.mxu0 %v3120
        %v3122 = vpop.f32.mrf.mxu0
        %v3123 = vadd.f32 0.0, %v3122
        %3124 = vdwg.mxu0
        %v3125 = vand.u32 %v3042, 4294901760
        %v3126 = vsub.f32 %v3042, %v3125
        %v3127 = vand.u32 %v3126, 4294901760
        %v3128 = vsub.f32 %v3126, %v3127
        %v3129 = vand.u32 %v3128, 4294901760
        %3130 = vmatpush.msra.mxu0 %v3129
        %v3131 = vand.u32 %v3040, 4294901760
        %v3132 = vsub.f32 %v3040, %v3131
        %v3133 = vand.u32 %v3132, 4294901760
        %v3134 = vsub.f32 %v3132, %v3133
        %v3135 = vand.u32 %v3134, 4294901760
        %3136 = vmatpush.msra.mxu0 %v3135
        %v3137 = vand.u32 %v3038, 4294901760
        %v3138 = vsub.f32 %v3038, %v3137
        %v3139 = vand.u32 %v3138, 4294901760
        %v3140 = vsub.f32 %v3138, %v3139
        %v3141 = vand.u32 %v3140, 4294901760
        %3142 = vmatpush.msra.mxu0 %v3141
        %v3143 = vand.u32 %v3036, 4294901760
        %v3144 = vsub.f32 %v3036, %v3143
        %v3145 = vand.u32 %v3144, 4294901760
        %v3146 = vsub.f32 %v3144, %v3145
        %v3147 = vand.u32 %v3146, 4294901760
        %3148 = vmatpush.msra.mxu0 %v3147
        %v3149 = vand.u32 %v3034, 4294901760
        %v3150 = vsub.f32 %v3034, %v3149
        %v3151 = vand.u32 %v3150, 4294901760
        %v3152 = vsub.f32 %v3150, %v3151
        %v3153 = vand.u32 %v3152, 4294901760
        %3154 = vmatpush.msra.mxu0 %v3153
        %v3155 = vand.u32 %v3032, 4294901760
        %v3156 = vsub.f32 %v3032, %v3155
        %v3157 = vand.u32 %v3156, 4294901760
        %v3158 = vsub.f32 %v3156, %v3157
        %v3159 = vand.u32 %v3158, 4294901760
        %3160 = vmatpush.msra.mxu0 %v3159
        %v3161 = vand.u32 %v3030, 4294901760
        %v3162 = vsub.f32 %v3030, %v3161
        %v3163 = vand.u32 %v3162, 4294901760
        %v3164 = vsub.f32 %v3162, %v3163
        %v3165 = vand.u32 %v3164, 4294901760
        %3166 = vmatpush.msra.mxu0 %v3165
        %v3167 = vand.u32 %v3028, 4294901760
        %v3168 = vsub.f32 %v3028, %v3167
        %v3169 = vand.u32 %v3168, 4294901760
        %v3170 = vsub.f32 %v3168, %v3169
        %v3171 = vand.u32 %v3170, 4294901760
        %3172 = vmatpush.msra.mxu0 %v3171
        %v3173 = vand.u32 %v3026, 4294901760
        %v3174 = vsub.f32 %v3026, %v3173
        %v3175 = vand.u32 %v3174, 4294901760
        %v3176 = vsub.f32 %v3174, %v3175
        %v3177 = vand.u32 %v3176, 4294901760
        %3178 = vmatpush.msra.mxu0 %v3177
        %v3179 = vand.u32 %v3024, 4294901760
        %v3180 = vsub.f32 %v3024, %v3179
        %v3181 = vand.u32 %v3180, 4294901760
        %v3182 = vsub.f32 %v3180, %v3181
        %v3183 = vand.u32 %v3182, 4294901760
        %3184 = vmatpush.msra.mxu0 %v3183
        %v3185 = vand.u32 %v3022, 4294901760
        %v3186 = vsub.f32 %v3022, %v3185
        %v3187 = vand.u32 %v3186, 4294901760
        %v3188 = vsub.f32 %v3186, %v3187
        %v3189 = vand.u32 %v3188, 4294901760
        %3190 = vmatpush.msra.mxu0 %v3189
        %v3191 = vand.u32 %v3020, 4294901760
        %v3192 = vsub.f32 %v3020, %v3191
        %v3193 = vand.u32 %v3192, 4294901760
        %v3194 = vsub.f32 %v3192, %v3193
        %v3195 = vand.u32 %v3194, 4294901760
        %3196 = vmatpush.msra.mxu0 %v3195
        %v3197 = vand.u32 %v3018, 4294901760
        %v3198 = vsub.f32 %v3018, %v3197
        %v3199 = vand.u32 %v3198, 4294901760
        %v3200 = vsub.f32 %v3198, %v3199
        %v3201 = vand.u32 %v3200, 4294901760
        %3202 = vmatpush.msra.mxu0 %v3201
        %v3203 = vand.u32 %v3016, 4294901760
        %v3204 = vsub.f32 %v3016, %v3203
        %v3205 = vand.u32 %v3204, 4294901760
        %v3206 = vsub.f32 %v3204, %v3205
        %v3207 = vand.u32 %v3206, 4294901760
        %3208 = vmatpush.msra.mxu0 %v3207
        %v3209 = vand.u32 %v3014, 4294901760
        %v3210 = vsub.f32 %v3014, %v3209
        %v3211 = vand.u32 %v3210, 4294901760
        %v3212 = vsub.f32 %v3210, %v3211
        %v3213 = vand.u32 %v3212, 4294901760
        %3214 = vmatpush.msra.mxu0 %v3213
        %v3215 = vand.u32 %v3012, 4294901760
        %v3216 = vsub.f32 %v3012, %v3215
        %v3217 = vand.u32 %v3216, 4294901760
        %v3218 = vsub.f32 %v3216, %v3217
        %v3219 = vand.u32 %v3218, 4294901760
        %3220 = vmatpush.msra.mxu0 %v3219
        %v3221 = vand.u32 %v2907, 4294901760
        %3222 = vmatmul.f32.gmra.mxu0 %v3221
        %v3223 = vpop.f32.mrf.mxu0
        %v3224 = vadd.f32 %v3115, %v3223
        %v3225 = vand.u32 %v2908, 4294901760
        %3226 = vmatmul.f32.gmra.mxu0 %v3225
        %v3227 = vpop.f32.mrf.mxu0
        %v3228 = vadd.f32 %v3123, %v3227
        %3229 = vdwg.mxu0
        %v3230 = vand.u32 %v3042, 4294901760
        %v3231 = vsub.f32 %v3042, %v3230
        %3232 = vmatpush.msra.mxu0 %v3231
        %v3233 = vand.u32 %v3040, 4294901760
        %v3234 = vsub.f32 %v3040, %v3233
        %3235 = vmatpush.msra.mxu0 %v3234
        %v3236 = vand.u32 %v3038, 4294901760
        %v3237 = vsub.f32 %v3038, %v3236
        %3238 = vmatpush.msra.mxu0 %v3237
        %v3239 = vand.u32 %v3036, 4294901760
        %v3240 = vsub.f32 %v3036, %v3239
        %3241 = vmatpush.msra.mxu0 %v3240
        %v3242 = vand.u32 %v3034, 4294901760
        %v3243 = vsub.f32 %v3034, %v3242
        %3244 = vmatpush.msra.mxu0 %v3243
        %v3245 = vand.u32 %v3032, 4294901760
        %v3246 = vsub.f32 %v3032, %v3245
        %3247 = vmatpush.msra.mxu0 %v3246
        %v3248 = vand.u32 %v3030, 4294901760
        %v3249 = vsub.f32 %v3030, %v3248
        %3250 = vmatpush.msra.mxu0 %v3249
        %v3251 = vand.u32 %v3028, 4294901760
        %v3252 = vsub.f32 %v3028, %v3251
        %3253 = vmatpush.msra.mxu0 %v3252
        %v3254 = vand.u32 %v3026, 4294901760
        %v3255 = vsub.f32 %v3026, %v3254
        %3256 = vmatpush.msra.mxu0 %v3255
        %v3257 = vand.u32 %v3024, 4294901760
        %v3258 = vsub.f32 %v3024, %v3257
        %3259 = vmatpush.msra.mxu0 %v3258
        %v3260 = vand.u32 %v3022, 4294901760
        %v3261 = vsub.f32 %v3022, %v3260
        %3262 = vmatpush.msra.mxu0 %v3261
        %v3263 = vand.u32 %v3020, 4294901760
        %v3264 = vsub.f32 %v3020, %v3263
        %3265 = vmatpush.msra.mxu0 %v3264
        %v3266 = vand.u32 %v3018, 4294901760
        %v3267 = vsub.f32 %v3018, %v3266
        %3268 = vmatpush.msra.mxu0 %v3267
        %v3269 = vand.u32 %v3016, 4294901760
        %v3270 = vsub.f32 %v3016, %v3269
        %3271 = vmatpush.msra.mxu0 %v3270
        %v3272 = vand.u32 %v3014, 4294901760
        %v3273 = vsub.f32 %v3014, %v3272
        %3274 = vmatpush.msra.mxu0 %v3273
        %v3275 = vand.u32 %v3012, 4294901760
        %v3276 = vsub.f32 %v3012, %v3275
        %3277 = vmatpush.msra.mxu0 %v3276
        %v3278 = vand.u32 %v2907, 4294901760
        %v3279 = vsub.f32 %v2907, %v3278
        %3280 = vmatmul.f32.gmra.mxu0 %v3279
        %v3281 = vpop.f32.mrf.mxu0
        %v3282 = vadd.f32 %v3224, %v3281
        %v3283 = vand.u32 %v2908, 4294901760
        %v3284 = vsub.f32 %v2908, %v3283
        %3285 = vmatmul.f32.gmra.mxu0 %v3284
        %v3286 = vpop.f32.mrf.mxu0
        %v3287 = vadd.f32 %v3228, %v3286
        %3288 = vdwg.mxu0
        %v3289 = vand.u32 %v3042, 4294901760
        %3290 = vmatpush.msra.mxu0 %v3289
        %v3291 = vand.u32 %v3040, 4294901760
        %3292 = vmatpush.msra.mxu0 %v3291
        %v3293 = vand.u32 %v3038, 4294901760
        %3294 = vmatpush.msra.mxu0 %v3293
        %v3295 = vand.u32 %v3036, 4294901760
        %3296 = vmatpush.msra.mxu0 %v3295
        %v3297 = vand.u32 %v3034, 4294901760
        %3298 = vmatpush.msra.mxu0 %v3297
        %v3299 = vand.u32 %v3032, 4294901760
        %3300 = vmatpush.msra.mxu0 %v3299
        %v3301 = vand.u32 %v3030, 4294901760
        %3302 = vmatpush.msra.mxu0 %v3301
        %v3303 = vand.u32 %v3028, 4294901760
        %3304 = vmatpush.msra.mxu0 %v3303
        %v3305 = vand.u32 %v3026, 4294901760
        %3306 = vmatpush.msra.mxu0 %v3305
        %v3307 = vand.u32 %v3024, 4294901760
        %3308 = vmatpush.msra.mxu0 %v3307
        %v3309 = vand.u32 %v3022, 4294901760
        %3310 = vmatpush.msra.mxu0 %v3309
        %v3311 = vand.u32 %v3020, 4294901760
        %3312 = vmatpush.msra.mxu0 %v3311
        %v3313 = vand.u32 %v3018, 4294901760
        %3314 = vmatpush.msra.mxu0 %v3313
        %v3315 = vand.u32 %v3016, 4294901760
        %3316 = vmatpush.msra.mxu0 %v3315
        %v3317 = vand.u32 %v3014, 4294901760
        %3318 = vmatpush.msra.mxu0 %v3317
        %v3319 = vand.u32 %v3012, 4294901760
        %3320 = vmatpush.msra.mxu0 %v3319
        %v3321 = vand.u32 %v2907, 4294901760
        %v3322 = vsub.f32 %v2907, %v3321
        %v3323 = vand.u32 %v3322, 4294901760
        %3324 = vmatmul.f32.gmra.mxu0 %v3323
        %v3325 = vpop.f32.mrf.mxu0
        %v3326 = vadd.f32 %v3282, %v3325
        %v3327 = vand.u32 %v2908, 4294901760
        %v3328 = vsub.f32 %v2908, %v3327
        %v3329 = vand.u32 %v3328, 4294901760
        %3330 = vmatmul.f32.gmra.mxu0 %v3329
        %v3331 = vpop.f32.mrf.mxu0
        %v3332 = vadd.f32 %v3287, %v3331
        %3333 = vdwg.mxu0
        %v3334 = vand.u32 %v3042, 4294901760
        %v3335 = vsub.f32 %v3042, %v3334
        %v3336 = vand.u32 %v3335, 4294901760
        %3337 = vmatpush.msra.mxu0 %v3336
        %v3338 = vand.u32 %v3040, 4294901760
        %v3339 = vsub.f32 %v3040, %v3338
        %v3340 = vand.u32 %v3339, 4294901760
        %3341 = vmatpush.msra.mxu0 %v3340
        %v3342 = vand.u32 %v3038, 4294901760
        %v3343 = vsub.f32 %v3038, %v3342
        %v3344 = vand.u32 %v3343, 4294901760
        %3345 = vmatpush.msra.mxu0 %v3344
        %v3346 = vand.u32 %v3036, 4294901760
        %v3347 = vsub.f32 %v3036, %v3346
        %v3348 = vand.u32 %v3347, 4294901760
        %3349 = vmatpush.msra.mxu0 %v3348
        %v3350 = vand.u32 %v3034, 4294901760
        %v3351 = vsub.f32 %v3034, %v3350
        %v3352 = vand.u32 %v3351, 4294901760
        %3353 = vmatpush.msra.mxu0 %v3352
        %v3354 = vand.u32 %v3032, 4294901760
        %v3355 = vsub.f32 %v3032, %v3354
        %v3356 = vand.u32 %v3355, 4294901760
        %3357 = vmatpush.msra.mxu0 %v3356
        %v3358 = vand.u32 %v3030, 4294901760
        %v3359 = vsub.f32 %v3030, %v3358
        %v3360 = vand.u32 %v3359, 4294901760
        %3361 = vmatpush.msra.mxu0 %v3360
        %v3362 = vand.u32 %v3028, 4294901760
        %v3363 = vsub.f32 %v3028, %v3362
        %v3364 = vand.u32 %v3363, 4294901760
        %3365 = vmatpush.msra.mxu0 %v3364
        %v3366 = vand.u32 %v3026, 4294901760
        %v3367 = vsub.f32 %v3026, %v3366
        %v3368 = vand.u32 %v3367, 4294901760
        %3369 = vmatpush.msra.mxu0 %v3368
        %v3370 = vand.u32 %v3024, 4294901760
        %v3371 = vsub.f32 %v3024, %v3370
        %v3372 = vand.u32 %v3371, 4294901760
        %3373 = vmatpush.msra.mxu0 %v3372
        %v3374 = vand.u32 %v3022, 4294901760
        %v3375 = vsub.f32 %v3022, %v3374
        %v3376 = vand.u32 %v3375, 4294901760
        %3377 = vmatpush.msra.mxu0 %v3376
        %v3378 = vand.u32 %v3020, 4294901760
        %v3379 = vsub.f32 %v3020, %v3378
        %v3380 = vand.u32 %v3379, 4294901760
        %3381 = vmatpush.msra.mxu0 %v3380
        %v3382 = vand.u32 %v3018, 4294901760
        %v3383 = vsub.f32 %v3018, %v3382
        %v3384 = vand.u32 %v3383, 4294901760
        %3385 = vmatpush.msra.mxu0 %v3384
        %v3386 = vand.u32 %v3016, 4294901760
        %v3387 = vsub.f32 %v3016, %v3386
        %v3388 = vand.u32 %v3387, 4294901760
        %3389 = vmatpush.msra.mxu0 %v3388
        %v3390 = vand.u32 %v3014, 4294901760
        %v3391 = vsub.f32 %v3014, %v3390
        %v3392 = vand.u32 %v3391, 4294901760
        %3393 = vmatpush.msra.mxu0 %v3392
        %v3394 = vand.u32 %v3012, 4294901760
        %v3395 = vsub.f32 %v3012, %v3394
        %v3396 = vand.u32 %v3395, 4294901760
        %3397 = vmatpush.msra.mxu0 %v3396
        %v3398 = vand.u32 %v2907, 4294901760
        %3399 = vmatmul.f32.gmra.mxu0 %v3398
        %v3400 = vpop.f32.mrf.mxu0
        %v3401 = vadd.f32 %v3326, %v3400
        %v3402 = vand.u32 %v2908, 4294901760
        %3403 = vmatmul.f32.gmra.mxu0 %v3402
        %v3404 = vpop.f32.mrf.mxu0
        %v3405 = vadd.f32 %v3332, %v3404
        %3406 = vdwg.mxu0
        %v3407 = vand.u32 %v3042, 4294901760
        %3408 = vmatpush.msra.mxu0 %v3407
        %v3409 = vand.u32 %v3040, 4294901760
        %3410 = vmatpush.msra.mxu0 %v3409
        %v3411 = vand.u32 %v3038, 4294901760
        %3412 = vmatpush.msra.mxu0 %v3411
        %v3413 = vand.u32 %v3036, 4294901760
        %3414 = vmatpush.msra.mxu0 %v3413
        %v3415 = vand.u32 %v3034, 4294901760
        %3416 = vmatpush.msra.mxu0 %v3415
        %v3417 = vand.u32 %v3032, 4294901760
        %3418 = vmatpush.msra.mxu0 %v3417
        %v3419 = vand.u32 %v3030, 4294901760
        %3420 = vmatpush.msra.mxu0 %v3419
        %v3421 = vand.u32 %v3028, 4294901760
        %3422 = vmatpush.msra.mxu0 %v3421
        %v3423 = vand.u32 %v3026, 4294901760
        %3424 = vmatpush.msra.mxu0 %v3423
        %v3425 = vand.u32 %v3024, 4294901760
        %3426 = vmatpush.msra.mxu0 %v3425
        %v3427 = vand.u32 %v3022, 4294901760
        %3428 = vmatpush.msra.mxu0 %v3427
        %v3429 = vand.u32 %v3020, 4294901760
        %3430 = vmatpush.msra.mxu0 %v3429
        %v3431 = vand.u32 %v3018, 4294901760
        %3432 = vmatpush.msra.mxu0 %v3431
        %v3433 = vand.u32 %v3016, 4294901760
        %3434 = vmatpush.msra.mxu0 %v3433
        %v3435 = vand.u32 %v3014, 4294901760
        %3436 = vmatpush.msra.mxu0 %v3435
        %v3437 = vand.u32 %v3012, 4294901760
        %3438 = vmatpush.msra.mxu0 %v3437
        %v3439 = vand.u32 %v2907, 4294901760
        %3440 = vmatmul.f32.gmra.mxu0 %v3439
        %v3441 = vpop.f32.mrf.mxu0
        %v3442 = vadd.f32 %v3401, %v3441
        %v3443 = vand.u32 %v2908, 4294901760
        %3444 = vmatmul.f32.gmra.mxu0 %v3443
        %v3445 = vpop.f32.mrf.mxu0
        %v3446 = vadd.f32 %v3405, %v3445
        %3447 = vdwg.mxu0
        %v3448 = vand.u32 %v3043, 4294901760
        %3449 = vmatpush.msra.mxu0 %v3448
        %v3450 = vand.u32 %v3041, 4294901760
        %3451 = vmatpush.msra.mxu0 %v3450
        %v3452 = vand.u32 %v3039, 4294901760
        %3453 = vmatpush.msra.mxu0 %v3452
        %v3454 = vand.u32 %v3037, 4294901760
        %3455 = vmatpush.msra.mxu0 %v3454
        %v3456 = vand.u32 %v3035, 4294901760
        %3457 = vmatpush.msra.mxu0 %v3456
        %v3458 = vand.u32 %v3033, 4294901760
        %3459 = vmatpush.msra.mxu0 %v3458
        %v3460 = vand.u32 %v3031, 4294901760
        %3461 = vmatpush.msra.mxu0 %v3460
        %v3462 = vand.u32 %v3029, 4294901760
        %3463 = vmatpush.msra.mxu0 %v3462
        %v3464 = vand.u32 %v3027, 4294901760
        %3465 = vmatpush.msra.mxu0 %v3464
        %v3466 = vand.u32 %v3025, 4294901760
        %3467 = vmatpush.msra.mxu0 %v3466
        %v3468 = vand.u32 %v3023, 4294901760
        %3469 = vmatpush.msra.mxu0 %v3468
        %v3470 = vand.u32 %v3021, 4294901760
        %3471 = vmatpush.msra.mxu0 %v3470
        %v3472 = vand.u32 %v3019, 4294901760
        %3473 = vmatpush.msra.mxu0 %v3472
        %v3474 = vand.u32 %v3017, 4294901760
        %3475 = vmatpush.msra.mxu0 %v3474
        %v3476 = vand.u32 %v3015, 4294901760
        %3477 = vmatpush.msra.mxu0 %v3476
        %v3478 = vand.u32 %v3013, 4294901760
        %3479 = vmatpush.msra.mxu0 %v3478
        %v3480 = vand.u32 %v2907, 4294901760
        %v3481 = vsub.f32 %v2907, %v3480
        %v3482 = vand.u32 %v3481, 4294901760
        %v3483 = vsub.f32 %v3481, %v3482
        %v3484 = vand.u32 %v3483, 4294901760
        %3485 = vmatmul.f32.gmra.mxu0 %v3484
        %v3486 = vpop.f32.mrf.mxu0
        %v3487 = vadd.f32 0.0, %v3486
        %v3488 = vand.u32 %v2908, 4294901760
        %v3489 = vsub.f32 %v2908, %v3488
        %v3490 = vand.u32 %v3489, 4294901760
        %v3491 = vsub.f32 %v3489, %v3490
        %v3492 = vand.u32 %v3491, 4294901760
        %3493 = vmatmul.f32.gmra.mxu0 %v3492
        %v3494 = vpop.f32.mrf.mxu0
        %v3495 = vadd.f32 0.0, %v3494
        %3496 = vdwg.mxu0
        %v3497 = vand.u32 %v3043, 4294901760
        %v3498 = vsub.f32 %v3043, %v3497
        %v3499 = vand.u32 %v3498, 4294901760
        %v3500 = vsub.f32 %v3498, %v3499
        %v3501 = vand.u32 %v3500, 4294901760
        %3502 = vmatpush.msra.mxu0 %v3501
        %v3503 = vand.u32 %v3041, 4294901760
        %v3504 = vsub.f32 %v3041, %v3503
        %v3505 = vand.u32 %v3504, 4294901760
        %v3506 = vsub.f32 %v3504, %v3505
        %v3507 = vand.u32 %v3506, 4294901760
        %3508 = vmatpush.msra.mxu0 %v3507
        %v3509 = vand.u32 %v3039, 4294901760
        %v3510 = vsub.f32 %v3039, %v3509
        %v3511 = vand.u32 %v3510, 4294901760
        %v3512 = vsub.f32 %v3510, %v3511
        %v3513 = vand.u32 %v3512, 4294901760
        %3514 = vmatpush.msra.mxu0 %v3513
        %v3515 = vand.u32 %v3037, 4294901760
        %v3516 = vsub.f32 %v3037, %v3515
        %v3517 = vand.u32 %v3516, 4294901760
        %v3518 = vsub.f32 %v3516, %v3517
        %v3519 = vand.u32 %v3518, 4294901760
        %3520 = vmatpush.msra.mxu0 %v3519
        %v3521 = vand.u32 %v3035, 4294901760
        %v3522 = vsub.f32 %v3035, %v3521
        %v3523 = vand.u32 %v3522, 4294901760
        %v3524 = vsub.f32 %v3522, %v3523
        %v3525 = vand.u32 %v3524, 4294901760
        %3526 = vmatpush.msra.mxu0 %v3525
        %v3527 = vand.u32 %v3033, 4294901760
        %v3528 = vsub.f32 %v3033, %v3527
        %v3529 = vand.u32 %v3528, 4294901760
        %v3530 = vsub.f32 %v3528, %v3529
        %v3531 = vand.u32 %v3530, 4294901760
        %3532 = vmatpush.msra.mxu0 %v3531
        %v3533 = vand.u32 %v3031, 4294901760
        %v3534 = vsub.f32 %v3031, %v3533
        %v3535 = vand.u32 %v3534, 4294901760
        %v3536 = vsub.f32 %v3534, %v3535
        %v3537 = vand.u32 %v3536, 4294901760
        %3538 = vmatpush.msra.mxu0 %v3537
        %v3539 = vand.u32 %v3029, 4294901760
        %v3540 = vsub.f32 %v3029, %v3539
        %v3541 = vand.u32 %v3540, 4294901760
        %v3542 = vsub.f32 %v3540, %v3541
        %v3543 = vand.u32 %v3542, 4294901760
        %3544 = vmatpush.msra.mxu0 %v3543
        %v3545 = vand.u32 %v3027, 4294901760
        %v3546 = vsub.f32 %v3027, %v3545
        %v3547 = vand.u32 %v3546, 4294901760
        %v3548 = vsub.f32 %v3546, %v3547
        %v3549 = vand.u32 %v3548, 4294901760
        %3550 = vmatpush.msra.mxu0 %v3549
        %v3551 = vand.u32 %v3025, 4294901760
        %v3552 = vsub.f32 %v3025, %v3551
        %v3553 = vand.u32 %v3552, 4294901760
        %v3554 = vsub.f32 %v3552, %v3553
        %v3555 = vand.u32 %v3554, 4294901760
        %3556 = vmatpush.msra.mxu0 %v3555
        %v3557 = vand.u32 %v3023, 4294901760
        %v3558 = vsub.f32 %v3023, %v3557
        %v3559 = vand.u32 %v3558, 4294901760
        %v3560 = vsub.f32 %v3558, %v3559
        %v3561 = vand.u32 %v3560, 4294901760
        %3562 = vmatpush.msra.mxu0 %v3561
        %v3563 = vand.u32 %v3021, 4294901760
        %v3564 = vsub.f32 %v3021, %v3563
        %v3565 = vand.u32 %v3564, 4294901760
        %v3566 = vsub.f32 %v3564, %v3565
        %v3567 = vand.u32 %v3566, 4294901760
        %3568 = vmatpush.msra.mxu0 %v3567
        %v3569 = vand.u32 %v3019, 4294901760
        %v3570 = vsub.f32 %v3019, %v3569
        %v3571 = vand.u32 %v3570, 4294901760
        %v3572 = vsub.f32 %v3570, %v3571
        %v3573 = vand.u32 %v3572, 4294901760
        %3574 = vmatpush.msra.mxu0 %v3573
        %v3575 = vand.u32 %v3017, 4294901760
        %v3576 = vsub.f32 %v3017, %v3575
        %v3577 = vand.u32 %v3576, 4294901760
        %v3578 = vsub.f32 %v3576, %v3577
        %v3579 = vand.u32 %v3578, 4294901760
        %3580 = vmatpush.msra.mxu0 %v3579
        %v3581 = vand.u32 %v3015, 4294901760
        %v3582 = vsub.f32 %v3015, %v3581
        %v3583 = vand.u32 %v3582, 4294901760
        %v3584 = vsub.f32 %v3582, %v3583
        %v3585 = vand.u32 %v3584, 4294901760
        %3586 = vmatpush.msra.mxu0 %v3585
        %v3587 = vand.u32 %v3013, 4294901760
        %v3588 = vsub.f32 %v3013, %v3587
        %v3589 = vand.u32 %v3588, 4294901760
        %v3590 = vsub.f32 %v3588, %v3589
        %v3591 = vand.u32 %v3590, 4294901760
        %3592 = vmatpush.msra.mxu0 %v3591
        %v3593 = vand.u32 %v2907, 4294901760
        %3594 = vmatmul.f32.gmra.mxu0 %v3593
        %v3595 = vpop.f32.mrf.mxu0
        %v3596 = vadd.f32 %v3487, %v3595
        %v3597 = vand.u32 %v2908, 4294901760
        %3598 = vmatmul.f32.gmra.mxu0 %v3597
        %v3599 = vpop.f32.mrf.mxu0
        %v3600 = vadd.f32 %v3495, %v3599
        %3601 = vdwg.mxu0
        %v3602 = vand.u32 %v3043, 4294901760
        %v3603 = vsub.f32 %v3043, %v3602
        %3604 = vmatpush.msra.mxu0 %v3603
        %v3605 = vand.u32 %v3041, 4294901760
        %v3606 = vsub.f32 %v3041, %v3605
        %3607 = vmatpush.msra.mxu0 %v3606
        %v3608 = vand.u32 %v3039, 4294901760
        %v3609 = vsub.f32 %v3039, %v3608
        %3610 = vmatpush.msra.mxu0 %v3609
        %v3611 = vand.u32 %v3037, 4294901760
        %v3612 = vsub.f32 %v3037, %v3611
        %3613 = vmatpush.msra.mxu0 %v3612
        %v3614 = vand.u32 %v3035, 4294901760
        %v3615 = vsub.f32 %v3035, %v3614
        %3616 = vmatpush.msra.mxu0 %v3615
        %v3617 = vand.u32 %v3033, 4294901760
        %v3618 = vsub.f32 %v3033, %v3617
        %3619 = vmatpush.msra.mxu0 %v3618
        %v3620 = vand.u32 %v3031, 4294901760
        %v3621 = vsub.f32 %v3031, %v3620
        %3622 = vmatpush.msra.mxu0 %v3621
        %v3623 = vand.u32 %v3029, 4294901760
        %v3624 = vsub.f32 %v3029, %v3623
        %3625 = vmatpush.msra.mxu0 %v3624
        %v3626 = vand.u32 %v3027, 4294901760
        %v3627 = vsub.f32 %v3027, %v3626
        %3628 = vmatpush.msra.mxu0 %v3627
        %v3629 = vand.u32 %v3025, 4294901760
        %v3630 = vsub.f32 %v3025, %v3629
        %3631 = vmatpush.msra.mxu0 %v3630
        %v3632 = vand.u32 %v3023, 4294901760
        %v3633 = vsub.f32 %v3023, %v3632
        %3634 = vmatpush.msra.mxu0 %v3633
        %v3635 = vand.u32 %v3021, 4294901760
        %v3636 = vsub.f32 %v3021, %v3635
        %3637 = vmatpush.msra.mxu0 %v3636
        %v3638 = vand.u32 %v3019, 4294901760
        %v3639 = vsub.f32 %v3019, %v3638
        %3640 = vmatpush.msra.mxu0 %v3639
        %v3641 = vand.u32 %v3017, 4294901760
        %v3642 = vsub.f32 %v3017, %v3641
        %3643 = vmatpush.msra.mxu0 %v3642
        %v3644 = vand.u32 %v3015, 4294901760
        %v3645 = vsub.f32 %v3015, %v3644
        %3646 = vmatpush.msra.mxu0 %v3645
        %v3647 = vand.u32 %v3013, 4294901760
        %v3648 = vsub.f32 %v3013, %v3647
        %3649 = vmatpush.msra.mxu0 %v3648
        %v3650 = vand.u32 %v2907, 4294901760
        %v3651 = vsub.f32 %v2907, %v3650
        %3652 = vmatmul.f32.gmra.mxu0 %v3651
        %v3653 = vpop.f32.mrf.mxu0
        %v3654 = vadd.f32 %v3596, %v3653
        %v3655 = vand.u32 %v2908, 4294901760
        %v3656 = vsub.f32 %v2908, %v3655
        %3657 = vmatmul.f32.gmra.mxu0 %v3656
        %v3658 = vpop.f32.mrf.mxu0
        %v3659 = vadd.f32 %v3600, %v3658
        %3660 = vdwg.mxu0
        %v3661 = vand.u32 %v3043, 4294901760
        %3662 = vmatpush.msra.mxu0 %v3661
        %v3663 = vand.u32 %v3041, 4294901760
        %3664 = vmatpush.msra.mxu0 %v3663
        %v3665 = vand.u32 %v3039, 4294901760
        %3666 = vmatpush.msra.mxu0 %v3665
        %v3667 = vand.u32 %v3037, 4294901760
        %3668 = vmatpush.msra.mxu0 %v3667
        %v3669 = vand.u32 %v3035, 4294901760
        %3670 = vmatpush.msra.mxu0 %v3669
        %v3671 = vand.u32 %v3033, 4294901760
        %3672 = vmatpush.msra.mxu0 %v3671
        %v3673 = vand.u32 %v3031, 4294901760
        %3674 = vmatpush.msra.mxu0 %v3673
        %v3675 = vand.u32 %v3029, 4294901760
        %3676 = vmatpush.msra.mxu0 %v3675
        %v3677 = vand.u32 %v3027, 4294901760
        %3678 = vmatpush.msra.mxu0 %v3677
        %v3679 = vand.u32 %v3025, 4294901760
        %3680 = vmatpush.msra.mxu0 %v3679
        %v3681 = vand.u32 %v3023, 4294901760
        %3682 = vmatpush.msra.mxu0 %v3681
        %v3683 = vand.u32 %v3021, 4294901760
        %3684 = vmatpush.msra.mxu0 %v3683
        %v3685 = vand.u32 %v3019, 4294901760
        %3686 = vmatpush.msra.mxu0 %v3685
        %v3687 = vand.u32 %v3017, 4294901760
        %3688 = vmatpush.msra.mxu0 %v3687
        %v3689 = vand.u32 %v3015, 4294901760
        %3690 = vmatpush.msra.mxu0 %v3689
        %v3691 = vand.u32 %v3013, 4294901760
        %3692 = vmatpush.msra.mxu0 %v3691
        %v3693 = vand.u32 %v2907, 4294901760
        %v3694 = vsub.f32 %v2907, %v3693
        %v3695 = vand.u32 %v3694, 4294901760
        %3696 = vmatmul.f32.gmra.mxu0 %v3695
        %v3697 = vpop.f32.mrf.mxu0
        %v3698 = vadd.f32 %v3654, %v3697
        %v3699 = vand.u32 %v2908, 4294901760
        %v3700 = vsub.f32 %v2908, %v3699
        %v3701 = vand.u32 %v3700, 4294901760
        %3702 = vmatmul.f32.gmra.mxu0 %v3701
        %v3703 = vpop.f32.mrf.mxu0
        %v3704 = vadd.f32 %v3659, %v3703
        %3705 = vdwg.mxu0
        %v3706 = vand.u32 %v3043, 4294901760
        %v3707 = vsub.f32 %v3043, %v3706
        %v3708 = vand.u32 %v3707, 4294901760
        %3709 = vmatpush.msra.mxu0 %v3708
        %v3710 = vand.u32 %v3041, 4294901760
        %v3711 = vsub.f32 %v3041, %v3710
        %v3712 = vand.u32 %v3711, 4294901760
        %3713 = vmatpush.msra.mxu0 %v3712
        %v3714 = vand.u32 %v3039, 4294901760
        %v3715 = vsub.f32 %v3039, %v3714
        %v3716 = vand.u32 %v3715, 4294901760
        %3717 = vmatpush.msra.mxu0 %v3716
        %v3718 = vand.u32 %v3037, 4294901760
        %v3719 = vsub.f32 %v3037, %v3718
        %v3720 = vand.u32 %v3719, 4294901760
        %3721 = vmatpush.msra.mxu0 %v3720
        %v3722 = vand.u32 %v3035, 4294901760
        %v3723 = vsub.f32 %v3035, %v3722
        %v3724 = vand.u32 %v3723, 4294901760
        %3725 = vmatpush.msra.mxu0 %v3724
        %v3726 = vand.u32 %v3033, 4294901760
        %v3727 = vsub.f32 %v3033, %v3726
        %v3728 = vand.u32 %v3727, 4294901760
        %3729 = vmatpush.msra.mxu0 %v3728
        %v3730 = vand.u32 %v3031, 4294901760
        %v3731 = vsub.f32 %v3031, %v3730
        %v3732 = vand.u32 %v3731, 4294901760
        %3733 = vmatpush.msra.mxu0 %v3732
        %v3734 = vand.u32 %v3029, 4294901760
        %v3735 = vsub.f32 %v3029, %v3734
        %v3736 = vand.u32 %v3735, 4294901760
        %3737 = vmatpush.msra.mxu0 %v3736
        %v3738 = vand.u32 %v3027, 4294901760
        %v3739 = vsub.f32 %v3027, %v3738
        %v3740 = vand.u32 %v3739, 4294901760
        %3741 = vmatpush.msra.mxu0 %v3740
        %v3742 = vand.u32 %v3025, 4294901760
        %v3743 = vsub.f32 %v3025, %v3742
        %v3744 = vand.u32 %v3743, 4294901760
        %3745 = vmatpush.msra.mxu0 %v3744
        %v3746 = vand.u32 %v3023, 4294901760
        %v3747 = vsub.f32 %v3023, %v3746
        %v3748 = vand.u32 %v3747, 4294901760
        %3749 = vmatpush.msra.mxu0 %v3748
        %v3750 = vand.u32 %v3021, 4294901760
        %v3751 = vsub.f32 %v3021, %v3750
        %v3752 = vand.u32 %v3751, 4294901760
        %3753 = vmatpush.msra.mxu0 %v3752
        %v3754 = vand.u32 %v3019, 4294901760
        %v3755 = vsub.f32 %v3019, %v3754
        %v3756 = vand.u32 %v3755, 4294901760
        %3757 = vmatpush.msra.mxu0 %v3756
        %v3758 = vand.u32 %v3017, 4294901760
        %v3759 = vsub.f32 %v3017, %v3758
        %v3760 = vand.u32 %v3759, 4294901760
        %3761 = vmatpush.msra.mxu0 %v3760
        %v3762 = vand.u32 %v3015, 4294901760
        %v3763 = vsub.f32 %v3015, %v3762
        %v3764 = vand.u32 %v3763, 4294901760
        %3765 = vmatpush.msra.mxu0 %v3764
        %v3766 = vand.u32 %v3013, 4294901760
        %v3767 = vsub.f32 %v3013, %v3766
        %v3768 = vand.u32 %v3767, 4294901760
        %3769 = vmatpush.msra.mxu0 %v3768
        %v3770 = vand.u32 %v2907, 4294901760
        %3771 = vmatmul.f32.gmra.mxu0 %v3770
        %v3772 = vpop.f32.mrf.mxu0
        %v3773 = vadd.f32 %v3698, %v3772
        %v3774 = vand.u32 %v2908, 4294901760
        %3775 = vmatmul.f32.gmra.mxu0 %v3774
        %v3776 = vpop.f32.mrf.mxu0
        %v3777 = vadd.f32 %v3704, %v3776
        %3778 = vdwg.mxu0
        %v3779 = vand.u32 %v3043, 4294901760
        %3780 = vmatpush.msra.mxu0 %v3779
        %v3781 = vand.u32 %v3041, 4294901760
        %3782 = vmatpush.msra.mxu0 %v3781
        %v3783 = vand.u32 %v3039, 4294901760
        %3784 = vmatpush.msra.mxu0 %v3783
        %v3785 = vand.u32 %v3037, 4294901760
        %3786 = vmatpush.msra.mxu0 %v3785
        %v3787 = vand.u32 %v3035, 4294901760
        %3788 = vmatpush.msra.mxu0 %v3787
        %v3789 = vand.u32 %v3033, 4294901760
        %3790 = vmatpush.msra.mxu0 %v3789
        %v3791 = vand.u32 %v3031, 4294901760
        %3792 = vmatpush.msra.mxu0 %v3791
        %v3793 = vand.u32 %v3029, 4294901760
        %3794 = vmatpush.msra.mxu0 %v3793
        %v3795 = vand.u32 %v3027, 4294901760
        %3796 = vmatpush.msra.mxu0 %v3795
        %v3797 = vand.u32 %v3025, 4294901760
        %3798 = vmatpush.msra.mxu0 %v3797
        %v3799 = vand.u32 %v3023, 4294901760
        %3800 = vmatpush.msra.mxu0 %v3799
        %v3801 = vand.u32 %v3021, 4294901760
        %3802 = vmatpush.msra.mxu0 %v3801
        %v3803 = vand.u32 %v3019, 4294901760
        %3804 = vmatpush.msra.mxu0 %v3803
        %v3805 = vand.u32 %v3017, 4294901760
        %3806 = vmatpush.msra.mxu0 %v3805
        %v3807 = vand.u32 %v3015, 4294901760
        %3808 = vmatpush.msra.mxu0 %v3807
        %v3809 = vand.u32 %v3013, 4294901760
        %3810 = vmatpush.msra.mxu0 %v3809
        %v3811 = vand.u32 %v2907, 4294901760
        %3812 = vmatmul.f32.gmra.mxu0 %v3811
        %v3813 = vpop.f32.mrf.mxu0
        %v3814 = vadd.f32 %v3773, %v3813
        %v3815 = vand.u32 %v2908, 4294901760
        %3816 = vmatmul.f32.gmra.mxu0 %v3815
        %v3817 = vpop.f32.mrf.mxu0
        %v3818 = vadd.f32 %v3777, %v3817
        %3819 = vdwg.mxu0
        %v3820 = vadd.f32 %v2587, %v3442
        %v3821 = vadd.f32 %v2588, %v3814
        %v3822 = vadd.f32 %v2589, %v3446
        %v3823 = vadd.f32 %v2590, %v3818
        %s3824 = scalar_lea.vmem [#allocation7], 48
        %v3825 = vld [vmem:[%s3824] ss:$8 sm:$0x3]
        %v3827 = vperm.slane %v3825, 0
        %v3828 = vperm.slane %v3825, 1
        %3829 = vrot.lane.b32.xlu0 %v3827, 51
        %v3830 = vpop.permute.xlu0 %3829
        %3831 = vrot.lane.b32.xlu0 %v3828, 51
        %v3832 = vpop.permute.xlu0 %3831
        %vm3833 = vcmask 416768
        %v3834 = vsel %vm3833, %v3830, %v3832
        %v3838 = vmul.f32 %v251, %v3830
        %v3839 = vmul.f32 %v252, %v3834
        %v3840 = vmul.f32 %v253, %v3832
        %v3841 = vmul.f32 %v254, %v3830
        %v3842 = vmul.f32 %v255, %v3834
        %v3843 = vmul.f32 %v256, %v3832
        %s3844 = scalar_lea.vmem [#allocation7], 49
        %v3845 = vld [vmem:[%s3844] ss:$8 sm:$0x3]
        %v3847 = vperm.slane %v3845, 0
        %v3848 = vperm.slane %v3845, 1
        %3849 = vrot.lane.b32.xlu0 %v3847, 52
        %v3850 = vpop.permute.xlu0 %3849
        %3851 = vrot.lane.b32.xlu0 %v3848, 52
        %v3852 = vpop.permute.xlu0 %3851
        %vm3853 = vcmask 424960
        %v3854 = vsel %vm3853, %v3850, %v3852
        %v3858 = vmul.f32 %v251, %v3850
        %v3859 = vmul.f32 %v252, %v3854
        %v3860 = vmul.f32 %v253, %v3852
        %v3861 = vmul.f32 %v254, %v3850
        %v3862 = vmul.f32 %v255, %v3854
        %v3863 = vmul.f32 %v256, %v3852
        %s3864 = scalar_lea.vmem [#allocation7], 50
        %v3865 = vld [vmem:[%s3864] ss:$8 sm:$0x3]
        %v3867 = vperm.slane %v3865, 0
        %v3868 = vperm.slane %v3865, 1
        %3869 = vrot.lane.b32.xlu0 %v3867, 53
        %v3870 = vpop.permute.xlu0 %3869
        %3871 = vrot.lane.b32.xlu0 %v3868, 53
        %v3872 = vpop.permute.xlu0 %3871
        %vm3873 = vcmask 433152
        %v3874 = vsel %vm3873, %v3870, %v3872
        %v3878 = vmul.f32 %v251, %v3870
        %v3879 = vmul.f32 %v252, %v3874
        %v3880 = vmul.f32 %v253, %v3872
        %v3881 = vmul.f32 %v254, %v3870
        %v3882 = vmul.f32 %v255, %v3874
        %v3883 = vmul.f32 %v256, %v3872
        %s3884 = scalar_lea.vmem [#allocation7], 51
        %v3885 = vld [vmem:[%s3884] ss:$8 sm:$0x3]
        %v3887 = vperm.slane %v3885, 0
        %v3888 = vperm.slane %v3885, 1
        %3889 = vrot.lane.b32.xlu0 %v3887, 54
        %v3890 = vpop.permute.xlu0 %3889
        %3891 = vrot.lane.b32.xlu0 %v3888, 54
        %v3892 = vpop.permute.xlu0 %3891
        %vm3893 = vcmask 441344
        %v3894 = vsel %vm3893, %v3890, %v3892
        %v3898 = vmul.f32 %v251, %v3890
        %v3899 = vmul.f32 %v252, %v3894
        %v3900 = vmul.f32 %v253, %v3892
        %v3901 = vmul.f32 %v254, %v3890
        %v3902 = vmul.f32 %v255, %v3894
        %v3903 = vmul.f32 %v256, %v3892
        %s3904 = scalar_lea.vmem [#allocation7], 52
        %v3905 = vld [vmem:[%s3904] ss:$8 sm:$0x3]
        %v3907 = vperm.slane %v3905, 0
        %v3908 = vperm.slane %v3905, 1
        %3909 = vrot.lane.b32.xlu0 %v3907, 64
        %v3910 = vpop.permute.xlu0 %3909
        %3911 = vrot.lane.b32.xlu0 %v3908, 64
        %v3912 = vpop.permute.xlu0 %3911
        %vm3913 = vcmask 523264
        %v3914 = vsel %vm3913, %v3910, %v3912
        %v3918 = vmul.f32 %v251, %v3910
        %v3919 = vmul.f32 %v252, %v3914
        %v3920 = vmul.f32 %v253, %v3912
        %v3921 = vmul.f32 %v254, %v3910
        %v3922 = vmul.f32 %v255, %v3914
        %v3923 = vmul.f32 %v256, %v3912
        %s3924 = scalar_lea.vmem [#allocation7], 53
        %v3925 = vld [vmem:[%s3924] ss:$8 sm:$0x3]
        %v3927 = vperm.slane %v3925, 0
        %v3928 = vperm.slane %v3925, 1
        %3929 = vrot.lane.b32.xlu0 %v3927, 65
        %v3930 = vpop.permute.xlu0 %3929
        %3931 = vrot.lane.b32.xlu0 %v3928, 65
        %v3932 = vpop.permute.xlu0 %3931
        %vm3933 = vcmask 531456
        %v3934 = vsel %vm3933, %v3930, %v3932
        %v3938 = vmul.f32 %v251, %v3930
        %v3939 = vmul.f32 %v252, %v3934
        %v3940 = vmul.f32 %v253, %v3932
        %v3941 = vmul.f32 %v254, %v3930
        %v3942 = vmul.f32 %v255, %v3934
        %v3943 = vmul.f32 %v256, %v3932
        %s3944 = scalar_lea.vmem [#allocation7], 54
        %v3945 = vld [vmem:[%s3944] ss:$8 sm:$0x3]
        %v3947 = vperm.slane %v3945, 0
        %v3948 = vperm.slane %v3945, 1
        %3949 = vrot.lane.b32.xlu0 %v3947, 66
        %v3950 = vpop.permute.xlu0 %3949
        %3951 = vrot.lane.b32.xlu0 %v3948, 66
        %v3952 = vpop.permute.xlu0 %3951
        %vm3953 = vcmask 539648
        %v3954 = vsel %vm3953, %v3950, %v3952
        %v3958 = vmul.f32 %v251, %v3950
        %v3959 = vmul.f32 %v252, %v3954
        %v3960 = vmul.f32 %v253, %v3952
        %v3961 = vmul.f32 %v254, %v3950
        %v3962 = vmul.f32 %v255, %v3954
        %v3963 = vmul.f32 %v256, %v3952
        %s3964 = scalar_lea.vmem [#allocation7], 55
        %v3965 = vld [vmem:[%s3964] ss:$8 sm:$0x3]
        %v3967 = vperm.slane %v3965, 0
        %v3968 = vperm.slane %v3965, 1
        %3969 = vrot.lane.b32.xlu0 %v3967, 67
        %v3970 = vpop.permute.xlu0 %3969
        %3971 = vrot.lane.b32.xlu0 %v3968, 67
        %v3972 = vpop.permute.xlu0 %3971
        %vm3973 = vcmask 547840
        %v3974 = vsel %vm3973, %v3970, %v3972
        %v3978 = vmul.f32 %v251, %v3970
        %v3979 = vmul.f32 %v252, %v3974
        %v3980 = vmul.f32 %v253, %v3972
        %v3981 = vmul.f32 %v254, %v3970
        %v3982 = vmul.f32 %v255, %v3974
        %v3983 = vmul.f32 %v256, %v3972
        %3990 = vrot.lane.b32.xlu0 %v3858, 127
        %v3991 = vpop.permute.xlu0 %3990
        %3992 = vrot.lane.b32.xlu0 %v3859, 127
        %v3993 = vpop.permute.xlu0 %3992
        %3994 = vrot.lane.b32.xlu0 %v3860, 127
        %v3995 = vpop.permute.xlu0 %3994
        %3996 = vrot.lane.b32.xlu0 %v3861, 127
        %v3997 = vpop.permute.xlu0 %3996
        %3998 = vrot.lane.b32.xlu0 %v3862, 127
        %v3999 = vpop.permute.xlu0 %3998
        %4000 = vrot.lane.b32.xlu0 %v3863, 127
        %v4001 = vpop.permute.xlu0 %4000
        %v4002 = vsel %vm437, %v3991, %v3993
        %v4003 = vsel %vm437, %v3993, %v3995
        %v4004 = vsel %vm437, %v3997, %v3999
        %v4005 = vsel %vm437, %v3999, %v4001
        %4012 = vrot.lane.b32.xlu0 %v3878, 126
        %v4013 = vpop.permute.xlu0 %4012
        %4014 = vrot.lane.b32.xlu0 %v3879, 126
        %v4015 = vpop.permute.xlu0 %4014
        %4016 = vrot.lane.b32.xlu0 %v3880, 126
        %v4017 = vpop.permute.xlu0 %4016
        %4018 = vrot.lane.b32.xlu0 %v3881, 126
        %v4019 = vpop.permute.xlu0 %4018
        %4020 = vrot.lane.b32.xlu0 %v3882, 126
        %v4021 = vpop.permute.xlu0 %4020
        %4022 = vrot.lane.b32.xlu0 %v3883, 126
        %v4023 = vpop.permute.xlu0 %4022
        %v4024 = vsel %vm464, %v4013, %v4015
        %v4025 = vsel %vm464, %v4015, %v4017
        %v4026 = vsel %vm464, %v4019, %v4021
        %v4027 = vsel %vm464, %v4021, %v4023
        %4034 = vrot.lane.b32.xlu0 %v3898, 125
        %v4035 = vpop.permute.xlu0 %4034
        %4036 = vrot.lane.b32.xlu0 %v3899, 125
        %v4037 = vpop.permute.xlu0 %4036
        %4038 = vrot.lane.b32.xlu0 %v3900, 125
        %v4039 = vpop.permute.xlu0 %4038
        %4040 = vrot.lane.b32.xlu0 %v3901, 125
        %v4041 = vpop.permute.xlu0 %4040
        %4042 = vrot.lane.b32.xlu0 %v3902, 125
        %v4043 = vpop.permute.xlu0 %4042
        %4044 = vrot.lane.b32.xlu0 %v3903, 125
        %v4045 = vpop.permute.xlu0 %4044
        %v4046 = vsel %vm491, %v4035, %v4037
        %v4047 = vsel %vm491, %v4037, %v4039
        %v4048 = vsel %vm491, %v4041, %v4043
        %v4049 = vsel %vm491, %v4043, %v4045
        %4056 = vrot.lane.b32.xlu0 %v3918, 115
        %v4057 = vpop.permute.xlu0 %4056
        %4058 = vrot.lane.b32.xlu0 %v3919, 115
        %v4059 = vpop.permute.xlu0 %4058
        %4060 = vrot.lane.b32.xlu0 %v3920, 115
        %v4061 = vpop.permute.xlu0 %4060
        %4062 = vrot.lane.b32.xlu0 %v3921, 115
        %v4063 = vpop.permute.xlu0 %4062
        %4064 = vrot.lane.b32.xlu0 %v3922, 115
        %v4065 = vpop.permute.xlu0 %4064
        %4066 = vrot.lane.b32.xlu0 %v3923, 115
        %v4067 = vpop.permute.xlu0 %4066
        %vm4068 = vcmask 941056
        %v4069 = vsel %vm4068, %v4057, %v4059
        %v4070 = vsel %vm4068, %v4059, %v4061
        %v4071 = vsel %vm4068, %v4063, %v4065
        %v4072 = vsel %vm4068, %v4065, %v4067
        %4079 = vrot.lane.b32.xlu0 %v3938, 114
        %v4080 = vpop.permute.xlu0 %4079
        %4081 = vrot.lane.b32.xlu0 %v3939, 114
        %v4082 = vpop.permute.xlu0 %4081
        %4083 = vrot.lane.b32.xlu0 %v3940, 114
        %v4084 = vpop.permute.xlu0 %4083
        %4085 = vrot.lane.b32.xlu0 %v3941, 114
        %v4086 = vpop.permute.xlu0 %4085
        %4087 = vrot.lane.b32.xlu0 %v3942, 114
        %v4088 = vpop.permute.xlu0 %4087
        %4089 = vrot.lane.b32.xlu0 %v3943, 114
        %v4090 = vpop.permute.xlu0 %4089
        %v4091 = vsel %vm2857, %v4080, %v4082
        %v4092 = vsel %vm2857, %v4082, %v4084
        %v4093 = vsel %vm2857, %v4086, %v4088
        %v4094 = vsel %vm2857, %v4088, %v4090
        %4101 = vrot.lane.b32.xlu0 %v3958, 113
        %v4102 = vpop.permute.xlu0 %4101
        %4103 = vrot.lane.b32.xlu0 %v3959, 113
        %v4104 = vpop.permute.xlu0 %4103
        %4105 = vrot.lane.b32.xlu0 %v3960, 113
        %v4106 = vpop.permute.xlu0 %4105
        %4107 = vrot.lane.b32.xlu0 %v3961, 113
        %v4108 = vpop.permute.xlu0 %4107
        %4109 = vrot.lane.b32.xlu0 %v3962, 113
        %v4110 = vpop.permute.xlu0 %4109
        %4111 = vrot.lane.b32.xlu0 %v3963, 113
        %v4112 = vpop.permute.xlu0 %4111
        %v4113 = vsel %vm1646, %v4102, %v4104
        %v4114 = vsel %vm1646, %v4104, %v4106
        %v4115 = vsel %vm1646, %v4108, %v4110
        %v4116 = vsel %vm1646, %v4110, %v4112
        %4123 = vrot.lane.b32.xlu0 %v3978, 112
        %v4124 = vpop.permute.xlu0 %4123
        %4125 = vrot.lane.b32.xlu0 %v3979, 112
        %v4126 = vpop.permute.xlu0 %4125
        %4127 = vrot.lane.b32.xlu0 %v3980, 112
        %v4128 = vpop.permute.xlu0 %4127
        %4129 = vrot.lane.b32.xlu0 %v3981, 112
        %v4130 = vpop.permute.xlu0 %4129
        %4131 = vrot.lane.b32.xlu0 %v3982, 112
        %v4132 = vpop.permute.xlu0 %4131
        %4133 = vrot.lane.b32.xlu0 %v3983, 112
        %v4134 = vpop.permute.xlu0 %4133
        %v4135 = vsel %vm599, %v4124, %v4126
        %v4136 = vsel %vm599, %v4126, %v4128
        %v4137 = vsel %vm599, %v4130, %v4132
        %v4138 = vsel %vm599, %v4132, %v4134
        %s4139 = scalar_lea.vmem [#allocation5], 48
        %v4140 = vld [vmem:[%s4139] sm:$0xff]
        %v4141 = vld [vmem:[%s4139 + $0x8] sm:$0xff]
        %4148 = vrot.lane.b32.xlu0 %v3838, 77
        %v4149 = vpop.permute.xlu0 %4148
        %4150 = vrot.lane.b32.xlu0 %v3839, 77
        %v4151 = vpop.permute.xlu0 %4150
        %4152 = vrot.lane.b32.xlu0 %v3840, 77
        %v4153 = vpop.permute.xlu0 %4152
        %4154 = vrot.lane.b32.xlu0 %v3841, 77
        %v4155 = vpop.permute.xlu0 %4154
        %4156 = vrot.lane.b32.xlu0 %v3842, 77
        %v4157 = vpop.permute.xlu0 %4156
        %4158 = vrot.lane.b32.xlu0 %v3843, 77
        %v4159 = vpop.permute.xlu0 %4158
        %4160 = vrot.lane.b32.xlu0 %v4002, 77
        %v4161 = vpop.permute.xlu0 %4160
        %4162 = vrot.lane.b32.xlu0 %v4003, 77
        %v4163 = vpop.permute.xlu0 %4162
        %4164 = vrot.lane.b32.xlu0 %v3995, 77
        %v4165 = vpop.permute.xlu0 %4164
        %4166 = vrot.lane.b32.xlu0 %v4004, 77
        %v4167 = vpop.permute.xlu0 %4166
        %4168 = vrot.lane.b32.xlu0 %v4005, 77
        %v4169 = vpop.permute.xlu0 %4168
        %4170 = vrot.lane.b32.xlu0 %v4001, 77
        %v4171 = vpop.permute.xlu0 %4170
        %4172 = vrot.lane.b32.xlu0 %v4024, 77
        %v4173 = vpop.permute.xlu0 %4172
        %4174 = vrot.lane.b32.xlu0 %v4025, 77
        %v4175 = vpop.permute.xlu0 %4174
        %4176 = vrot.lane.b32.xlu0 %v4017, 77
        %v4177 = vpop.permute.xlu0 %4176
        %4178 = vrot.lane.b32.xlu0 %v4026, 77
        %v4179 = vpop.permute.xlu0 %4178
        %4180 = vrot.lane.b32.xlu0 %v4027, 77
        %v4181 = vpop.permute.xlu0 %4180
        %4182 = vrot.lane.b32.xlu0 %v4023, 77
        %v4183 = vpop.permute.xlu0 %4182
        %4184 = vrot.lane.b32.xlu0 %v4046, 77
        %v4185 = vpop.permute.xlu0 %4184
        %4186 = vrot.lane.b32.xlu0 %v4047, 77
        %v4187 = vpop.permute.xlu0 %4186
        %4188 = vrot.lane.b32.xlu0 %v4039, 77
        %v4189 = vpop.permute.xlu0 %4188
        %4190 = vrot.lane.b32.xlu0 %v4048, 77
        %v4191 = vpop.permute.xlu0 %4190
        %4192 = vrot.lane.b32.xlu0 %v4049, 77
        %v4193 = vpop.permute.xlu0 %4192
        %4194 = vrot.lane.b32.xlu0 %v4045, 77
        %v4195 = vpop.permute.xlu0 %4194
        %4196 = vrot.lane.b32.xlu0 %v4069, 77
        %v4197 = vpop.permute.xlu0 %4196
        %4198 = vrot.lane.b32.xlu0 %v4070, 77
        %v4199 = vpop.permute.xlu0 %4198
        %4200 = vrot.lane.b32.xlu0 %v4061, 77
        %v4201 = vpop.permute.xlu0 %4200
        %4202 = vrot.lane.b32.xlu0 %v4071, 77
        %v4203 = vpop.permute.xlu0 %4202
        %4204 = vrot.lane.b32.xlu0 %v4072, 77
        %v4205 = vpop.permute.xlu0 %4204
        %4206 = vrot.lane.b32.xlu0 %v4067, 77
        %v4207 = vpop.permute.xlu0 %4206
        %4208 = vrot.lane.b32.xlu0 %v4091, 77
        %v4209 = vpop.permute.xlu0 %4208
        %4210 = vrot.lane.b32.xlu0 %v4092, 77
        %v4211 = vpop.permute.xlu0 %4210
        %4212 = vrot.lane.b32.xlu0 %v4084, 77
        %v4213 = vpop.permute.xlu0 %4212
        %4214 = vrot.lane.b32.xlu0 %v4093, 77
        %v4215 = vpop.permute.xlu0 %4214
        %4216 = vrot.lane.b32.xlu0 %v4094, 77
        %v4217 = vpop.permute.xlu0 %4216
        %4218 = vrot.lane.b32.xlu0 %v4090, 77
        %v4219 = vpop.permute.xlu0 %4218
        %4220 = vrot.lane.b32.xlu0 %v4113, 77
        %v4221 = vpop.permute.xlu0 %4220
        %4222 = vrot.lane.b32.xlu0 %v4114, 77
        %v4223 = vpop.permute.xlu0 %4222
        %4224 = vrot.lane.b32.xlu0 %v4106, 77
        %v4225 = vpop.permute.xlu0 %4224
        %4226 = vrot.lane.b32.xlu0 %v4115, 77
        %v4227 = vpop.permute.xlu0 %4226
        %4228 = vrot.lane.b32.xlu0 %v4116, 77
        %v4229 = vpop.permute.xlu0 %4228
        %4230 = vrot.lane.b32.xlu0 %v4112, 77
        %v4231 = vpop.permute.xlu0 %4230
        %4232 = vrot.lane.b32.xlu0 %v4135, 77
        %v4233 = vpop.permute.xlu0 %4232
        %4234 = vrot.lane.b32.xlu0 %v4136, 77
        %v4235 = vpop.permute.xlu0 %4234
        %4236 = vrot.lane.b32.xlu0 %v4128, 77
        %v4237 = vpop.permute.xlu0 %4236
        %4238 = vrot.lane.b32.xlu0 %v4137, 77
        %v4239 = vpop.permute.xlu0 %4238
        %4240 = vrot.lane.b32.xlu0 %v4138, 77
        %v4241 = vpop.permute.xlu0 %4240
        %4242 = vrot.lane.b32.xlu0 %v4134, 77
        %v4243 = vpop.permute.xlu0 %4242
        %vm4244 = vcmask 629760
        %v4245 = vsel %vm4244, %v4149, %v4151
        %v4246 = vsel %vm4244, %v4151, %v4153
        %v4247 = vsel %vm4244, %v4155, %v4157
        %v4248 = vsel %vm4244, %v4157, %v4159
        %v4249 = vsel %vm4244, %v4161, %v4163
        %v4250 = vsel %vm4244, %v4163, %v4165
        %v4251 = vsel %vm4244, %v4167, %v4169
        %v4252 = vsel %vm4244, %v4169, %v4171
        %v4253 = vsel %vm4244, %v4173, %v4175
        %v4254 = vsel %vm4244, %v4175, %v4177
        %v4255 = vsel %vm4244, %v4179, %v4181
        %v4256 = vsel %vm4244, %v4181, %v4183
        %v4257 = vsel %vm4244, %v4185, %v4187
        %v4258 = vsel %vm4244, %v4187, %v4189
        %v4259 = vsel %vm4244, %v4191, %v4193
        %v4260 = vsel %vm4244, %v4193, %v4195
        %v4261 = vsel %vm4244, %v4197, %v4199
        %v4262 = vsel %vm4244, %v4199, %v4201
        %v4263 = vsel %vm4244, %v4203, %v4205
        %v4264 = vsel %vm4244, %v4205, %v4207
        %v4265 = vsel %vm4244, %v4209, %v4211
        %v4266 = vsel %vm4244, %v4211, %v4213
        %v4267 = vsel %vm4244, %v4215, %v4217
        %v4268 = vsel %vm4244, %v4217, %v4219
        %v4269 = vsel %vm4244, %v4221, %v4223
        %v4270 = vsel %vm4244, %v4223, %v4225
        %v4271 = vsel %vm4244, %v4227, %v4229
        %v4272 = vsel %vm4244, %v4229, %v4231
        %v4273 = vsel %vm4244, %v4233, %v4235
        %v4274 = vsel %vm4244, %v4235, %v4237
        %v4275 = vsel %vm4244, %v4239, %v4241
        %v4276 = vsel %vm4244, %v4241, %v4243
        %v4309 = vand.u32 %v4275, 4294901760
        %4310 = vmatpush.msra.mxu0 %v4309
        %v4311 = vand.u32 %v4273, 4294901760
        %4312 = vmatpush.msra.mxu0 %v4311
        %v4313 = vand.u32 %v4271, 4294901760
        %4314 = vmatpush.msra.mxu0 %v4313
        %v4315 = vand.u32 %v4269, 4294901760
        %4316 = vmatpush.msra.mxu0 %v4315
        %v4317 = vand.u32 %v4267, 4294901760
        %4318 = vmatpush.msra.mxu0 %v4317
        %v4319 = vand.u32 %v4265, 4294901760
        %4320 = vmatpush.msra.mxu0 %v4319
        %v4321 = vand.u32 %v4263, 4294901760
        %4322 = vmatpush.msra.mxu0 %v4321
        %v4323 = vand.u32 %v4261, 4294901760
        %4324 = vmatpush.msra.mxu0 %v4323
        %v4325 = vand.u32 %v4259, 4294901760
        %4326 = vmatpush.msra.mxu0 %v4325
        %v4327 = vand.u32 %v4257, 4294901760
        %4328 = vmatpush.msra.mxu0 %v4327
        %v4329 = vand.u32 %v4255, 4294901760
        %4330 = vmatpush.msra.mxu0 %v4329
        %v4331 = vand.u32 %v4253, 4294901760
        %4332 = vmatpush.msra.mxu0 %v4331
        %v4333 = vand.u32 %v4251, 4294901760
        %4334 = vmatpush.msra.mxu0 %v4333
        %v4335 = vand.u32 %v4249, 4294901760
        %4336 = vmatpush.msra.mxu0 %v4335
        %v4337 = vand.u32 %v4247, 4294901760
        %4338 = vmatpush.msra.mxu0 %v4337
        %v4339 = vand.u32 %v4245, 4294901760
        %4340 = vmatpush.msra.mxu0 %v4339
        %v4341 = vand.u32 %v4140, 4294901760
        %v4342 = vsub.f32 %v4140, %v4341
        %v4343 = vand.u32 %v4342, 4294901760
        %v4344 = vsub.f32 %v4342, %v4343
        %v4345 = vand.u32 %v4344, 4294901760
        %4346 = vmatmul.f32.gmra.mxu0 %v4345
        %v4347 = vpop.f32.mrf.mxu0
        %v4348 = vadd.f32 0.0, %v4347
        %v4349 = vand.u32 %v4141, 4294901760
        %v4350 = vsub.f32 %v4141, %v4349
        %v4351 = vand.u32 %v4350, 4294901760
        %v4352 = vsub.f32 %v4350, %v4351
        %v4353 = vand.u32 %v4352, 4294901760
        %4354 = vmatmul.f32.gmra.mxu0 %v4353
        %v4355 = vpop.f32.mrf.mxu0
        %v4356 = vadd.f32 0.0, %v4355
        %4357 = vdwg.mxu0
        %v4358 = vand.u32 %v4275, 4294901760
        %v4359 = vsub.f32 %v4275, %v4358
        %v4360 = vand.u32 %v4359, 4294901760
        %v4361 = vsub.f32 %v4359, %v4360
        %v4362 = vand.u32 %v4361, 4294901760
        %4363 = vmatpush.msra.mxu0 %v4362
        %v4364 = vand.u32 %v4273, 4294901760
        %v4365 = vsub.f32 %v4273, %v4364
        %v4366 = vand.u32 %v4365, 4294901760
        %v4367 = vsub.f32 %v4365, %v4366
        %v4368 = vand.u32 %v4367, 4294901760
        %4369 = vmatpush.msra.mxu0 %v4368
        %v4370 = vand.u32 %v4271, 4294901760
        %v4371 = vsub.f32 %v4271, %v4370
        %v4372 = vand.u32 %v4371, 4294901760
        %v4373 = vsub.f32 %v4371, %v4372
        %v4374 = vand.u32 %v4373, 4294901760
        %4375 = vmatpush.msra.mxu0 %v4374
        %v4376 = vand.u32 %v4269, 4294901760
        %v4377 = vsub.f32 %v4269, %v4376
        %v4378 = vand.u32 %v4377, 4294901760
        %v4379 = vsub.f32 %v4377, %v4378
        %v4380 = vand.u32 %v4379, 4294901760
        %4381 = vmatpush.msra.mxu0 %v4380
        %v4382 = vand.u32 %v4267, 4294901760
        %v4383 = vsub.f32 %v4267, %v4382
        %v4384 = vand.u32 %v4383, 4294901760
        %v4385 = vsub.f32 %v4383, %v4384
        %v4386 = vand.u32 %v4385, 4294901760
        %4387 = vmatpush.msra.mxu0 %v4386
        %v4388 = vand.u32 %v4265, 4294901760
        %v4389 = vsub.f32 %v4265, %v4388
        %v4390 = vand.u32 %v4389, 4294901760
        %v4391 = vsub.f32 %v4389, %v4390
        %v4392 = vand.u32 %v4391, 4294901760
        %4393 = vmatpush.msra.mxu0 %v4392
        %v4394 = vand.u32 %v4263, 4294901760
        %v4395 = vsub.f32 %v4263, %v4394
        %v4396 = vand.u32 %v4395, 4294901760
        %v4397 = vsub.f32 %v4395, %v4396
        %v4398 = vand.u32 %v4397, 4294901760
        %4399 = vmatpush.msra.mxu0 %v4398
        %v4400 = vand.u32 %v4261, 4294901760
        %v4401 = vsub.f32 %v4261, %v4400
        %v4402 = vand.u32 %v4401, 4294901760
        %v4403 = vsub.f32 %v4401, %v4402
        %v4404 = vand.u32 %v4403, 4294901760
        %4405 = vmatpush.msra.mxu0 %v4404
        %v4406 = vand.u32 %v4259, 4294901760
        %v4407 = vsub.f32 %v4259, %v4406
        %v4408 = vand.u32 %v4407, 4294901760
        %v4409 = vsub.f32 %v4407, %v4408
        %v4410 = vand.u32 %v4409, 4294901760
        %4411 = vmatpush.msra.mxu0 %v4410
        %v4412 = vand.u32 %v4257, 4294901760
        %v4413 = vsub.f32 %v4257, %v4412
        %v4414 = vand.u32 %v4413, 4294901760
        %v4415 = vsub.f32 %v4413, %v4414
        %v4416 = vand.u32 %v4415, 4294901760
        %4417 = vmatpush.msra.mxu0 %v4416
        %v4418 = vand.u32 %v4255, 4294901760
        %v4419 = vsub.f32 %v4255, %v4418
        %v4420 = vand.u32 %v4419, 4294901760
        %v4421 = vsub.f32 %v4419, %v4420
        %v4422 = vand.u32 %v4421, 4294901760
        %4423 = vmatpush.msra.mxu0 %v4422
        %v4424 = vand.u32 %v4253, 4294901760
        %v4425 = vsub.f32 %v4253, %v4424
        %v4426 = vand.u32 %v4425, 4294901760
        %v4427 = vsub.f32 %v4425, %v4426
        %v4428 = vand.u32 %v4427, 4294901760
        %4429 = vmatpush.msra.mxu0 %v4428
        %v4430 = vand.u32 %v4251, 4294901760
        %v4431 = vsub.f32 %v4251, %v4430
        %v4432 = vand.u32 %v4431, 4294901760
        %v4433 = vsub.f32 %v4431, %v4432
        %v4434 = vand.u32 %v4433, 4294901760
        %4435 = vmatpush.msra.mxu0 %v4434
        %v4436 = vand.u32 %v4249, 4294901760
        %v4437 = vsub.f32 %v4249, %v4436
        %v4438 = vand.u32 %v4437, 4294901760
        %v4439 = vsub.f32 %v4437, %v4438
        %v4440 = vand.u32 %v4439, 4294901760
        %4441 = vmatpush.msra.mxu0 %v4440
        %v4442 = vand.u32 %v4247, 4294901760
        %v4443 = vsub.f32 %v4247, %v4442
        %v4444 = vand.u32 %v4443, 4294901760
        %v4445 = vsub.f32 %v4443, %v4444
        %v4446 = vand.u32 %v4445, 4294901760
        %4447 = vmatpush.msra.mxu0 %v4446
        %v4448 = vand.u32 %v4245, 4294901760
        %v4449 = vsub.f32 %v4245, %v4448
        %v4450 = vand.u32 %v4449, 4294901760
        %v4451 = vsub.f32 %v4449, %v4450
        %v4452 = vand.u32 %v4451, 4294901760
        %4453 = vmatpush.msra.mxu0 %v4452
        %v4454 = vand.u32 %v4140, 4294901760
        %4455 = vmatmul.f32.gmra.mxu0 %v4454
        %v4456 = vpop.f32.mrf.mxu0
        %v4457 = vadd.f32 %v4348, %v4456
        %v4458 = vand.u32 %v4141, 4294901760
        %4459 = vmatmul.f32.gmra.mxu0 %v4458
        %v4460 = vpop.f32.mrf.mxu0
        %v4461 = vadd.f32 %v4356, %v4460
        %4462 = vdwg.mxu0
        %v4463 = vand.u32 %v4275, 4294901760
        %v4464 = vsub.f32 %v4275, %v4463
        %4465 = vmatpush.msra.mxu0 %v4464
        %v4466 = vand.u32 %v4273, 4294901760
        %v4467 = vsub.f32 %v4273, %v4466
        %4468 = vmatpush.msra.mxu0 %v4467
        %v4469 = vand.u32 %v4271, 4294901760
        %v4470 = vsub.f32 %v4271, %v4469
        %4471 = vmatpush.msra.mxu0 %v4470
        %v4472 = vand.u32 %v4269, 4294901760
        %v4473 = vsub.f32 %v4269, %v4472
        %4474 = vmatpush.msra.mxu0 %v4473
        %v4475 = vand.u32 %v4267, 4294901760
        %v4476 = vsub.f32 %v4267, %v4475
        %4477 = vmatpush.msra.mxu0 %v4476
        %v4478 = vand.u32 %v4265, 4294901760
        %v4479 = vsub.f32 %v4265, %v4478
        %4480 = vmatpush.msra.mxu0 %v4479
        %v4481 = vand.u32 %v4263, 4294901760
        %v4482 = vsub.f32 %v4263, %v4481
        %4483 = vmatpush.msra.mxu0 %v4482
        %v4484 = vand.u32 %v4261, 4294901760
        %v4485 = vsub.f32 %v4261, %v4484
        %4486 = vmatpush.msra.mxu0 %v4485
        %v4487 = vand.u32 %v4259, 4294901760
        %v4488 = vsub.f32 %v4259, %v4487
        %4489 = vmatpush.msra.mxu0 %v4488
        %v4490 = vand.u32 %v4257, 4294901760
        %v4491 = vsub.f32 %v4257, %v4490
        %4492 = vmatpush.msra.mxu0 %v4491
        %v4493 = vand.u32 %v4255, 4294901760
        %v4494 = vsub.f32 %v4255, %v4493
        %4495 = vmatpush.msra.mxu0 %v4494
        %v4496 = vand.u32 %v4253, 4294901760
        %v4497 = vsub.f32 %v4253, %v4496
        %4498 = vmatpush.msra.mxu0 %v4497
        %v4499 = vand.u32 %v4251, 4294901760
        %v4500 = vsub.f32 %v4251, %v4499
        %4501 = vmatpush.msra.mxu0 %v4500
        %v4502 = vand.u32 %v4249, 4294901760
        %v4503 = vsub.f32 %v4249, %v4502
        %4504 = vmatpush.msra.mxu0 %v4503
        %v4505 = vand.u32 %v4247, 4294901760
        %v4506 = vsub.f32 %v4247, %v4505
        %4507 = vmatpush.msra.mxu0 %v4506
        %v4508 = vand.u32 %v4245, 4294901760
        %v4509 = vsub.f32 %v4245, %v4508
        %4510 = vmatpush.msra.mxu0 %v4509
        %v4511 = vand.u32 %v4140, 4294901760
        %v4512 = vsub.f32 %v4140, %v4511
        %4513 = vmatmul.f32.gmra.mxu0 %v4512
        %v4514 = vpop.f32.mrf.mxu0
        %v4515 = vadd.f32 %v4457, %v4514
        %v4516 = vand.u32 %v4141, 4294901760
        %v4517 = vsub.f32 %v4141, %v4516
        %4518 = vmatmul.f32.gmra.mxu0 %v4517
        %v4519 = vpop.f32.mrf.mxu0
        %v4520 = vadd.f32 %v4461, %v4519
        %4521 = vdwg.mxu0
        %v4522 = vand.u32 %v4275, 4294901760
        %4523 = vmatpush.msra.mxu0 %v4522
        %v4524 = vand.u32 %v4273, 4294901760
        %4525 = vmatpush.msra.mxu0 %v4524
        %v4526 = vand.u32 %v4271, 4294901760
        %4527 = vmatpush.msra.mxu0 %v4526
        %v4528 = vand.u32 %v4269, 4294901760
        %4529 = vmatpush.msra.mxu0 %v4528
        %v4530 = vand.u32 %v4267, 4294901760
        %4531 = vmatpush.msra.mxu0 %v4530
        %v4532 = vand.u32 %v4265, 4294901760
        %4533 = vmatpush.msra.mxu0 %v4532
        %v4534 = vand.u32 %v4263, 4294901760
        %4535 = vmatpush.msra.mxu0 %v4534
        %v4536 = vand.u32 %v4261, 4294901760
        %4537 = vmatpush.msra.mxu0 %v4536
        %v4538 = vand.u32 %v4259, 4294901760
        %4539 = vmatpush.msra.mxu0 %v4538
        %v4540 = vand.u32 %v4257, 4294901760
        %4541 = vmatpush.msra.mxu0 %v4540
        %v4542 = vand.u32 %v4255, 4294901760
        %4543 = vmatpush.msra.mxu0 %v4542
        %v4544 = vand.u32 %v4253, 4294901760
        %4545 = vmatpush.msra.mxu0 %v4544
        %v4546 = vand.u32 %v4251, 4294901760
        %4547 = vmatpush.msra.mxu0 %v4546
        %v4548 = vand.u32 %v4249, 4294901760
        %4549 = vmatpush.msra.mxu0 %v4548
        %v4550 = vand.u32 %v4247, 4294901760
        %4551 = vmatpush.msra.mxu0 %v4550
        %v4552 = vand.u32 %v4245, 4294901760
        %4553 = vmatpush.msra.mxu0 %v4552
        %v4554 = vand.u32 %v4140, 4294901760
        %v4555 = vsub.f32 %v4140, %v4554
        %v4556 = vand.u32 %v4555, 4294901760
        %4557 = vmatmul.f32.gmra.mxu0 %v4556
        %v4558 = vpop.f32.mrf.mxu0
        %v4559 = vadd.f32 %v4515, %v4558
        %v4560 = vand.u32 %v4141, 4294901760
        %v4561 = vsub.f32 %v4141, %v4560
        %v4562 = vand.u32 %v4561, 4294901760
        %4563 = vmatmul.f32.gmra.mxu0 %v4562
        %v4564 = vpop.f32.mrf.mxu0
        %v4565 = vadd.f32 %v4520, %v4564
        %4566 = vdwg.mxu0
        %v4567 = vand.u32 %v4275, 4294901760
        %v4568 = vsub.f32 %v4275, %v4567
        %v4569 = vand.u32 %v4568, 4294901760
        %4570 = vmatpush.msra.mxu0 %v4569
        %v4571 = vand.u32 %v4273, 4294901760
        %v4572 = vsub.f32 %v4273, %v4571
        %v4573 = vand.u32 %v4572, 4294901760
        %4574 = vmatpush.msra.mxu0 %v4573
        %v4575 = vand.u32 %v4271, 4294901760
        %v4576 = vsub.f32 %v4271, %v4575
        %v4577 = vand.u32 %v4576, 4294901760
        %4578 = vmatpush.msra.mxu0 %v4577
        %v4579 = vand.u32 %v4269, 4294901760
        %v4580 = vsub.f32 %v4269, %v4579
        %v4581 = vand.u32 %v4580, 4294901760
        %4582 = vmatpush.msra.mxu0 %v4581
        %v4583 = vand.u32 %v4267, 4294901760
        %v4584 = vsub.f32 %v4267, %v4583
        %v4585 = vand.u32 %v4584, 4294901760
        %4586 = vmatpush.msra.mxu0 %v4585
        %v4587 = vand.u32 %v4265, 4294901760
        %v4588 = vsub.f32 %v4265, %v4587
        %v4589 = vand.u32 %v4588, 4294901760
        %4590 = vmatpush.msra.mxu0 %v4589
        %v4591 = vand.u32 %v4263, 4294901760
        %v4592 = vsub.f32 %v4263, %v4591
        %v4593 = vand.u32 %v4592, 4294901760
        %4594 = vmatpush.msra.mxu0 %v4593
        %v4595 = vand.u32 %v4261, 4294901760
        %v4596 = vsub.f32 %v4261, %v4595
        %v4597 = vand.u32 %v4596, 4294901760
        %4598 = vmatpush.msra.mxu0 %v4597
        %v4599 = vand.u32 %v4259, 4294901760
        %v4600 = vsub.f32 %v4259, %v4599
        %v4601 = vand.u32 %v4600, 4294901760
        %4602 = vmatpush.msra.mxu0 %v4601
        %v4603 = vand.u32 %v4257, 4294901760
        %v4604 = vsub.f32 %v4257, %v4603
        %v4605 = vand.u32 %v4604, 4294901760
        %4606 = vmatpush.msra.mxu0 %v4605
        %v4607 = vand.u32 %v4255, 4294901760
        %v4608 = vsub.f32 %v4255, %v4607
        %v4609 = vand.u32 %v4608, 4294901760
        %4610 = vmatpush.msra.mxu0 %v4609
        %v4611 = vand.u32 %v4253, 4294901760
        %v4612 = vsub.f32 %v4253, %v4611
        %v4613 = vand.u32 %v4612, 4294901760
        %4614 = vmatpush.msra.mxu0 %v4613
        %v4615 = vand.u32 %v4251, 4294901760
        %v4616 = vsub.f32 %v4251, %v4615
        %v4617 = vand.u32 %v4616, 4294901760
        %4618 = vmatpush.msra.mxu0 %v4617
        %v4619 = vand.u32 %v4249, 4294901760
        %v4620 = vsub.f32 %v4249, %v4619
        %v4621 = vand.u32 %v4620, 4294901760
        %4622 = vmatpush.msra.mxu0 %v4621
        %v4623 = vand.u32 %v4247, 4294901760
        %v4624 = vsub.f32 %v4247, %v4623
        %v4625 = vand.u32 %v4624, 4294901760
        %4626 = vmatpush.msra.mxu0 %v4625
        %v4627 = vand.u32 %v4245, 4294901760
        %v4628 = vsub.f32 %v4245, %v4627
        %v4629 = vand.u32 %v4628, 4294901760
        %4630 = vmatpush.msra.mxu0 %v4629
        %v4631 = vand.u32 %v4140, 4294901760
        %4632 = vmatmul.f32.gmra.mxu0 %v4631
        %v4633 = vpop.f32.mrf.mxu0
        %v4634 = vadd.f32 %v4559, %v4633
        %v4635 = vand.u32 %v4141, 4294901760
        %4636 = vmatmul.f32.gmra.mxu0 %v4635
        %v4637 = vpop.f32.mrf.mxu0
        %v4638 = vadd.f32 %v4565, %v4637
        %4639 = vdwg.mxu0
        %v4640 = vand.u32 %v4275, 4294901760
        %4641 = vmatpush.msra.mxu0 %v4640
        %v4642 = vand.u32 %v4273, 4294901760
        %4643 = vmatpush.msra.mxu0 %v4642
        %v4644 = vand.u32 %v4271, 4294901760
        %4645 = vmatpush.msra.mxu0 %v4644
        %v4646 = vand.u32 %v4269, 4294901760
        %4647 = vmatpush.msra.mxu0 %v4646
        %v4648 = vand.u32 %v4267, 4294901760
        %4649 = vmatpush.msra.mxu0 %v4648
        %v4650 = vand.u32 %v4265, 4294901760
        %4651 = vmatpush.msra.mxu0 %v4650
        %v4652 = vand.u32 %v4263, 4294901760
        %4653 = vmatpush.msra.mxu0 %v4652
        %v4654 = vand.u32 %v4261, 4294901760
        %4655 = vmatpush.msra.mxu0 %v4654
        %v4656 = vand.u32 %v4259, 4294901760
        %4657 = vmatpush.msra.mxu0 %v4656
        %v4658 = vand.u32 %v4257, 4294901760
        %4659 = vmatpush.msra.mxu0 %v4658
        %v4660 = vand.u32 %v4255, 4294901760
        %4661 = vmatpush.msra.mxu0 %v4660
        %v4662 = vand.u32 %v4253, 4294901760
        %4663 = vmatpush.msra.mxu0 %v4662
        %v4664 = vand.u32 %v4251, 4294901760
        %4665 = vmatpush.msra.mxu0 %v4664
        %v4666 = vand.u32 %v4249, 4294901760
        %4667 = vmatpush.msra.mxu0 %v4666
        %v4668 = vand.u32 %v4247, 4294901760
        %4669 = vmatpush.msra.mxu0 %v4668
        %v4670 = vand.u32 %v4245, 4294901760
        %4671 = vmatpush.msra.mxu0 %v4670
        %v4672 = vand.u32 %v4140, 4294901760
        %4673 = vmatmul.f32.gmra.mxu0 %v4672
        %v4674 = vpop.f32.mrf.mxu0
        %v4675 = vadd.f32 %v4634, %v4674
        %v4676 = vand.u32 %v4141, 4294901760
        %4677 = vmatmul.f32.gmra.mxu0 %v4676
        %v4678 = vpop.f32.mrf.mxu0
        %v4679 = vadd.f32 %v4638, %v4678
        %4680 = vdwg.mxu0
        %v4681 = vand.u32 %v4276, 4294901760
        %4682 = vmatpush.msra.mxu0 %v4681
        %v4683 = vand.u32 %v4274, 4294901760
        %4684 = vmatpush.msra.mxu0 %v4683
        %v4685 = vand.u32 %v4272, 4294901760
        %4686 = vmatpush.msra.mxu0 %v4685
        %v4687 = vand.u32 %v4270, 4294901760
        %4688 = vmatpush.msra.mxu0 %v4687
        %v4689 = vand.u32 %v4268, 4294901760
        %4690 = vmatpush.msra.mxu0 %v4689
        %v4691 = vand.u32 %v4266, 4294901760
        %4692 = vmatpush.msra.mxu0 %v4691
        %v4693 = vand.u32 %v4264, 4294901760
        %4694 = vmatpush.msra.mxu0 %v4693
        %v4695 = vand.u32 %v4262, 4294901760
        %4696 = vmatpush.msra.mxu0 %v4695
        %v4697 = vand.u32 %v4260, 4294901760
        %4698 = vmatpush.msra.mxu0 %v4697
        %v4699 = vand.u32 %v4258, 4294901760
        %4700 = vmatpush.msra.mxu0 %v4699
        %v4701 = vand.u32 %v4256, 4294901760
        %4702 = vmatpush.msra.mxu0 %v4701
        %v4703 = vand.u32 %v4254, 4294901760
        %4704 = vmatpush.msra.mxu0 %v4703
        %v4705 = vand.u32 %v4252, 4294901760
        %4706 = vmatpush.msra.mxu0 %v4705
        %v4707 = vand.u32 %v4250, 4294901760
        %4708 = vmatpush.msra.mxu0 %v4707
        %v4709 = vand.u32 %v4248, 4294901760
        %4710 = vmatpush.msra.mxu0 %v4709
        %v4711 = vand.u32 %v4246, 4294901760
        %4712 = vmatpush.msra.mxu0 %v4711
        %v4713 = vand.u32 %v4140, 4294901760
        %v4714 = vsub.f32 %v4140, %v4713
        %v4715 = vand.u32 %v4714, 4294901760
        %v4716 = vsub.f32 %v4714, %v4715
        %v4717 = vand.u32 %v4716, 4294901760
        %4718 = vmatmul.f32.gmra.mxu0 %v4717
        %v4719 = vpop.f32.mrf.mxu0
        %v4720 = vadd.f32 0.0, %v4719
        %v4721 = vand.u32 %v4141, 4294901760
        %v4722 = vsub.f32 %v4141, %v4721
        %v4723 = vand.u32 %v4722, 4294901760
        %v4724 = vsub.f32 %v4722, %v4723
        %v4725 = vand.u32 %v4724, 4294901760
        %4726 = vmatmul.f32.gmra.mxu0 %v4725
        %v4727 = vpop.f32.mrf.mxu0
        %v4728 = vadd.f32 0.0, %v4727
        %4729 = vdwg.mxu0
        %v4730 = vand.u32 %v4276, 4294901760
        %v4731 = vsub.f32 %v4276, %v4730
        %v4732 = vand.u32 %v4731, 4294901760
        %v4733 = vsub.f32 %v4731, %v4732
        %v4734 = vand.u32 %v4733, 4294901760
        %4735 = vmatpush.msra.mxu0 %v4734
        %v4736 = vand.u32 %v4274, 4294901760
        %v4737 = vsub.f32 %v4274, %v4736
        %v4738 = vand.u32 %v4737, 4294901760
        %v4739 = vsub.f32 %v4737, %v4738
        %v4740 = vand.u32 %v4739, 4294901760
        %4741 = vmatpush.msra.mxu0 %v4740
        %v4742 = vand.u32 %v4272, 4294901760
        %v4743 = vsub.f32 %v4272, %v4742
        %v4744 = vand.u32 %v4743, 4294901760
        %v4745 = vsub.f32 %v4743, %v4744
        %v4746 = vand.u32 %v4745, 4294901760
        %4747 = vmatpush.msra.mxu0 %v4746
        %v4748 = vand.u32 %v4270, 4294901760
        %v4749 = vsub.f32 %v4270, %v4748
        %v4750 = vand.u32 %v4749, 4294901760
        %v4751 = vsub.f32 %v4749, %v4750
        %v4752 = vand.u32 %v4751, 4294901760
        %4753 = vmatpush.msra.mxu0 %v4752
        %v4754 = vand.u32 %v4268, 4294901760
        %v4755 = vsub.f32 %v4268, %v4754
        %v4756 = vand.u32 %v4755, 4294901760
        %v4757 = vsub.f32 %v4755, %v4756
        %v4758 = vand.u32 %v4757, 4294901760
        %4759 = vmatpush.msra.mxu0 %v4758
        %v4760 = vand.u32 %v4266, 4294901760
        %v4761 = vsub.f32 %v4266, %v4760
        %v4762 = vand.u32 %v4761, 4294901760
        %v4763 = vsub.f32 %v4761, %v4762
        %v4764 = vand.u32 %v4763, 4294901760
        %4765 = vmatpush.msra.mxu0 %v4764
        %v4766 = vand.u32 %v4264, 4294901760
        %v4767 = vsub.f32 %v4264, %v4766
        %v4768 = vand.u32 %v4767, 4294901760
        %v4769 = vsub.f32 %v4767, %v4768
        %v4770 = vand.u32 %v4769, 4294901760
        %4771 = vmatpush.msra.mxu0 %v4770
        %v4772 = vand.u32 %v4262, 4294901760
        %v4773 = vsub.f32 %v4262, %v4772
        %v4774 = vand.u32 %v4773, 4294901760
        %v4775 = vsub.f32 %v4773, %v4774
        %v4776 = vand.u32 %v4775, 4294901760
        %4777 = vmatpush.msra.mxu0 %v4776
        %v4778 = vand.u32 %v4260, 4294901760
        %v4779 = vsub.f32 %v4260, %v4778
        %v4780 = vand.u32 %v4779, 4294901760
        %v4781 = vsub.f32 %v4779, %v4780
        %v4782 = vand.u32 %v4781, 4294901760
        %4783 = vmatpush.msra.mxu0 %v4782
        %v4784 = vand.u32 %v4258, 4294901760
        %v4785 = vsub.f32 %v4258, %v4784
        %v4786 = vand.u32 %v4785, 4294901760
        %v4787 = vsub.f32 %v4785, %v4786
        %v4788 = vand.u32 %v4787, 4294901760
        %4789 = vmatpush.msra.mxu0 %v4788
        %v4790 = vand.u32 %v4256, 4294901760
        %v4791 = vsub.f32 %v4256, %v4790
        %v4792 = vand.u32 %v4791, 4294901760
        %v4793 = vsub.f32 %v4791, %v4792
        %v4794 = vand.u32 %v4793, 4294901760
        %4795 = vmatpush.msra.mxu0 %v4794
        %v4796 = vand.u32 %v4254, 4294901760
        %v4797 = vsub.f32 %v4254, %v4796
        %v4798 = vand.u32 %v4797, 4294901760
        %v4799 = vsub.f32 %v4797, %v4798
        %v4800 = vand.u32 %v4799, 4294901760
        %4801 = vmatpush.msra.mxu0 %v4800
        %v4802 = vand.u32 %v4252, 4294901760
        %v4803 = vsub.f32 %v4252, %v4802
        %v4804 = vand.u32 %v4803, 4294901760
        %v4805 = vsub.f32 %v4803, %v4804
        %v4806 = vand.u32 %v4805, 4294901760
        %4807 = vmatpush.msra.mxu0 %v4806
        %v4808 = vand.u32 %v4250, 4294901760
        %v4809 = vsub.f32 %v4250, %v4808
        %v4810 = vand.u32 %v4809, 4294901760
        %v4811 = vsub.f32 %v4809, %v4810
        %v4812 = vand.u32 %v4811, 4294901760
        %4813 = vmatpush.msra.mxu0 %v4812
        %v4814 = vand.u32 %v4248, 4294901760
        %v4815 = vsub.f32 %v4248, %v4814
        %v4816 = vand.u32 %v4815, 4294901760
        %v4817 = vsub.f32 %v4815, %v4816
        %v4818 = vand.u32 %v4817, 4294901760
        %4819 = vmatpush.msra.mxu0 %v4818
        %v4820 = vand.u32 %v4246, 4294901760
        %v4821 = vsub.f32 %v4246, %v4820
        %v4822 = vand.u32 %v4821, 4294901760
        %v4823 = vsub.f32 %v4821, %v4822
        %v4824 = vand.u32 %v4823, 4294901760
        %4825 = vmatpush.msra.mxu0 %v4824
        %v4826 = vand.u32 %v4140, 4294901760
        %4827 = vmatmul.f32.gmra.mxu0 %v4826
        %v4828 = vpop.f32.mrf.mxu0
        %v4829 = vadd.f32 %v4720, %v4828
        %v4830 = vand.u32 %v4141, 4294901760
        %4831 = vmatmul.f32.gmra.mxu0 %v4830
        %v4832 = vpop.f32.mrf.mxu0
        %v4833 = vadd.f32 %v4728, %v4832
        %4834 = vdwg.mxu0
        %v4835 = vand.u32 %v4276, 4294901760
        %v4836 = vsub.f32 %v4276, %v4835
        %4837 = vmatpush.msra.mxu0 %v4836
        %v4838 = vand.u32 %v4274, 4294901760
        %v4839 = vsub.f32 %v4274, %v4838
        %4840 = vmatpush.msra.mxu0 %v4839
        %v4841 = vand.u32 %v4272, 4294901760
        %v4842 = vsub.f32 %v4272, %v4841
        %4843 = vmatpush.msra.mxu0 %v4842
        %v4844 = vand.u32 %v4270, 4294901760
        %v4845 = vsub.f32 %v4270, %v4844
        %4846 = vmatpush.msra.mxu0 %v4845
        %v4847 = vand.u32 %v4268, 4294901760
        %v4848 = vsub.f32 %v4268, %v4847
        %4849 = vmatpush.msra.mxu0 %v4848
        %v4850 = vand.u32 %v4266, 4294901760
        %v4851 = vsub.f32 %v4266, %v4850
        %4852 = vmatpush.msra.mxu0 %v4851
        %v4853 = vand.u32 %v4264, 4294901760
        %v4854 = vsub.f32 %v4264, %v4853
        %4855 = vmatpush.msra.mxu0 %v4854
        %v4856 = vand.u32 %v4262, 4294901760
        %v4857 = vsub.f32 %v4262, %v4856
        %4858 = vmatpush.msra.mxu0 %v4857
        %v4859 = vand.u32 %v4260, 4294901760
        %v4860 = vsub.f32 %v4260, %v4859
        %4861 = vmatpush.msra.mxu0 %v4860
        %v4862 = vand.u32 %v4258, 4294901760
        %v4863 = vsub.f32 %v4258, %v4862
        %4864 = vmatpush.msra.mxu0 %v4863
        %v4865 = vand.u32 %v4256, 4294901760
        %v4866 = vsub.f32 %v4256, %v4865
        %4867 = vmatpush.msra.mxu0 %v4866
        %v4868 = vand.u32 %v4254, 4294901760
        %v4869 = vsub.f32 %v4254, %v4868
        %4870 = vmatpush.msra.mxu0 %v4869
        %v4871 = vand.u32 %v4252, 4294901760
        %v4872 = vsub.f32 %v4252, %v4871
        %4873 = vmatpush.msra.mxu0 %v4872
        %v4874 = vand.u32 %v4250, 4294901760
        %v4875 = vsub.f32 %v4250, %v4874
        %4876 = vmatpush.msra.mxu0 %v4875
        %v4877 = vand.u32 %v4248, 4294901760
        %v4878 = vsub.f32 %v4248, %v4877
        %4879 = vmatpush.msra.mxu0 %v4878
        %v4880 = vand.u32 %v4246, 4294901760
        %v4881 = vsub.f32 %v4246, %v4880
        %4882 = vmatpush.msra.mxu0 %v4881
        %v4883 = vand.u32 %v4140, 4294901760
        %v4884 = vsub.f32 %v4140, %v4883
        %4885 = vmatmul.f32.gmra.mxu0 %v4884
        %v4886 = vpop.f32.mrf.mxu0
        %v4887 = vadd.f32 %v4829, %v4886
        %v4888 = vand.u32 %v4141, 4294901760
        %v4889 = vsub.f32 %v4141, %v4888
        %4890 = vmatmul.f32.gmra.mxu0 %v4889
        %v4891 = vpop.f32.mrf.mxu0
        %v4892 = vadd.f32 %v4833, %v4891
        %4893 = vdwg.mxu0
        %v4894 = vand.u32 %v4276, 4294901760
        %4895 = vmatpush.msra.mxu0 %v4894
        %v4896 = vand.u32 %v4274, 4294901760
        %4897 = vmatpush.msra.mxu0 %v4896
        %v4898 = vand.u32 %v4272, 4294901760
        %4899 = vmatpush.msra.mxu0 %v4898
        %v4900 = vand.u32 %v4270, 4294901760
        %4901 = vmatpush.msra.mxu0 %v4900
        %v4902 = vand.u32 %v4268, 4294901760
        %4903 = vmatpush.msra.mxu0 %v4902
        %v4904 = vand.u32 %v4266, 4294901760
        %4905 = vmatpush.msra.mxu0 %v4904
        %v4906 = vand.u32 %v4264, 4294901760
        %4907 = vmatpush.msra.mxu0 %v4906
        %v4908 = vand.u32 %v4262, 4294901760
        %4909 = vmatpush.msra.mxu0 %v4908
        %v4910 = vand.u32 %v4260, 4294901760
        %4911 = vmatpush.msra.mxu0 %v4910
        %v4912 = vand.u32 %v4258, 4294901760
        %4913 = vmatpush.msra.mxu0 %v4912
        %v4914 = vand.u32 %v4256, 4294901760
        %4915 = vmatpush.msra.mxu0 %v4914
        %v4916 = vand.u32 %v4254, 4294901760
        %4917 = vmatpush.msra.mxu0 %v4916
        %v4918 = vand.u32 %v4252, 4294901760
        %4919 = vmatpush.msra.mxu0 %v4918
        %v4920 = vand.u32 %v4250, 4294901760
        %4921 = vmatpush.msra.mxu0 %v4920
        %v4922 = vand.u32 %v4248, 4294901760
        %4923 = vmatpush.msra.mxu0 %v4922
        %v4924 = vand.u32 %v4246, 4294901760
        %4925 = vmatpush.msra.mxu0 %v4924
        %v4926 = vand.u32 %v4140, 4294901760
        %v4927 = vsub.f32 %v4140, %v4926
        %v4928 = vand.u32 %v4927, 4294901760
        %4929 = vmatmul.f32.gmra.mxu0 %v4928
        %v4930 = vpop.f32.mrf.mxu0
        %v4931 = vadd.f32 %v4887, %v4930
        %v4932 = vand.u32 %v4141, 4294901760
        %v4933 = vsub.f32 %v4141, %v4932
        %v4934 = vand.u32 %v4933, 4294901760
        %4935 = vmatmul.f32.gmra.mxu0 %v4934
        %v4936 = vpop.f32.mrf.mxu0
        %v4937 = vadd.f32 %v4892, %v4936
        %4938 = vdwg.mxu0
        %v4939 = vand.u32 %v4276, 4294901760
        %v4940 = vsub.f32 %v4276, %v4939
        %v4941 = vand.u32 %v4940, 4294901760
        %4942 = vmatpush.msra.mxu0 %v4941
        %v4943 = vand.u32 %v4274, 4294901760
        %v4944 = vsub.f32 %v4274, %v4943
        %v4945 = vand.u32 %v4944, 4294901760
        %4946 = vmatpush.msra.mxu0 %v4945
        %v4947 = vand.u32 %v4272, 4294901760
        %v4948 = vsub.f32 %v4272, %v4947
        %v4949 = vand.u32 %v4948, 4294901760
        %4950 = vmatpush.msra.mxu0 %v4949
        %v4951 = vand.u32 %v4270, 4294901760
        %v4952 = vsub.f32 %v4270, %v4951
        %v4953 = vand.u32 %v4952, 4294901760
        %4954 = vmatpush.msra.mxu0 %v4953
        %v4955 = vand.u32 %v4268, 4294901760
        %v4956 = vsub.f32 %v4268, %v4955
        %v4957 = vand.u32 %v4956, 4294901760
        %4958 = vmatpush.msra.mxu0 %v4957
        %v4959 = vand.u32 %v4266, 4294901760
        %v4960 = vsub.f32 %v4266, %v4959
        %v4961 = vand.u32 %v4960, 4294901760
        %4962 = vmatpush.msra.mxu0 %v4961
        %v4963 = vand.u32 %v4264, 4294901760
        %v4964 = vsub.f32 %v4264, %v4963
        %v4965 = vand.u32 %v4964, 4294901760
        %4966 = vmatpush.msra.mxu0 %v4965
        %v4967 = vand.u32 %v4262, 4294901760
        %v4968 = vsub.f32 %v4262, %v4967
        %v4969 = vand.u32 %v4968, 4294901760
        %4970 = vmatpush.msra.mxu0 %v4969
        %v4971 = vand.u32 %v4260, 4294901760
        %v4972 = vsub.f32 %v4260, %v4971
        %v4973 = vand.u32 %v4972, 4294901760
        %4974 = vmatpush.msra.mxu0 %v4973
        %v4975 = vand.u32 %v4258, 4294901760
        %v4976 = vsub.f32 %v4258, %v4975
        %v4977 = vand.u32 %v4976, 4294901760
        %4978 = vmatpush.msra.mxu0 %v4977
        %v4979 = vand.u32 %v4256, 4294901760
        %v4980 = vsub.f32 %v4256, %v4979
        %v4981 = vand.u32 %v4980, 4294901760
        %4982 = vmatpush.msra.mxu0 %v4981
        %v4983 = vand.u32 %v4254, 4294901760
        %v4984 = vsub.f32 %v4254, %v4983
        %v4985 = vand.u32 %v4984, 4294901760
        %4986 = vmatpush.msra.mxu0 %v4985
        %v4987 = vand.u32 %v4252, 4294901760
        %v4988 = vsub.f32 %v4252, %v4987
        %v4989 = vand.u32 %v4988, 4294901760
        %4990 = vmatpush.msra.mxu0 %v4989
        %v4991 = vand.u32 %v4250, 4294901760
        %v4992 = vsub.f32 %v4250, %v4991
        %v4993 = vand.u32 %v4992, 4294901760
        %4994 = vmatpush.msra.mxu0 %v4993
        %v4995 = vand.u32 %v4248, 4294901760
        %v4996 = vsub.f32 %v4248, %v4995
        %v4997 = vand.u32 %v4996, 4294901760
        %4998 = vmatpush.msra.mxu0 %v4997
        %v4999 = vand.u32 %v4246, 4294901760
        %v5000 = vsub.f32 %v4246, %v4999
        %v5001 = vand.u32 %v5000, 4294901760
        %5002 = vmatpush.msra.mxu0 %v5001
        %v5003 = vand.u32 %v4140, 4294901760
        %5004 = vmatmul.f32.gmra.mxu0 %v5003
        %v5005 = vpop.f32.mrf.mxu0
        %v5006 = vadd.f32 %v4931, %v5005
        %v5007 = vand.u32 %v4141, 4294901760
        %5008 = vmatmul.f32.gmra.mxu0 %v5007
        %v5009 = vpop.f32.mrf.mxu0
        %v5010 = vadd.f32 %v4937, %v5009
        %5011 = vdwg.mxu0
        %v5012 = vand.u32 %v4276, 4294901760
        %5013 = vmatpush.msra.mxu0 %v5012
        %v5014 = vand.u32 %v4274, 4294901760
        %5015 = vmatpush.msra.mxu0 %v5014
        %v5016 = vand.u32 %v4272, 4294901760
        %5017 = vmatpush.msra.mxu0 %v5016
        %v5018 = vand.u32 %v4270, 4294901760
        %5019 = vmatpush.msra.mxu0 %v5018
        %v5020 = vand.u32 %v4268, 4294901760
        %5021 = vmatpush.msra.mxu0 %v5020
        %v5022 = vand.u32 %v4266, 4294901760
        %5023 = vmatpush.msra.mxu0 %v5022
        %v5024 = vand.u32 %v4264, 4294901760
        %5025 = vmatpush.msra.mxu0 %v5024
        %v5026 = vand.u32 %v4262, 4294901760
        %5027 = vmatpush.msra.mxu0 %v5026
        %v5028 = vand.u32 %v4260, 4294901760
        %5029 = vmatpush.msra.mxu0 %v5028
        %v5030 = vand.u32 %v4258, 4294901760
        %5031 = vmatpush.msra.mxu0 %v5030
        %v5032 = vand.u32 %v4256, 4294901760
        %5033 = vmatpush.msra.mxu0 %v5032
        %v5034 = vand.u32 %v4254, 4294901760
        %5035 = vmatpush.msra.mxu0 %v5034
        %v5036 = vand.u32 %v4252, 4294901760
        %5037 = vmatpush.msra.mxu0 %v5036
        %v5038 = vand.u32 %v4250, 4294901760
        %5039 = vmatpush.msra.mxu0 %v5038
        %v5040 = vand.u32 %v4248, 4294901760
        %5041 = vmatpush.msra.mxu0 %v5040
        %v5042 = vand.u32 %v4246, 4294901760
        %5043 = vmatpush.msra.mxu0 %v5042
        %v5044 = vand.u32 %v4140, 4294901760
        %5045 = vmatmul.f32.gmra.mxu0 %v5044
        %v5046 = vpop.f32.mrf.mxu0
        %v5047 = vadd.f32 %v5006, %v5046
        %v5048 = vand.u32 %v4141, 4294901760
        %5049 = vmatmul.f32.gmra.mxu0 %v5048
        %v5050 = vpop.f32.mrf.mxu0
        %v5051 = vadd.f32 %v5010, %v5050
        %5052 = vdwg.mxu0
        %v5053 = vadd.f32 %v3820, %v4675
        %v5054 = vadd.f32 %v3821, %v5047
        %v5055 = vadd.f32 %v3822, %v4679
        %v5056 = vadd.f32 %v3823, %v5051
        %s5057 = scalar_lea.vmem [#allocation7], 64
        %v5058 = vld [vmem:[%s5057] ss:$8 sm:$0x3]
        %v5060 = vperm.slane %v5058, 0
        %v5061 = vperm.slane %v5058, 1
        %5062 = vrot.lane.b32.xlu0 %v5060, 68
        %v5063 = vpop.permute.xlu0 %5062
        %5064 = vrot.lane.b32.xlu0 %v5061, 68
        %v5065 = vpop.permute.xlu0 %5064
        %vm5066 = vcmask 556032
        %v5067 = vsel %vm5066, %v5063, %v5065
        %v5071 = vmul.f32 %v251, %v5063
        %v5072 = vmul.f32 %v252, %v5067
        %v5073 = vmul.f32 %v253, %v5065
        %v5074 = vmul.f32 %v254, %v5063
        %v5075 = vmul.f32 %v255, %v5067
        %v5076 = vmul.f32 %v256, %v5065
        %s5077 = scalar_lea.vmem [#allocation7], 65
        %v5078 = vld [vmem:[%s5077] ss:$8 sm:$0x3]
        %v5080 = vperm.slane %v5078, 0
        %v5081 = vperm.slane %v5078, 1
        %5082 = vrot.lane.b32.xlu0 %v5080, 69
        %v5083 = vpop.permute.xlu0 %5082
        %5084 = vrot.lane.b32.xlu0 %v5081, 69
        %v5085 = vpop.permute.xlu0 %5084
        %vm5086 = vcmask 564224
        %v5087 = vsel %vm5086, %v5083, %v5085
        %v5091 = vmul.f32 %v251, %v5083
        %v5092 = vmul.f32 %v252, %v5087
        %v5093 = vmul.f32 %v253, %v5085
        %v5094 = vmul.f32 %v254, %v5083
        %v5095 = vmul.f32 %v255, %v5087
        %v5096 = vmul.f32 %v256, %v5085
        %s5097 = scalar_lea.vmem [#allocation7], 66
        %v5098 = vld [vmem:[%s5097] ss:$8 sm:$0x3]
        %v5100 = vperm.slane %v5098, 0
        %v5101 = vperm.slane %v5098, 1
        %5102 = vrot.lane.b32.xlu0 %v5100, 70
        %v5103 = vpop.permute.xlu0 %5102
        %5104 = vrot.lane.b32.xlu0 %v5101, 70
        %v5105 = vpop.permute.xlu0 %5104
        %vm5106 = vcmask 572416
        %v5107 = vsel %vm5106, %v5103, %v5105
        %v5111 = vmul.f32 %v251, %v5103
        %v5112 = vmul.f32 %v252, %v5107
        %v5113 = vmul.f32 %v253, %v5105
        %v5114 = vmul.f32 %v254, %v5103
        %v5115 = vmul.f32 %v255, %v5107
        %v5116 = vmul.f32 %v256, %v5105
        %s5117 = scalar_lea.vmem [#allocation7], 67
        %v5118 = vld [vmem:[%s5117] ss:$8 sm:$0x3]
        %v5120 = vperm.slane %v5118, 0
        %v5121 = vperm.slane %v5118, 1
        %5122 = vrot.lane.b32.xlu0 %v5120, 80
        %v5123 = vpop.permute.xlu0 %5122
        %5124 = vrot.lane.b32.xlu0 %v5121, 80
        %v5125 = vpop.permute.xlu0 %5124
        %vm5126 = vcmask 654336
        %v5127 = vsel %vm5126, %v5123, %v5125
        %v5131 = vmul.f32 %v251, %v5123
        %v5132 = vmul.f32 %v252, %v5127
        %v5133 = vmul.f32 %v253, %v5125
        %v5134 = vmul.f32 %v254, %v5123
        %v5135 = vmul.f32 %v255, %v5127
        %v5136 = vmul.f32 %v256, %v5125
        %s5137 = scalar_lea.vmem [#allocation7], 68
        %v5138 = vld [vmem:[%s5137] ss:$8 sm:$0x3]
        %v5140 = vperm.slane %v5138, 0
        %v5141 = vperm.slane %v5138, 1
        %5142 = vrot.lane.b32.xlu0 %v5140, 81
        %v5143 = vpop.permute.xlu0 %5142
        %5144 = vrot.lane.b32.xlu0 %v5141, 81
        %v5145 = vpop.permute.xlu0 %5144
        %vm5146 = vcmask 662528
        %v5147 = vsel %vm5146, %v5143, %v5145
        %v5151 = vmul.f32 %v251, %v5143
        %v5152 = vmul.f32 %v252, %v5147
        %v5153 = vmul.f32 %v253, %v5145
        %v5154 = vmul.f32 %v254, %v5143
        %v5155 = vmul.f32 %v255, %v5147
        %v5156 = vmul.f32 %v256, %v5145
        %s5157 = scalar_lea.vmem [#allocation7], 69
        %v5158 = vld [vmem:[%s5157] ss:$8 sm:$0x3]
        %v5160 = vperm.slane %v5158, 0
        %v5161 = vperm.slane %v5158, 1
        %5162 = vrot.lane.b32.xlu0 %v5160, 82
        %v5163 = vpop.permute.xlu0 %5162
        %5164 = vrot.lane.b32.xlu0 %v5161, 82
        %v5165 = vpop.permute.xlu0 %5164
        %vm5166 = vcmask 670720
        %v5167 = vsel %vm5166, %v5163, %v5165
        %v5171 = vmul.f32 %v251, %v5163
        %v5172 = vmul.f32 %v252, %v5167
        %v5173 = vmul.f32 %v253, %v5165
        %v5174 = vmul.f32 %v254, %v5163
        %v5175 = vmul.f32 %v255, %v5167
        %v5176 = vmul.f32 %v256, %v5165
        %s5177 = scalar_lea.vmem [#allocation7], 70
        %v5178 = vld [vmem:[%s5177] ss:$8 sm:$0x3]
        %v5180 = vperm.slane %v5178, 0
        %v5181 = vperm.slane %v5178, 1
        %5182 = vrot.lane.b32.xlu0 %v5180, 83
        %v5183 = vpop.permute.xlu0 %5182
        %5184 = vrot.lane.b32.xlu0 %v5181, 83
        %v5185 = vpop.permute.xlu0 %5184
        %vm5186 = vcmask 678912
        %v5187 = vsel %vm5186, %v5183, %v5185
        %v5191 = vmul.f32 %v251, %v5183
        %v5192 = vmul.f32 %v252, %v5187
        %v5193 = vmul.f32 %v253, %v5185
        %v5194 = vmul.f32 %v254, %v5183
        %v5195 = vmul.f32 %v255, %v5187
        %v5196 = vmul.f32 %v256, %v5185
        %s5197 = scalar_lea.vmem [#allocation7], 71
        %v5198 = vld [vmem:[%s5197] ss:$8 sm:$0x3]
        %v5200 = vperm.slane %v5198, 0
        %v5201 = vperm.slane %v5198, 1
        %5202 = vrot.lane.b32.xlu0 %v5200, 84
        %v5203 = vpop.permute.xlu0 %5202
        %5204 = vrot.lane.b32.xlu0 %v5201, 84
        %v5205 = vpop.permute.xlu0 %5204
        %vm5206 = vcmask 687104
        %v5207 = vsel %vm5206, %v5203, %v5205
        %v5211 = vmul.f32 %v251, %v5203
        %v5212 = vmul.f32 %v252, %v5207
        %v5213 = vmul.f32 %v253, %v5205
        %v5214 = vmul.f32 %v254, %v5203
        %v5215 = vmul.f32 %v255, %v5207
        %v5216 = vmul.f32 %v256, %v5205
        %5223 = vrot.lane.b32.xlu0 %v5091, 127
        %v5224 = vpop.permute.xlu0 %5223
        %5225 = vrot.lane.b32.xlu0 %v5092, 127
        %v5226 = vpop.permute.xlu0 %5225
        %5227 = vrot.lane.b32.xlu0 %v5093, 127
        %v5228 = vpop.permute.xlu0 %5227
        %5229 = vrot.lane.b32.xlu0 %v5094, 127
        %v5230 = vpop.permute.xlu0 %5229
        %5231 = vrot.lane.b32.xlu0 %v5095, 127
        %v5232 = vpop.permute.xlu0 %5231
        %5233 = vrot.lane.b32.xlu0 %v5096, 127
        %v5234 = vpop.permute.xlu0 %5233
        %v5235 = vsel %vm437, %v5224, %v5226
        %v5236 = vsel %vm437, %v5226, %v5228
        %v5237 = vsel %vm437, %v5230, %v5232
        %v5238 = vsel %vm437, %v5232, %v5234
        %5245 = vrot.lane.b32.xlu0 %v5111, 126
        %v5246 = vpop.permute.xlu0 %5245
        %5247 = vrot.lane.b32.xlu0 %v5112, 126
        %v5248 = vpop.permute.xlu0 %5247
        %5249 = vrot.lane.b32.xlu0 %v5113, 126
        %v5250 = vpop.permute.xlu0 %5249
        %5251 = vrot.lane.b32.xlu0 %v5114, 126
        %v5252 = vpop.permute.xlu0 %5251
        %5253 = vrot.lane.b32.xlu0 %v5115, 126
        %v5254 = vpop.permute.xlu0 %5253
        %5255 = vrot.lane.b32.xlu0 %v5116, 126
        %v5256 = vpop.permute.xlu0 %5255
        %v5257 = vsel %vm464, %v5246, %v5248
        %v5258 = vsel %vm464, %v5248, %v5250
        %v5259 = vsel %vm464, %v5252, %v5254
        %v5260 = vsel %vm464, %v5254, %v5256
        %5267 = vrot.lane.b32.xlu0 %v5131, 116
        %v5268 = vpop.permute.xlu0 %5267
        %5269 = vrot.lane.b32.xlu0 %v5132, 116
        %v5270 = vpop.permute.xlu0 %5269
        %5271 = vrot.lane.b32.xlu0 %v5133, 116
        %v5272 = vpop.permute.xlu0 %5271
        %5273 = vrot.lane.b32.xlu0 %v5134, 116
        %v5274 = vpop.permute.xlu0 %5273
        %5275 = vrot.lane.b32.xlu0 %v5135, 116
        %v5276 = vpop.permute.xlu0 %5275
        %5277 = vrot.lane.b32.xlu0 %v5136, 116
        %v5278 = vpop.permute.xlu0 %5277
        %vm5279 = vcmask 949248
        %v5280 = vsel %vm5279, %v5268, %v5270
        %v5281 = vsel %vm5279, %v5270, %v5272
        %v5282 = vsel %vm5279, %v5274, %v5276
        %v5283 = vsel %vm5279, %v5276, %v5278
        %5290 = vrot.lane.b32.xlu0 %v5151, 115
        %v5291 = vpop.permute.xlu0 %5290
        %5292 = vrot.lane.b32.xlu0 %v5152, 115
        %v5293 = vpop.permute.xlu0 %5292
        %5294 = vrot.lane.b32.xlu0 %v5153, 115
        %v5295 = vpop.permute.xlu0 %5294
        %5296 = vrot.lane.b32.xlu0 %v5154, 115
        %v5297 = vpop.permute.xlu0 %5296
        %5298 = vrot.lane.b32.xlu0 %v5155, 115
        %v5299 = vpop.permute.xlu0 %5298
        %5300 = vrot.lane.b32.xlu0 %v5156, 115
        %v5301 = vpop.permute.xlu0 %5300
        %v5302 = vsel %vm4068, %v5291, %v5293
        %v5303 = vsel %vm4068, %v5293, %v5295
        %v5304 = vsel %vm4068, %v5297, %v5299
        %v5305 = vsel %vm4068, %v5299, %v5301
        %5312 = vrot.lane.b32.xlu0 %v5171, 114
        %v5313 = vpop.permute.xlu0 %5312
        %5314 = vrot.lane.b32.xlu0 %v5172, 114
        %v5315 = vpop.permute.xlu0 %5314
        %5316 = vrot.lane.b32.xlu0 %v5173, 114
        %v5317 = vpop.permute.xlu0 %5316
        %5318 = vrot.lane.b32.xlu0 %v5174, 114
        %v5319 = vpop.permute.xlu0 %5318
        %5320 = vrot.lane.b32.xlu0 %v5175, 114
        %v5321 = vpop.permute.xlu0 %5320
        %5322 = vrot.lane.b32.xlu0 %v5176, 114
        %v5323 = vpop.permute.xlu0 %5322
        %v5324 = vsel %vm2857, %v5313, %v5315
        %v5325 = vsel %vm2857, %v5315, %v5317
        %v5326 = vsel %vm2857, %v5319, %v5321
        %v5327 = vsel %vm2857, %v5321, %v5323
        %5334 = vrot.lane.b32.xlu0 %v5191, 113
        %v5335 = vpop.permute.xlu0 %5334
        %5336 = vrot.lane.b32.xlu0 %v5192, 113
        %v5337 = vpop.permute.xlu0 %5336
        %5338 = vrot.lane.b32.xlu0 %v5193, 113
        %v5339 = vpop.permute.xlu0 %5338
        %5340 = vrot.lane.b32.xlu0 %v5194, 113
        %v5341 = vpop.permute.xlu0 %5340
        %5342 = vrot.lane.b32.xlu0 %v5195, 113
        %v5343 = vpop.permute.xlu0 %5342
        %5344 = vrot.lane.b32.xlu0 %v5196, 113
        %v5345 = vpop.permute.xlu0 %5344
        %v5346 = vsel %vm1646, %v5335, %v5337
        %v5347 = vsel %vm1646, %v5337, %v5339
        %v5348 = vsel %vm1646, %v5341, %v5343
        %v5349 = vsel %vm1646, %v5343, %v5345
        %5356 = vrot.lane.b32.xlu0 %v5211, 112
        %v5357 = vpop.permute.xlu0 %5356
        %5358 = vrot.lane.b32.xlu0 %v5212, 112
        %v5359 = vpop.permute.xlu0 %5358
        %5360 = vrot.lane.b32.xlu0 %v5213, 112
        %v5361 = vpop.permute.xlu0 %5360
        %5362 = vrot.lane.b32.xlu0 %v5214, 112
        %v5363 = vpop.permute.xlu0 %5362
        %5364 = vrot.lane.b32.xlu0 %v5215, 112
        %v5365 = vpop.permute.xlu0 %5364
        %5366 = vrot.lane.b32.xlu0 %v5216, 112
        %v5367 = vpop.permute.xlu0 %5366
        %v5368 = vsel %vm599, %v5357, %v5359
        %v5369 = vsel %vm599, %v5359, %v5361
        %v5370 = vsel %vm599, %v5363, %v5365
        %v5371 = vsel %vm599, %v5365, %v5367
        %s5372 = scalar_lea.vmem [#allocation5], 64
        %v5373 = vld [vmem:[%s5372] sm:$0xff]
        %v5374 = vld [vmem:[%s5372 + $0x8] sm:$0xff]
        %5381 = vrot.lane.b32.xlu0 %v5071, 60
        %v5382 = vpop.permute.xlu0 %5381
        %5383 = vrot.lane.b32.xlu0 %v5072, 60
        %v5384 = vpop.permute.xlu0 %5383
        %5385 = vrot.lane.b32.xlu0 %v5073, 60
        %v5386 = vpop.permute.xlu0 %5385
        %5387 = vrot.lane.b32.xlu0 %v5074, 60
        %v5388 = vpop.permute.xlu0 %5387
        %5389 = vrot.lane.b32.xlu0 %v5075, 60
        %v5390 = vpop.permute.xlu0 %5389
        %5391 = vrot.lane.b32.xlu0 %v5076, 60
        %v5392 = vpop.permute.xlu0 %5391
        %5393 = vrot.lane.b32.xlu0 %v5235, 60
        %v5394 = vpop.permute.xlu0 %5393
        %5395 = vrot.lane.b32.xlu0 %v5236, 60
        %v5396 = vpop.permute.xlu0 %5395
        %5397 = vrot.lane.b32.xlu0 %v5228, 60
        %v5398 = vpop.permute.xlu0 %5397
        %5399 = vrot.lane.b32.xlu0 %v5237, 60
        %v5400 = vpop.permute.xlu0 %5399
        %5401 = vrot.lane.b32.xlu0 %v5238, 60
        %v5402 = vpop.permute.xlu0 %5401
        %5403 = vrot.lane.b32.xlu0 %v5234, 60
        %v5404 = vpop.permute.xlu0 %5403
        %5405 = vrot.lane.b32.xlu0 %v5257, 60
        %v5406 = vpop.permute.xlu0 %5405
        %5407 = vrot.lane.b32.xlu0 %v5258, 60
        %v5408 = vpop.permute.xlu0 %5407
        %5409 = vrot.lane.b32.xlu0 %v5250, 60
        %v5410 = vpop.permute.xlu0 %5409
        %5411 = vrot.lane.b32.xlu0 %v5259, 60
        %v5412 = vpop.permute.xlu0 %5411
        %5413 = vrot.lane.b32.xlu0 %v5260, 60
        %v5414 = vpop.permute.xlu0 %5413
        %5415 = vrot.lane.b32.xlu0 %v5256, 60
        %v5416 = vpop.permute.xlu0 %5415
        %5417 = vrot.lane.b32.xlu0 %v5280, 60
        %v5418 = vpop.permute.xlu0 %5417
        %5419 = vrot.lane.b32.xlu0 %v5281, 60
        %v5420 = vpop.permute.xlu0 %5419
        %5421 = vrot.lane.b32.xlu0 %v5272, 60
        %v5422 = vpop.permute.xlu0 %5421
        %5423 = vrot.lane.b32.xlu0 %v5282, 60
        %v5424 = vpop.permute.xlu0 %5423
        %5425 = vrot.lane.b32.xlu0 %v5283, 60
        %v5426 = vpop.permute.xlu0 %5425
        %5427 = vrot.lane.b32.xlu0 %v5278, 60
        %v5428 = vpop.permute.xlu0 %5427
        %5429 = vrot.lane.b32.xlu0 %v5302, 60
        %v5430 = vpop.permute.xlu0 %5429
        %5431 = vrot.lane.b32.xlu0 %v5303, 60
        %v5432 = vpop.permute.xlu0 %5431
        %5433 = vrot.lane.b32.xlu0 %v5295, 60
        %v5434 = vpop.permute.xlu0 %5433
        %5435 = vrot.lane.b32.xlu0 %v5304, 60
        %v5436 = vpop.permute.xlu0 %5435
        %5437 = vrot.lane.b32.xlu0 %v5305, 60
        %v5438 = vpop.permute.xlu0 %5437
        %5439 = vrot.lane.b32.xlu0 %v5301, 60
        %v5440 = vpop.permute.xlu0 %5439
        %5441 = vrot.lane.b32.xlu0 %v5324, 60
        %v5442 = vpop.permute.xlu0 %5441
        %5443 = vrot.lane.b32.xlu0 %v5325, 60
        %v5444 = vpop.permute.xlu0 %5443
        %5445 = vrot.lane.b32.xlu0 %v5317, 60
        %v5446 = vpop.permute.xlu0 %5445
        %5447 = vrot.lane.b32.xlu0 %v5326, 60
        %v5448 = vpop.permute.xlu0 %5447
        %5449 = vrot.lane.b32.xlu0 %v5327, 60
        %v5450 = vpop.permute.xlu0 %5449
        %5451 = vrot.lane.b32.xlu0 %v5323, 60
        %v5452 = vpop.permute.xlu0 %5451
        %5453 = vrot.lane.b32.xlu0 %v5346, 60
        %v5454 = vpop.permute.xlu0 %5453
        %5455 = vrot.lane.b32.xlu0 %v5347, 60
        %v5456 = vpop.permute.xlu0 %5455
        %5457 = vrot.lane.b32.xlu0 %v5339, 60
        %v5458 = vpop.permute.xlu0 %5457
        %5459 = vrot.lane.b32.xlu0 %v5348, 60
        %v5460 = vpop.permute.xlu0 %5459
        %5461 = vrot.lane.b32.xlu0 %v5349, 60
        %v5462 = vpop.permute.xlu0 %5461
        %5463 = vrot.lane.b32.xlu0 %v5345, 60
        %v5464 = vpop.permute.xlu0 %5463
        %5465 = vrot.lane.b32.xlu0 %v5368, 60
        %v5466 = vpop.permute.xlu0 %5465
        %5467 = vrot.lane.b32.xlu0 %v5369, 60
        %v5468 = vpop.permute.xlu0 %5467
        %5469 = vrot.lane.b32.xlu0 %v5361, 60
        %v5470 = vpop.permute.xlu0 %5469
        %5471 = vrot.lane.b32.xlu0 %v5370, 60
        %v5472 = vpop.permute.xlu0 %5471
        %5473 = vrot.lane.b32.xlu0 %v5371, 60
        %v5474 = vpop.permute.xlu0 %5473
        %5475 = vrot.lane.b32.xlu0 %v5367, 60
        %v5476 = vpop.permute.xlu0 %5475
        %vm5477 = vcmask 490496
        %v5478 = vsel %vm5477, %v5382, %v5384
        %v5479 = vsel %vm5477, %v5384, %v5386
        %v5480 = vsel %vm5477, %v5388, %v5390
        %v5481 = vsel %vm5477, %v5390, %v5392
        %v5482 = vsel %vm5477, %v5394, %v5396
        %v5483 = vsel %vm5477, %v5396, %v5398
        %v5484 = vsel %vm5477, %v5400, %v5402
        %v5485 = vsel %vm5477, %v5402, %v5404
        %v5486 = vsel %vm5477, %v5406, %v5408
        %v5487 = vsel %vm5477, %v5408, %v5410
        %v5488 = vsel %vm5477, %v5412, %v5414
        %v5489 = vsel %vm5477, %v5414, %v5416
        %v5490 = vsel %vm5477, %v5418, %v5420
        %v5491 = vsel %vm5477, %v5420, %v5422
        %v5492 = vsel %vm5477, %v5424, %v5426
        %v5493 = vsel %vm5477, %v5426, %v5428
        %v5494 = vsel %vm5477, %v5430, %v5432
        %v5495 = vsel %vm5477, %v5432, %v5434
        %v5496 = vsel %vm5477, %v5436, %v5438
        %v5497 = vsel %vm5477, %v5438, %v5440
        %v5498 = vsel %vm5477, %v5442, %v5444
        %v5499 = vsel %vm5477, %v5444, %v5446
        %v5500 = vsel %vm5477, %v5448, %v5450
        %v5501 = vsel %vm5477, %v5450, %v5452
        %v5502 = vsel %vm5477, %v5454, %v5456
        %v5503 = vsel %vm5477, %v5456, %v5458
        %v5504 = vsel %vm5477, %v5460, %v5462
        %v5505 = vsel %vm5477, %v5462, %v5464
        %v5506 = vsel %vm5477, %v5466, %v5468
        %v5507 = vsel %vm5477, %v5468, %v5470
        %v5508 = vsel %vm5477, %v5472, %v5474
        %v5509 = vsel %vm5477, %v5474, %v5476
        %v5542 = vand.u32 %v5508, 4294901760
        %5543 = vmatpush.msra.mxu0 %v5542
        %v5544 = vand.u32 %v5506, 4294901760
        %5545 = vmatpush.msra.mxu0 %v5544
        %v5546 = vand.u32 %v5504, 4294901760
        %5547 = vmatpush.msra.mxu0 %v5546
        %v5548 = vand.u32 %v5502, 4294901760
        %5549 = vmatpush.msra.mxu0 %v5548
        %v5550 = vand.u32 %v5500, 4294901760
        %5551 = vmatpush.msra.mxu0 %v5550
        %v5552 = vand.u32 %v5498, 4294901760
        %5553 = vmatpush.msra.mxu0 %v5552
        %v5554 = vand.u32 %v5496, 4294901760
        %5555 = vmatpush.msra.mxu0 %v5554
        %v5556 = vand.u32 %v5494, 4294901760
        %5557 = vmatpush.msra.mxu0 %v5556
        %v5558 = vand.u32 %v5492, 4294901760
        %5559 = vmatpush.msra.mxu0 %v5558
        %v5560 = vand.u32 %v5490, 4294901760
        %5561 = vmatpush.msra.mxu0 %v5560
        %v5562 = vand.u32 %v5488, 4294901760
        %5563 = vmatpush.msra.mxu0 %v5562
        %v5564 = vand.u32 %v5486, 4294901760
        %5565 = vmatpush.msra.mxu0 %v5564
        %v5566 = vand.u32 %v5484, 4294901760
        %5567 = vmatpush.msra.mxu0 %v5566
        %v5568 = vand.u32 %v5482, 4294901760
        %5569 = vmatpush.msra.mxu0 %v5568
        %v5570 = vand.u32 %v5480, 4294901760
        %5571 = vmatpush.msra.mxu0 %v5570
        %v5572 = vand.u32 %v5478, 4294901760
        %5573 = vmatpush.msra.mxu0 %v5572
        %v5574 = vand.u32 %v5373, 4294901760
        %v5575 = vsub.f32 %v5373, %v5574
        %v5576 = vand.u32 %v5575, 4294901760
        %v5577 = vsub.f32 %v5575, %v5576
        %v5578 = vand.u32 %v5577, 4294901760
        %5579 = vmatmul.f32.gmra.mxu0 %v5578
        %v5580 = vpop.f32.mrf.mxu0
        %v5581 = vadd.f32 0.0, %v5580
        %v5582 = vand.u32 %v5374, 4294901760
        %v5583 = vsub.f32 %v5374, %v5582
        %v5584 = vand.u32 %v5583, 4294901760
        %v5585 = vsub.f32 %v5583, %v5584
        %v5586 = vand.u32 %v5585, 4294901760
        %5587 = vmatmul.f32.gmra.mxu0 %v5586
        %v5588 = vpop.f32.mrf.mxu0
        %v5589 = vadd.f32 0.0, %v5588
        %5590 = vdwg.mxu0
        %v5591 = vand.u32 %v5508, 4294901760
        %v5592 = vsub.f32 %v5508, %v5591
        %v5593 = vand.u32 %v5592, 4294901760
        %v5594 = vsub.f32 %v5592, %v5593
        %v5595 = vand.u32 %v5594, 4294901760
        %5596 = vmatpush.msra.mxu0 %v5595
        %v5597 = vand.u32 %v5506, 4294901760
        %v5598 = vsub.f32 %v5506, %v5597
        %v5599 = vand.u32 %v5598, 4294901760
        %v5600 = vsub.f32 %v5598, %v5599
        %v5601 = vand.u32 %v5600, 4294901760
        %5602 = vmatpush.msra.mxu0 %v5601
        %v5603 = vand.u32 %v5504, 4294901760
        %v5604 = vsub.f32 %v5504, %v5603
        %v5605 = vand.u32 %v5604, 4294901760
        %v5606 = vsub.f32 %v5604, %v5605
        %v5607 = vand.u32 %v5606, 4294901760
        %5608 = vmatpush.msra.mxu0 %v5607
        %v5609 = vand.u32 %v5502, 4294901760
        %v5610 = vsub.f32 %v5502, %v5609
        %v5611 = vand.u32 %v5610, 4294901760
        %v5612 = vsub.f32 %v5610, %v5611
        %v5613 = vand.u32 %v5612, 4294901760
        %5614 = vmatpush.msra.mxu0 %v5613
        %v5615 = vand.u32 %v5500, 4294901760
        %v5616 = vsub.f32 %v5500, %v5615
        %v5617 = vand.u32 %v5616, 4294901760
        %v5618 = vsub.f32 %v5616, %v5617
        %v5619 = vand.u32 %v5618, 4294901760
        %5620 = vmatpush.msra.mxu0 %v5619
        %v5621 = vand.u32 %v5498, 4294901760
        %v5622 = vsub.f32 %v5498, %v5621
        %v5623 = vand.u32 %v5622, 4294901760
        %v5624 = vsub.f32 %v5622, %v5623
        %v5625 = vand.u32 %v5624, 4294901760
        %5626 = vmatpush.msra.mxu0 %v5625
        %v5627 = vand.u32 %v5496, 4294901760
        %v5628 = vsub.f32 %v5496, %v5627
        %v5629 = vand.u32 %v5628, 4294901760
        %v5630 = vsub.f32 %v5628, %v5629
        %v5631 = vand.u32 %v5630, 4294901760
        %5632 = vmatpush.msra.mxu0 %v5631
        %v5633 = vand.u32 %v5494, 4294901760
        %v5634 = vsub.f32 %v5494, %v5633
        %v5635 = vand.u32 %v5634, 4294901760
        %v5636 = vsub.f32 %v5634, %v5635
        %v5637 = vand.u32 %v5636, 4294901760
        %5638 = vmatpush.msra.mxu0 %v5637
        %v5639 = vand.u32 %v5492, 4294901760
        %v5640 = vsub.f32 %v5492, %v5639
        %v5641 = vand.u32 %v5640, 4294901760
        %v5642 = vsub.f32 %v5640, %v5641
        %v5643 = vand.u32 %v5642, 4294901760
        %5644 = vmatpush.msra.mxu0 %v5643
        %v5645 = vand.u32 %v5490, 4294901760
        %v5646 = vsub.f32 %v5490, %v5645
        %v5647 = vand.u32 %v5646, 4294901760
        %v5648 = vsub.f32 %v5646, %v5647
        %v5649 = vand.u32 %v5648, 4294901760
        %5650 = vmatpush.msra.mxu0 %v5649
        %v5651 = vand.u32 %v5488, 4294901760
        %v5652 = vsub.f32 %v5488, %v5651
        %v5653 = vand.u32 %v5652, 4294901760
        %v5654 = vsub.f32 %v5652, %v5653
        %v5655 = vand.u32 %v5654, 4294901760
        %5656 = vmatpush.msra.mxu0 %v5655
        %v5657 = vand.u32 %v5486, 4294901760
        %v5658 = vsub.f32 %v5486, %v5657
        %v5659 = vand.u32 %v5658, 4294901760
        %v5660 = vsub.f32 %v5658, %v5659
        %v5661 = vand.u32 %v5660, 4294901760
        %5662 = vmatpush.msra.mxu0 %v5661
        %v5663 = vand.u32 %v5484, 4294901760
        %v5664 = vsub.f32 %v5484, %v5663
        %v5665 = vand.u32 %v5664, 4294901760
        %v5666 = vsub.f32 %v5664, %v5665
        %v5667 = vand.u32 %v5666, 4294901760
        %5668 = vmatpush.msra.mxu0 %v5667
        %v5669 = vand.u32 %v5482, 4294901760
        %v5670 = vsub.f32 %v5482, %v5669
        %v5671 = vand.u32 %v5670, 4294901760
        %v5672 = vsub.f32 %v5670, %v5671
        %v5673 = vand.u32 %v5672, 4294901760
        %5674 = vmatpush.msra.mxu0 %v5673
        %v5675 = vand.u32 %v5480, 4294901760
        %v5676 = vsub.f32 %v5480, %v5675
        %v5677 = vand.u32 %v5676, 4294901760
        %v5678 = vsub.f32 %v5676, %v5677
        %v5679 = vand.u32 %v5678, 4294901760
        %5680 = vmatpush.msra.mxu0 %v5679
        %v5681 = vand.u32 %v5478, 4294901760
        %v5682 = vsub.f32 %v5478, %v5681
        %v5683 = vand.u32 %v5682, 4294901760
        %v5684 = vsub.f32 %v5682, %v5683
        %v5685 = vand.u32 %v5684, 4294901760
        %5686 = vmatpush.msra.mxu0 %v5685
        %v5687 = vand.u32 %v5373, 4294901760
        %5688 = vmatmul.f32.gmra.mxu0 %v5687
        %v5689 = vpop.f32.mrf.mxu0
        %v5690 = vadd.f32 %v5581, %v5689
        %v5691 = vand.u32 %v5374, 4294901760
        %5692 = vmatmul.f32.gmra.mxu0 %v5691
        %v5693 = vpop.f32.mrf.mxu0
        %v5694 = vadd.f32 %v5589, %v5693
        %5695 = vdwg.mxu0
        %v5696 = vand.u32 %v5508, 4294901760
        %v5697 = vsub.f32 %v5508, %v5696
        %5698 = vmatpush.msra.mxu0 %v5697
        %v5699 = vand.u32 %v5506, 4294901760
        %v5700 = vsub.f32 %v5506, %v5699
        %5701 = vmatpush.msra.mxu0 %v5700
        %v5702 = vand.u32 %v5504, 4294901760
        %v5703 = vsub.f32 %v5504, %v5702
        %5704 = vmatpush.msra.mxu0 %v5703
        %v5705 = vand.u32 %v5502, 4294901760
        %v5706 = vsub.f32 %v5502, %v5705
        %5707 = vmatpush.msra.mxu0 %v5706
        %v5708 = vand.u32 %v5500, 4294901760
        %v5709 = vsub.f32 %v5500, %v5708
        %5710 = vmatpush.msra.mxu0 %v5709
        %v5711 = vand.u32 %v5498, 4294901760
        %v5712 = vsub.f32 %v5498, %v5711
        %5713 = vmatpush.msra.mxu0 %v5712
        %v5714 = vand.u32 %v5496, 4294901760
        %v5715 = vsub.f32 %v5496, %v5714
        %5716 = vmatpush.msra.mxu0 %v5715
        %v5717 = vand.u32 %v5494, 4294901760
        %v5718 = vsub.f32 %v5494, %v5717
        %5719 = vmatpush.msra.mxu0 %v5718
        %v5720 = vand.u32 %v5492, 4294901760
        %v5721 = vsub.f32 %v5492, %v5720
        %5722 = vmatpush.msra.mxu0 %v5721
        %v5723 = vand.u32 %v5490, 4294901760
        %v5724 = vsub.f32 %v5490, %v5723
        %5725 = vmatpush.msra.mxu0 %v5724
        %v5726 = vand.u32 %v5488, 4294901760
        %v5727 = vsub.f32 %v5488, %v5726
        %5728 = vmatpush.msra.mxu0 %v5727
        %v5729 = vand.u32 %v5486, 4294901760
        %v5730 = vsub.f32 %v5486, %v5729
        %5731 = vmatpush.msra.mxu0 %v5730
        %v5732 = vand.u32 %v5484, 4294901760
        %v5733 = vsub.f32 %v5484, %v5732
        %5734 = vmatpush.msra.mxu0 %v5733
        %v5735 = vand.u32 %v5482, 4294901760
        %v5736 = vsub.f32 %v5482, %v5735
        %5737 = vmatpush.msra.mxu0 %v5736
        %v5738 = vand.u32 %v5480, 4294901760
        %v5739 = vsub.f32 %v5480, %v5738
        %5740 = vmatpush.msra.mxu0 %v5739
        %v5741 = vand.u32 %v5478, 4294901760
        %v5742 = vsub.f32 %v5478, %v5741
        %5743 = vmatpush.msra.mxu0 %v5742
        %v5744 = vand.u32 %v5373, 4294901760
        %v5745 = vsub.f32 %v5373, %v5744
        %5746 = vmatmul.f32.gmra.mxu0 %v5745
        %v5747 = vpop.f32.mrf.mxu0
        %v5748 = vadd.f32 %v5690, %v5747
        %v5749 = vand.u32 %v5374, 4294901760
        %v5750 = vsub.f32 %v5374, %v5749
        %5751 = vmatmul.f32.gmra.mxu0 %v5750
        %v5752 = vpop.f32.mrf.mxu0
        %v5753 = vadd.f32 %v5694, %v5752
        %5754 = vdwg.mxu0
        %v5755 = vand.u32 %v5508, 4294901760
        %5756 = vmatpush.msra.mxu0 %v5755
        %v5757 = vand.u32 %v5506, 4294901760
        %5758 = vmatpush.msra.mxu0 %v5757
        %v5759 = vand.u32 %v5504, 4294901760
        %5760 = vmatpush.msra.mxu0 %v5759
        %v5761 = vand.u32 %v5502, 4294901760
        %5762 = vmatpush.msra.mxu0 %v5761
        %v5763 = vand.u32 %v5500, 4294901760
        %5764 = vmatpush.msra.mxu0 %v5763
        %v5765 = vand.u32 %v5498, 4294901760
        %5766 = vmatpush.msra.mxu0 %v5765
        %v5767 = vand.u32 %v5496, 4294901760
        %5768 = vmatpush.msra.mxu0 %v5767
        %v5769 = vand.u32 %v5494, 4294901760
        %5770 = vmatpush.msra.mxu0 %v5769
        %v5771 = vand.u32 %v5492, 4294901760
        %5772 = vmatpush.msra.mxu0 %v5771
        %v5773 = vand.u32 %v5490, 4294901760
        %5774 = vmatpush.msra.mxu0 %v5773
        %v5775 = vand.u32 %v5488, 4294901760
        %5776 = vmatpush.msra.mxu0 %v5775
        %v5777 = vand.u32 %v5486, 4294901760
        %5778 = vmatpush.msra.mxu0 %v5777
        %v5779 = vand.u32 %v5484, 4294901760
        %5780 = vmatpush.msra.mxu0 %v5779
        %v5781 = vand.u32 %v5482, 4294901760
        %5782 = vmatpush.msra.mxu0 %v5781
        %v5783 = vand.u32 %v5480, 4294901760
        %5784 = vmatpush.msra.mxu0 %v5783
        %v5785 = vand.u32 %v5478, 4294901760
        %5786 = vmatpush.msra.mxu0 %v5785
        %v5787 = vand.u32 %v5373, 4294901760
        %v5788 = vsub.f32 %v5373, %v5787
        %v5789 = vand.u32 %v5788, 4294901760
        %5790 = vmatmul.f32.gmra.mxu0 %v5789
        %v5791 = vpop.f32.mrf.mxu0
        %v5792 = vadd.f32 %v5748, %v5791
        %v5793 = vand.u32 %v5374, 4294901760
        %v5794 = vsub.f32 %v5374, %v5793
        %v5795 = vand.u32 %v5794, 4294901760
        %5796 = vmatmul.f32.gmra.mxu0 %v5795
        %v5797 = vpop.f32.mrf.mxu0
        %v5798 = vadd.f32 %v5753, %v5797
        %5799 = vdwg.mxu0
        %v5800 = vand.u32 %v5508, 4294901760
        %v5801 = vsub.f32 %v5508, %v5800
        %v5802 = vand.u32 %v5801, 4294901760
        %5803 = vmatpush.msra.mxu0 %v5802
        %v5804 = vand.u32 %v5506, 4294901760
        %v5805 = vsub.f32 %v5506, %v5804
        %v5806 = vand.u32 %v5805, 4294901760
        %5807 = vmatpush.msra.mxu0 %v5806
        %v5808 = vand.u32 %v5504, 4294901760
        %v5809 = vsub.f32 %v5504, %v5808
        %v5810 = vand.u32 %v5809, 4294901760
        %5811 = vmatpush.msra.mxu0 %v5810
        %v5812 = vand.u32 %v5502, 4294901760
        %v5813 = vsub.f32 %v5502, %v5812
        %v5814 = vand.u32 %v5813, 4294901760
        %5815 = vmatpush.msra.mxu0 %v5814
        %v5816 = vand.u32 %v5500, 4294901760
        %v5817 = vsub.f32 %v5500, %v5816
        %v5818 = vand.u32 %v5817, 4294901760
        %5819 = vmatpush.msra.mxu0 %v5818
        %v5820 = vand.u32 %v5498, 4294901760
        %v5821 = vsub.f32 %v5498, %v5820
        %v5822 = vand.u32 %v5821, 4294901760
        %5823 = vmatpush.msra.mxu0 %v5822
        %v5824 = vand.u32 %v5496, 4294901760
        %v5825 = vsub.f32 %v5496, %v5824
        %v5826 = vand.u32 %v5825, 4294901760
        %5827 = vmatpush.msra.mxu0 %v5826
        %v5828 = vand.u32 %v5494, 4294901760
        %v5829 = vsub.f32 %v5494, %v5828
        %v5830 = vand.u32 %v5829, 4294901760
        %5831 = vmatpush.msra.mxu0 %v5830
        %v5832 = vand.u32 %v5492, 4294901760
        %v5833 = vsub.f32 %v5492, %v5832
        %v5834 = vand.u32 %v5833, 4294901760
        %5835 = vmatpush.msra.mxu0 %v5834
        %v5836 = vand.u32 %v5490, 4294901760
        %v5837 = vsub.f32 %v5490, %v5836
        %v5838 = vand.u32 %v5837, 4294901760
        %5839 = vmatpush.msra.mxu0 %v5838
        %v5840 = vand.u32 %v5488, 4294901760
        %v5841 = vsub.f32 %v5488, %v5840
        %v5842 = vand.u32 %v5841, 4294901760
        %5843 = vmatpush.msra.mxu0 %v5842
        %v5844 = vand.u32 %v5486, 4294901760
        %v5845 = vsub.f32 %v5486, %v5844
        %v5846 = vand.u32 %v5845, 4294901760
        %5847 = vmatpush.msra.mxu0 %v5846
        %v5848 = vand.u32 %v5484, 4294901760
        %v5849 = vsub.f32 %v5484, %v5848
        %v5850 = vand.u32 %v5849, 4294901760
        %5851 = vmatpush.msra.mxu0 %v5850
        %v5852 = vand.u32 %v5482, 4294901760
        %v5853 = vsub.f32 %v5482, %v5852
        %v5854 = vand.u32 %v5853, 4294901760
        %5855 = vmatpush.msra.mxu0 %v5854
        %v5856 = vand.u32 %v5480, 4294901760
        %v5857 = vsub.f32 %v5480, %v5856
        %v5858 = vand.u32 %v5857, 4294901760
        %5859 = vmatpush.msra.mxu0 %v5858
        %v5860 = vand.u32 %v5478, 4294901760
        %v5861 = vsub.f32 %v5478, %v5860
        %v5862 = vand.u32 %v5861, 4294901760
        %5863 = vmatpush.msra.mxu0 %v5862
        %v5864 = vand.u32 %v5373, 4294901760
        %5865 = vmatmul.f32.gmra.mxu0 %v5864
        %v5866 = vpop.f32.mrf.mxu0
        %v5867 = vadd.f32 %v5792, %v5866
        %v5868 = vand.u32 %v5374, 4294901760
        %5869 = vmatmul.f32.gmra.mxu0 %v5868
        %v5870 = vpop.f32.mrf.mxu0
        %v5871 = vadd.f32 %v5798, %v5870
        %5872 = vdwg.mxu0
        %v5873 = vand.u32 %v5508, 4294901760
        %5874 = vmatpush.msra.mxu0 %v5873
        %v5875 = vand.u32 %v5506, 4294901760
        %5876 = vmatpush.msra.mxu0 %v5875
        %v5877 = vand.u32 %v5504, 4294901760
        %5878 = vmatpush.msra.mxu0 %v5877
        %v5879 = vand.u32 %v5502, 4294901760
        %5880 = vmatpush.msra.mxu0 %v5879
        %v5881 = vand.u32 %v5500, 4294901760
        %5882 = vmatpush.msra.mxu0 %v5881
        %v5883 = vand.u32 %v5498, 4294901760
        %5884 = vmatpush.msra.mxu0 %v5883
        %v5885 = vand.u32 %v5496, 4294901760
        %5886 = vmatpush.msra.mxu0 %v5885
        %v5887 = vand.u32 %v5494, 4294901760
        %5888 = vmatpush.msra.mxu0 %v5887
        %v5889 = vand.u32 %v5492, 4294901760
        %5890 = vmatpush.msra.mxu0 %v5889
        %v5891 = vand.u32 %v5490, 4294901760
        %5892 = vmatpush.msra.mxu0 %v5891
        %v5893 = vand.u32 %v5488, 4294901760
        %5894 = vmatpush.msra.mxu0 %v5893
        %v5895 = vand.u32 %v5486, 4294901760
        %5896 = vmatpush.msra.mxu0 %v5895
        %v5897 = vand.u32 %v5484, 4294901760
        %5898 = vmatpush.msra.mxu0 %v5897
        %v5899 = vand.u32 %v5482, 4294901760
        %5900 = vmatpush.msra.mxu0 %v5899
        %v5901 = vand.u32 %v5480, 4294901760
        %5902 = vmatpush.msra.mxu0 %v5901
        %v5903 = vand.u32 %v5478, 4294901760
        %5904 = vmatpush.msra.mxu0 %v5903
        %v5905 = vand.u32 %v5373, 4294901760
        %5906 = vmatmul.f32.gmra.mxu0 %v5905
        %v5907 = vpop.f32.mrf.mxu0
        %v5908 = vadd.f32 %v5867, %v5907
        %v5909 = vand.u32 %v5374, 4294901760
        %5910 = vmatmul.f32.gmra.mxu0 %v5909
        %v5911 = vpop.f32.mrf.mxu0
        %v5912 = vadd.f32 %v5871, %v5911
        %5913 = vdwg.mxu0
        %v5914 = vand.u32 %v5509, 4294901760
        %5915 = vmatpush.msra.mxu0 %v5914
        %v5916 = vand.u32 %v5507, 4294901760
        %5917 = vmatpush.msra.mxu0 %v5916
        %v5918 = vand.u32 %v5505, 4294901760
        %5919 = vmatpush.msra.mxu0 %v5918
        %v5920 = vand.u32 %v5503, 4294901760
        %5921 = vmatpush.msra.mxu0 %v5920
        %v5922 = vand.u32 %v5501, 4294901760
        %5923 = vmatpush.msra.mxu0 %v5922
        %v5924 = vand.u32 %v5499, 4294901760
        %5925 = vmatpush.msra.mxu0 %v5924
        %v5926 = vand.u32 %v5497, 4294901760
        %5927 = vmatpush.msra.mxu0 %v5926
        %v5928 = vand.u32 %v5495, 4294901760
        %5929 = vmatpush.msra.mxu0 %v5928
        %v5930 = vand.u32 %v5493, 4294901760
        %5931 = vmatpush.msra.mxu0 %v5930
        %v5932 = vand.u32 %v5491, 4294901760
        %5933 = vmatpush.msra.mxu0 %v5932
        %v5934 = vand.u32 %v5489, 4294901760
        %5935 = vmatpush.msra.mxu0 %v5934
        %v5936 = vand.u32 %v5487, 4294901760
        %5937 = vmatpush.msra.mxu0 %v5936
        %v5938 = vand.u32 %v5485, 4294901760
        %5939 = vmatpush.msra.mxu0 %v5938
        %v5940 = vand.u32 %v5483, 4294901760
        %5941 = vmatpush.msra.mxu0 %v5940
        %v5942 = vand.u32 %v5481, 4294901760
        %5943 = vmatpush.msra.mxu0 %v5942
        %v5944 = vand.u32 %v5479, 4294901760
        %5945 = vmatpush.msra.mxu0 %v5944
        %v5946 = vand.u32 %v5373, 4294901760
        %v5947 = vsub.f32 %v5373, %v5946
        %v5948 = vand.u32 %v5947, 4294901760
        %v5949 = vsub.f32 %v5947, %v5948
        %v5950 = vand.u32 %v5949, 4294901760
        %5951 = vmatmul.f32.gmra.mxu0 %v5950
        %v5952 = vpop.f32.mrf.mxu0
        %v5953 = vadd.f32 0.0, %v5952
        %v5954 = vand.u32 %v5374, 4294901760
        %v5955 = vsub.f32 %v5374, %v5954
        %v5956 = vand.u32 %v5955, 4294901760
        %v5957 = vsub.f32 %v5955, %v5956
        %v5958 = vand.u32 %v5957, 4294901760
        %5959 = vmatmul.f32.gmra.mxu0 %v5958
        %v5960 = vpop.f32.mrf.mxu0
        %v5961 = vadd.f32 0.0, %v5960
        %5962 = vdwg.mxu0
        %v5963 = vand.u32 %v5509, 4294901760
        %v5964 = vsub.f32 %v5509, %v5963
        %v5965 = vand.u32 %v5964, 4294901760
        %v5966 = vsub.f32 %v5964, %v5965
        %v5967 = vand.u32 %v5966, 4294901760
        %5968 = vmatpush.msra.mxu0 %v5967
        %v5969 = vand.u32 %v5507, 4294901760
        %v5970 = vsub.f32 %v5507, %v5969
        %v5971 = vand.u32 %v5970, 4294901760
        %v5972 = vsub.f32 %v5970, %v5971
        %v5973 = vand.u32 %v5972, 4294901760
        %5974 = vmatpush.msra.mxu0 %v5973
        %v5975 = vand.u32 %v5505, 4294901760
        %v5976 = vsub.f32 %v5505, %v5975
        %v5977 = vand.u32 %v5976, 4294901760
        %v5978 = vsub.f32 %v5976, %v5977
        %v5979 = vand.u32 %v5978, 4294901760
        %5980 = vmatpush.msra.mxu0 %v5979
        %v5981 = vand.u32 %v5503, 4294901760
        %v5982 = vsub.f32 %v5503, %v5981
        %v5983 = vand.u32 %v5982, 4294901760
        %v5984 = vsub.f32 %v5982, %v5983
        %v5985 = vand.u32 %v5984, 4294901760
        %5986 = vmatpush.msra.mxu0 %v5985
        %v5987 = vand.u32 %v5501, 4294901760
        %v5988 = vsub.f32 %v5501, %v5987
        %v5989 = vand.u32 %v5988, 4294901760
        %v5990 = vsub.f32 %v5988, %v5989
        %v5991 = vand.u32 %v5990, 4294901760
        %5992 = vmatpush.msra.mxu0 %v5991
        %v5993 = vand.u32 %v5499, 4294901760
        %v5994 = vsub.f32 %v5499, %v5993
        %v5995 = vand.u32 %v5994, 4294901760
        %v5996 = vsub.f32 %v5994, %v5995
        %v5997 = vand.u32 %v5996, 4294901760
        %5998 = vmatpush.msra.mxu0 %v5997
        %v5999 = vand.u32 %v5497, 4294901760
        %v6000 = vsub.f32 %v5497, %v5999
        %v6001 = vand.u32 %v6000, 4294901760
        %v6002 = vsub.f32 %v6000, %v6001
        %v6003 = vand.u32 %v6002, 4294901760
        %6004 = vmatpush.msra.mxu0 %v6003
        %v6005 = vand.u32 %v5495, 4294901760
        %v6006 = vsub.f32 %v5495, %v6005
        %v6007 = vand.u32 %v6006, 4294901760
        %v6008 = vsub.f32 %v6006, %v6007
        %v6009 = vand.u32 %v6008, 4294901760
        %6010 = vmatpush.msra.mxu0 %v6009
        %v6011 = vand.u32 %v5493, 4294901760
        %v6012 = vsub.f32 %v5493, %v6011
        %v6013 = vand.u32 %v6012, 4294901760
        %v6014 = vsub.f32 %v6012, %v6013
        %v6015 = vand.u32 %v6014, 4294901760
        %6016 = vmatpush.msra.mxu0 %v6015
        %v6017 = vand.u32 %v5491, 4294901760
        %v6018 = vsub.f32 %v5491, %v6017
        %v6019 = vand.u32 %v6018, 4294901760
        %v6020 = vsub.f32 %v6018, %v6019
        %v6021 = vand.u32 %v6020, 4294901760
        %6022 = vmatpush.msra.mxu0 %v6021
        %v6023 = vand.u32 %v5489, 4294901760
        %v6024 = vsub.f32 %v5489, %v6023
        %v6025 = vand.u32 %v6024, 4294901760
        %v6026 = vsub.f32 %v6024, %v6025
        %v6027 = vand.u32 %v6026, 4294901760
        %6028 = vmatpush.msra.mxu0 %v6027
        %v6029 = vand.u32 %v5487, 4294901760
        %v6030 = vsub.f32 %v5487, %v6029
        %v6031 = vand.u32 %v6030, 4294901760
        %v6032 = vsub.f32 %v6030, %v6031
        %v6033 = vand.u32 %v6032, 4294901760
        %6034 = vmatpush.msra.mxu0 %v6033
        %v6035 = vand.u32 %v5485, 4294901760
        %v6036 = vsub.f32 %v5485, %v6035
        %v6037 = vand.u32 %v6036, 4294901760
        %v6038 = vsub.f32 %v6036, %v6037
        %v6039 = vand.u32 %v6038, 4294901760
        %6040 = vmatpush.msra.mxu0 %v6039
        %v6041 = vand.u32 %v5483, 4294901760
        %v6042 = vsub.f32 %v5483, %v6041
        %v6043 = vand.u32 %v6042, 4294901760
        %v6044 = vsub.f32 %v6042, %v6043
        %v6045 = vand.u32 %v6044, 4294901760
        %6046 = vmatpush.msra.mxu0 %v6045
        %v6047 = vand.u32 %v5481, 4294901760
        %v6048 = vsub.f32 %v5481, %v6047
        %v6049 = vand.u32 %v6048, 4294901760
        %v6050 = vsub.f32 %v6048, %v6049
        %v6051 = vand.u32 %v6050, 4294901760
        %6052 = vmatpush.msra.mxu0 %v6051
        %v6053 = vand.u32 %v5479, 4294901760
        %v6054 = vsub.f32 %v5479, %v6053
        %v6055 = vand.u32 %v6054, 4294901760
        %v6056 = vsub.f32 %v6054, %v6055
        %v6057 = vand.u32 %v6056, 4294901760
        %6058 = vmatpush.msra.mxu0 %v6057
        %v6059 = vand.u32 %v5373, 4294901760
        %6060 = vmatmul.f32.gmra.mxu0 %v6059
        %v6061 = vpop.f32.mrf.mxu0
        %v6062 = vadd.f32 %v5953, %v6061
        %v6063 = vand.u32 %v5374, 4294901760
        %6064 = vmatmul.f32.gmra.mxu0 %v6063
        %v6065 = vpop.f32.mrf.mxu0
        %v6066 = vadd.f32 %v5961, %v6065
        %6067 = vdwg.mxu0
        %v6068 = vand.u32 %v5509, 4294901760
        %v6069 = vsub.f32 %v5509, %v6068
        %6070 = vmatpush.msra.mxu0 %v6069
        %v6071 = vand.u32 %v5507, 4294901760
        %v6072 = vsub.f32 %v5507, %v6071
        %6073 = vmatpush.msra.mxu0 %v6072
        %v6074 = vand.u32 %v5505, 4294901760
        %v6075 = vsub.f32 %v5505, %v6074
        %6076 = vmatpush.msra.mxu0 %v6075
        %v6077 = vand.u32 %v5503, 4294901760
        %v6078 = vsub.f32 %v5503, %v6077
        %6079 = vmatpush.msra.mxu0 %v6078
        %v6080 = vand.u32 %v5501, 4294901760
        %v6081 = vsub.f32 %v5501, %v6080
        %6082 = vmatpush.msra.mxu0 %v6081
        %v6083 = vand.u32 %v5499, 4294901760
        %v6084 = vsub.f32 %v5499, %v6083
        %6085 = vmatpush.msra.mxu0 %v6084
        %v6086 = vand.u32 %v5497, 4294901760
        %v6087 = vsub.f32 %v5497, %v6086
        %6088 = vmatpush.msra.mxu0 %v6087
        %v6089 = vand.u32 %v5495, 4294901760
        %v6090 = vsub.f32 %v5495, %v6089
        %6091 = vmatpush.msra.mxu0 %v6090
        %v6092 = vand.u32 %v5493, 4294901760
        %v6093 = vsub.f32 %v5493, %v6092
        %6094 = vmatpush.msra.mxu0 %v6093
        %v6095 = vand.u32 %v5491, 4294901760
        %v6096 = vsub.f32 %v5491, %v6095
        %6097 = vmatpush.msra.mxu0 %v6096
        %v6098 = vand.u32 %v5489, 4294901760
        %v6099 = vsub.f32 %v5489, %v6098
        %6100 = vmatpush.msra.mxu0 %v6099
        %v6101 = vand.u32 %v5487, 4294901760
        %v6102 = vsub.f32 %v5487, %v6101
        %6103 = vmatpush.msra.mxu0 %v6102
        %v6104 = vand.u32 %v5485, 4294901760
        %v6105 = vsub.f32 %v5485, %v6104
        %6106 = vmatpush.msra.mxu0 %v6105
        %v6107 = vand.u32 %v5483, 4294901760
        %v6108 = vsub.f32 %v5483, %v6107
        %6109 = vmatpush.msra.mxu0 %v6108
        %v6110 = vand.u32 %v5481, 4294901760
        %v6111 = vsub.f32 %v5481, %v6110
        %6112 = vmatpush.msra.mxu0 %v6111
        %v6113 = vand.u32 %v5479, 4294901760
        %v6114 = vsub.f32 %v5479, %v6113
        %6115 = vmatpush.msra.mxu0 %v6114
        %v6116 = vand.u32 %v5373, 4294901760
        %v6117 = vsub.f32 %v5373, %v6116
        %6118 = vmatmul.f32.gmra.mxu0 %v6117
        %v6119 = vpop.f32.mrf.mxu0
        %v6120 = vadd.f32 %v6062, %v6119
        %v6121 = vand.u32 %v5374, 4294901760
        %v6122 = vsub.f32 %v5374, %v6121
        %6123 = vmatmul.f32.gmra.mxu0 %v6122
        %v6124 = vpop.f32.mrf.mxu0
        %v6125 = vadd.f32 %v6066, %v6124
        %6126 = vdwg.mxu0
        %v6127 = vand.u32 %v5509, 4294901760
        %6128 = vmatpush.msra.mxu0 %v6127
        %v6129 = vand.u32 %v5507, 4294901760
        %6130 = vmatpush.msra.mxu0 %v6129
        %v6131 = vand.u32 %v5505, 4294901760
        %6132 = vmatpush.msra.mxu0 %v6131
        %v6133 = vand.u32 %v5503, 4294901760
        %6134 = vmatpush.msra.mxu0 %v6133
        %v6135 = vand.u32 %v5501, 4294901760
        %6136 = vmatpush.msra.mxu0 %v6135
        %v6137 = vand.u32 %v5499, 4294901760
        %6138 = vmatpush.msra.mxu0 %v6137
        %v6139 = vand.u32 %v5497, 4294901760
        %6140 = vmatpush.msra.mxu0 %v6139
        %v6141 = vand.u32 %v5495, 4294901760
        %6142 = vmatpush.msra.mxu0 %v6141
        %v6143 = vand.u32 %v5493, 4294901760
        %6144 = vmatpush.msra.mxu0 %v6143
        %v6145 = vand.u32 %v5491, 4294901760
        %6146 = vmatpush.msra.mxu0 %v6145
        %v6147 = vand.u32 %v5489, 4294901760
        %6148 = vmatpush.msra.mxu0 %v6147
        %v6149 = vand.u32 %v5487, 4294901760
        %6150 = vmatpush.msra.mxu0 %v6149
        %v6151 = vand.u32 %v5485, 4294901760
        %6152 = vmatpush.msra.mxu0 %v6151
        %v6153 = vand.u32 %v5483, 4294901760
        %6154 = vmatpush.msra.mxu0 %v6153
        %v6155 = vand.u32 %v5481, 4294901760
        %6156 = vmatpush.msra.mxu0 %v6155
        %v6157 = vand.u32 %v5479, 4294901760
        %6158 = vmatpush.msra.mxu0 %v6157
        %v6159 = vand.u32 %v5373, 4294901760
        %v6160 = vsub.f32 %v5373, %v6159
        %v6161 = vand.u32 %v6160, 4294901760
        %6162 = vmatmul.f32.gmra.mxu0 %v6161
        %v6163 = vpop.f32.mrf.mxu0
        %v6164 = vadd.f32 %v6120, %v6163
        %v6165 = vand.u32 %v5374, 4294901760
        %v6166 = vsub.f32 %v5374, %v6165
        %v6167 = vand.u32 %v6166, 4294901760
        %6168 = vmatmul.f32.gmra.mxu0 %v6167
        %v6169 = vpop.f32.mrf.mxu0
        %v6170 = vadd.f32 %v6125, %v6169
        %6171 = vdwg.mxu0
        %v6172 = vand.u32 %v5509, 4294901760
        %v6173 = vsub.f32 %v5509, %v6172
        %v6174 = vand.u32 %v6173, 4294901760
        %6175 = vmatpush.msra.mxu0 %v6174
        %v6176 = vand.u32 %v5507, 4294901760
        %v6177 = vsub.f32 %v5507, %v6176
        %v6178 = vand.u32 %v6177, 4294901760
        %6179 = vmatpush.msra.mxu0 %v6178
        %v6180 = vand.u32 %v5505, 4294901760
        %v6181 = vsub.f32 %v5505, %v6180
        %v6182 = vand.u32 %v6181, 4294901760
        %6183 = vmatpush.msra.mxu0 %v6182
        %v6184 = vand.u32 %v5503, 4294901760
        %v6185 = vsub.f32 %v5503, %v6184
        %v6186 = vand.u32 %v6185, 4294901760
        %6187 = vmatpush.msra.mxu0 %v6186
        %v6188 = vand.u32 %v5501, 4294901760
        %v6189 = vsub.f32 %v5501, %v6188
        %v6190 = vand.u32 %v6189, 4294901760
        %6191 = vmatpush.msra.mxu0 %v6190
        %v6192 = vand.u32 %v5499, 4294901760
        %v6193 = vsub.f32 %v5499, %v6192
        %v6194 = vand.u32 %v6193, 4294901760
        %6195 = vmatpush.msra.mxu0 %v6194
        %v6196 = vand.u32 %v5497, 4294901760
        %v6197 = vsub.f32 %v5497, %v6196
        %v6198 = vand.u32 %v6197, 4294901760
        %6199 = vmatpush.msra.mxu0 %v6198
        %v6200 = vand.u32 %v5495, 4294901760
        %v6201 = vsub.f32 %v5495, %v6200
        %v6202 = vand.u32 %v6201, 4294901760
        %6203 = vmatpush.msra.mxu0 %v6202
        %v6204 = vand.u32 %v5493, 4294901760
        %v6205 = vsub.f32 %v5493, %v6204
        %v6206 = vand.u32 %v6205, 4294901760
        %6207 = vmatpush.msra.mxu0 %v6206
        %v6208 = vand.u32 %v5491, 4294901760
        %v6209 = vsub.f32 %v5491, %v6208
        %v6210 = vand.u32 %v6209, 4294901760
        %6211 = vmatpush.msra.mxu0 %v6210
        %v6212 = vand.u32 %v5489, 4294901760
        %v6213 = vsub.f32 %v5489, %v6212
        %v6214 = vand.u32 %v6213, 4294901760
        %6215 = vmatpush.msra.mxu0 %v6214
        %v6216 = vand.u32 %v5487, 4294901760
        %v6217 = vsub.f32 %v5487, %v6216
        %v6218 = vand.u32 %v6217, 4294901760
        %6219 = vmatpush.msra.mxu0 %v6218
        %v6220 = vand.u32 %v5485, 4294901760
        %v6221 = vsub.f32 %v5485, %v6220
        %v6222 = vand.u32 %v6221, 4294901760
        %6223 = vmatpush.msra.mxu0 %v6222
        %v6224 = vand.u32 %v5483, 4294901760
        %v6225 = vsub.f32 %v5483, %v6224
        %v6226 = vand.u32 %v6225, 4294901760
        %6227 = vmatpush.msra.mxu0 %v6226
        %v6228 = vand.u32 %v5481, 4294901760
        %v6229 = vsub.f32 %v5481, %v6228
        %v6230 = vand.u32 %v6229, 4294901760
        %6231 = vmatpush.msra.mxu0 %v6230
        %v6232 = vand.u32 %v5479, 4294901760
        %v6233 = vsub.f32 %v5479, %v6232
        %v6234 = vand.u32 %v6233, 4294901760
        %6235 = vmatpush.msra.mxu0 %v6234
        %v6236 = vand.u32 %v5373, 4294901760
        %6237 = vmatmul.f32.gmra.mxu0 %v6236
        %v6238 = vpop.f32.mrf.mxu0
        %v6239 = vadd.f32 %v6164, %v6238
        %v6240 = vand.u32 %v5374, 4294901760
        %6241 = vmatmul.f32.gmra.mxu0 %v6240
        %v6242 = vpop.f32.mrf.mxu0
        %v6243 = vadd.f32 %v6170, %v6242
        %6244 = vdwg.mxu0
        %v6245 = vand.u32 %v5509, 4294901760
        %6246 = vmatpush.msra.mxu0 %v6245
        %v6247 = vand.u32 %v5507, 4294901760
        %6248 = vmatpush.msra.mxu0 %v6247
        %v6249 = vand.u32 %v5505, 4294901760
        %6250 = vmatpush.msra.mxu0 %v6249
        %v6251 = vand.u32 %v5503, 4294901760
        %6252 = vmatpush.msra.mxu0 %v6251
        %v6253 = vand.u32 %v5501, 4294901760
        %6254 = vmatpush.msra.mxu0 %v6253
        %v6255 = vand.u32 %v5499, 4294901760
        %6256 = vmatpush.msra.mxu0 %v6255
        %v6257 = vand.u32 %v5497, 4294901760
        %6258 = vmatpush.msra.mxu0 %v6257
        %v6259 = vand.u32 %v5495, 4294901760
        %6260 = vmatpush.msra.mxu0 %v6259
        %v6261 = vand.u32 %v5493, 4294901760
        %6262 = vmatpush.msra.mxu0 %v6261
        %v6263 = vand.u32 %v5491, 4294901760
        %6264 = vmatpush.msra.mxu0 %v6263
        %v6265 = vand.u32 %v5489, 4294901760
        %6266 = vmatpush.msra.mxu0 %v6265
        %v6267 = vand.u32 %v5487, 4294901760
        %6268 = vmatpush.msra.mxu0 %v6267
        %v6269 = vand.u32 %v5485, 4294901760
        %6270 = vmatpush.msra.mxu0 %v6269
        %v6271 = vand.u32 %v5483, 4294901760
        %6272 = vmatpush.msra.mxu0 %v6271
        %v6273 = vand.u32 %v5481, 4294901760
        %6274 = vmatpush.msra.mxu0 %v6273
        %v6275 = vand.u32 %v5479, 4294901760
        %6276 = vmatpush.msra.mxu0 %v6275
        %v6277 = vand.u32 %v5373, 4294901760
        %6278 = vmatmul.f32.gmra.mxu0 %v6277
        %v6279 = vpop.f32.mrf.mxu0
        %v6280 = vadd.f32 %v6239, %v6279
        %v6281 = vand.u32 %v5374, 4294901760
        %6282 = vmatmul.f32.gmra.mxu0 %v6281
        %v6283 = vpop.f32.mrf.mxu0
        %v6284 = vadd.f32 %v6243, %v6283
        %6285 = vdwg.mxu0
        %v6286 = vadd.f32 %v5053, %v5908
        %v6287 = vadd.f32 %v5054, %v6280
        %v6288 = vadd.f32 %v5055, %v5912
        %v6289 = vadd.f32 %v5056, %v6284
        %s6290 = scalar_lea.vmem [#allocation7], 80
        %v6291 = vld [vmem:[%s6290] ss:$8 sm:$0x3]
        %v6293 = vperm.slane %v6291, 0
        %v6294 = vperm.slane %v6291, 1
        %6295 = vrot.lane.b32.xlu0 %v6293, 85
        %v6296 = vpop.permute.xlu0 %6295
        %6297 = vrot.lane.b32.xlu0 %v6294, 85
        %v6298 = vpop.permute.xlu0 %6297
        %vm6299 = vcmask 695296
        %v6300 = vsel %vm6299, %v6296, %v6298
        %v6304 = vmul.f32 %v251, %v6296
        %v6305 = vmul.f32 %v252, %v6300
        %v6306 = vmul.f32 %v253, %v6298
        %v6307 = vmul.f32 %v254, %v6296
        %v6308 = vmul.f32 %v255, %v6300
        %v6309 = vmul.f32 %v256, %v6298
        %s6310 = scalar_lea.vmem [#allocation7], 81
        %v6311 = vld [vmem:[%s6310] ss:$8 sm:$0x3]
        %v6313 = vperm.slane %v6311, 0
        %v6314 = vperm.slane %v6311, 1
        %6315 = vrot.lane.b32.xlu0 %v6313, 86
        %v6316 = vpop.permute.xlu0 %6315
        %6317 = vrot.lane.b32.xlu0 %v6314, 86
        %v6318 = vpop.permute.xlu0 %6317
        %vm6319 = vcmask 703488
        %v6320 = vsel %vm6319, %v6316, %v6318
        %v6324 = vmul.f32 %v251, %v6316
        %v6325 = vmul.f32 %v252, %v6320
        %v6326 = vmul.f32 %v253, %v6318
        %v6327 = vmul.f32 %v254, %v6316
        %v6328 = vmul.f32 %v255, %v6320
        %v6329 = vmul.f32 %v256, %v6318
        %s6330 = scalar_lea.vmem [#allocation7], 82
        %v6331 = vld [vmem:[%s6330] ss:$8 sm:$0x3]
        %v6333 = vperm.slane %v6331, 0
        %v6334 = vperm.slane %v6331, 1
        %6335 = vrot.lane.b32.xlu0 %v6333, 96
        %v6336 = vpop.permute.xlu0 %6335
        %6337 = vrot.lane.b32.xlu0 %v6334, 96
        %v6338 = vpop.permute.xlu0 %6337
        %vm6339 = vcmask 785408
        %v6340 = vsel %vm6339, %v6336, %v6338
        %v6344 = vmul.f32 %v251, %v6336
        %v6345 = vmul.f32 %v252, %v6340
        %v6346 = vmul.f32 %v253, %v6338
        %v6347 = vmul.f32 %v254, %v6336
        %v6348 = vmul.f32 %v255, %v6340
        %v6349 = vmul.f32 %v256, %v6338
        %s6350 = scalar_lea.vmem [#allocation7], 83
        %v6351 = vld [vmem:[%s6350] ss:$8 sm:$0x3]
        %v6353 = vperm.slane %v6351, 0
        %v6354 = vperm.slane %v6351, 1
        %6355 = vrot.lane.b32.xlu0 %v6353, 97
        %v6356 = vpop.permute.xlu0 %6355
        %6357 = vrot.lane.b32.xlu0 %v6354, 97
        %v6358 = vpop.permute.xlu0 %6357
        %vm6359 = vcmask 793600
        %v6360 = vsel %vm6359, %v6356, %v6358
        %v6364 = vmul.f32 %v251, %v6356
        %v6365 = vmul.f32 %v252, %v6360
        %v6366 = vmul.f32 %v253, %v6358
        %v6367 = vmul.f32 %v254, %v6356
        %v6368 = vmul.f32 %v255, %v6360
        %v6369 = vmul.f32 %v256, %v6358
        %s6370 = scalar_lea.vmem [#allocation7], 84
        %v6371 = vld [vmem:[%s6370] ss:$8 sm:$0x3]
        %v6373 = vperm.slane %v6371, 0
        %v6374 = vperm.slane %v6371, 1
        %6375 = vrot.lane.b32.xlu0 %v6373, 98
        %v6376 = vpop.permute.xlu0 %6375
        %6377 = vrot.lane.b32.xlu0 %v6374, 98
        %v6378 = vpop.permute.xlu0 %6377
        %vm6379 = vcmask 801792
        %v6380 = vsel %vm6379, %v6376, %v6378
        %v6384 = vmul.f32 %v251, %v6376
        %v6385 = vmul.f32 %v252, %v6380
        %v6386 = vmul.f32 %v253, %v6378
        %v6387 = vmul.f32 %v254, %v6376
        %v6388 = vmul.f32 %v255, %v6380
        %v6389 = vmul.f32 %v256, %v6378
        %s6390 = scalar_lea.vmem [#allocation7], 85
        %v6391 = vld [vmem:[%s6390] ss:$8 sm:$0x3]
        %v6393 = vperm.slane %v6391, 0
        %v6394 = vperm.slane %v6391, 1
        %6395 = vrot.lane.b32.xlu0 %v6393, 99
        %v6396 = vpop.permute.xlu0 %6395
        %6397 = vrot.lane.b32.xlu0 %v6394, 99
        %v6398 = vpop.permute.xlu0 %6397
        %vm6399 = vcmask 809984
        %v6400 = vsel %vm6399, %v6396, %v6398
        %v6404 = vmul.f32 %v251, %v6396
        %v6405 = vmul.f32 %v252, %v6400
        %v6406 = vmul.f32 %v253, %v6398
        %v6407 = vmul.f32 %v254, %v6396
        %v6408 = vmul.f32 %v255, %v6400
        %v6409 = vmul.f32 %v256, %v6398
        %s6410 = scalar_lea.vmem [#allocation7], 86
        %v6411 = vld [vmem:[%s6410] ss:$8 sm:$0x3]
        %v6413 = vperm.slane %v6411, 0
        %v6414 = vperm.slane %v6411, 1
        %6415 = vrot.lane.b32.xlu0 %v6413, 100
        %v6416 = vpop.permute.xlu0 %6415
        %6417 = vrot.lane.b32.xlu0 %v6414, 100
        %v6418 = vpop.permute.xlu0 %6417
        %vm6419 = vcmask 818176
        %v6420 = vsel %vm6419, %v6416, %v6418
        %v6424 = vmul.f32 %v251, %v6416
        %v6425 = vmul.f32 %v252, %v6420
        %v6426 = vmul.f32 %v253, %v6418
        %v6427 = vmul.f32 %v254, %v6416
        %v6428 = vmul.f32 %v255, %v6420
        %v6429 = vmul.f32 %v256, %v6418
        %s6430 = scalar_lea.vmem [#allocation7], 87
        %v6431 = vld [vmem:[%s6430] ss:$8 sm:$0x3]
        %v6433 = vperm.slane %v6431, 0
        %v6434 = vperm.slane %v6431, 1
        %6435 = vrot.lane.b32.xlu0 %v6433, 101
        %v6436 = vpop.permute.xlu0 %6435
        %6437 = vrot.lane.b32.xlu0 %v6434, 101
        %v6438 = vpop.permute.xlu0 %6437
        %vm6439 = vcmask 826368
        %v6440 = vsel %vm6439, %v6436, %v6438
        %v6444 = vmul.f32 %v251, %v6436
        %v6445 = vmul.f32 %v252, %v6440
        %v6446 = vmul.f32 %v253, %v6438
        %v6447 = vmul.f32 %v254, %v6436
        %v6448 = vmul.f32 %v255, %v6440
        %v6449 = vmul.f32 %v256, %v6438
        %6456 = vrot.lane.b32.xlu0 %v6324, 127
        %v6457 = vpop.permute.xlu0 %6456
        %6458 = vrot.lane.b32.xlu0 %v6325, 127
        %v6459 = vpop.permute.xlu0 %6458
        %6460 = vrot.lane.b32.xlu0 %v6326, 127
        %v6461 = vpop.permute.xlu0 %6460
        %6462 = vrot.lane.b32.xlu0 %v6327, 127
        %v6463 = vpop.permute.xlu0 %6462
        %6464 = vrot.lane.b32.xlu0 %v6328, 127
        %v6465 = vpop.permute.xlu0 %6464
        %6466 = vrot.lane.b32.xlu0 %v6329, 127
        %v6467 = vpop.permute.xlu0 %6466
        %v6468 = vsel %vm437, %v6457, %v6459
        %v6469 = vsel %vm437, %v6459, %v6461
        %v6470 = vsel %vm437, %v6463, %v6465
        %v6471 = vsel %vm437, %v6465, %v6467
        %6478 = vrot.lane.b32.xlu0 %v6344, 117
        %v6479 = vpop.permute.xlu0 %6478
        %6480 = vrot.lane.b32.xlu0 %v6345, 117
        %v6481 = vpop.permute.xlu0 %6480
        %6482 = vrot.lane.b32.xlu0 %v6346, 117
        %v6483 = vpop.permute.xlu0 %6482
        %6484 = vrot.lane.b32.xlu0 %v6347, 117
        %v6485 = vpop.permute.xlu0 %6484
        %6486 = vrot.lane.b32.xlu0 %v6348, 117
        %v6487 = vpop.permute.xlu0 %6486
        %6488 = vrot.lane.b32.xlu0 %v6349, 117
        %v6489 = vpop.permute.xlu0 %6488
        %vm6490 = vcmask 957440
        %v6491 = vsel %vm6490, %v6479, %v6481
        %v6492 = vsel %vm6490, %v6481, %v6483
        %v6493 = vsel %vm6490, %v6485, %v6487
        %v6494 = vsel %vm6490, %v6487, %v6489
        %6501 = vrot.lane.b32.xlu0 %v6364, 116
        %v6502 = vpop.permute.xlu0 %6501
        %6503 = vrot.lane.b32.xlu0 %v6365, 116
        %v6504 = vpop.permute.xlu0 %6503
        %6505 = vrot.lane.b32.xlu0 %v6366, 116
        %v6506 = vpop.permute.xlu0 %6505
        %6507 = vrot.lane.b32.xlu0 %v6367, 116
        %v6508 = vpop.permute.xlu0 %6507
        %6509 = vrot.lane.b32.xlu0 %v6368, 116
        %v6510 = vpop.permute.xlu0 %6509
        %6511 = vrot.lane.b32.xlu0 %v6369, 116
        %v6512 = vpop.permute.xlu0 %6511
        %v6513 = vsel %vm5279, %v6502, %v6504
        %v6514 = vsel %vm5279, %v6504, %v6506
        %v6515 = vsel %vm5279, %v6508, %v6510
        %v6516 = vsel %vm5279, %v6510, %v6512
        %6523 = vrot.lane.b32.xlu0 %v6384, 115
        %v6524 = vpop.permute.xlu0 %6523
        %6525 = vrot.lane.b32.xlu0 %v6385, 115
        %v6526 = vpop.permute.xlu0 %6525
        %6527 = vrot.lane.b32.xlu0 %v6386, 115
        %v6528 = vpop.permute.xlu0 %6527
        %6529 = vrot.lane.b32.xlu0 %v6387, 115
        %v6530 = vpop.permute.xlu0 %6529
        %6531 = vrot.lane.b32.xlu0 %v6388, 115
        %v6532 = vpop.permute.xlu0 %6531
        %6533 = vrot.lane.b32.xlu0 %v6389, 115
        %v6534 = vpop.permute.xlu0 %6533
        %v6535 = vsel %vm4068, %v6524, %v6526
        %v6536 = vsel %vm4068, %v6526, %v6528
        %v6537 = vsel %vm4068, %v6530, %v6532
        %v6538 = vsel %vm4068, %v6532, %v6534
        %6545 = vrot.lane.b32.xlu0 %v6404, 114
        %v6546 = vpop.permute.xlu0 %6545
        %6547 = vrot.lane.b32.xlu0 %v6405, 114
        %v6548 = vpop.permute.xlu0 %6547
        %6549 = vrot.lane.b32.xlu0 %v6406, 114
        %v6550 = vpop.permute.xlu0 %6549
        %6551 = vrot.lane.b32.xlu0 %v6407, 114
        %v6552 = vpop.permute.xlu0 %6551
        %6553 = vrot.lane.b32.xlu0 %v6408, 114
        %v6554 = vpop.permute.xlu0 %6553
        %6555 = vrot.lane.b32.xlu0 %v6409, 114
        %v6556 = vpop.permute.xlu0 %6555
        %v6557 = vsel %vm2857, %v6546, %v6548
        %v6558 = vsel %vm2857, %v6548, %v6550
        %v6559 = vsel %vm2857, %v6552, %v6554
        %v6560 = vsel %vm2857, %v6554, %v6556
        %6567 = vrot.lane.b32.xlu0 %v6424, 113
        %v6568 = vpop.permute.xlu0 %6567
        %6569 = vrot.lane.b32.xlu0 %v6425, 113
        %v6570 = vpop.permute.xlu0 %6569
        %6571 = vrot.lane.b32.xlu0 %v6426, 113
        %v6572 = vpop.permute.xlu0 %6571
        %6573 = vrot.lane.b32.xlu0 %v6427, 113
        %v6574 = vpop.permute.xlu0 %6573
        %6575 = vrot.lane.b32.xlu0 %v6428, 113
        %v6576 = vpop.permute.xlu0 %6575
        %6577 = vrot.lane.b32.xlu0 %v6429, 113
        %v6578 = vpop.permute.xlu0 %6577
        %v6579 = vsel %vm1646, %v6568, %v6570
        %v6580 = vsel %vm1646, %v6570, %v6572
        %v6581 = vsel %vm1646, %v6574, %v6576
        %v6582 = vsel %vm1646, %v6576, %v6578
        %6589 = vrot.lane.b32.xlu0 %v6444, 112
        %v6590 = vpop.permute.xlu0 %6589
        %6591 = vrot.lane.b32.xlu0 %v6445, 112
        %v6592 = vpop.permute.xlu0 %6591
        %6593 = vrot.lane.b32.xlu0 %v6446, 112
        %v6594 = vpop.permute.xlu0 %6593
        %6595 = vrot.lane.b32.xlu0 %v6447, 112
        %v6596 = vpop.permute.xlu0 %6595
        %6597 = vrot.lane.b32.xlu0 %v6448, 112
        %v6598 = vpop.permute.xlu0 %6597
        %6599 = vrot.lane.b32.xlu0 %v6449, 112
        %v6600 = vpop.permute.xlu0 %6599
        %v6601 = vsel %vm599, %v6590, %v6592
        %v6602 = vsel %vm599, %v6592, %v6594
        %v6603 = vsel %vm599, %v6596, %v6598
        %v6604 = vsel %vm599, %v6598, %v6600
        %s6605 = scalar_lea.vmem [#allocation5], 80
        %v6606 = vld [vmem:[%s6605] sm:$0xff]
        %v6607 = vld [vmem:[%s6605 + $0x8] sm:$0xff]
        %6614 = vrot.lane.b32.xlu0 %v6304, 43
        %v6615 = vpop.permute.xlu0 %6614
        %6616 = vrot.lane.b32.xlu0 %v6305, 43
        %v6617 = vpop.permute.xlu0 %6616
        %6618 = vrot.lane.b32.xlu0 %v6306, 43
        %v6619 = vpop.permute.xlu0 %6618
        %6620 = vrot.lane.b32.xlu0 %v6307, 43
        %v6621 = vpop.permute.xlu0 %6620
        %6622 = vrot.lane.b32.xlu0 %v6308, 43
        %v6623 = vpop.permute.xlu0 %6622
        %6624 = vrot.lane.b32.xlu0 %v6309, 43
        %v6625 = vpop.permute.xlu0 %6624
        %6626 = vrot.lane.b32.xlu0 %v6468, 43
        %v6627 = vpop.permute.xlu0 %6626
        %6628 = vrot.lane.b32.xlu0 %v6469, 43
        %v6629 = vpop.permute.xlu0 %6628
        %6630 = vrot.lane.b32.xlu0 %v6461, 43
        %v6631 = vpop.permute.xlu0 %6630
        %6632 = vrot.lane.b32.xlu0 %v6470, 43
        %v6633 = vpop.permute.xlu0 %6632
        %6634 = vrot.lane.b32.xlu0 %v6471, 43
        %v6635 = vpop.permute.xlu0 %6634
        %6636 = vrot.lane.b32.xlu0 %v6467, 43
        %v6637 = vpop.permute.xlu0 %6636
        %6638 = vrot.lane.b32.xlu0 %v6491, 43
        %v6639 = vpop.permute.xlu0 %6638
        %6640 = vrot.lane.b32.xlu0 %v6492, 43
        %v6641 = vpop.permute.xlu0 %6640
        %6642 = vrot.lane.b32.xlu0 %v6483, 43
        %v6643 = vpop.permute.xlu0 %6642
        %6644 = vrot.lane.b32.xlu0 %v6493, 43
        %v6645 = vpop.permute.xlu0 %6644
        %6646 = vrot.lane.b32.xlu0 %v6494, 43
        %v6647 = vpop.permute.xlu0 %6646
        %6648 = vrot.lane.b32.xlu0 %v6489, 43
        %v6649 = vpop.permute.xlu0 %6648
        %6650 = vrot.lane.b32.xlu0 %v6513, 43
        %v6651 = vpop.permute.xlu0 %6650
        %6652 = vrot.lane.b32.xlu0 %v6514, 43
        %v6653 = vpop.permute.xlu0 %6652
        %6654 = vrot.lane.b32.xlu0 %v6506, 43
        %v6655 = vpop.permute.xlu0 %6654
        %6656 = vrot.lane.b32.xlu0 %v6515, 43
        %v6657 = vpop.permute.xlu0 %6656
        %6658 = vrot.lane.b32.xlu0 %v6516, 43
        %v6659 = vpop.permute.xlu0 %6658
        %6660 = vrot.lane.b32.xlu0 %v6512, 43
        %v6661 = vpop.permute.xlu0 %6660
        %6662 = vrot.lane.b32.xlu0 %v6535, 43
        %v6663 = vpop.permute.xlu0 %6662
        %6664 = vrot.lane.b32.xlu0 %v6536, 43
        %v6665 = vpop.permute.xlu0 %6664
        %6666 = vrot.lane.b32.xlu0 %v6528, 43
        %v6667 = vpop.permute.xlu0 %6666
        %6668 = vrot.lane.b32.xlu0 %v6537, 43
        %v6669 = vpop.permute.xlu0 %6668
        %6670 = vrot.lane.b32.xlu0 %v6538, 43
        %v6671 = vpop.permute.xlu0 %6670
        %6672 = vrot.lane.b32.xlu0 %v6534, 43
        %v6673 = vpop.permute.xlu0 %6672
        %6674 = vrot.lane.b32.xlu0 %v6557, 43
        %v6675 = vpop.permute.xlu0 %6674
        %6676 = vrot.lane.b32.xlu0 %v6558, 43
        %v6677 = vpop.permute.xlu0 %6676
        %6678 = vrot.lane.b32.xlu0 %v6550, 43
        %v6679 = vpop.permute.xlu0 %6678
        %6680 = vrot.lane.b32.xlu0 %v6559, 43
        %v6681 = vpop.permute.xlu0 %6680
        %6682 = vrot.lane.b32.xlu0 %v6560, 43
        %v6683 = vpop.permute.xlu0 %6682
        %6684 = vrot.lane.b32.xlu0 %v6556, 43
        %v6685 = vpop.permute.xlu0 %6684
        %6686 = vrot.lane.b32.xlu0 %v6579, 43
        %v6687 = vpop.permute.xlu0 %6686
        %6688 = vrot.lane.b32.xlu0 %v6580, 43
        %v6689 = vpop.permute.xlu0 %6688
        %6690 = vrot.lane.b32.xlu0 %v6572, 43
        %v6691 = vpop.permute.xlu0 %6690
        %6692 = vrot.lane.b32.xlu0 %v6581, 43
        %v6693 = vpop.permute.xlu0 %6692
        %6694 = vrot.lane.b32.xlu0 %v6582, 43
        %v6695 = vpop.permute.xlu0 %6694
        %6696 = vrot.lane.b32.xlu0 %v6578, 43
        %v6697 = vpop.permute.xlu0 %6696
        %6698 = vrot.lane.b32.xlu0 %v6601, 43
        %v6699 = vpop.permute.xlu0 %6698
        %6700 = vrot.lane.b32.xlu0 %v6602, 43
        %v6701 = vpop.permute.xlu0 %6700
        %6702 = vrot.lane.b32.xlu0 %v6594, 43
        %v6703 = vpop.permute.xlu0 %6702
        %6704 = vrot.lane.b32.xlu0 %v6603, 43
        %v6705 = vpop.permute.xlu0 %6704
        %6706 = vrot.lane.b32.xlu0 %v6604, 43
        %v6707 = vpop.permute.xlu0 %6706
        %6708 = vrot.lane.b32.xlu0 %v6600, 43
        %v6709 = vpop.permute.xlu0 %6708
        %vm6710 = vcmask 351232
        %v6711 = vsel %vm6710, %v6615, %v6617
        %v6712 = vsel %vm6710, %v6617, %v6619
        %v6713 = vsel %vm6710, %v6621, %v6623
        %v6714 = vsel %vm6710, %v6623, %v6625
        %v6715 = vsel %vm6710, %v6627, %v6629
        %v6716 = vsel %vm6710, %v6629, %v6631
        %v6717 = vsel %vm6710, %v6633, %v6635
        %v6718 = vsel %vm6710, %v6635, %v6637
        %v6719 = vsel %vm6710, %v6639, %v6641
        %v6720 = vsel %vm6710, %v6641, %v6643
        %v6721 = vsel %vm6710, %v6645, %v6647
        %v6722 = vsel %vm6710, %v6647, %v6649
        %v6723 = vsel %vm6710, %v6651, %v6653
        %v6724 = vsel %vm6710, %v6653, %v6655
        %v6725 = vsel %vm6710, %v6657, %v6659
        %v6726 = vsel %vm6710, %v6659, %v6661
        %v6727 = vsel %vm6710, %v6663, %v6665
        %v6728 = vsel %vm6710, %v6665, %v6667
        %v6729 = vsel %vm6710, %v6669, %v6671
        %v6730 = vsel %vm6710, %v6671, %v6673
        %v6731 = vsel %vm6710, %v6675, %v6677
        %v6732 = vsel %vm6710, %v6677, %v6679
        %v6733 = vsel %vm6710, %v6681, %v6683
        %v6734 = vsel %vm6710, %v6683, %v6685
        %v6735 = vsel %vm6710, %v6687, %v6689
        %v6736 = vsel %vm6710, %v6689, %v6691
        %v6737 = vsel %vm6710, %v6693, %v6695
        %v6738 = vsel %vm6710, %v6695, %v6697
        %v6739 = vsel %vm6710, %v6699, %v6701
        %v6740 = vsel %vm6710, %v6701, %v6703
        %v6741 = vsel %vm6710, %v6705, %v6707
        %v6742 = vsel %vm6710, %v6707, %v6709
        %v6775 = vand.u32 %v6741, 4294901760
        %6776 = vmatpush.msra.mxu0 %v6775
        %v6777 = vand.u32 %v6739, 4294901760
        %6778 = vmatpush.msra.mxu0 %v6777
        %v6779 = vand.u32 %v6737, 4294901760
        %6780 = vmatpush.msra.mxu0 %v6779
        %v6781 = vand.u32 %v6735, 4294901760
        %6782 = vmatpush.msra.mxu0 %v6781
        %v6783 = vand.u32 %v6733, 4294901760
        %6784 = vmatpush.msra.mxu0 %v6783
        %v6785 = vand.u32 %v6731, 4294901760
        %6786 = vmatpush.msra.mxu0 %v6785
        %v6787 = vand.u32 %v6729, 4294901760
        %6788 = vmatpush.msra.mxu0 %v6787
        %v6789 = vand.u32 %v6727, 4294901760
        %6790 = vmatpush.msra.mxu0 %v6789
        %v6791 = vand.u32 %v6725, 4294901760
        %6792 = vmatpush.msra.mxu0 %v6791
        %v6793 = vand.u32 %v6723, 4294901760
        %6794 = vmatpush.msra.mxu0 %v6793
        %v6795 = vand.u32 %v6721, 4294901760
        %6796 = vmatpush.msra.mxu0 %v6795
        %v6797 = vand.u32 %v6719, 4294901760
        %6798 = vmatpush.msra.mxu0 %v6797
        %v6799 = vand.u32 %v6717, 4294901760
        %6800 = vmatpush.msra.mxu0 %v6799
        %v6801 = vand.u32 %v6715, 4294901760
        %6802 = vmatpush.msra.mxu0 %v6801
        %v6803 = vand.u32 %v6713, 4294901760
        %6804 = vmatpush.msra.mxu0 %v6803
        %v6805 = vand.u32 %v6711, 4294901760
        %6806 = vmatpush.msra.mxu0 %v6805
        %v6807 = vand.u32 %v6606, 4294901760
        %v6808 = vsub.f32 %v6606, %v6807
        %v6809 = vand.u32 %v6808, 4294901760
        %v6810 = vsub.f32 %v6808, %v6809
        %v6811 = vand.u32 %v6810, 4294901760
        %6812 = vmatmul.f32.gmra.mxu0 %v6811
        %v6813 = vpop.f32.mrf.mxu0
        %v6814 = vadd.f32 0.0, %v6813
        %v6815 = vand.u32 %v6607, 4294901760
        %v6816 = vsub.f32 %v6607, %v6815
        %v6817 = vand.u32 %v6816, 4294901760
        %v6818 = vsub.f32 %v6816, %v6817
        %v6819 = vand.u32 %v6818, 4294901760
        %6820 = vmatmul.f32.gmra.mxu0 %v6819
        %v6821 = vpop.f32.mrf.mxu0
        %v6822 = vadd.f32 0.0, %v6821
        %6823 = vdwg.mxu0
        %v6824 = vand.u32 %v6741, 4294901760
        %v6825 = vsub.f32 %v6741, %v6824
        %v6826 = vand.u32 %v6825, 4294901760
        %v6827 = vsub.f32 %v6825, %v6826
        %v6828 = vand.u32 %v6827, 4294901760
        %6829 = vmatpush.msra.mxu0 %v6828
        %v6830 = vand.u32 %v6739, 4294901760
        %v6831 = vsub.f32 %v6739, %v6830
        %v6832 = vand.u32 %v6831, 4294901760
        %v6833 = vsub.f32 %v6831, %v6832
        %v6834 = vand.u32 %v6833, 4294901760
        %6835 = vmatpush.msra.mxu0 %v6834
        %v6836 = vand.u32 %v6737, 4294901760
        %v6837 = vsub.f32 %v6737, %v6836
        %v6838 = vand.u32 %v6837, 4294901760
        %v6839 = vsub.f32 %v6837, %v6838
        %v6840 = vand.u32 %v6839, 4294901760
        %6841 = vmatpush.msra.mxu0 %v6840
        %v6842 = vand.u32 %v6735, 4294901760
        %v6843 = vsub.f32 %v6735, %v6842
        %v6844 = vand.u32 %v6843, 4294901760
        %v6845 = vsub.f32 %v6843, %v6844
        %v6846 = vand.u32 %v6845, 4294901760
        %6847 = vmatpush.msra.mxu0 %v6846
        %v6848 = vand.u32 %v6733, 4294901760
        %v6849 = vsub.f32 %v6733, %v6848
        %v6850 = vand.u32 %v6849, 4294901760
        %v6851 = vsub.f32 %v6849, %v6850
        %v6852 = vand.u32 %v6851, 4294901760
        %6853 = vmatpush.msra.mxu0 %v6852
        %v6854 = vand.u32 %v6731, 4294901760
        %v6855 = vsub.f32 %v6731, %v6854
        %v6856 = vand.u32 %v6855, 4294901760
        %v6857 = vsub.f32 %v6855, %v6856
        %v6858 = vand.u32 %v6857, 4294901760
        %6859 = vmatpush.msra.mxu0 %v6858
        %v6860 = vand.u32 %v6729, 4294901760
        %v6861 = vsub.f32 %v6729, %v6860
        %v6862 = vand.u32 %v6861, 4294901760
        %v6863 = vsub.f32 %v6861, %v6862
        %v6864 = vand.u32 %v6863, 4294901760
        %6865 = vmatpush.msra.mxu0 %v6864
        %v6866 = vand.u32 %v6727, 4294901760
        %v6867 = vsub.f32 %v6727, %v6866
        %v6868 = vand.u32 %v6867, 4294901760
        %v6869 = vsub.f32 %v6867, %v6868
        %v6870 = vand.u32 %v6869, 4294901760
        %6871 = vmatpush.msra.mxu0 %v6870
        %v6872 = vand.u32 %v6725, 4294901760
        %v6873 = vsub.f32 %v6725, %v6872
        %v6874 = vand.u32 %v6873, 4294901760
        %v6875 = vsub.f32 %v6873, %v6874
        %v6876 = vand.u32 %v6875, 4294901760
        %6877 = vmatpush.msra.mxu0 %v6876
        %v6878 = vand.u32 %v6723, 4294901760
        %v6879 = vsub.f32 %v6723, %v6878
        %v6880 = vand.u32 %v6879, 4294901760
        %v6881 = vsub.f32 %v6879, %v6880
        %v6882 = vand.u32 %v6881, 4294901760
        %6883 = vmatpush.msra.mxu0 %v6882
        %v6884 = vand.u32 %v6721, 4294901760
        %v6885 = vsub.f32 %v6721, %v6884
        %v6886 = vand.u32 %v6885, 4294901760
        %v6887 = vsub.f32 %v6885, %v6886
        %v6888 = vand.u32 %v6887, 4294901760
        %6889 = vmatpush.msra.mxu0 %v6888
        %v6890 = vand.u32 %v6719, 4294901760
        %v6891 = vsub.f32 %v6719, %v6890
        %v6892 = vand.u32 %v6891, 4294901760
        %v6893 = vsub.f32 %v6891, %v6892
        %v6894 = vand.u32 %v6893, 4294901760
        %6895 = vmatpush.msra.mxu0 %v6894
        %v6896 = vand.u32 %v6717, 4294901760
        %v6897 = vsub.f32 %v6717, %v6896
        %v6898 = vand.u32 %v6897, 4294901760
        %v6899 = vsub.f32 %v6897, %v6898
        %v6900 = vand.u32 %v6899, 4294901760
        %6901 = vmatpush.msra.mxu0 %v6900
        %v6902 = vand.u32 %v6715, 4294901760
        %v6903 = vsub.f32 %v6715, %v6902
        %v6904 = vand.u32 %v6903, 4294901760
        %v6905 = vsub.f32 %v6903, %v6904
        %v6906 = vand.u32 %v6905, 4294901760
        %6907 = vmatpush.msra.mxu0 %v6906
        %v6908 = vand.u32 %v6713, 4294901760
        %v6909 = vsub.f32 %v6713, %v6908
        %v6910 = vand.u32 %v6909, 4294901760
        %v6911 = vsub.f32 %v6909, %v6910
        %v6912 = vand.u32 %v6911, 4294901760
        %6913 = vmatpush.msra.mxu0 %v6912
        %v6914 = vand.u32 %v6711, 4294901760
        %v6915 = vsub.f32 %v6711, %v6914
        %v6916 = vand.u32 %v6915, 4294901760
        %v6917 = vsub.f32 %v6915, %v6916
        %v6918 = vand.u32 %v6917, 4294901760
        %6919 = vmatpush.msra.mxu0 %v6918
        %v6920 = vand.u32 %v6606, 4294901760
        %6921 = vmatmul.f32.gmra.mxu0 %v6920
        %v6922 = vpop.f32.mrf.mxu0
        %v6923 = vadd.f32 %v6814, %v6922
        %v6924 = vand.u32 %v6607, 4294901760
        %6925 = vmatmul.f32.gmra.mxu0 %v6924
        %v6926 = vpop.f32.mrf.mxu0
        %v6927 = vadd.f32 %v6822, %v6926
        %6928 = vdwg.mxu0
        %v6929 = vand.u32 %v6741, 4294901760
        %v6930 = vsub.f32 %v6741, %v6929
        %6931 = vmatpush.msra.mxu0 %v6930
        %v6932 = vand.u32 %v6739, 4294901760
        %v6933 = vsub.f32 %v6739, %v6932
        %6934 = vmatpush.msra.mxu0 %v6933
        %v6935 = vand.u32 %v6737, 4294901760
        %v6936 = vsub.f32 %v6737, %v6935
        %6937 = vmatpush.msra.mxu0 %v6936
        %v6938 = vand.u32 %v6735, 4294901760
        %v6939 = vsub.f32 %v6735, %v6938
        %6940 = vmatpush.msra.mxu0 %v6939
        %v6941 = vand.u32 %v6733, 4294901760
        %v6942 = vsub.f32 %v6733, %v6941
        %6943 = vmatpush.msra.mxu0 %v6942
        %v6944 = vand.u32 %v6731, 4294901760
        %v6945 = vsub.f32 %v6731, %v6944
        %6946 = vmatpush.msra.mxu0 %v6945
        %v6947 = vand.u32 %v6729, 4294901760
        %v6948 = vsub.f32 %v6729, %v6947
        %6949 = vmatpush.msra.mxu0 %v6948
        %v6950 = vand.u32 %v6727, 4294901760
        %v6951 = vsub.f32 %v6727, %v6950
        %6952 = vmatpush.msra.mxu0 %v6951
        %v6953 = vand.u32 %v6725, 4294901760
        %v6954 = vsub.f32 %v6725, %v6953
        %6955 = vmatpush.msra.mxu0 %v6954
        %v6956 = vand.u32 %v6723, 4294901760
        %v6957 = vsub.f32 %v6723, %v6956
        %6958 = vmatpush.msra.mxu0 %v6957
        %v6959 = vand.u32 %v6721, 4294901760
        %v6960 = vsub.f32 %v6721, %v6959
        %6961 = vmatpush.msra.mxu0 %v6960
        %v6962 = vand.u32 %v6719, 4294901760
        %v6963 = vsub.f32 %v6719, %v6962
        %6964 = vmatpush.msra.mxu0 %v6963
        %v6965 = vand.u32 %v6717, 4294901760
        %v6966 = vsub.f32 %v6717, %v6965
        %6967 = vmatpush.msra.mxu0 %v6966
        %v6968 = vand.u32 %v6715, 4294901760
        %v6969 = vsub.f32 %v6715, %v6968
        %6970 = vmatpush.msra.mxu0 %v6969
        %v6971 = vand.u32 %v6713, 4294901760
        %v6972 = vsub.f32 %v6713, %v6971
        %6973 = vmatpush.msra.mxu0 %v6972
        %v6974 = vand.u32 %v6711, 4294901760
        %v6975 = vsub.f32 %v6711, %v6974
        %6976 = vmatpush.msra.mxu0 %v6975
        %v6977 = vand.u32 %v6606, 4294901760
        %v6978 = vsub.f32 %v6606, %v6977
        %6979 = vmatmul.f32.gmra.mxu0 %v6978
        %v6980 = vpop.f32.mrf.mxu0
        %v6981 = vadd.f32 %v6923, %v6980
        %v6982 = vand.u32 %v6607, 4294901760
        %v6983 = vsub.f32 %v6607, %v6982
        %6984 = vmatmul.f32.gmra.mxu0 %v6983
        %v6985 = vpop.f32.mrf.mxu0
        %v6986 = vadd.f32 %v6927, %v6985
        %6987 = vdwg.mxu0
        %v6988 = vand.u32 %v6741, 4294901760
        %6989 = vmatpush.msra.mxu0 %v6988
        %v6990 = vand.u32 %v6739, 4294901760
        %6991 = vmatpush.msra.mxu0 %v6990
        %v6992 = vand.u32 %v6737, 4294901760
        %6993 = vmatpush.msra.mxu0 %v6992
        %v6994 = vand.u32 %v6735, 4294901760
        %6995 = vmatpush.msra.mxu0 %v6994
        %v6996 = vand.u32 %v6733, 4294901760
        %6997 = vmatpush.msra.mxu0 %v6996
        %v6998 = vand.u32 %v6731, 4294901760
        %6999 = vmatpush.msra.mxu0 %v6998
        %v7000 = vand.u32 %v6729, 4294901760
        %7001 = vmatpush.msra.mxu0 %v7000
        %v7002 = vand.u32 %v6727, 4294901760
        %7003 = vmatpush.msra.mxu0 %v7002
        %v7004 = vand.u32 %v6725, 4294901760
        %7005 = vmatpush.msra.mxu0 %v7004
        %v7006 = vand.u32 %v6723, 4294901760
        %7007 = vmatpush.msra.mxu0 %v7006
        %v7008 = vand.u32 %v6721, 4294901760
        %7009 = vmatpush.msra.mxu0 %v7008
        %v7010 = vand.u32 %v6719, 4294901760
        %7011 = vmatpush.msra.mxu0 %v7010
        %v7012 = vand.u32 %v6717, 4294901760
        %7013 = vmatpush.msra.mxu0 %v7012
        %v7014 = vand.u32 %v6715, 4294901760
        %7015 = vmatpush.msra.mxu0 %v7014
        %v7016 = vand.u32 %v6713, 4294901760
        %7017 = vmatpush.msra.mxu0 %v7016
        %v7018 = vand.u32 %v6711, 4294901760
        %7019 = vmatpush.msra.mxu0 %v7018
        %v7020 = vand.u32 %v6606, 4294901760
        %v7021 = vsub.f32 %v6606, %v7020
        %v7022 = vand.u32 %v7021, 4294901760
        %7023 = vmatmul.f32.gmra.mxu0 %v7022
        %v7024 = vpop.f32.mrf.mxu0
        %v7025 = vadd.f32 %v6981, %v7024
        %v7026 = vand.u32 %v6607, 4294901760
        %v7027 = vsub.f32 %v6607, %v7026
        %v7028 = vand.u32 %v7027, 4294901760
        %7029 = vmatmul.f32.gmra.mxu0 %v7028
        %v7030 = vpop.f32.mrf.mxu0
        %v7031 = vadd.f32 %v6986, %v7030
        %7032 = vdwg.mxu0
        %v7033 = vand.u32 %v6741, 4294901760
        %v7034 = vsub.f32 %v6741, %v7033
        %v7035 = vand.u32 %v7034, 4294901760
        %7036 = vmatpush.msra.mxu0 %v7035
        %v7037 = vand.u32 %v6739, 4294901760
        %v7038 = vsub.f32 %v6739, %v7037
        %v7039 = vand.u32 %v7038, 4294901760
        %7040 = vmatpush.msra.mxu0 %v7039
        %v7041 = vand.u32 %v6737, 4294901760
        %v7042 = vsub.f32 %v6737, %v7041
        %v7043 = vand.u32 %v7042, 4294901760
        %7044 = vmatpush.msra.mxu0 %v7043
        %v7045 = vand.u32 %v6735, 4294901760
        %v7046 = vsub.f32 %v6735, %v7045
        %v7047 = vand.u32 %v7046, 4294901760
        %7048 = vmatpush.msra.mxu0 %v7047
        %v7049 = vand.u32 %v6733, 4294901760
        %v7050 = vsub.f32 %v6733, %v7049
        %v7051 = vand.u32 %v7050, 4294901760
        %7052 = vmatpush.msra.mxu0 %v7051
        %v7053 = vand.u32 %v6731, 4294901760
        %v7054 = vsub.f32 %v6731, %v7053
        %v7055 = vand.u32 %v7054, 4294901760
        %7056 = vmatpush.msra.mxu0 %v7055
        %v7057 = vand.u32 %v6729, 4294901760
        %v7058 = vsub.f32 %v6729, %v7057
        %v7059 = vand.u32 %v7058, 4294901760
        %7060 = vmatpush.msra.mxu0 %v7059
        %v7061 = vand.u32 %v6727, 4294901760
        %v7062 = vsub.f32 %v6727, %v7061
        %v7063 = vand.u32 %v7062, 4294901760
        %7064 = vmatpush.msra.mxu0 %v7063
        %v7065 = vand.u32 %v6725, 4294901760
        %v7066 = vsub.f32 %v6725, %v7065
        %v7067 = vand.u32 %v7066, 4294901760
        %7068 = vmatpush.msra.mxu0 %v7067
        %v7069 = vand.u32 %v6723, 4294901760
        %v7070 = vsub.f32 %v6723, %v7069
        %v7071 = vand.u32 %v7070, 4294901760
        %7072 = vmatpush.msra.mxu0 %v7071
        %v7073 = vand.u32 %v6721, 4294901760
        %v7074 = vsub.f32 %v6721, %v7073
        %v7075 = vand.u32 %v7074, 4294901760
        %7076 = vmatpush.msra.mxu0 %v7075
        %v7077 = vand.u32 %v6719, 4294901760
        %v7078 = vsub.f32 %v6719, %v7077
        %v7079 = vand.u32 %v7078, 4294901760
        %7080 = vmatpush.msra.mxu0 %v7079
        %v7081 = vand.u32 %v6717, 4294901760
        %v7082 = vsub.f32 %v6717, %v7081
        %v7083 = vand.u32 %v7082, 4294901760
        %7084 = vmatpush.msra.mxu0 %v7083
        %v7085 = vand.u32 %v6715, 4294901760
        %v7086 = vsub.f32 %v6715, %v7085
        %v7087 = vand.u32 %v7086, 4294901760
        %7088 = vmatpush.msra.mxu0 %v7087
        %v7089 = vand.u32 %v6713, 4294901760
        %v7090 = vsub.f32 %v6713, %v7089
        %v7091 = vand.u32 %v7090, 4294901760
        %7092 = vmatpush.msra.mxu0 %v7091
        %v7093 = vand.u32 %v6711, 4294901760
        %v7094 = vsub.f32 %v6711, %v7093
        %v7095 = vand.u32 %v7094, 4294901760
        %7096 = vmatpush.msra.mxu0 %v7095
        %v7097 = vand.u32 %v6606, 4294901760
        %7098 = vmatmul.f32.gmra.mxu0 %v7097
        %v7099 = vpop.f32.mrf.mxu0
        %v7100 = vadd.f32 %v7025, %v7099
        %v7101 = vand.u32 %v6607, 4294901760
        %7102 = vmatmul.f32.gmra.mxu0 %v7101
        %v7103 = vpop.f32.mrf.mxu0
        %v7104 = vadd.f32 %v7031, %v7103
        %7105 = vdwg.mxu0
        %v7106 = vand.u32 %v6741, 4294901760
        %7107 = vmatpush.msra.mxu0 %v7106
        %v7108 = vand.u32 %v6739, 4294901760
        %7109 = vmatpush.msra.mxu0 %v7108
        %v7110 = vand.u32 %v6737, 4294901760
        %7111 = vmatpush.msra.mxu0 %v7110
        %v7112 = vand.u32 %v6735, 4294901760
        %7113 = vmatpush.msra.mxu0 %v7112
        %v7114 = vand.u32 %v6733, 4294901760
        %7115 = vmatpush.msra.mxu0 %v7114
        %v7116 = vand.u32 %v6731, 4294901760
        %7117 = vmatpush.msra.mxu0 %v7116
        %v7118 = vand.u32 %v6729, 4294901760
        %7119 = vmatpush.msra.mxu0 %v7118
        %v7120 = vand.u32 %v6727, 4294901760
        %7121 = vmatpush.msra.mxu0 %v7120
        %v7122 = vand.u32 %v6725, 4294901760
        %7123 = vmatpush.msra.mxu0 %v7122
        %v7124 = vand.u32 %v6723, 4294901760
        %7125 = vmatpush.msra.mxu0 %v7124
        %v7126 = vand.u32 %v6721, 4294901760
        %7127 = vmatpush.msra.mxu0 %v7126
        %v7128 = vand.u32 %v6719, 4294901760
        %7129 = vmatpush.msra.mxu0 %v7128
        %v7130 = vand.u32 %v6717, 4294901760
        %7131 = vmatpush.msra.mxu0 %v7130
        %v7132 = vand.u32 %v6715, 4294901760
        %7133 = vmatpush.msra.mxu0 %v7132
        %v7134 = vand.u32 %v6713, 4294901760
        %7135 = vmatpush.msra.mxu0 %v7134
        %v7136 = vand.u32 %v6711, 4294901760
        %7137 = vmatpush.msra.mxu0 %v7136
        %v7138 = vand.u32 %v6606, 4294901760
        %7139 = vmatmul.f32.gmra.mxu0 %v7138
        %v7140 = vpop.f32.mrf.mxu0
        %v7141 = vadd.f32 %v7100, %v7140
        %v7142 = vand.u32 %v6607, 4294901760
        %7143 = vmatmul.f32.gmra.mxu0 %v7142
        %v7144 = vpop.f32.mrf.mxu0
        %v7145 = vadd.f32 %v7104, %v7144
        %7146 = vdwg.mxu0
        %v7147 = vand.u32 %v6742, 4294901760
        %7148 = vmatpush.msra.mxu0 %v7147
        %v7149 = vand.u32 %v6740, 4294901760
        %7150 = vmatpush.msra.mxu0 %v7149
        %v7151 = vand.u32 %v6738, 4294901760
        %7152 = vmatpush.msra.mxu0 %v7151
        %v7153 = vand.u32 %v6736, 4294901760
        %7154 = vmatpush.msra.mxu0 %v7153
        %v7155 = vand.u32 %v6734, 4294901760
        %7156 = vmatpush.msra.mxu0 %v7155
        %v7157 = vand.u32 %v6732, 4294901760
        %7158 = vmatpush.msra.mxu0 %v7157
        %v7159 = vand.u32 %v6730, 4294901760
        %7160 = vmatpush.msra.mxu0 %v7159
        %v7161 = vand.u32 %v6728, 4294901760
        %7162 = vmatpush.msra.mxu0 %v7161
        %v7163 = vand.u32 %v6726, 4294901760
        %7164 = vmatpush.msra.mxu0 %v7163
        %v7165 = vand.u32 %v6724, 4294901760
        %7166 = vmatpush.msra.mxu0 %v7165
        %v7167 = vand.u32 %v6722, 4294901760
        %7168 = vmatpush.msra.mxu0 %v7167
        %v7169 = vand.u32 %v6720, 4294901760
        %7170 = vmatpush.msra.mxu0 %v7169
        %v7171 = vand.u32 %v6718, 4294901760
        %7172 = vmatpush.msra.mxu0 %v7171
        %v7173 = vand.u32 %v6716, 4294901760
        %7174 = vmatpush.msra.mxu0 %v7173
        %v7175 = vand.u32 %v6714, 4294901760
        %7176 = vmatpush.msra.mxu0 %v7175
        %v7177 = vand.u32 %v6712, 4294901760
        %7178 = vmatpush.msra.mxu0 %v7177
        %v7179 = vand.u32 %v6606, 4294901760
        %v7180 = vsub.f32 %v6606, %v7179
        %v7181 = vand.u32 %v7180, 4294901760
        %v7182 = vsub.f32 %v7180, %v7181
        %v7183 = vand.u32 %v7182, 4294901760
        %7184 = vmatmul.f32.gmra.mxu0 %v7183
        %v7185 = vpop.f32.mrf.mxu0
        %v7186 = vadd.f32 0.0, %v7185
        %v7187 = vand.u32 %v6607, 4294901760
        %v7188 = vsub.f32 %v6607, %v7187
        %v7189 = vand.u32 %v7188, 4294901760
        %v7190 = vsub.f32 %v7188, %v7189
        %v7191 = vand.u32 %v7190, 4294901760
        %7192 = vmatmul.f32.gmra.mxu0 %v7191
        %v7193 = vpop.f32.mrf.mxu0
        %v7194 = vadd.f32 0.0, %v7193
        %7195 = vdwg.mxu0
        %v7196 = vand.u32 %v6742, 4294901760
        %v7197 = vsub.f32 %v6742, %v7196
        %v7198 = vand.u32 %v7197, 4294901760
        %v7199 = vsub.f32 %v7197, %v7198
        %v7200 = vand.u32 %v7199, 4294901760
        %7201 = vmatpush.msra.mxu0 %v7200
        %v7202 = vand.u32 %v6740, 4294901760
        %v7203 = vsub.f32 %v6740, %v7202
        %v7204 = vand.u32 %v7203, 4294901760
        %v7205 = vsub.f32 %v7203, %v7204
        %v7206 = vand.u32 %v7205, 4294901760
        %7207 = vmatpush.msra.mxu0 %v7206
        %v7208 = vand.u32 %v6738, 4294901760
        %v7209 = vsub.f32 %v6738, %v7208
        %v7210 = vand.u32 %v7209, 4294901760
        %v7211 = vsub.f32 %v7209, %v7210
        %v7212 = vand.u32 %v7211, 4294901760
        %7213 = vmatpush.msra.mxu0 %v7212
        %v7214 = vand.u32 %v6736, 4294901760
        %v7215 = vsub.f32 %v6736, %v7214
        %v7216 = vand.u32 %v7215, 4294901760
        %v7217 = vsub.f32 %v7215, %v7216
        %v7218 = vand.u32 %v7217, 4294901760
        %7219 = vmatpush.msra.mxu0 %v7218
        %v7220 = vand.u32 %v6734, 4294901760
        %v7221 = vsub.f32 %v6734, %v7220
        %v7222 = vand.u32 %v7221, 4294901760
        %v7223 = vsub.f32 %v7221, %v7222
        %v7224 = vand.u32 %v7223, 4294901760
        %7225 = vmatpush.msra.mxu0 %v7224
        %v7226 = vand.u32 %v6732, 4294901760
        %v7227 = vsub.f32 %v6732, %v7226
        %v7228 = vand.u32 %v7227, 4294901760
        %v7229 = vsub.f32 %v7227, %v7228
        %v7230 = vand.u32 %v7229, 4294901760
        %7231 = vmatpush.msra.mxu0 %v7230
        %v7232 = vand.u32 %v6730, 4294901760
        %v7233 = vsub.f32 %v6730, %v7232
        %v7234 = vand.u32 %v7233, 4294901760
        %v7235 = vsub.f32 %v7233, %v7234
        %v7236 = vand.u32 %v7235, 4294901760
        %7237 = vmatpush.msra.mxu0 %v7236
        %v7238 = vand.u32 %v6728, 4294901760
        %v7239 = vsub.f32 %v6728, %v7238
        %v7240 = vand.u32 %v7239, 4294901760
        %v7241 = vsub.f32 %v7239, %v7240
        %v7242 = vand.u32 %v7241, 4294901760
        %7243 = vmatpush.msra.mxu0 %v7242
        %v7244 = vand.u32 %v6726, 4294901760
        %v7245 = vsub.f32 %v6726, %v7244
        %v7246 = vand.u32 %v7245, 4294901760
        %v7247 = vsub.f32 %v7245, %v7246
        %v7248 = vand.u32 %v7247, 4294901760
        %7249 = vmatpush.msra.mxu0 %v7248
        %v7250 = vand.u32 %v6724, 4294901760
        %v7251 = vsub.f32 %v6724, %v7250
        %v7252 = vand.u32 %v7251, 4294901760
        %v7253 = vsub.f32 %v7251, %v7252
        %v7254 = vand.u32 %v7253, 4294901760
        %7255 = vmatpush.msra.mxu0 %v7254
        %v7256 = vand.u32 %v6722, 4294901760
        %v7257 = vsub.f32 %v6722, %v7256
        %v7258 = vand.u32 %v7257, 4294901760
        %v7259 = vsub.f32 %v7257, %v7258
        %v7260 = vand.u32 %v7259, 4294901760
        %7261 = vmatpush.msra.mxu0 %v7260
        %v7262 = vand.u32 %v6720, 4294901760
        %v7263 = vsub.f32 %v6720, %v7262
        %v7264 = vand.u32 %v7263, 4294901760
        %v7265 = vsub.f32 %v7263, %v7264
        %v7266 = vand.u32 %v7265, 4294901760
        %7267 = vmatpush.msra.mxu0 %v7266
        %v7268 = vand.u32 %v6718, 4294901760
        %v7269 = vsub.f32 %v6718, %v7268
        %v7270 = vand.u32 %v7269, 4294901760
        %v7271 = vsub.f32 %v7269, %v7270
        %v7272 = vand.u32 %v7271, 4294901760
        %7273 = vmatpush.msra.mxu0 %v7272
        %v7274 = vand.u32 %v6716, 4294901760
        %v7275 = vsub.f32 %v6716, %v7274
        %v7276 = vand.u32 %v7275, 4294901760
        %v7277 = vsub.f32 %v7275, %v7276
        %v7278 = vand.u32 %v7277, 4294901760
        %7279 = vmatpush.msra.mxu0 %v7278
        %v7280 = vand.u32 %v6714, 4294901760
        %v7281 = vsub.f32 %v6714, %v7280
        %v7282 = vand.u32 %v7281, 4294901760
        %v7283 = vsub.f32 %v7281, %v7282
        %v7284 = vand.u32 %v7283, 4294901760
        %7285 = vmatpush.msra.mxu0 %v7284
        %v7286 = vand.u32 %v6712, 4294901760
        %v7287 = vsub.f32 %v6712, %v7286
        %v7288 = vand.u32 %v7287, 4294901760
        %v7289 = vsub.f32 %v7287, %v7288
        %v7290 = vand.u32 %v7289, 4294901760
        %7291 = vmatpush.msra.mxu0 %v7290
        %v7292 = vand.u32 %v6606, 4294901760
        %7293 = vmatmul.f32.gmra.mxu0 %v7292
        %v7294 = vpop.f32.mrf.mxu0
        %v7295 = vadd.f32 %v7186, %v7294
        %v7296 = vand.u32 %v6607, 4294901760
        %7297 = vmatmul.f32.gmra.mxu0 %v7296
        %v7298 = vpop.f32.mrf.mxu0
        %v7299 = vadd.f32 %v7194, %v7298
        %7300 = vdwg.mxu0
        %v7301 = vand.u32 %v6742, 4294901760
        %v7302 = vsub.f32 %v6742, %v7301
        %7303 = vmatpush.msra.mxu0 %v7302
        %v7304 = vand.u32 %v6740, 4294901760
        %v7305 = vsub.f32 %v6740, %v7304
        %7306 = vmatpush.msra.mxu0 %v7305
        %v7307 = vand.u32 %v6738, 4294901760
        %v7308 = vsub.f32 %v6738, %v7307
        %7309 = vmatpush.msra.mxu0 %v7308
        %v7310 = vand.u32 %v6736, 4294901760
        %v7311 = vsub.f32 %v6736, %v7310
        %7312 = vmatpush.msra.mxu0 %v7311
        %v7313 = vand.u32 %v6734, 4294901760
        %v7314 = vsub.f32 %v6734, %v7313
        %7315 = vmatpush.msra.mxu0 %v7314
        %v7316 = vand.u32 %v6732, 4294901760
        %v7317 = vsub.f32 %v6732, %v7316
        %7318 = vmatpush.msra.mxu0 %v7317
        %v7319 = vand.u32 %v6730, 4294901760
        %v7320 = vsub.f32 %v6730, %v7319
        %7321 = vmatpush.msra.mxu0 %v7320
        %v7322 = vand.u32 %v6728, 4294901760
        %v7323 = vsub.f32 %v6728, %v7322
        %7324 = vmatpush.msra.mxu0 %v7323
        %v7325 = vand.u32 %v6726, 4294901760
        %v7326 = vsub.f32 %v6726, %v7325
        %7327 = vmatpush.msra.mxu0 %v7326
        %v7328 = vand.u32 %v6724, 4294901760
        %v7329 = vsub.f32 %v6724, %v7328
        %7330 = vmatpush.msra.mxu0 %v7329
        %v7331 = vand.u32 %v6722, 4294901760
        %v7332 = vsub.f32 %v6722, %v7331
        %7333 = vmatpush.msra.mxu0 %v7332
        %v7334 = vand.u32 %v6720, 4294901760
        %v7335 = vsub.f32 %v6720, %v7334
        %7336 = vmatpush.msra.mxu0 %v7335
        %v7337 = vand.u32 %v6718, 4294901760
        %v7338 = vsub.f32 %v6718, %v7337
        %7339 = vmatpush.msra.mxu0 %v7338
        %v7340 = vand.u32 %v6716, 4294901760
        %v7341 = vsub.f32 %v6716, %v7340
        %7342 = vmatpush.msra.mxu0 %v7341
        %v7343 = vand.u32 %v6714, 4294901760
        %v7344 = vsub.f32 %v6714, %v7343
        %7345 = vmatpush.msra.mxu0 %v7344
        %v7346 = vand.u32 %v6712, 4294901760
        %v7347 = vsub.f32 %v6712, %v7346
        %7348 = vmatpush.msra.mxu0 %v7347
        %v7349 = vand.u32 %v6606, 4294901760
        %v7350 = vsub.f32 %v6606, %v7349
        %7351 = vmatmul.f32.gmra.mxu0 %v7350
        %v7352 = vpop.f32.mrf.mxu0
        %v7353 = vadd.f32 %v7295, %v7352
        %v7354 = vand.u32 %v6607, 4294901760
        %v7355 = vsub.f32 %v6607, %v7354
        %7356 = vmatmul.f32.gmra.mxu0 %v7355
        %v7357 = vpop.f32.mrf.mxu0
        %v7358 = vadd.f32 %v7299, %v7357
        %7359 = vdwg.mxu0
        %v7360 = vand.u32 %v6742, 4294901760
        %7361 = vmatpush.msra.mxu0 %v7360
        %v7362 = vand.u32 %v6740, 4294901760
        %7363 = vmatpush.msra.mxu0 %v7362
        %v7364 = vand.u32 %v6738, 4294901760
        %7365 = vmatpush.msra.mxu0 %v7364
        %v7366 = vand.u32 %v6736, 4294901760
        %7367 = vmatpush.msra.mxu0 %v7366
        %v7368 = vand.u32 %v6734, 4294901760
        %7369 = vmatpush.msra.mxu0 %v7368
        %v7370 = vand.u32 %v6732, 4294901760
        %7371 = vmatpush.msra.mxu0 %v7370
        %v7372 = vand.u32 %v6730, 4294901760
        %7373 = vmatpush.msra.mxu0 %v7372
        %v7374 = vand.u32 %v6728, 4294901760
        %7375 = vmatpush.msra.mxu0 %v7374
        %v7376 = vand.u32 %v6726, 4294901760
        %7377 = vmatpush.msra.mxu0 %v7376
        %v7378 = vand.u32 %v6724, 4294901760
        %7379 = vmatpush.msra.mxu0 %v7378
        %v7380 = vand.u32 %v6722, 4294901760
        %7381 = vmatpush.msra.mxu0 %v7380
        %v7382 = vand.u32 %v6720, 4294901760
        %7383 = vmatpush.msra.mxu0 %v7382
        %v7384 = vand.u32 %v6718, 4294901760
        %7385 = vmatpush.msra.mxu0 %v7384
        %v7386 = vand.u32 %v6716, 4294901760
        %7387 = vmatpush.msra.mxu0 %v7386
        %v7388 = vand.u32 %v6714, 4294901760
        %7389 = vmatpush.msra.mxu0 %v7388
        %v7390 = vand.u32 %v6712, 4294901760
        %7391 = vmatpush.msra.mxu0 %v7390
        %v7392 = vand.u32 %v6606, 4294901760
        %v7393 = vsub.f32 %v6606, %v7392
        %v7394 = vand.u32 %v7393, 4294901760
        %7395 = vmatmul.f32.gmra.mxu0 %v7394
        %v7396 = vpop.f32.mrf.mxu0
        %v7397 = vadd.f32 %v7353, %v7396
        %v7398 = vand.u32 %v6607, 4294901760
        %v7399 = vsub.f32 %v6607, %v7398
        %v7400 = vand.u32 %v7399, 4294901760
        %7401 = vmatmul.f32.gmra.mxu0 %v7400
        %v7402 = vpop.f32.mrf.mxu0
        %v7403 = vadd.f32 %v7358, %v7402
        %7404 = vdwg.mxu0
        %v7405 = vand.u32 %v6742, 4294901760
        %v7406 = vsub.f32 %v6742, %v7405
        %v7407 = vand.u32 %v7406, 4294901760
        %7408 = vmatpush.msra.mxu0 %v7407
        %v7409 = vand.u32 %v6740, 4294901760
        %v7410 = vsub.f32 %v6740, %v7409
        %v7411 = vand.u32 %v7410, 4294901760
        %7412 = vmatpush.msra.mxu0 %v7411
        %v7413 = vand.u32 %v6738, 4294901760
        %v7414 = vsub.f32 %v6738, %v7413
        %v7415 = vand.u32 %v7414, 4294901760
        %7416 = vmatpush.msra.mxu0 %v7415
        %v7417 = vand.u32 %v6736, 4294901760
        %v7418 = vsub.f32 %v6736, %v7417
        %v7419 = vand.u32 %v7418, 4294901760
        %7420 = vmatpush.msra.mxu0 %v7419
        %v7421 = vand.u32 %v6734, 4294901760
        %v7422 = vsub.f32 %v6734, %v7421
        %v7423 = vand.u32 %v7422, 4294901760
        %7424 = vmatpush.msra.mxu0 %v7423
        %v7425 = vand.u32 %v6732, 4294901760
        %v7426 = vsub.f32 %v6732, %v7425
        %v7427 = vand.u32 %v7426, 4294901760
        %7428 = vmatpush.msra.mxu0 %v7427
        %v7429 = vand.u32 %v6730, 4294901760
        %v7430 = vsub.f32 %v6730, %v7429
        %v7431 = vand.u32 %v7430, 4294901760
        %7432 = vmatpush.msra.mxu0 %v7431
        %v7433 = vand.u32 %v6728, 4294901760
        %v7434 = vsub.f32 %v6728, %v7433
        %v7435 = vand.u32 %v7434, 4294901760
        %7436 = vmatpush.msra.mxu0 %v7435
        %v7437 = vand.u32 %v6726, 4294901760
        %v7438 = vsub.f32 %v6726, %v7437
        %v7439 = vand.u32 %v7438, 4294901760
        %7440 = vmatpush.msra.mxu0 %v7439
        %v7441 = vand.u32 %v6724, 4294901760
        %v7442 = vsub.f32 %v6724, %v7441
        %v7443 = vand.u32 %v7442, 4294901760
        %7444 = vmatpush.msra.mxu0 %v7443
        %v7445 = vand.u32 %v6722, 4294901760
        %v7446 = vsub.f32 %v6722, %v7445
        %v7447 = vand.u32 %v7446, 4294901760
        %7448 = vmatpush.msra.mxu0 %v7447
        %v7449 = vand.u32 %v6720, 4294901760
        %v7450 = vsub.f32 %v6720, %v7449
        %v7451 = vand.u32 %v7450, 4294901760
        %7452 = vmatpush.msra.mxu0 %v7451
        %v7453 = vand.u32 %v6718, 4294901760
        %v7454 = vsub.f32 %v6718, %v7453
        %v7455 = vand.u32 %v7454, 4294901760
        %7456 = vmatpush.msra.mxu0 %v7455
        %v7457 = vand.u32 %v6716, 4294901760
        %v7458 = vsub.f32 %v6716, %v7457
        %v7459 = vand.u32 %v7458, 4294901760
        %7460 = vmatpush.msra.mxu0 %v7459
        %v7461 = vand.u32 %v6714, 4294901760
        %v7462 = vsub.f32 %v6714, %v7461
        %v7463 = vand.u32 %v7462, 4294901760
        %7464 = vmatpush.msra.mxu0 %v7463
        %v7465 = vand.u32 %v6712, 4294901760
        %v7466 = vsub.f32 %v6712, %v7465
        %v7467 = vand.u32 %v7466, 4294901760
        %7468 = vmatpush.msra.mxu0 %v7467
        %v7469 = vand.u32 %v6606, 4294901760
        %7470 = vmatmul.f32.gmra.mxu0 %v7469
        %v7471 = vpop.f32.mrf.mxu0
        %v7472 = vadd.f32 %v7397, %v7471
        %v7473 = vand.u32 %v6607, 4294901760
        %7474 = vmatmul.f32.gmra.mxu0 %v7473
        %v7475 = vpop.f32.mrf.mxu0
        %v7476 = vadd.f32 %v7403, %v7475
        %7477 = vdwg.mxu0
        %v7478 = vand.u32 %v6742, 4294901760
        %7479 = vmatpush.msra.mxu0 %v7478
        %v7480 = vand.u32 %v6740, 4294901760
        %7481 = vmatpush.msra.mxu0 %v7480
        %v7482 = vand.u32 %v6738, 4294901760
        %7483 = vmatpush.msra.mxu0 %v7482
        %v7484 = vand.u32 %v6736, 4294901760
        %7485 = vmatpush.msra.mxu0 %v7484
        %v7486 = vand.u32 %v6734, 4294901760
        %7487 = vmatpush.msra.mxu0 %v7486
        %v7488 = vand.u32 %v6732, 4294901760
        %7489 = vmatpush.msra.mxu0 %v7488
        %v7490 = vand.u32 %v6730, 4294901760
        %7491 = vmatpush.msra.mxu0 %v7490
        %v7492 = vand.u32 %v6728, 4294901760
        %7493 = vmatpush.msra.mxu0 %v7492
        %v7494 = vand.u32 %v6726, 4294901760
        %7495 = vmatpush.msra.mxu0 %v7494
        %v7496 = vand.u32 %v6724, 4294901760
        %7497 = vmatpush.msra.mxu0 %v7496
        %v7498 = vand.u32 %v6722, 4294901760
        %7499 = vmatpush.msra.mxu0 %v7498
        %v7500 = vand.u32 %v6720, 4294901760
        %7501 = vmatpush.msra.mxu0 %v7500
        %v7502 = vand.u32 %v6718, 4294901760
        %7503 = vmatpush.msra.mxu0 %v7502
        %v7504 = vand.u32 %v6716, 4294901760
        %7505 = vmatpush.msra.mxu0 %v7504
        %v7506 = vand.u32 %v6714, 4294901760
        %7507 = vmatpush.msra.mxu0 %v7506
        %v7508 = vand.u32 %v6712, 4294901760
        %7509 = vmatpush.msra.mxu0 %v7508
        %v7510 = vand.u32 %v6606, 4294901760
        %7511 = vmatmul.f32.gmra.mxu0 %v7510
        %v7512 = vpop.f32.mrf.mxu0
        %v7513 = vadd.f32 %v7472, %v7512
        %v7514 = vand.u32 %v6607, 4294901760
        %7515 = vmatmul.f32.gmra.mxu0 %v7514
        %v7516 = vpop.f32.mrf.mxu0
        %v7517 = vadd.f32 %v7476, %v7516
        %7518 = vdwg.mxu0
        %v7519 = vadd.f32 %v6286, %v7141
        %v7520 = vadd.f32 %v6287, %v7513
        %v7521 = vadd.f32 %v6288, %v7145
        %v7522 = vadd.f32 %v6289, %v7517
        %s7523 = scalar_lea.vmem [#allocation7], 96
        %v7524 = vld [vmem:[%s7523] ss:$8 sm:$0x3]
        %v7526 = vperm.slane %v7524, 0
        %v7527 = vperm.slane %v7524, 1
        %7528 = vrot.lane.b32.xlu0 %v7526, 102
        %v7529 = vpop.permute.xlu0 %7528
        %7530 = vrot.lane.b32.xlu0 %v7527, 102
        %v7531 = vpop.permute.xlu0 %7530
        %vm7532 = vcmask 834560
        %v7533 = vsel %vm7532, %v7529, %v7531
        %v7537 = vmul.f32 %v251, %v7529
        %v7538 = vmul.f32 %v252, %v7533
        %v7539 = vmul.f32 %v253, %v7531
        %v7540 = vmul.f32 %v254, %v7529
        %v7541 = vmul.f32 %v255, %v7533
        %v7542 = vmul.f32 %v256, %v7531
        %s7543 = scalar_lea.vmem [#allocation5], 96
        %v7544 = vld [vmem:[%s7543] sm:$0xff]
        %v7545 = vld [vmem:[%s7543 + $0x8] sm:$0xff]
        %7553 = vrot.lane.b32.xlu0 %v7537, 26
        %v7554 = vpop.permute.xlu0 %7553
        %7555 = vrot.lane.b32.xlu0 %v7538, 26
        %v7556 = vpop.permute.xlu0 %7555
        %7557 = vrot.lane.b32.xlu0 %v7539, 26
        %v7558 = vpop.permute.xlu0 %7557
        %7559 = vrot.lane.b32.xlu0 %v7540, 26
        %v7560 = vpop.permute.xlu0 %7559
        %7561 = vrot.lane.b32.xlu0 %v7541, 26
        %v7562 = vpop.permute.xlu0 %7561
        %7563 = vrot.lane.b32.xlu0 %v7542, 26
        %v7564 = vpop.permute.xlu0 %7563
        %7565 = vrot.lane.b32.xlu0 0.0, 26
        %v7566 = vpop.permute.xlu0 %7565
        %vm7567 = vcmask 211968
        %v7568 = vsel %vm7567, %v7554, %v7556
        %v7569 = vsel %vm7567, %v7556, %v7558
        %v7570 = vsel %vm7567, %v7560, %v7562
        %v7571 = vsel %vm7567, %v7562, %v7564
        %v7577 = vand.u32 %v7566, 4294901760
        %7578 = vmatpush.msra.mxu0 %v7577
        %v7579 = vand.u32 %v7566, 4294901760
        %7580 = vmatpush.msra.mxu0 %v7579
        %v7581 = vand.u32 %v7566, 4294901760
        %7582 = vmatpush.msra.mxu0 %v7581
        %v7583 = vand.u32 %v7566, 4294901760
        %7584 = vmatpush.msra.mxu0 %v7583
        %v7585 = vand.u32 %v7566, 4294901760
        %7586 = vmatpush.msra.mxu0 %v7585
        %v7587 = vand.u32 %v7566, 4294901760
        %7588 = vmatpush.msra.mxu0 %v7587
        %v7589 = vand.u32 %v7566, 4294901760
        %7590 = vmatpush.msra.mxu0 %v7589
        %v7591 = vand.u32 %v7566, 4294901760
        %7592 = vmatpush.msra.mxu0 %v7591
        %v7593 = vand.u32 %v7566, 4294901760
        %7594 = vmatpush.msra.mxu0 %v7593
        %v7595 = vand.u32 %v7566, 4294901760
        %7596 = vmatpush.msra.mxu0 %v7595
        %v7597 = vand.u32 %v7566, 4294901760
        %7598 = vmatpush.msra.mxu0 %v7597
        %v7599 = vand.u32 %v7566, 4294901760
        %7600 = vmatpush.msra.mxu0 %v7599
        %v7601 = vand.u32 %v7566, 4294901760
        %7602 = vmatpush.msra.mxu0 %v7601
        %v7603 = vand.u32 %v7566, 4294901760
        %7604 = vmatpush.msra.mxu0 %v7603
        %v7605 = vand.u32 %v7570, 4294901760
        %7606 = vmatpush.msra.mxu0 %v7605
        %v7607 = vand.u32 %v7568, 4294901760
        %7608 = vmatpush.msra.mxu0 %v7607
        %v7609 = vand.u32 %v7544, 4294901760
        %v7610 = vsub.f32 %v7544, %v7609
        %v7611 = vand.u32 %v7610, 4294901760
        %v7612 = vsub.f32 %v7610, %v7611
        %v7613 = vand.u32 %v7612, 4294901760
        %7614 = vmatmul.f32.gmra.mxu0 %v7613
        %v7615 = vpop.f32.mrf.mxu0
        %v7616 = vadd.f32 0.0, %v7615
        %v7617 = vand.u32 %v7545, 4294901760
        %v7618 = vsub.f32 %v7545, %v7617
        %v7619 = vand.u32 %v7618, 4294901760
        %v7620 = vsub.f32 %v7618, %v7619
        %v7621 = vand.u32 %v7620, 4294901760
        %7622 = vmatmul.f32.gmra.mxu0 %v7621
        %v7623 = vpop.f32.mrf.mxu0
        %v7624 = vadd.f32 0.0, %v7623
        %7625 = vdwg.mxu0
        %v7626 = vand.u32 %v7566, 4294901760
        %v7627 = vsub.f32 %v7566, %v7626
        %v7628 = vand.u32 %v7627, 4294901760
        %v7629 = vsub.f32 %v7627, %v7628
        %v7630 = vand.u32 %v7629, 4294901760
        %7631 = vmatpush.msra.mxu0 %v7630
        %v7632 = vand.u32 %v7566, 4294901760
        %v7633 = vsub.f32 %v7566, %v7632
        %v7634 = vand.u32 %v7633, 4294901760
        %v7635 = vsub.f32 %v7633, %v7634
        %v7636 = vand.u32 %v7635, 4294901760
        %7637 = vmatpush.msra.mxu0 %v7636
        %v7638 = vand.u32 %v7566, 4294901760
        %v7639 = vsub.f32 %v7566, %v7638
        %v7640 = vand.u32 %v7639, 4294901760
        %v7641 = vsub.f32 %v7639, %v7640
        %v7642 = vand.u32 %v7641, 4294901760
        %7643 = vmatpush.msra.mxu0 %v7642
        %v7644 = vand.u32 %v7566, 4294901760
        %v7645 = vsub.f32 %v7566, %v7644
        %v7646 = vand.u32 %v7645, 4294901760
        %v7647 = vsub.f32 %v7645, %v7646
        %v7648 = vand.u32 %v7647, 4294901760
        %7649 = vmatpush.msra.mxu0 %v7648
        %v7650 = vand.u32 %v7566, 4294901760
        %v7651 = vsub.f32 %v7566, %v7650
        %v7652 = vand.u32 %v7651, 4294901760
        %v7653 = vsub.f32 %v7651, %v7652
        %v7654 = vand.u32 %v7653, 4294901760
        %7655 = vmatpush.msra.mxu0 %v7654
        %v7656 = vand.u32 %v7566, 4294901760
        %v7657 = vsub.f32 %v7566, %v7656
        %v7658 = vand.u32 %v7657, 4294901760
        %v7659 = vsub.f32 %v7657, %v7658
        %v7660 = vand.u32 %v7659, 4294901760
        %7661 = vmatpush.msra.mxu0 %v7660
        %v7662 = vand.u32 %v7566, 4294901760
        %v7663 = vsub.f32 %v7566, %v7662
        %v7664 = vand.u32 %v7663, 4294901760
        %v7665 = vsub.f32 %v7663, %v7664
        %v7666 = vand.u32 %v7665, 4294901760
        %7667 = vmatpush.msra.mxu0 %v7666
        %v7668 = vand.u32 %v7566, 4294901760
        %v7669 = vsub.f32 %v7566, %v7668
        %v7670 = vand.u32 %v7669, 4294901760
        %v7671 = vsub.f32 %v7669, %v7670
        %v7672 = vand.u32 %v7671, 4294901760
        %7673 = vmatpush.msra.mxu0 %v7672
        %v7674 = vand.u32 %v7566, 4294901760
        %v7675 = vsub.f32 %v7566, %v7674
        %v7676 = vand.u32 %v7675, 4294901760
        %v7677 = vsub.f32 %v7675, %v7676
        %v7678 = vand.u32 %v7677, 4294901760
        %7679 = vmatpush.msra.mxu0 %v7678
        %v7680 = vand.u32 %v7566, 4294901760
        %v7681 = vsub.f32 %v7566, %v7680
        %v7682 = vand.u32 %v7681, 4294901760
        %v7683 = vsub.f32 %v7681, %v7682
        %v7684 = vand.u32 %v7683, 4294901760
        %7685 = vmatpush.msra.mxu0 %v7684
        %v7686 = vand.u32 %v7566, 4294901760
        %v7687 = vsub.f32 %v7566, %v7686
        %v7688 = vand.u32 %v7687, 4294901760
        %v7689 = vsub.f32 %v7687, %v7688
        %v7690 = vand.u32 %v7689, 4294901760
        %7691 = vmatpush.msra.mxu0 %v7690
        %v7692 = vand.u32 %v7566, 4294901760
        %v7693 = vsub.f32 %v7566, %v7692
        %v7694 = vand.u32 %v7693, 4294901760
        %v7695 = vsub.f32 %v7693, %v7694
        %v7696 = vand.u32 %v7695, 4294901760
        %7697 = vmatpush.msra.mxu0 %v7696
        %v7698 = vand.u32 %v7566, 4294901760
        %v7699 = vsub.f32 %v7566, %v7698
        %v7700 = vand.u32 %v7699, 4294901760
        %v7701 = vsub.f32 %v7699, %v7700
        %v7702 = vand.u32 %v7701, 4294901760
        %7703 = vmatpush.msra.mxu0 %v7702
        %v7704 = vand.u32 %v7566, 4294901760
        %v7705 = vsub.f32 %v7566, %v7704
        %v7706 = vand.u32 %v7705, 4294901760
        %v7707 = vsub.f32 %v7705, %v7706
        %v7708 = vand.u32 %v7707, 4294901760
        %7709 = vmatpush.msra.mxu0 %v7708
        %v7710 = vand.u32 %v7570, 4294901760
        %v7711 = vsub.f32 %v7570, %v7710
        %v7712 = vand.u32 %v7711, 4294901760
        %v7713 = vsub.f32 %v7711, %v7712
        %v7714 = vand.u32 %v7713, 4294901760
        %7715 = vmatpush.msra.mxu0 %v7714
        %v7716 = vand.u32 %v7568, 4294901760
        %v7717 = vsub.f32 %v7568, %v7716
        %v7718 = vand.u32 %v7717, 4294901760
        %v7719 = vsub.f32 %v7717, %v7718
        %v7720 = vand.u32 %v7719, 4294901760
        %7721 = vmatpush.msra.mxu0 %v7720
        %v7722 = vand.u32 %v7544, 4294901760
        %7723 = vmatmul.f32.gmra.mxu0 %v7722
        %v7724 = vpop.f32.mrf.mxu0
        %v7725 = vadd.f32 %v7616, %v7724
        %v7726 = vand.u32 %v7545, 4294901760
        %7727 = vmatmul.f32.gmra.mxu0 %v7726
        %v7728 = vpop.f32.mrf.mxu0
        %v7729 = vadd.f32 %v7624, %v7728
        %7730 = vdwg.mxu0
        %v7731 = vand.u32 %v7566, 4294901760
        %v7732 = vsub.f32 %v7566, %v7731
        %7733 = vmatpush.msra.mxu0 %v7732
        %v7734 = vand.u32 %v7566, 4294901760
        %v7735 = vsub.f32 %v7566, %v7734
        %7736 = vmatpush.msra.mxu0 %v7735
        %v7737 = vand.u32 %v7566, 4294901760
        %v7738 = vsub.f32 %v7566, %v7737
        %7739 = vmatpush.msra.mxu0 %v7738
        %v7740 = vand.u32 %v7566, 4294901760
        %v7741 = vsub.f32 %v7566, %v7740
        %7742 = vmatpush.msra.mxu0 %v7741
        %v7743 = vand.u32 %v7566, 4294901760
        %v7744 = vsub.f32 %v7566, %v7743
        %7745 = vmatpush.msra.mxu0 %v7744
        %v7746 = vand.u32 %v7566, 4294901760
        %v7747 = vsub.f32 %v7566, %v7746
        %7748 = vmatpush.msra.mxu0 %v7747
        %v7749 = vand.u32 %v7566, 4294901760
        %v7750 = vsub.f32 %v7566, %v7749
        %7751 = vmatpush.msra.mxu0 %v7750
        %v7752 = vand.u32 %v7566, 4294901760
        %v7753 = vsub.f32 %v7566, %v7752
        %7754 = vmatpush.msra.mxu0 %v7753
        %v7755 = vand.u32 %v7566, 4294901760
        %v7756 = vsub.f32 %v7566, %v7755
        %7757 = vmatpush.msra.mxu0 %v7756
        %v7758 = vand.u32 %v7566, 4294901760
        %v7759 = vsub.f32 %v7566, %v7758
        %7760 = vmatpush.msra.mxu0 %v7759
        %v7761 = vand.u32 %v7566, 4294901760
        %v7762 = vsub.f32 %v7566, %v7761
        %7763 = vmatpush.msra.mxu0 %v7762
        %v7764 = vand.u32 %v7566, 4294901760
        %v7765 = vsub.f32 %v7566, %v7764
        %7766 = vmatpush.msra.mxu0 %v7765
        %v7767 = vand.u32 %v7566, 4294901760
        %v7768 = vsub.f32 %v7566, %v7767
        %7769 = vmatpush.msra.mxu0 %v7768
        %v7770 = vand.u32 %v7566, 4294901760
        %v7771 = vsub.f32 %v7566, %v7770
        %7772 = vmatpush.msra.mxu0 %v7771
        %v7773 = vand.u32 %v7570, 4294901760
        %v7774 = vsub.f32 %v7570, %v7773
        %7775 = vmatpush.msra.mxu0 %v7774
        %v7776 = vand.u32 %v7568, 4294901760
        %v7777 = vsub.f32 %v7568, %v7776
        %7778 = vmatpush.msra.mxu0 %v7777
        %v7779 = vand.u32 %v7544, 4294901760
        %v7780 = vsub.f32 %v7544, %v7779
        %7781 = vmatmul.f32.gmra.mxu0 %v7780
        %v7782 = vpop.f32.mrf.mxu0
        %v7783 = vadd.f32 %v7725, %v7782
        %v7784 = vand.u32 %v7545, 4294901760
        %v7785 = vsub.f32 %v7545, %v7784
        %7786 = vmatmul.f32.gmra.mxu0 %v7785
        %v7787 = vpop.f32.mrf.mxu0
        %v7788 = vadd.f32 %v7729, %v7787
        %7789 = vdwg.mxu0
        %v7790 = vand.u32 %v7566, 4294901760
        %7791 = vmatpush.msra.mxu0 %v7790
        %v7792 = vand.u32 %v7566, 4294901760
        %7793 = vmatpush.msra.mxu0 %v7792
        %v7794 = vand.u32 %v7566, 4294901760
        %7795 = vmatpush.msra.mxu0 %v7794
        %v7796 = vand.u32 %v7566, 4294901760
        %7797 = vmatpush.msra.mxu0 %v7796
        %v7798 = vand.u32 %v7566, 4294901760
        %7799 = vmatpush.msra.mxu0 %v7798
        %v7800 = vand.u32 %v7566, 4294901760
        %7801 = vmatpush.msra.mxu0 %v7800
        %v7802 = vand.u32 %v7566, 4294901760
        %7803 = vmatpush.msra.mxu0 %v7802
        %v7804 = vand.u32 %v7566, 4294901760
        %7805 = vmatpush.msra.mxu0 %v7804
        %v7806 = vand.u32 %v7566, 4294901760
        %7807 = vmatpush.msra.mxu0 %v7806
        %v7808 = vand.u32 %v7566, 4294901760
        %7809 = vmatpush.msra.mxu0 %v7808
        %v7810 = vand.u32 %v7566, 4294901760
        %7811 = vmatpush.msra.mxu0 %v7810
        %v7812 = vand.u32 %v7566, 4294901760
        %7813 = vmatpush.msra.mxu0 %v7812
        %v7814 = vand.u32 %v7566, 4294901760
        %7815 = vmatpush.msra.mxu0 %v7814
        %v7816 = vand.u32 %v7566, 4294901760
        %7817 = vmatpush.msra.mxu0 %v7816
        %v7818 = vand.u32 %v7570, 4294901760
        %7819 = vmatpush.msra.mxu0 %v7818
        %v7820 = vand.u32 %v7568, 4294901760
        %7821 = vmatpush.msra.mxu0 %v7820
        %v7822 = vand.u32 %v7544, 4294901760
        %v7823 = vsub.f32 %v7544, %v7822
        %v7824 = vand.u32 %v7823, 4294901760
        %7825 = vmatmul.f32.gmra.mxu0 %v7824
        %v7826 = vpop.f32.mrf.mxu0
        %v7827 = vadd.f32 %v7783, %v7826
        %v7828 = vand.u32 %v7545, 4294901760
        %v7829 = vsub.f32 %v7545, %v7828
        %v7830 = vand.u32 %v7829, 4294901760
        %7831 = vmatmul.f32.gmra.mxu0 %v7830
        %v7832 = vpop.f32.mrf.mxu0
        %v7833 = vadd.f32 %v7788, %v7832
        %7834 = vdwg.mxu0
        %v7835 = vand.u32 %v7566, 4294901760
        %v7836 = vsub.f32 %v7566, %v7835
        %v7837 = vand.u32 %v7836, 4294901760
        %7838 = vmatpush.msra.mxu0 %v7837
        %v7839 = vand.u32 %v7566, 4294901760
        %v7840 = vsub.f32 %v7566, %v7839
        %v7841 = vand.u32 %v7840, 4294901760
        %7842 = vmatpush.msra.mxu0 %v7841
        %v7843 = vand.u32 %v7566, 4294901760
        %v7844 = vsub.f32 %v7566, %v7843
        %v7845 = vand.u32 %v7844, 4294901760
        %7846 = vmatpush.msra.mxu0 %v7845
        %v7847 = vand.u32 %v7566, 4294901760
        %v7848 = vsub.f32 %v7566, %v7847
        %v7849 = vand.u32 %v7848, 4294901760
        %7850 = vmatpush.msra.mxu0 %v7849
        %v7851 = vand.u32 %v7566, 4294901760
        %v7852 = vsub.f32 %v7566, %v7851
        %v7853 = vand.u32 %v7852, 4294901760
        %7854 = vmatpush.msra.mxu0 %v7853
        %v7855 = vand.u32 %v7566, 4294901760
        %v7856 = vsub.f32 %v7566, %v7855
        %v7857 = vand.u32 %v7856, 4294901760
        %7858 = vmatpush.msra.mxu0 %v7857
        %v7859 = vand.u32 %v7566, 4294901760
        %v7860 = vsub.f32 %v7566, %v7859
        %v7861 = vand.u32 %v7860, 4294901760
        %7862 = vmatpush.msra.mxu0 %v7861
        %v7863 = vand.u32 %v7566, 4294901760
        %v7864 = vsub.f32 %v7566, %v7863
        %v7865 = vand.u32 %v7864, 4294901760
        %7866 = vmatpush.msra.mxu0 %v7865
        %v7867 = vand.u32 %v7566, 4294901760
        %v7868 = vsub.f32 %v7566, %v7867
        %v7869 = vand.u32 %v7868, 4294901760
        %7870 = vmatpush.msra.mxu0 %v7869
        %v7871 = vand.u32 %v7566, 4294901760
        %v7872 = vsub.f32 %v7566, %v7871
        %v7873 = vand.u32 %v7872, 4294901760
        %7874 = vmatpush.msra.mxu0 %v7873
        %v7875 = vand.u32 %v7566, 4294901760
        %v7876 = vsub.f32 %v7566, %v7875
        %v7877 = vand.u32 %v7876, 4294901760
        %7878 = vmatpush.msra.mxu0 %v7877
        %v7879 = vand.u32 %v7566, 4294901760
        %v7880 = vsub.f32 %v7566, %v7879
        %v7881 = vand.u32 %v7880, 4294901760
        %7882 = vmatpush.msra.mxu0 %v7881
        %v7883 = vand.u32 %v7566, 4294901760
        %v7884 = vsub.f32 %v7566, %v7883
        %v7885 = vand.u32 %v7884, 4294901760
        %7886 = vmatpush.msra.mxu0 %v7885
        %v7887 = vand.u32 %v7566, 4294901760
        %v7888 = vsub.f32 %v7566, %v7887
        %v7889 = vand.u32 %v7888, 4294901760
        %7890 = vmatpush.msra.mxu0 %v7889
        %v7891 = vand.u32 %v7570, 4294901760
        %v7892 = vsub.f32 %v7570, %v7891
        %v7893 = vand.u32 %v7892, 4294901760
        %7894 = vmatpush.msra.mxu0 %v7893
        %v7895 = vand.u32 %v7568, 4294901760
        %v7896 = vsub.f32 %v7568, %v7895
        %v7897 = vand.u32 %v7896, 4294901760
        %7898 = vmatpush.msra.mxu0 %v7897
        %v7899 = vand.u32 %v7544, 4294901760
        %7900 = vmatmul.f32.gmra.mxu0 %v7899
        %v7901 = vpop.f32.mrf.mxu0
        %v7902 = vadd.f32 %v7827, %v7901
        %v7903 = vand.u32 %v7545, 4294901760
        %7904 = vmatmul.f32.gmra.mxu0 %v7903
        %v7905 = vpop.f32.mrf.mxu0
        %v7906 = vadd.f32 %v7833, %v7905
        %7907 = vdwg.mxu0
        %v7908 = vand.u32 %v7566, 4294901760
        %7909 = vmatpush.msra.mxu0 %v7908
        %v7910 = vand.u32 %v7566, 4294901760
        %7911 = vmatpush.msra.mxu0 %v7910
        %v7912 = vand.u32 %v7566, 4294901760
        %7913 = vmatpush.msra.mxu0 %v7912
        %v7914 = vand.u32 %v7566, 4294901760
        %7915 = vmatpush.msra.mxu0 %v7914
        %v7916 = vand.u32 %v7566, 4294901760
        %7917 = vmatpush.msra.mxu0 %v7916
        %v7918 = vand.u32 %v7566, 4294901760
        %7919 = vmatpush.msra.mxu0 %v7918
        %v7920 = vand.u32 %v7566, 4294901760
        %7921 = vmatpush.msra.mxu0 %v7920
        %v7922 = vand.u32 %v7566, 4294901760
        %7923 = vmatpush.msra.mxu0 %v7922
        %v7924 = vand.u32 %v7566, 4294901760
        %7925 = vmatpush.msra.mxu0 %v7924
        %v7926 = vand.u32 %v7566, 4294901760
        %7927 = vmatpush.msra.mxu0 %v7926
        %v7928 = vand.u32 %v7566, 4294901760
        %7929 = vmatpush.msra.mxu0 %v7928
        %v7930 = vand.u32 %v7566, 4294901760
        %7931 = vmatpush.msra.mxu0 %v7930
        %v7932 = vand.u32 %v7566, 4294901760
        %7933 = vmatpush.msra.mxu0 %v7932
        %v7934 = vand.u32 %v7566, 4294901760
        %7935 = vmatpush.msra.mxu0 %v7934
        %v7936 = vand.u32 %v7570, 4294901760
        %7937 = vmatpush.msra.mxu0 %v7936
        %v7938 = vand.u32 %v7568, 4294901760
        %7939 = vmatpush.msra.mxu0 %v7938
        %v7940 = vand.u32 %v7544, 4294901760
        %7941 = vmatmul.f32.gmra.mxu0 %v7940
        %v7942 = vpop.f32.mrf.mxu0
        %v7943 = vadd.f32 %v7902, %v7942
        %v7944 = vand.u32 %v7545, 4294901760
        %7945 = vmatmul.f32.gmra.mxu0 %v7944
        %v7946 = vpop.f32.mrf.mxu0
        %v7947 = vadd.f32 %v7906, %v7946
        %7948 = vdwg.mxu0
        %v7949 = vand.u32 %v7566, 4294901760
        %7950 = vmatpush.msra.mxu0 %v7949
        %v7951 = vand.u32 %v7566, 4294901760
        %7952 = vmatpush.msra.mxu0 %v7951
        %v7953 = vand.u32 %v7566, 4294901760
        %7954 = vmatpush.msra.mxu0 %v7953
        %v7955 = vand.u32 %v7566, 4294901760
        %7956 = vmatpush.msra.mxu0 %v7955
        %v7957 = vand.u32 %v7566, 4294901760
        %7958 = vmatpush.msra.mxu0 %v7957
        %v7959 = vand.u32 %v7566, 4294901760
        %7960 = vmatpush.msra.mxu0 %v7959
        %v7961 = vand.u32 %v7566, 4294901760
        %7962 = vmatpush.msra.mxu0 %v7961
        %v7963 = vand.u32 %v7566, 4294901760
        %7964 = vmatpush.msra.mxu0 %v7963
        %v7965 = vand.u32 %v7566, 4294901760
        %7966 = vmatpush.msra.mxu0 %v7965
        %v7967 = vand.u32 %v7566, 4294901760
        %7968 = vmatpush.msra.mxu0 %v7967
        %v7969 = vand.u32 %v7566, 4294901760
        %7970 = vmatpush.msra.mxu0 %v7969
        %v7971 = vand.u32 %v7566, 4294901760
        %7972 = vmatpush.msra.mxu0 %v7971
        %v7973 = vand.u32 %v7566, 4294901760
        %7974 = vmatpush.msra.mxu0 %v7973
        %v7975 = vand.u32 %v7566, 4294901760
        %7976 = vmatpush.msra.mxu0 %v7975
        %v7977 = vand.u32 %v7571, 4294901760
        %7978 = vmatpush.msra.mxu0 %v7977
        %v7979 = vand.u32 %v7569, 4294901760
        %7980 = vmatpush.msra.mxu0 %v7979
        %v7981 = vand.u32 %v7544, 4294901760
        %v7982 = vsub.f32 %v7544, %v7981
        %v7983 = vand.u32 %v7982, 4294901760
        %v7984 = vsub.f32 %v7982, %v7983
        %v7985 = vand.u32 %v7984, 4294901760
        %7986 = vmatmul.f32.gmra.mxu0 %v7985
        %v7987 = vpop.f32.mrf.mxu0
        %v7988 = vadd.f32 0.0, %v7987
        %v7989 = vand.u32 %v7545, 4294901760
        %v7990 = vsub.f32 %v7545, %v7989
        %v7991 = vand.u32 %v7990, 4294901760
        %v7992 = vsub.f32 %v7990, %v7991
        %v7993 = vand.u32 %v7992, 4294901760
        %7994 = vmatmul.f32.gmra.mxu0 %v7993
        %v7995 = vpop.f32.mrf.mxu0
        %v7996 = vadd.f32 0.0, %v7995
        %7997 = vdwg.mxu0
        %v7998 = vand.u32 %v7566, 4294901760
        %v7999 = vsub.f32 %v7566, %v7998
        %v8000 = vand.u32 %v7999, 4294901760
        %v8001 = vsub.f32 %v7999, %v8000
        %v8002 = vand.u32 %v8001, 4294901760
        %8003 = vmatpush.msra.mxu0 %v8002
        %v8004 = vand.u32 %v7566, 4294901760
        %v8005 = vsub.f32 %v7566, %v8004
        %v8006 = vand.u32 %v8005, 4294901760
        %v8007 = vsub.f32 %v8005, %v8006
        %v8008 = vand.u32 %v8007, 4294901760
        %8009 = vmatpush.msra.mxu0 %v8008
        %v8010 = vand.u32 %v7566, 4294901760
        %v8011 = vsub.f32 %v7566, %v8010
        %v8012 = vand.u32 %v8011, 4294901760
        %v8013 = vsub.f32 %v8011, %v8012
        %v8014 = vand.u32 %v8013, 4294901760
        %8015 = vmatpush.msra.mxu0 %v8014
        %v8016 = vand.u32 %v7566, 4294901760
        %v8017 = vsub.f32 %v7566, %v8016
        %v8018 = vand.u32 %v8017, 4294901760
        %v8019 = vsub.f32 %v8017, %v8018
        %v8020 = vand.u32 %v8019, 4294901760
        %8021 = vmatpush.msra.mxu0 %v8020
        %v8022 = vand.u32 %v7566, 4294901760
        %v8023 = vsub.f32 %v7566, %v8022
        %v8024 = vand.u32 %v8023, 4294901760
        %v8025 = vsub.f32 %v8023, %v8024
        %v8026 = vand.u32 %v8025, 4294901760
        %8027 = vmatpush.msra.mxu0 %v8026
        %v8028 = vand.u32 %v7566, 4294901760
        %v8029 = vsub.f32 %v7566, %v8028
        %v8030 = vand.u32 %v8029, 4294901760
        %v8031 = vsub.f32 %v8029, %v8030
        %v8032 = vand.u32 %v8031, 4294901760
        %8033 = vmatpush.msra.mxu0 %v8032
        %v8034 = vand.u32 %v7566, 4294901760
        %v8035 = vsub.f32 %v7566, %v8034
        %v8036 = vand.u32 %v8035, 4294901760
        %v8037 = vsub.f32 %v8035, %v8036
        %v8038 = vand.u32 %v8037, 4294901760
        %8039 = vmatpush.msra.mxu0 %v8038
        %v8040 = vand.u32 %v7566, 4294901760
        %v8041 = vsub.f32 %v7566, %v8040
        %v8042 = vand.u32 %v8041, 4294901760
        %v8043 = vsub.f32 %v8041, %v8042
        %v8044 = vand.u32 %v8043, 4294901760
        %8045 = vmatpush.msra.mxu0 %v8044
        %v8046 = vand.u32 %v7566, 4294901760
        %v8047 = vsub.f32 %v7566, %v8046
        %v8048 = vand.u32 %v8047, 4294901760
        %v8049 = vsub.f32 %v8047, %v8048
        %v8050 = vand.u32 %v8049, 4294901760
        %8051 = vmatpush.msra.mxu0 %v8050
        %v8052 = vand.u32 %v7566, 4294901760
        %v8053 = vsub.f32 %v7566, %v8052
        %v8054 = vand.u32 %v8053, 4294901760
        %v8055 = vsub.f32 %v8053, %v8054
        %v8056 = vand.u32 %v8055, 4294901760
        %8057 = vmatpush.msra.mxu0 %v8056
        %v8058 = vand.u32 %v7566, 4294901760
        %v8059 = vsub.f32 %v7566, %v8058
        %v8060 = vand.u32 %v8059, 4294901760
        %v8061 = vsub.f32 %v8059, %v8060
        %v8062 = vand.u32 %v8061, 4294901760
        %8063 = vmatpush.msra.mxu0 %v8062
        %v8064 = vand.u32 %v7566, 4294901760
        %v8065 = vsub.f32 %v7566, %v8064
        %v8066 = vand.u32 %v8065, 4294901760
        %v8067 = vsub.f32 %v8065, %v8066
        %v8068 = vand.u32 %v8067, 4294901760
        %8069 = vmatpush.msra.mxu0 %v8068
        %v8070 = vand.u32 %v7566, 4294901760
        %v8071 = vsub.f32 %v7566, %v8070
        %v8072 = vand.u32 %v8071, 4294901760
        %v8073 = vsub.f32 %v8071, %v8072
        %v8074 = vand.u32 %v8073, 4294901760
        %8075 = vmatpush.msra.mxu0 %v8074
        %v8076 = vand.u32 %v7566, 4294901760
        %v8077 = vsub.f32 %v7566, %v8076
        %v8078 = vand.u32 %v8077, 4294901760
        %v8079 = vsub.f32 %v8077, %v8078
        %v8080 = vand.u32 %v8079, 4294901760
        %8081 = vmatpush.msra.mxu0 %v8080
        %v8082 = vand.u32 %v7571, 4294901760
        %v8083 = vsub.f32 %v7571, %v8082
        %v8084 = vand.u32 %v8083, 4294901760
        %v8085 = vsub.f32 %v8083, %v8084
        %v8086 = vand.u32 %v8085, 4294901760
        %8087 = vmatpush.msra.mxu0 %v8086
        %v8088 = vand.u32 %v7569, 4294901760
        %v8089 = vsub.f32 %v7569, %v8088
        %v8090 = vand.u32 %v8089, 4294901760
        %v8091 = vsub.f32 %v8089, %v8090
        %v8092 = vand.u32 %v8091, 4294901760
        %8093 = vmatpush.msra.mxu0 %v8092
        %v8094 = vand.u32 %v7544, 4294901760
        %8095 = vmatmul.f32.gmra.mxu0 %v8094
        %v8096 = vpop.f32.mrf.mxu0
        %v8097 = vadd.f32 %v7988, %v8096
        %v8098 = vand.u32 %v7545, 4294901760
        %8099 = vmatmul.f32.gmra.mxu0 %v8098
        %v8100 = vpop.f32.mrf.mxu0
        %v8101 = vadd.f32 %v7996, %v8100
        %8102 = vdwg.mxu0
        %v8103 = vand.u32 %v7566, 4294901760
        %v8104 = vsub.f32 %v7566, %v8103
        %8105 = vmatpush.msra.mxu0 %v8104
        %v8106 = vand.u32 %v7566, 4294901760
        %v8107 = vsub.f32 %v7566, %v8106
        %8108 = vmatpush.msra.mxu0 %v8107
        %v8109 = vand.u32 %v7566, 4294901760
        %v8110 = vsub.f32 %v7566, %v8109
        %8111 = vmatpush.msra.mxu0 %v8110
        %v8112 = vand.u32 %v7566, 4294901760
        %v8113 = vsub.f32 %v7566, %v8112
        %8114 = vmatpush.msra.mxu0 %v8113
        %v8115 = vand.u32 %v7566, 4294901760
        %v8116 = vsub.f32 %v7566, %v8115
        %8117 = vmatpush.msra.mxu0 %v8116
        %v8118 = vand.u32 %v7566, 4294901760
        %v8119 = vsub.f32 %v7566, %v8118
        %8120 = vmatpush.msra.mxu0 %v8119
        %v8121 = vand.u32 %v7566, 4294901760
        %v8122 = vsub.f32 %v7566, %v8121
        %8123 = vmatpush.msra.mxu0 %v8122
        %v8124 = vand.u32 %v7566, 4294901760
        %v8125 = vsub.f32 %v7566, %v8124
        %8126 = vmatpush.msra.mxu0 %v8125
        %v8127 = vand.u32 %v7566, 4294901760
        %v8128 = vsub.f32 %v7566, %v8127
        %8129 = vmatpush.msra.mxu0 %v8128
        %v8130 = vand.u32 %v7566, 4294901760
        %v8131 = vsub.f32 %v7566, %v8130
        %8132 = vmatpush.msra.mxu0 %v8131
        %v8133 = vand.u32 %v7566, 4294901760
        %v8134 = vsub.f32 %v7566, %v8133
        %8135 = vmatpush.msra.mxu0 %v8134
        %v8136 = vand.u32 %v7566, 4294901760
        %v8137 = vsub.f32 %v7566, %v8136
        %8138 = vmatpush.msra.mxu0 %v8137
        %v8139 = vand.u32 %v7566, 4294901760
        %v8140 = vsub.f32 %v7566, %v8139
        %8141 = vmatpush.msra.mxu0 %v8140
        %v8142 = vand.u32 %v7566, 4294901760
        %v8143 = vsub.f32 %v7566, %v8142
        %8144 = vmatpush.msra.mxu0 %v8143
        %v8145 = vand.u32 %v7571, 4294901760
        %v8146 = vsub.f32 %v7571, %v8145
        %8147 = vmatpush.msra.mxu0 %v8146
        %v8148 = vand.u32 %v7569, 4294901760
        %v8149 = vsub.f32 %v7569, %v8148
        %8150 = vmatpush.msra.mxu0 %v8149
        %v8151 = vand.u32 %v7544, 4294901760
        %v8152 = vsub.f32 %v7544, %v8151
        %8153 = vmatmul.f32.gmra.mxu0 %v8152
        %v8154 = vpop.f32.mrf.mxu0
        %v8155 = vadd.f32 %v8097, %v8154
        %v8156 = vand.u32 %v7545, 4294901760
        %v8157 = vsub.f32 %v7545, %v8156
        %8158 = vmatmul.f32.gmra.mxu0 %v8157
        %v8159 = vpop.f32.mrf.mxu0
        %v8160 = vadd.f32 %v8101, %v8159
        %8161 = vdwg.mxu0
        %v8162 = vand.u32 %v7566, 4294901760
        %8163 = vmatpush.msra.mxu0 %v8162
        %v8164 = vand.u32 %v7566, 4294901760
        %8165 = vmatpush.msra.mxu0 %v8164
        %v8166 = vand.u32 %v7566, 4294901760
        %8167 = vmatpush.msra.mxu0 %v8166
        %v8168 = vand.u32 %v7566, 4294901760
        %8169 = vmatpush.msra.mxu0 %v8168
        %v8170 = vand.u32 %v7566, 4294901760
        %8171 = vmatpush.msra.mxu0 %v8170
        %v8172 = vand.u32 %v7566, 4294901760
        %8173 = vmatpush.msra.mxu0 %v8172
        %v8174 = vand.u32 %v7566, 4294901760
        %8175 = vmatpush.msra.mxu0 %v8174
        %v8176 = vand.u32 %v7566, 4294901760
        %8177 = vmatpush.msra.mxu0 %v8176
        %v8178 = vand.u32 %v7566, 4294901760
        %8179 = vmatpush.msra.mxu0 %v8178
        %v8180 = vand.u32 %v7566, 4294901760
        %8181 = vmatpush.msra.mxu0 %v8180
        %v8182 = vand.u32 %v7566, 4294901760
        %8183 = vmatpush.msra.mxu0 %v8182
        %v8184 = vand.u32 %v7566, 4294901760
        %8185 = vmatpush.msra.mxu0 %v8184
        %v8186 = vand.u32 %v7566, 4294901760
        %8187 = vmatpush.msra.mxu0 %v8186
        %v8188 = vand.u32 %v7566, 4294901760
        %8189 = vmatpush.msra.mxu0 %v8188
        %v8190 = vand.u32 %v7571, 4294901760
        %8191 = vmatpush.msra.mxu0 %v8190
        %v8192 = vand.u32 %v7569, 4294901760
        %8193 = vmatpush.msra.mxu0 %v8192
        %v8194 = vand.u32 %v7544, 4294901760
        %v8195 = vsub.f32 %v7544, %v8194
        %v8196 = vand.u32 %v8195, 4294901760
        %8197 = vmatmul.f32.gmra.mxu0 %v8196
        %v8198 = vpop.f32.mrf.mxu0
        %v8199 = vadd.f32 %v8155, %v8198
        %v8200 = vand.u32 %v7545, 4294901760
        %v8201 = vsub.f32 %v7545, %v8200
        %v8202 = vand.u32 %v8201, 4294901760
        %8203 = vmatmul.f32.gmra.mxu0 %v8202
        %v8204 = vpop.f32.mrf.mxu0
        %v8205 = vadd.f32 %v8160, %v8204
        %8206 = vdwg.mxu0
        %v8207 = vand.u32 %v7566, 4294901760
        %v8208 = vsub.f32 %v7566, %v8207
        %v8209 = vand.u32 %v8208, 4294901760
        %8210 = vmatpush.msra.mxu0 %v8209
        %v8211 = vand.u32 %v7566, 4294901760
        %v8212 = vsub.f32 %v7566, %v8211
        %v8213 = vand.u32 %v8212, 4294901760
        %8214 = vmatpush.msra.mxu0 %v8213
        %v8215 = vand.u32 %v7566, 4294901760
        %v8216 = vsub.f32 %v7566, %v8215
        %v8217 = vand.u32 %v8216, 4294901760
        %8218 = vmatpush.msra.mxu0 %v8217
        %v8219 = vand.u32 %v7566, 4294901760
        %v8220 = vsub.f32 %v7566, %v8219
        %v8221 = vand.u32 %v8220, 4294901760
        %8222 = vmatpush.msra.mxu0 %v8221
        %v8223 = vand.u32 %v7566, 4294901760
        %v8224 = vsub.f32 %v7566, %v8223
        %v8225 = vand.u32 %v8224, 4294901760
        %8226 = vmatpush.msra.mxu0 %v8225
        %v8227 = vand.u32 %v7566, 4294901760
        %v8228 = vsub.f32 %v7566, %v8227
        %v8229 = vand.u32 %v8228, 4294901760
        %8230 = vmatpush.msra.mxu0 %v8229
        %v8231 = vand.u32 %v7566, 4294901760
        %v8232 = vsub.f32 %v7566, %v8231
        %v8233 = vand.u32 %v8232, 4294901760
        %8234 = vmatpush.msra.mxu0 %v8233
        %v8235 = vand.u32 %v7566, 4294901760
        %v8236 = vsub.f32 %v7566, %v8235
        %v8237 = vand.u32 %v8236, 4294901760
        %8238 = vmatpush.msra.mxu0 %v8237
        %v8239 = vand.u32 %v7566, 4294901760
        %v8240 = vsub.f32 %v7566, %v8239
        %v8241 = vand.u32 %v8240, 4294901760
        %8242 = vmatpush.msra.mxu0 %v8241
        %v8243 = vand.u32 %v7566, 4294901760
        %v8244 = vsub.f32 %v7566, %v8243
        %v8245 = vand.u32 %v8244, 4294901760
        %8246 = vmatpush.msra.mxu0 %v8245
        %v8247 = vand.u32 %v7566, 4294901760
        %v8248 = vsub.f32 %v7566, %v8247
        %v8249 = vand.u32 %v8248, 4294901760
        %8250 = vmatpush.msra.mxu0 %v8249
        %v8251 = vand.u32 %v7566, 4294901760
        %v8252 = vsub.f32 %v7566, %v8251
        %v8253 = vand.u32 %v8252, 4294901760
        %8254 = vmatpush.msra.mxu0 %v8253
        %v8255 = vand.u32 %v7566, 4294901760
        %v8256 = vsub.f32 %v7566, %v8255
        %v8257 = vand.u32 %v8256, 4294901760
        %8258 = vmatpush.msra.mxu0 %v8257
        %v8259 = vand.u32 %v7566, 4294901760
        %v8260 = vsub.f32 %v7566, %v8259
        %v8261 = vand.u32 %v8260, 4294901760
        %8262 = vmatpush.msra.mxu0 %v8261
        %v8263 = vand.u32 %v7571, 4294901760
        %v8264 = vsub.f32 %v7571, %v8263
        %v8265 = vand.u32 %v8264, 4294901760
        %8266 = vmatpush.msra.mxu0 %v8265
        %v8267 = vand.u32 %v7569, 4294901760
        %v8268 = vsub.f32 %v7569, %v8267
        %v8269 = vand.u32 %v8268, 4294901760
        %8270 = vmatpush.msra.mxu0 %v8269
        %v8271 = vand.u32 %v7544, 4294901760
        %8272 = vmatmul.f32.gmra.mxu0 %v8271
        %v8273 = vpop.f32.mrf.mxu0
        %v8274 = vadd.f32 %v8199, %v8273
        %v8275 = vand.u32 %v7545, 4294901760
        %8276 = vmatmul.f32.gmra.mxu0 %v8275
        %v8277 = vpop.f32.mrf.mxu0
        %v8278 = vadd.f32 %v8205, %v8277
        %8279 = vdwg.mxu0
        %v8280 = vand.u32 %v7566, 4294901760
        %8281 = vmatpush.msra.mxu0 %v8280
        %v8282 = vand.u32 %v7566, 4294901760
        %8283 = vmatpush.msra.mxu0 %v8282
        %v8284 = vand.u32 %v7566, 4294901760
        %8285 = vmatpush.msra.mxu0 %v8284
        %v8286 = vand.u32 %v7566, 4294901760
        %8287 = vmatpush.msra.mxu0 %v8286
        %v8288 = vand.u32 %v7566, 4294901760
        %8289 = vmatpush.msra.mxu0 %v8288
        %v8290 = vand.u32 %v7566, 4294901760
        %8291 = vmatpush.msra.mxu0 %v8290
        %v8292 = vand.u32 %v7566, 4294901760
        %8293 = vmatpush.msra.mxu0 %v8292
        %v8294 = vand.u32 %v7566, 4294901760
        %8295 = vmatpush.msra.mxu0 %v8294
        %v8296 = vand.u32 %v7566, 4294901760
        %8297 = vmatpush.msra.mxu0 %v8296
        %v8298 = vand.u32 %v7566, 4294901760
        %8299 = vmatpush.msra.mxu0 %v8298
        %v8300 = vand.u32 %v7566, 4294901760
        %8301 = vmatpush.msra.mxu0 %v8300
        %v8302 = vand.u32 %v7566, 4294901760
        %8303 = vmatpush.msra.mxu0 %v8302
        %v8304 = vand.u32 %v7566, 4294901760
        %8305 = vmatpush.msra.mxu0 %v8304
        %v8306 = vand.u32 %v7566, 4294901760
        %8307 = vmatpush.msra.mxu0 %v8306
        %v8308 = vand.u32 %v7571, 4294901760
        %8309 = vmatpush.msra.mxu0 %v8308
        %v8310 = vand.u32 %v7569, 4294901760
        %8311 = vmatpush.msra.mxu0 %v8310
        %v8312 = vand.u32 %v7544, 4294901760
        %8313 = vmatmul.f32.gmra.mxu0 %v8312
        %v8314 = vpop.f32.mrf.mxu0
        %v8315 = vadd.f32 %v8274, %v8314
        %v8316 = vand.u32 %v7545, 4294901760
        %8317 = vmatmul.f32.gmra.mxu0 %v8316
        %v8318 = vpop.f32.mrf.mxu0
        %v8319 = vadd.f32 %v8278, %v8318
        %8320 = vdwg.mxu0
        %v8321 = vadd.f32 %v7519, %v7943
        %v8322 = vadd.f32 %v7520, %v8315
        %v8323 = vadd.f32 %v7521, %v7947
        %v8324 = vadd.f32 %v7522, %v8319
        %8325 = vst [vmem:[%s250] sm:$0xff] %v8321
        %8326 = vst [vmem:[%s250 + $0x8] sm:$0xff] %v8322
        %8327 = vst [vmem:[%s250 + $0x10] sm:$0xff] %v8323
        %8328 = vst [vmem:[%s250 + $0x18] sm:$0xff] %v8324
        %s8329 = sand.u32 %s119, 1
        %s8330 = scalar_lea.sflag [#allocation4], %s8329
        %s8331 = sand.u32 %s119, 1
        %s8332 = smul.addr %s8331, 32
        %s8333 = scalar_lea.vmem [#allocation8], %s8332
        // Predicated region
        $region49: #{tpu_custom_call.1} parent=35 // pred_check
          %p8334 = pneg %p129
        $region50: #{tpu_custom_call.1} parent=35 // pred_check_branch
          %8336 = sbr.rel (%p8334) target = $region52
        $region51: #{tpu_custom_call.1} parent=35 // pred_region
          %8338 = vsyncadd %s8330, 0
          %s8339 = smul.addr %s22, 4
          %s8340 = smul.addr %s8339, 8
          %s8341 = scalar_lea.hbm %s4, %s8340
          %s8342 = sshll.u32 %s8333, 4
          %s8343 = int_to_ptr.vmem [resolvable:$true] %s8342
          %s8344 = sshll.u32 %s8341, 4
          %s8345 = int_to_ptr.hbm [resolvable:$true] %s8344
          %8350 = dma.vmem_to_hbm [thread:$0]  %s8343, 512, %s8345, %s8330, 256, 256, 16
        $region52: #{tpu_custom_call.1} parent=35 // pred_fallthru
          _
      $region36: #{tpu_custom_call.1} parent=5 // pred_fallthru
        _
      %p8351 = scmp.le.s32.totalorder 2, %s17
      // Predicated region
      $region53: #{tpu_custom_call.1} parent=5 // pred_check
        %p8352 = pneg %p8351
      $region54: #{tpu_custom_call.1} parent=5 // pred_check_branch
        %8354 = sbr.rel (%p8352) target = $region56
      $region55: #{tpu_custom_call.1} parent=5 // pred_region
        %s8355 = ssub.s32 %s17, 2
        // Predicated region
        $region57: #{tpu_custom_call.1} parent=55 // pred_check
          %p8356 = pneg %p135
        $region58: #{tpu_custom_call.1} parent=55 // pred_check_branch
          %8358 = sbr.rel (%p8356) target = $region60
        $region59: #{tpu_custom_call.1} parent=55 // pred_region
          %s8359 = sand.u32 %s120, 1
          %s8360 = scalar_lea.sflag [#allocation4], %s8359
          %s8361 = sand.u32 %s120, 1
          %s8362 = smul.addr %s8361, 32
          %s8363 = scalar_lea.vmem [#allocation8], %s8362
          %8365 = dma.done %s8360, 512
        $region60: #{tpu_custom_call.1} parent=55 // pred_fallthru
          _
      $region56: #{tpu_custom_call.1} parent=5 // pred_fallthru
        _
    $region6: #{tpu_custom_call.1} parent=1 // loop_footer
      %s21 = sadd.s32 1, %s17
    $region7: #{tpu_custom_call.1} parent=1 // loop_footer_branch
      %16 = sbr.rel target = $region3
    $region8: #{tpu_custom_call.1} parent=1 // loop_exit
      _
    %8366 = vsyncpa [#allocation3], 1
    %s8367 = scalar_lea.sflag [#allocation3], 1
    %8368 = vsyncpa %s8367, 1
    %8369 = vsyncpa [#allocation6], 1
    %8370 = vsyncpa [#allocation4], 1
    %s8371 = scalar_lea.sflag [#allocation4], 1
    %8372 = vsyncpa %s8371, 1

</llo_original>
